<compile_context>
chip_gen: v6e
topology: v6e:2x2x1
jax: 0.10.0
libtpu: 0.0.40
codegen_flags: <defaults>
</compile_context>

<pallas_src>
import jax
import jax.numpy as jnp
from jax.experimental import pallas as pl
from jax.experimental.pallas import tpu as pltpu


# ----------------------------- Pallas kernel -------------------------------

def _encoder_fused_kernel(p_ref, w1_ref, b1_ref, w2_ref, b2_ref,
                          w3_ref, b3_ref, o_ref, pad_ref, slab_ref):
    # pad_ref : VMEM (H+2, W+2, C) bf16  -- zero-bordered padded activation
    # slab_ref: VMEM (H*W, 9*C)   bf16  -- tap-concatenated im2col slab
    Hp2, Wp2, C = pad_ref.shape
    H, W = Hp2 - 2, Wp2 - 2
    HW = H * W

    # -------- stem: single MXU dot (K padded to 32), + shift, ReLU ----------
    y = jnp.dot(p_ref[0], w1_ref[...], preferred_element_type=jnp.float32)
    y = jnp.maximum(y + b1_ref[...], 0.0)                  # [HW, C] f32

    # -------- zero-bordered padded scratch; cast to bf16 once per conv ------
    pad_ref[...] = jnp.zeros(pad_ref.shape, pad_ref.dtype)
    pad_ref[1:H + 1, 1:W + 1, :] = y.astype(pad_ref.dtype).reshape(H, W, C)

    def conv3x3_bn_relu(w_ref, shift_ref, residual=None):
        # Gather the 9 shifted taps into one [HW, 9C] bf16 slab, then a single
        # K = 9*C MXU matmul (accumulation stays in the MXU result buffer).
        for k in range(9):
            kh, kw = divmod(k, 3)
            slab_ref[:, k * C:(k + 1) * C] = (
                pad_ref[kh:kh + H, kw:kw + W, :].reshape(HW, C))
        out = jnp.dot(slab_ref[...], w_ref[...],
                      preferred_element_type=jnp.float32)
        out = out + shift_ref[...]                          # BN shift (f32)
        if residual is not None:
            out = out + residual                            # residual add
        return jnp.maximum(out, 0.0)                        # [HW, C] f32

    h = conv3x3_bn_relu(w2_ref, b2_ref)
    pad_ref[1:H + 1, 1:W + 1, :] = h.astype(pad_ref.dtype).reshape(H, W, C)
    z = conv3x3_bn_relu(w3_ref, b3_ref, residual=y)

    # -------- adaptive_avg_pool2d(1) + flatten (fc = Identity) --------------
    o_ref[0] = jnp.mean(z, axis=0, keepdims=True).astype(o_ref.dtype)


# ------------------------------- JAX glue ----------------------------------

def _bn_scale_shift(bn, eps=1e-5):
    scale = (bn["gamma"] / jnp.sqrt(bn["var"] + eps)).astype(jnp.float32)
    shift = (bn["beta"] - bn["mean"] * scale).astype(jnp.float32)
    return scale, shift[None, :]                            # [C], [1, C]


def _stem_im2col(x_nhwc, kpad):
    # Tiny wrapper-side im2col for the stem (Cin is small: 9*Cin = 27 -> 32).
    B, H, W, Cin = x_nhwc.shape
    xp = jnp.pad(x_nhwc, ((0, 0), (1, 1), (1, 1), (0, 0)))
    taps = [xp[:, kh:kh + H, kw:kw + W, :] for kh in range(3) for kw in range(3)]
    patches = jnp.concatenate(taps, axis=-1)                # [B, H, W, 9*Cin]
    patches = jnp.pad(patches, ((0, 0), (0, 0), (0, 0), (0, kpad - 9 * Cin)))
    return patches.reshape(B, H * W, kpad).astype(jnp.bfloat16)


def _stem_weight(w_oihw, scale, kpad):
    # [Cout, Cin, 3, 3] -> tap-major [9*Cin, Cout]; fold BN scale (f32) -> bf16.
    cout, cin = w_oihw.shape[0], w_oihw.shape[1]
    w = jnp.transpose(w_oihw, (2, 3, 1, 0)).reshape(9 * cin, cout)
    w = w.astype(jnp.float32) * scale[None, :]
    w = jnp.pad(w, ((0, kpad - 9 * cin), (0, 0)))
    return w.astype(jnp.bfloat16)


def _stacked_conv_weight(w_oihw, scale):
    # [Cout, Cin, 3, 3] -> tap-major [9*Cin, Cout]; fold BN scale (f32) -> bf16.
    cout, cin = w_oihw.shape[0], w_oihw.shape[1]
    w = jnp.transpose(w_oihw, (2, 3, 1, 0)).reshape(9 * cin, cout)
    w = w.astype(jnp.float32) * scale[None, :]
    return w.astype(jnp.bfloat16)


@jax.jit
def encoder_forward(x_nchw, params):
    # layout: input x is NCHW [B, Cin, H, W] (PyTorch); output is [B, C_feat].
    x = jnp.transpose(x_nchw, (0, 2, 3, 1)).astype(jnp.float32)   # NHWC
    B, H, W, Cin = x.shape
    C = params["w1"].shape[0]
    HW = H * W
    kpad = ((9 * Cin + 7) // 8) * 8

    s1, b1 = _bn_scale_shift(params["bn1"])
    s2, b2 = _bn_scale_shift(params["bn2"])
    s3, b3 = _bn_scale_shift(params["bn3"])

    patches = _stem_im2col(x, kpad)                         # [B, HW, kpad] bf16
    w1 = _stem_weight(params["w1"], s1, kpad)               # [kpad, C]  bf16
    w2 = _stacked_conv_weight(params["w2"], s2)             # [9C, C]    bf16
    w3 = _stacked_conv_weight(params["w3"], s3)             # [9C, C]    bf16

    out = pl.pallas_call(
        _encoder_fused_kernel,
        out_shape=jax.ShapeDtypeStruct((B, 1, C), jnp.float32),
        grid=(B,),
        in_specs=[
            pl.BlockSpec((1, HW, kpad), lambda b: (b, 0, 0)),
            pl.BlockSpec((kpad, C), lambda b: (0, 0)),
            pl.BlockSpec((1, C), lambda b: (0, 0)),
            pl.BlockSpec((9 * C, C), lambda b: (0, 0)),
            pl.BlockSpec((1, C), lambda b: (0, 0)),
            pl.BlockSpec((9 * C, C), lambda b: (0, 0)),
            pl.BlockSpec((1, C), lambda b: (0, 0)),
        ],
        out_specs=pl.BlockSpec((1, 1, C), lambda b: (b, 0, 0)),
        scratch_shapes=[
            pltpu.VMEM((H + 2, W + 2, C), jnp.bfloat16),    # padded activation
            pltpu.VMEM((HW, 9 * C), jnp.bfloat16),          # im2col slab
        ],
        compiler_params=pltpu.CompilerParams(
            dimension_semantics=("parallel",),              # batch over cores
            vmem_limit_bytes=16 * 1024 * 1024,              # per-step WS < 1 MiB
        ),
    )(patches, w1, b1, w2, b2, w3, b3)
    return out.reshape(B, C)


# -------------------- pure-JAX f32 reference (correctness) -----------------

def encoder_reference(x_nchw, params, eps=1e-5):
    x = jnp.transpose(x_nchw, (0, 2, 3, 1)).astype(jnp.float32)

    def conv_bn_relu(v, w, bn, residual=None):
        w_hwio = jnp.transpose(w, (2, 3, 1, 0))
        y = jax.lax.conv_general_dilated(
            v, w_hwio, (1, 1), "SAME",
            dimension_numbers=("NHWC", "HWIO", "NHWC"))
        scale = bn["gamma"] / jnp.sqrt(bn["var"] + eps)
        shift = bn["beta"] - bn["mean"] * scale
        y = y * scale + shift
        if residual is not None:
            y = y + residual
        return jnp.maximum(y, 0.0)

    y = conv_bn_relu(x, params["w1"], params["bn1"])
    h = conv_bn_relu(y, params["w2"], params["bn2"])
    z = conv_bn_relu(h, params["w3"], params["bn3"], residual=y)
    return jnp.mean(z, axis=(1, 2))                         # [B, C]


# ------------------------------- Encoder -----------------------------------

def init_encoder_params(key, c_in=3, c_feat=64):
    ks = jax.random.split(key, 6)

    def conv_w(k, cout, cin):
        fan_in = cin * 9
        return (jax.random.normal(k, (cout, cin, 3, 3), jnp.float32)
                * (2.0 / fan_in) ** 0.5)

    def bn_p(k, c):
        k1, k2 = jax.random.split(k)
        return {
            "gamma": 1.0 + 0.1 * jax.random.normal(k1, (c,), jnp.float32),
            "beta": 0.1 * jax.random.normal(k2, (c,), jnp.float32),
            "mean": jnp.zeros((c,), jnp.float32),
            "var": jnp.ones((c,), jnp.float32),
        }

    return {
        "w1": conv_w(ks[0], c_feat, c_in),   "bn1": bn_p(ks[1], c_feat),
        "w2": conv_w(ks[2], c_feat, c_feat), "bn2": bn_p(ks[3], c_feat),
        "w3": conv_w(ks[4], c_feat, c_feat), "bn3": bn_p(ks[5], c_feat),
    }


if __name__ == "__main__":
    key = jax.random.PRNGKey(0)
    kx, kp = jax.random.split(key)

    B, C_IN, H, W = 2, 3, 16, 16
    x = jax.random.normal(kx, (B, C_IN, H, W), jnp.float32)
    params = init_encoder_params(kp, c_in=C_IN, c_feat=64)

    feats = jax.block_until_ready(encoder_forward(x, params))
    assert feats.shape == (B, 64), feats.shape
    assert bool(jnp.all(jnp.isfinite(feats)))

    # bf16 MXU operands vs f32 reference: tolerance check before benchmarking.
    ref = jax.block_until_ready(encoder_reference(x, params))
    rel_err = float(jnp.max(jnp.abs(feats - ref)) /
                    (jnp.max(jnp.abs(ref)) + 1e-6))
    assert rel_err < 5e-2, f"relative error too large: {rel_err}"

    print("KERNEL_OK")
</pallas_src>

<mosaic_0001>
module attributes {stable_mosaic.version = 11 : i64} {
  func.func @_encoder_fused_kernel(%arg0: i32, %arg1: memref<1x256x32xbf16, #tpu.memory_space<vmem>>, %arg2: memref<32x64xbf16, #tpu.memory_space<vmem>>, %arg3: memref<1x64xf32, #tpu.memory_space<vmem>>, %arg4: memref<576x64xbf16, #tpu.memory_space<vmem>>, %arg5: memref<1x64xf32, #tpu.memory_space<vmem>>, %arg6: memref<576x64xbf16, #tpu.memory_space<vmem>>, %arg7: memref<1x64xf32, #tpu.memory_space<vmem>>, %arg8: memref<1x1x64xf32, #tpu.memory_space<vmem>>, %arg9: memref<18x18x64xbf16, #tpu.memory_space<vmem>>, %arg10: memref<256x576xbf16, #tpu.memory_space<vmem>>) attributes {dimension_semantics = [#tpu.dimension_semantics<parallel>], iteration_bounds = array<i64: 2>, scalar_prefetch = 0 : i64, scratch_operands = 2 : i64, tpu.core_type = #tpu.core_type<tc>, window_params = [{transform_indices = @transform_0, window_bounds = array<i64: 1, 256, 32>}, {pipeline_mode = #tpu.pipeline_mode<synchronous>, transform_indices = @transform_1, window_bounds = array<i64: 32, 64>}, {pipeline_mode = #tpu.pipeline_mode<synchronous>, transform_indices = @transform_2, window_bounds = array<i64: 1, 64>}, {pipeline_mode = #tpu.pipeline_mode<synchronous>, transform_indices = @transform_3, window_bounds = array<i64: 576, 64>}, {pipeline_mode = #tpu.pipeline_mode<synchronous>, transform_indices = @transform_4, window_bounds = array<i64: 1, 64>}, {pipeline_mode = #tpu.pipeline_mode<synchronous>, transform_indices = @transform_5, window_bounds = array<i64: 576, 64>}, {pipeline_mode = #tpu.pipeline_mode<synchronous>, transform_indices = @transform_6, window_bounds = array<i64: 1, 64>}, {transform_indices = @transform_7, window_bounds = array<i64: 1, 1, 64>}]} {
    %c0 = arith.constant 0 : index
    %c0_0 = arith.constant 0 : index
    %c0_1 = arith.constant 0 : index
    %0 = vector.load %arg1[%c0, %c0_0, %c0_1] : memref<1x256x32xbf16, #tpu.memory_space<vmem>>, vector<1x256x32xbf16>
    %1 = vector.shape_cast %0 : vector<1x256x32xbf16> to vector<256x32xbf16>
    %c0_2 = arith.constant 0 : index
    %c0_3 = arith.constant 0 : index
    %2 = vector.load %arg2[%c0_2, %c0_3] : memref<32x64xbf16, #tpu.memory_space<vmem>>, vector<32x64xbf16>
    %cst = arith.constant dense<0.000000e+00> : vector<256x64xf32>
    %3 = tpu.matmul %1, %2, %cst {dimension_numbers = #tpu.dot_dimension_numbers<[1], [0], [0], [1], [0, 0, 1, 1], [], []>} : vector<256x32xbf16>, vector<32x64xbf16>, vector<256x64xf32> -> vector<256x64xf32>
    %c0_4 = arith.constant 0 : index
    %c0_5 = arith.constant 0 : index
    %4 = vector.load %arg3[%c0_4, %c0_5] : memref<1x64xf32, #tpu.memory_space<vmem>>, vector<1x64xf32>
    %5 = vector.broadcast %4 : vector<1x64xf32> to vector<256x64xf32>
    %6 = arith.addf %3, %5 : vector<256x64xf32>
    %cst_6 = arith.constant 0.000000e+00 : f32
    %7 = vector.broadcast %cst_6 : f32 to vector<256x64xf32>
    %8 = arith.maximumf %6, %7 : vector<256x64xf32>
    %cst_7 = arith.constant 0.000000e+00 : bf16
    %9 = vector.broadcast %cst_7 : bf16 to vector<18x18x64xbf16>
    %c0_8 = arith.constant 0 : index
    %c0_9 = arith.constant 0 : index
    %c0_10 = arith.constant 0 : index
    %10 = vector.load %arg9[%c0_8, %c0_9, %c0_10] : memref<18x18x64xbf16, #tpu.memory_space<vmem>>, vector<18x18x64xbf16>
    tpu.vector_store %arg9[%c0_8, %c0_9, %c0_10], %9 {strides = array<i32>} : memref<18x18x64xbf16, #tpu.memory_space<vmem>>, vector<18x18x64xbf16>,
    %11 = arith.truncf %8 : vector<256x64xf32> to vector<256x64xbf16>
    %12 = vector.shape_cast %11 : vector<256x64xbf16> to vector<16x16x64xbf16>
    %c1 = arith.constant 1 : index
    %c1_11 = arith.constant 1 : index
    %c0_12 = arith.constant 0 : index
    %13 = vector.load %arg9[%c1, %c1_11, %c0_12] : memref<18x18x64xbf16, #tpu.memory_space<vmem>>, vector<16x16x64xbf16>
    tpu.vector_store %arg9[%c1, %c1_11, %c0_12], %12 {strides = array<i32>} : memref<18x18x64xbf16, #tpu.memory_space<vmem>>, vector<16x16x64xbf16>,
    %c0_13 = arith.constant 0 : index
    %c0_14 = arith.constant 0 : index
    %c0_15 = arith.constant 0 : index
    %14 = vector.load %arg9[%c0_13, %c0_14, %c0_15] : memref<18x18x64xbf16, #tpu.memory_space<vmem>>, vector<16x16x64xbf16>
    %15 = vector.shape_cast %14 : vector<16x16x64xbf16> to vector<256x64xbf16>
    %c0_16 = arith.constant 0 : index
    %c0_17 = arith.constant 0 : index
    %16 = vector.load %arg10[%c0_16, %c0_17] : memref<256x576xbf16, #tpu.memory_space<vmem>>, vector<256x64xbf16>
    tpu.vector_store %arg10[%c0_16, %c0_17], %15 {strides = array<i32>} : memref<256x576xbf16, #tpu.memory_space<vmem>>, vector<256x64xbf16>,
    %c0_18 = arith.constant 0 : index
    %c1_19 = arith.constant 1 : index
    %c0_20 = arith.constant 0 : index
    %17 = vector.load %arg9[%c0_18, %c1_19, %c0_20] : memref<18x18x64xbf16, #tpu.memory_space<vmem>>, vector<16x16x64xbf16>
    %18 = vector.shape_cast %17 : vector<16x16x64xbf16> to vector<256x64xbf16>
    %c0_21 = arith.constant 0 : index
    %c64 = arith.constant 64 : index
    %19 = vector.load %arg10[%c0_21, %c64] : memref<256x576xbf16, #tpu.memory_space<vmem>>, vector<256x64xbf16>
    tpu.vector_store %arg10[%c0_21, %c64], %18 {strides = array<i32>} : memref<256x576xbf16, #tpu.memory_space<vmem>>, vector<256x64xbf16>,
    %c0_22 = arith.constant 0 : index
    %c2 = arith.constant 2 : index
    %c0_23 = arith.constant 0 : index
    %20 = vector.load %arg9[%c0_22, %c2, %c0_23] : memref<18x18x64xbf16, #tpu.memory_space<vmem>>, vector<16x16x64xbf16>
    %21 = vector.shape_cast %20 : vector<16x16x64xbf16> to vector<256x64xbf16>
    %c0_24 = arith.constant 0 : index
    %c128 = arith.constant 128 : index
    %22 = vector.load %arg10[%c0_24, %c128] : memref<256x576xbf16, #tpu.memory_space<vmem>>, vector<256x64xbf16>
    tpu.vector_store %arg10[%c0_24, %c128], %21 {strides = array<i32>} : memref<256x576xbf16, #tpu.memory_space<vmem>>, vector<256x64xbf16>,
    %c1_25 = arith.constant 1 : index
    %c0_26 = arith.constant 0 : index
    %c0_27 = arith.constant 0 : index
    %23 = vector.load %arg9[%c1_25, %c0_26, %c0_27] : memref<18x18x64xbf16, #tpu.memory_space<vmem>>, vector<16x16x64xbf16>
    %24 = vector.shape_cast %23 : vector<16x16x64xbf16> to vector<256x64xbf16>
    %c0_28 = arith.constant 0 : index
    %c192 = arith.constant 192 : index
    %25 = vector.load %arg10[%c0_28, %c192] : memref<256x576xbf16, #tpu.memory_space<vmem>>, vector<256x64xbf16>
    tpu.vector_store %arg10[%c0_28, %c192], %24 {strides = array<i32>} : memref<256x576xbf16, #tpu.memory_space<vmem>>, vector<256x64xbf16>,
    %c1_29 = arith.constant 1 : index
    %c1_30 = arith.constant 1 : index
    %c0_31 = arith.constant 0 : index
    %26 = vector.load %arg9[%c1_29, %c1_30, %c0_31] : memref<18x18x64xbf16, #tpu.memory_space<vmem>>, vector<16x16x64xbf16>
    %27 = vector.shape_cast %26 : vector<16x16x64xbf16> to vector<256x64xbf16>
    %c0_32 = arith.constant 0 : index
    %c256 = arith.constant 256 : index
    %28 = vector.load %arg10[%c0_32, %c256] : memref<256x576xbf16, #tpu.memory_space<vmem>>, vector<256x64xbf16>
    tpu.vector_store %arg10[%c0_32, %c256], %27 {strides = array<i32>} : memref<256x576xbf16, #tpu.memory_space<vmem>>, vector<256x64xbf16>,
    %c1_33 = arith.constant 1 : index
    %c2_34 = arith.constant 2 : index
    %c0_35 = arith.constant 0 : index
    %29 = vector.load %arg9[%c1_33, %c2_34, %c0_35] : memref<18x18x64xbf16, #tpu.memory_space<vmem>>, vector<16x16x64xbf16>
    %30 = vector.shape_cast %29 : vector<16x16x64xbf16> to vector<256x64xbf16>
    %c0_36 = arith.constant 0 : index
    %c320 = arith.constant 320 : index
    %31 = vector.load %arg10[%c0_36, %c320] : memref<256x576xbf16, #tpu.memory_space<vmem>>, vector<256x64xbf16>
    tpu.vector_store %arg10[%c0_36, %c320], %30 {strides = array<i32>} : memref<256x576xbf16, #tpu.memory_space<vmem>>, vector<256x64xbf16>,
    %c2_37 = arith.constant 2 : index
    %c0_38 = arith.constant 0 : index
    %c0_39 = arith.constant 0 : index
    %32 = vector.load %arg9[%c2_37, %c0_38, %c0_39] : memref<18x18x64xbf16, #tpu.memory_space<vmem>>, vector<16x16x64xbf16>
    %33 = vector.shape_cast %32 : vector<16x16x64xbf16> to vector<256x64xbf16>
    %c0_40 = arith.constant 0 : index
    %c384 = arith.constant 384 : index
    %34 = vector.load %arg10[%c0_40, %c384] : memref<256x576xbf16, #tpu.memory_space<vmem>>, vector<256x64xbf16>
    tpu.vector_store %arg10[%c0_40, %c384], %33 {strides = array<i32>} : memref<256x576xbf16, #tpu.memory_space<vmem>>, vector<256x64xbf16>,
    %c2_41 = arith.constant 2 : index
    %c1_42 = arith.constant 1 : index
    %c0_43 = arith.constant 0 : index
    %35 = vector.load %arg9[%c2_41, %c1_42, %c0_43] : memref<18x18x64xbf16, #tpu.memory_space<vmem>>, vector<16x16x64xbf16>
    %36 = vector.shape_cast %35 : vector<16x16x64xbf16> to vector<256x64xbf16>
    %c0_44 = arith.constant 0 : index
    %c448 = arith.constant 448 : index
    %37 = vector.load %arg10[%c0_44, %c448] : memref<256x576xbf16, #tpu.memory_space<vmem>>, vector<256x64xbf16>
    tpu.vector_store %arg10[%c0_44, %c448], %36 {strides = array<i32>} : memref<256x576xbf16, #tpu.memory_space<vmem>>, vector<256x64xbf16>,
    %c2_45 = arith.constant 2 : index
    %c2_46 = arith.constant 2 : index
    %c0_47 = arith.constant 0 : index
    %38 = vector.load %arg9[%c2_45, %c2_46, %c0_47] : memref<18x18x64xbf16, #tpu.memory_space<vmem>>, vector<16x16x64xbf16>
    %39 = vector.shape_cast %38 : vector<16x16x64xbf16> to vector<256x64xbf16>
    %c0_48 = arith.constant 0 : index
    %c512 = arith.constant 512 : index
    %40 = vector.load %arg10[%c0_48, %c512] : memref<256x576xbf16, #tpu.memory_space<vmem>>, vector<256x64xbf16>
    tpu.vector_store %arg10[%c0_48, %c512], %39 {strides = array<i32>} : memref<256x576xbf16, #tpu.memory_space<vmem>>, vector<256x64xbf16>,
    %c0_49 = arith.constant 0 : index
    %c0_50 = arith.constant 0 : index
    %41 = vector.load %arg10[%c0_49, %c0_50] : memref<256x576xbf16, #tpu.memory_space<vmem>>, vector<256x576xbf16>
    %c0_51 = arith.constant 0 : index
    %c0_52 = arith.constant 0 : index
    %42 = vector.load %arg4[%c0_51, %c0_52] : memref<576x64xbf16, #tpu.memory_space<vmem>>, vector<576x64xbf16>
    %cst_53 = arith.constant dense<0.000000e+00> : vector<256x64xf32>
    %43 = tpu.matmul %41, %42, %cst_53 {dimension_numbers = #tpu.dot_dimension_numbers<[1], [0], [0], [1], [0, 0, 1, 1], [], []>} : vector<256x576xbf16>, vector<576x64xbf16>, vector<256x64xf32> -> vector<256x64xf32>
    %c0_54 = arith.constant 0 : index
    %c0_55 = arith.constant 0 : index
    %44 = vector.load %arg5[%c0_54, %c0_55] : memref<1x64xf32, #tpu.memory_space<vmem>>, vector<1x64xf32>
    %45 = vector.broadcast %44 : vector<1x64xf32> to vector<256x64xf32>
    %46 = arith.addf %43, %45 : vector<256x64xf32>
    %cst_56 = arith.constant 0.000000e+00 : f32
    %47 = vector.broadcast %cst_56 : f32 to vector<256x64xf32>
    %48 = arith.maximumf %46, %47 : vector<256x64xf32>
    %49 = arith.truncf %48 : vector<256x64xf32> to vector<256x64xbf16>
    %50 = vector.shape_cast %49 : vector<256x64xbf16> to vector<16x16x64xbf16>
    %c1_57 = arith.constant 1 : index
    %c1_58 = arith.constant 1 : index
    %c0_59 = arith.constant 0 : index
    %51 = vector.load %arg9[%c1_57, %c1_58, %c0_59] : memref<18x18x64xbf16, #tpu.memory_space<vmem>>, vector<16x16x64xbf16>
    tpu.vector_store %arg9[%c1_57, %c1_58, %c0_59], %50 {strides = array<i32>} : memref<18x18x64xbf16, #tpu.memory_space<vmem>>, vector<16x16x64xbf16>,
    %c0_60 = arith.constant 0 : index
    %c0_61 = arith.constant 0 : index
    %c0_62 = arith.constant 0 : index
    %52 = vector.load %arg9[%c0_60, %c0_61, %c0_62] : memref<18x18x64xbf16, #tpu.memory_space<vmem>>, vector<16x16x64xbf16>
    %53 = vector.shape_cast %52 : vector<16x16x64xbf16> to vector<256x64xbf16>
    %c0_63 = arith.constant 0 : index
    %c0_64 = arith.constant 0 : index
    %54 = vector.load %arg10[%c0_63, %c0_64] : memref<256x576xbf16, #tpu.memory_space<vmem>>, vector<256x64xbf16>
    tpu.vector_store %arg10[%c0_63, %c0_64], %53 {strides = array<i32>} : memref<256x576xbf16, #tpu.memory_space<vmem>>, vector<256x64xbf16>,
    %c0_65 = arith.constant 0 : index
    %c1_66 = arith.constant 1 : index
    %c0_67 = arith.constant 0 : index
    %55 = vector.load %arg9[%c0_65, %c1_66, %c0_67] : memref<18x18x64xbf16, #tpu.memory_space<vmem>>, vector<16x16x64xbf16>
    %56 = vector.shape_cast %55 : vector<16x16x64xbf16> to vector<256x64xbf16>
    %c0_68 = arith.constant 0 : index
    %c64_69 = arith.constant 64 : index
    %57 = vector.load %arg10[%c0_68, %c64_69] : memref<256x576xbf16, #tpu.memory_space<vmem>>, vector<256x64xbf16>
    tpu.vector_store %arg10[%c0_68, %c64_69], %56 {strides = array<i32>} : memref<256x576xbf16, #tpu.memory_space<vmem>>, vector<256x64xbf16>,
    %c0_70 = arith.constant 0 : index
    %c2_71 = arith.constant 2 : index
    %c0_72 = arith.constant 0 : index
    %58 = vector.load %arg9[%c0_70, %c2_71, %c0_72] : memref<18x18x64xbf16, #tpu.memory_space<vmem>>, vector<16x16x64xbf16>
    %59 = vector.shape_cast %58 : vector<16x16x64xbf16> to vector<256x64xbf16>
    %c0_73 = arith.constant 0 : index
    %c128_74 = arith.constant 128 : index
    %60 = vector.load %arg10[%c0_73, %c128_74] : memref<256x576xbf16, #tpu.memory_space<vmem>>, vector<256x64xbf16>
    tpu.vector_store %arg10[%c0_73, %c128_74], %59 {strides = array<i32>} : memref<256x576xbf16, #tpu.memory_space<vmem>>, vector<256x64xbf16>,
    %c1_75 = arith.constant 1 : index
    %c0_76 = arith.constant 0 : index
    %c0_77 = arith.constant 0 : index
    %61 = vector.load %arg9[%c1_75, %c0_76, %c0_77] : memref<18x18x64xbf16, #tpu.memory_space<vmem>>, vector<16x16x64xbf16>
    %62 = vector.shape_cast %61 : vector<16x16x64xbf16> to vector<256x64xbf16>
    %c0_78 = arith.constant 0 : index
    %c192_79 = arith.constant 192 : index
    %63 = vector.load %arg10[%c0_78, %c192_79] : memref<256x576xbf16, #tpu.memory_space<vmem>>, vector<256x64xbf16>
    tpu.vector_store %arg10[%c0_78, %c192_79], %62 {strides = array<i32>} : memref<256x576xbf16, #tpu.memory_space<vmem>>, vector<256x64xbf16>,
    %c1_80 = arith.constant 1 : index
    %c1_81 = arith.constant 1 : index
    %c0_82 = arith.constant 0 : index
    %64 = vector.load %arg9[%c1_80, %c1_81, %c0_82] : memref<18x18x64xbf16, #tpu.memory_space<vmem>>, vector<16x16x64xbf16>
    %65 = vector.shape_cast %64 : vector<16x16x64xbf16> to vector<256x64xbf16>
    %c0_83 = arith.constant 0 : index
    %c256_84 = arith.constant 256 : index
    %66 = vector.load %arg10[%c0_83, %c256_84] : memref<256x576xbf16, #tpu.memory_space<vmem>>, vector<256x64xbf16>
    tpu.vector_store %arg10[%c0_83, %c256_84], %65 {strides = array<i32>} : memref<256x576xbf16, #tpu.memory_space<vmem>>, vector<256x64xbf16>,
    %c1_85 = arith.constant 1 : index
    %c2_86 = arith.constant 2 : index
    %c0_87 = arith.constant 0 : index
    %67 = vector.load %arg9[%c1_85, %c2_86, %c0_87] : memref<18x18x64xbf16, #tpu.memory_space<vmem>>, vector<16x16x64xbf16>
    %68 = vector.shape_cast %67 : vector<16x16x64xbf16> to vector<256x64xbf16>
    %c0_88 = arith.constant 0 : index
    %c320_89 = arith.constant 320 : index
    %69 = vector.load %arg10[%c0_88, %c320_89] : memref<256x576xbf16, #tpu.memory_space<vmem>>, vector<256x64xbf16>
    tpu.vector_store %arg10[%c0_88, %c320_89], %68 {strides = array<i32>} : memref<256x576xbf16, #tpu.memory_space<vmem>>, vector<256x64xbf16>,
    %c2_90 = arith.constant 2 : index
    %c0_91 = arith.constant 0 : index
    %c0_92 = arith.constant 0 : index
    %70 = vector.load %arg9[%c2_90, %c0_91, %c0_92] : memref<18x18x64xbf16, #tpu.memory_space<vmem>>, vector<16x16x64xbf16>
    %71 = vector.shape_cast %70 : vector<16x16x64xbf16> to vector<256x64xbf16>
    %c0_93 = arith.constant 0 : index
    %c384_94 = arith.constant 384 : index
    %72 = vector.load %arg10[%c0_93, %c384_94] : memref<256x576xbf16, #tpu.memory_space<vmem>>, vector<256x64xbf16>
    tpu.vector_store %arg10[%c0_93, %c384_94], %71 {strides = array<i32>} : memref<256x576xbf16, #tpu.memory_space<vmem>>, vector<256x64xbf16>,
    %c2_95 = arith.constant 2 : index
    %c1_96 = arith.constant 1 : index
    %c0_97 = arith.constant 0 : index
    %73 = vector.load %arg9[%c2_95, %c1_96, %c0_97] : memref<18x18x64xbf16, #tpu.memory_space<vmem>>, vector<16x16x64xbf16>
    %74 = vector.shape_cast %73 : vector<16x16x64xbf16> to vector<256x64xbf16>
    %c0_98 = arith.constant 0 : index
    %c448_99 = arith.constant 448 : index
    %75 = vector.load %arg10[%c0_98, %c448_99] : memref<256x576xbf16, #tpu.memory_space<vmem>>, vector<256x64xbf16>
    tpu.vector_store %arg10[%c0_98, %c448_99], %74 {strides = array<i32>} : memref<256x576xbf16, #tpu.memory_space<vmem>>, vector<256x64xbf16>,
    %c2_100 = arith.constant 2 : index
    %c2_101 = arith.constant 2 : index
    %c0_102 = arith.constant 0 : index
    %76 = vector.load %arg9[%c2_100, %c2_101, %c0_102] : memref<18x18x64xbf16, #tpu.memory_space<vmem>>, vector<16x16x64xbf16>
    %77 = vector.shape_cast %76 : vector<16x16x64xbf16> to vector<256x64xbf16>
    %c0_103 = arith.constant 0 : index
    %c512_104 = arith.constant 512 : index
    %78 = vector.load %arg10[%c0_103, %c512_104] : memref<256x576xbf16, #tpu.memory_space<vmem>>, vector<256x64xbf16>
    tpu.vector_store %arg10[%c0_103, %c512_104], %77 {strides = array<i32>} : memref<256x576xbf16, #tpu.memory_space<vmem>>, vector<256x64xbf16>,
    %c0_105 = arith.constant 0 : index
    %c0_106 = arith.constant 0 : index
    %79 = vector.load %arg10[%c0_105, %c0_106] : memref<256x576xbf16, #tpu.memory_space<vmem>>, vector<256x576xbf16>
    %c0_107 = arith.constant 0 : index
    %c0_108 = arith.constant 0 : index
    %80 = vector.load %arg6[%c0_107, %c0_108] : memref<576x64xbf16, #tpu.memory_space<vmem>>, vector<576x64xbf16>
    %cst_109 = arith.constant dense<0.000000e+00> : vector<256x64xf32>
    %81 = tpu.matmul %79, %80, %cst_109 {dimension_numbers = #tpu.dot_dimension_numbers<[1], [0], [0], [1], [0, 0, 1, 1], [], []>} : vector<256x576xbf16>, vector<576x64xbf16>, vector<256x64xf32> -> vector<256x64xf32>
    %c0_110 = arith.constant 0 : index
    %c0_111 = arith.constant 0 : index
    %82 = vector.load %arg7[%c0_110, %c0_111] : memref<1x64xf32, #tpu.memory_space<vmem>>, vector<1x64xf32>
    %83 = vector.broadcast %82 : vector<1x64xf32> to vector<256x64xf32>
    %84 = arith.addf %81, %83 : vector<256x64xf32>
    %85 = arith.addf %84, %8 : vector<256x64xf32>
    %cst_112 = arith.constant 0.000000e+00 : f32
    %86 = vector.broadcast %cst_112 : f32 to vector<256x64xf32>
    %87 = arith.maximumf %85, %86 : vector<256x64xf32>
    %cst_113 = arith.constant dense<0.000000e+00> : vector<64xf32>
    %88 = vector.multi_reduction <add>, %87, %cst_113 [0] : vector<256x64xf32> to vector<64xf32>
    %89 = vector.shape_cast %88 : vector<64xf32> to vector<1x64xf32>
    %cst_114 = arith.constant 2.560000e+02 : f32
    %90 = vector.broadcast %cst_114 : f32 to vector<1x64xf32>
    %91 = arith.divf %89, %90 : vector<1x64xf32>
    %c0_115 = arith.constant 0 : index
    %c0_116 = arith.constant 0 : index
    %c0_117 = arith.constant 0 : index
    %92 = vector.load %arg8[%c0_115, %c0_116, %c0_117] : memref<1x1x64xf32, #tpu.memory_space<vmem>>, vector<1x1x64xf32>
    %93 = vector.shape_cast %92 : vector<1x1x64xf32> to vector<1x64xf32>
    %94 = vector.shape_cast %91 : vector<1x64xf32> to vector<1x1x64xf32>
    tpu.vector_store %arg8[%c0_115, %c0_116, %c0_117], %94 {strides = array<i32>} : memref<1x1x64xf32, #tpu.memory_space<vmem>>, vector<1x1x64xf32>,
    return
  }
  func.func @transform_0(%arg0: i32) -> (i32, i32, i32) {
    %c0_i32 = arith.constant 0 : i32
    %c0_i32_0 = arith.constant 0 : i32
    %c0_i32_1 = arith.constant 0 : i32
    return %arg0, %c0_i32, %c0_i32_0 : i32, i32, i32
  }
  func.func @transform_1(%arg0: i32) -> (i32, i32) {
    %c0_i32 = arith.constant 0 : i32
    %c0_i32_0 = arith.constant 0 : i32
    %c0_i32_1 = arith.constant 0 : i32
    return %c0_i32, %c0_i32_0 : i32, i32
  }
  func.func @transform_2(%arg0: i32) -> (i32, i32) {
    %c0_i32 = arith.constant 0 : i32
    %c0_i32_0 = arith.constant 0 : i32
    %c0_i32_1 = arith.constant 0 : i32
    return %c0_i32, %c0_i32_0 : i32, i32
  }
  func.func @transform_3(%arg0: i32) -> (i32, i32) {
    %c0_i32 = arith.constant 0 : i32
    %c0_i32_0 = arith.constant 0 : i32
    %c0_i32_1 = arith.constant 0 : i32
    return %c0_i32, %c0_i32_0 : i32, i32
  }
  func.func @transform_4(%arg0: i32) -> (i32, i32) {
    %c0_i32 = arith.constant 0 : i32
    %c0_i32_0 = arith.constant 0 : i32
    %c0_i32_1 = arith.constant 0 : i32
    return %c0_i32, %c0_i32_0 : i32, i32
  }
  func.func @transform_5(%arg0: i32) -> (i32, i32) {
    %c0_i32 = arith.constant 0 : i32
    %c0_i32_0 = arith.constant 0 : i32
    %c0_i32_1 = arith.constant 0 : i32
    return %c0_i32, %c0_i32_0 : i32, i32
  }
  func.func @transform_6(%arg0: i32) -> (i32, i32) {
    %c0_i32 = arith.constant 0 : i32
    %c0_i32_0 = arith.constant 0 : i32
    %c0_i32_1 = arith.constant 0 : i32
    return %c0_i32, %c0_i32_0 : i32, i32
  }
  func.func @transform_7(%arg0: i32) -> (i32, i32, i32) {
    %c0_i32 = arith.constant 0 : i32
    %c0_i32_0 = arith.constant 0 : i32
    %c0_i32_1 = arith.constant 0 : i32
    return %arg0, %c0_i32, %c0_i32_0 : i32, i32, i32
  }
}

</mosaic_0001>

<llo_original>
// kernel: encoder_forward.1
$region0: #{encoder_forward.1}
  #allocation0 [shape = 'u32[]', space=smem, size = 0x4, offset = 0x4, fixed_abs, tag = 'smem constant byte address 0x4 - core index']
  #allocation1 [shape = 'u32[144,128]{1,0:T(1,128)}', space=vmem, size = 0x12000, scoped, tag = 'internal scratch']
  #allocation2 [shape = 'bf16[18,18,64]{2,1,0:T(8,128)(2,1)}', space=vmem, size = 0x1b000, scoped, tag = 'scratch operand']
  #allocation3 [shape = 'bf16[256,576]{1,0:T(8,128)(2,1)}', space=vmem, size = 0x50000, scoped, tag = 'scratch operand']
  %s0 = inlined_call_operand.vmem [shape: bf16[2,256,32], index: 0, kind: input, shape index: {}]
  %s1 = inlined_call_operand.vmem [shape: bf16[32,64], index: 1, kind: input, shape index: {}]
  %s2 = inlined_call_operand.vmem [shape: f32[1,64], index: 2, kind: input, shape index: {}]
  %s3 = inlined_call_operand.vmem [shape: bf16[576,64], index: 3, kind: input, shape index: {}]
  %s4 = inlined_call_operand.vmem [shape: f32[1,64], index: 4, kind: input, shape index: {}]
  %s5 = inlined_call_operand.vmem [shape: bf16[576,64], index: 5, kind: input, shape index: {}]
  %s6 = inlined_call_operand.vmem [shape: f32[1,64], index: 6, kind: input, shape index: {}]
  %s7 = inlined_call_operand.hbm [shape: f32[2,1,64], index: 7, kind: output, shape index: {}]
  %s8 = sld [smem:[#allocation0]]
  $region61: #{encoder_forward.1} parent=0
    _
  %s10 = ssub.s32 1, %s8
  %s11 = scalar_select 0, %s10, %s8
  $region1: #{encoder_forward.1} parent=0
    #allocation4 [shape = 'u8[1024]{0}', space=vmem, size = 0x400, scoped, tag = 'output window, operand 0']
    #allocation5 [shape = 's32[2]{0}', space=sflag, size = 0x8, scoped, tag = 'scoped memory for encoder_forward.1']
    %12 = vsyncpa [#allocation5], 0
    %s13 = scalar_lea.sflag [#allocation5], 1
    %14 = vsyncpa %s13, 0
    loop: start=0, step=1, limit=4
    $region2: #{encoder_forward.1} parent=1 // loop_pre_header
      _
    $region3: #{encoder_forward.1} parent=1 // loop_header
      %s16 = sphi 0, %s20
      %p17 = scmp.ge.s32.totalorder %s16, 4
      %s26 = sphi 0, %s28
      %s29 = sphi 0, %s26
      %s30 = sphi 0, %s29
      %s46 = sphi 0, %s30
      %s50 = sphi 0, %s50
      %s52 = sphi 0, %s50
      %s53 = sphi 0, %s52
      %s67 = sphi 0, %s53
      %s71 = sphi 0, %s71
      %s73 = sphi 0, %s71
      %s74 = sphi 0, %s73
      %s88 = sphi 0, %s74
      %s92 = sphi 0, %s92
      %s94 = sphi 0, %s92
      %s95 = sphi 0, %s94
      %s109 = sphi 0, %s95
      %s113 = sphi 0, %s113
      %s115 = sphi 0, %s113
      %s116 = sphi 0, %s115
      %s130 = sphi 0, %s116
      %s134 = sphi 0, %s134
      %s136 = sphi 0, %s134
      %s137 = sphi 0, %s136
      %s151 = sphi 0, %s137
      %s155 = sphi 0, %s155
      %s157 = sphi 0, %s155
      %s158 = sphi 0, %s157
      %s172 = sphi 0, %s158
      %s178 = sphi 0, %s180
      %s181 = sphi 0, %s178
      %s182 = sphi 0, %s181
      %s198 = sphi 0, %s182
    $region4: #{encoder_forward.1} parent=1 // loop_header_branch
      %19 = sbr.rel (%p17) target = $region8
    $region5: #{encoder_forward.1} parent=1 // loop_body
      %s21 = ssub.s32 %s16, 1
      %s22 = ssub.s32 %s16, 2
      %s23 = sadd.s32 %s16, 1
      %s24 = ssub.s32 %s16, %s23
      %p25 = scmp.eq.s32.totalorder %s24, 0
      %s27 = sadd.s32 %s26, 1
      %s28 = scalar_select %p25, %s26, %s27
      %p31 = pneg %p25
      %p32 = scmp.eq.s32.totalorder %s16, 1
      %p33 = por %p31, %p32
      %p34 = scmp.ne.s32.totalorder %s26, %s29
      %p35 = scmp.eq.s32.totalorder %s16, 0
      %p36 = por %p34, %p35
      %p37 = scmp.ne.s32.totalorder %s26, %s29
      %p38 = scmp.eq.s32.totalorder %s21, 1
      %p39 = por %p37, %p38
      %p40 = scmp.ne.s32.totalorder %s29, %s30
      %p41 = scmp.eq.s32.totalorder %s21, 0
      %p42 = por %p40, %p41
      %p43 = scmp.ne.s32.totalorder %s29, %s30
      %p44 = scmp.eq.s32.totalorder %s22, 1
      %p45 = por %p43, %p44
      %p47 = scmp.ne.s32.totalorder %s30, %s46
      %p48 = scmp.eq.s32.totalorder %s22, 0
      %p49 = por %p47, %p48
      %s51 = sadd.s32 %s50, 1
      %p54 = scmp.eq.s32.totalorder %s16, 1
      %p55 = scmp.ne.s32.totalorder %s50, %s52
      %p56 = scmp.eq.s32.totalorder %s16, 0
      %p57 = por %p55, %p56
      %p58 = scmp.ne.s32.totalorder %s50, %s52
      %p59 = scmp.eq.s32.totalorder %s21, 1
      %p60 = por %p58, %p59
      %p61 = scmp.ne.s32.totalorder %s52, %s53
      %p62 = scmp.eq.s32.totalorder %s21, 0
      %p63 = por %p61, %p62
      %p64 = scmp.ne.s32.totalorder %s52, %s53
      %p65 = scmp.eq.s32.totalorder %s22, 1
      %p66 = por %p64, %p65
      %p68 = scmp.ne.s32.totalorder %s53, %s67
      %p69 = scmp.eq.s32.totalorder %s22, 0
      %p70 = por %p68, %p69
      %s72 = sadd.s32 %s71, 1
      %p75 = scmp.eq.s32.totalorder %s16, 1
      %p76 = scmp.ne.s32.totalorder %s71, %s73
      %p77 = scmp.eq.s32.totalorder %s16, 0
      %p78 = por %p76, %p77
      %p79 = scmp.ne.s32.totalorder %s71, %s73
      %p80 = scmp.eq.s32.totalorder %s21, 1
      %p81 = por %p79, %p80
      %p82 = scmp.ne.s32.totalorder %s73, %s74
      %p83 = scmp.eq.s32.totalorder %s21, 0
      %p84 = por %p82, %p83
      %p85 = scmp.ne.s32.totalorder %s73, %s74
      %p86 = scmp.eq.s32.totalorder %s22, 1
      %p87 = por %p85, %p86
      %p89 = scmp.ne.s32.totalorder %s74, %s88
      %p90 = scmp.eq.s32.totalorder %s22, 0
      %p91 = por %p89, %p90
      %s93 = sadd.s32 %s92, 1
      %p96 = scmp.eq.s32.totalorder %s16, 1
      %p97 = scmp.ne.s32.totalorder %s92, %s94
      %p98 = scmp.eq.s32.totalorder %s16, 0
      %p99 = por %p97, %p98
      %p100 = scmp.ne.s32.totalorder %s92, %s94
      %p101 = scmp.eq.s32.totalorder %s21, 1
      %p102 = por %p100, %p101
      %p103 = scmp.ne.s32.totalorder %s94, %s95
      %p104 = scmp.eq.s32.totalorder %s21, 0
      %p105 = por %p103, %p104
      %p106 = scmp.ne.s32.totalorder %s94, %s95
      %p107 = scmp.eq.s32.totalorder %s22, 1
      %p108 = por %p106, %p107
      %p110 = scmp.ne.s32.totalorder %s95, %s109
      %p111 = scmp.eq.s32.totalorder %s22, 0
      %p112 = por %p110, %p111
      %s114 = sadd.s32 %s113, 1
      %p117 = scmp.eq.s32.totalorder %s16, 1
      %p118 = scmp.ne.s32.totalorder %s113, %s115
      %p119 = scmp.eq.s32.totalorder %s16, 0
      %p120 = por %p118, %p119
      %p121 = scmp.ne.s32.totalorder %s113, %s115
      %p122 = scmp.eq.s32.totalorder %s21, 1
      %p123 = por %p121, %p122
      %p124 = scmp.ne.s32.totalorder %s115, %s116
      %p125 = scmp.eq.s32.totalorder %s21, 0
      %p126 = por %p124, %p125
      %p127 = scmp.ne.s32.totalorder %s115, %s116
      %p128 = scmp.eq.s32.totalorder %s22, 1
      %p129 = por %p127, %p128
      %p131 = scmp.ne.s32.totalorder %s116, %s130
      %p132 = scmp.eq.s32.totalorder %s22, 0
      %p133 = por %p131, %p132
      %s135 = sadd.s32 %s134, 1
      %p138 = scmp.eq.s32.totalorder %s16, 1
      %p139 = scmp.ne.s32.totalorder %s134, %s136
      %p140 = scmp.eq.s32.totalorder %s16, 0
      %p141 = por %p139, %p140
      %p142 = scmp.ne.s32.totalorder %s134, %s136
      %p143 = scmp.eq.s32.totalorder %s21, 1
      %p144 = por %p142, %p143
      %p145 = scmp.ne.s32.totalorder %s136, %s137
      %p146 = scmp.eq.s32.totalorder %s21, 0
      %p147 = por %p145, %p146
      %p148 = scmp.ne.s32.totalorder %s136, %s137
      %p149 = scmp.eq.s32.totalorder %s22, 1
      %p150 = por %p148, %p149
      %p152 = scmp.ne.s32.totalorder %s137, %s151
      %p153 = scmp.eq.s32.totalorder %s22, 0
      %p154 = por %p152, %p153
      %s156 = sadd.s32 %s155, 1
      %p159 = scmp.eq.s32.totalorder %s16, 1
      %p160 = scmp.ne.s32.totalorder %s155, %s157
      %p161 = scmp.eq.s32.totalorder %s16, 0
      %p162 = por %p160, %p161
      %p163 = scmp.ne.s32.totalorder %s155, %s157
      %p164 = scmp.eq.s32.totalorder %s21, 1
      %p165 = por %p163, %p164
      %p166 = scmp.ne.s32.totalorder %s157, %s158
      %p167 = scmp.eq.s32.totalorder %s21, 0
      %p168 = por %p166, %p167
      %p169 = scmp.ne.s32.totalorder %s157, %s158
      %p170 = scmp.eq.s32.totalorder %s22, 1
      %p171 = por %p169, %p170
      %p173 = scmp.ne.s32.totalorder %s158, %s172
      %p174 = scmp.eq.s32.totalorder %s22, 0
      %p175 = por %p173, %p174
      %s176 = ssub.s32 %s16, %s23
      %p177 = scmp.eq.s32.totalorder %s176, 0
      %s179 = sadd.s32 %s178, 1
      %s180 = scalar_select %p177, %s178, %s179
      %p183 = pneg %p177
      %p184 = scmp.eq.s32.totalorder %s16, 1
      %p185 = por %p183, %p184
      %p186 = scmp.ne.s32.totalorder %s178, %s181
      %p187 = scmp.eq.s32.totalorder %s16, 0
      %p188 = por %p186, %p187
      %p189 = scmp.ne.s32.totalorder %s178, %s181
      %p190 = scmp.eq.s32.totalorder %s21, 1
      %p191 = por %p189, %p190
      %p192 = scmp.ne.s32.totalorder %s181, %s182
      %p193 = scmp.eq.s32.totalorder %s21, 0
      %p194 = por %p192, %p193
      %p195 = scmp.ne.s32.totalorder %s181, %s182
      %p196 = scmp.eq.s32.totalorder %s22, 1
      %p197 = por %p195, %p196
      %p199 = scmp.ne.s32.totalorder %s182, %s198
      %p200 = scmp.eq.s32.totalorder %s22, 0
      %p201 = por %p199, %p200
      %p202 = scmp.le.s32.totalorder 1, %s16
      %p203 = scmp.lt.s32.totalorder %s16, 3
      %p204 = pnand %p202, %p203
      %p205 = pneg %p204
      // Predicated region
      $region9: #{encoder_forward.1} parent=5 // pred_check
        _
      $region10: #{encoder_forward.1} parent=5 // pred_check_branch
        %207 = sbr.rel (%p204) target = $region12
      $region11: #{encoder_forward.1} parent=5 // pred_region
        %s208 = ssub.s32 %s16, 1
        // Predicated region
        $region13: #{encoder_forward.1} parent=11 // pred_check
          %p209 = pneg %p63
        $region14: #{encoder_forward.1} parent=11 // pred_check_branch
          %211 = sbr.rel (%p209) target = $region16
        $region15: #{encoder_forward.1} parent=11 // pred_region
          _
        $region16: #{encoder_forward.1} parent=11 // pred_fallthru
          _
        // Predicated region
        $region17: #{encoder_forward.1} parent=11 // pred_check
          %p212 = pneg %p84
        $region18: #{encoder_forward.1} parent=11 // pred_check_branch
          %214 = sbr.rel (%p212) target = $region20
        $region19: #{encoder_forward.1} parent=11 // pred_region
          _
        $region20: #{encoder_forward.1} parent=11 // pred_fallthru
          _
        // Predicated region
        $region21: #{encoder_forward.1} parent=11 // pred_check
          %p215 = pneg %p105
        $region22: #{encoder_forward.1} parent=11 // pred_check_branch
          %217 = sbr.rel (%p215) target = $region24
        $region23: #{encoder_forward.1} parent=11 // pred_region
          _
        $region24: #{encoder_forward.1} parent=11 // pred_fallthru
          _
        // Predicated region
        $region25: #{encoder_forward.1} parent=11 // pred_check
          %p218 = pneg %p126
        $region26: #{encoder_forward.1} parent=11 // pred_check_branch
          %220 = sbr.rel (%p218) target = $region28
        $region27: #{encoder_forward.1} parent=11 // pred_region
          _
        $region28: #{encoder_forward.1} parent=11 // pred_fallthru
          _
        // Predicated region
        $region29: #{encoder_forward.1} parent=11 // pred_check
          %p221 = pneg %p147
        $region30: #{encoder_forward.1} parent=11 // pred_check_branch
          %223 = sbr.rel (%p221) target = $region32
        $region31: #{encoder_forward.1} parent=11 // pred_region
          _
        $region32: #{encoder_forward.1} parent=11 // pred_fallthru
          _
        // Predicated region
        $region33: #{encoder_forward.1} parent=11 // pred_check
          %p224 = pneg %p168
        $region34: #{encoder_forward.1} parent=11 // pred_check_branch
          %226 = sbr.rel (%p224) target = $region36
        $region35: #{encoder_forward.1} parent=11 // pred_region
          _
        $region36: #{encoder_forward.1} parent=11 // pred_fallthru
          _
      $region12: #{encoder_forward.1} parent=5 // pred_fallthru
        _
      %p227 = scmp.lt.s32.totalorder %s16, 2
      // Predicated region
      $region37: #{encoder_forward.1} parent=5 // pred_check
        %p228 = pneg %p227
      $region38: #{encoder_forward.1} parent=5 // pred_check_branch
        %230 = sbr.rel (%p228) target = $region40
      $region39: #{encoder_forward.1} parent=5 // pred_region
        // Predicated region
        $region41: #{encoder_forward.1} parent=39 // pred_check
          %p231 = pneg %p36
        $region42: #{encoder_forward.1} parent=39 // pred_check_branch
          %233 = sbr.rel (%p231) target = $region44
        $region43: #{encoder_forward.1} parent=39 // pred_region
          %p234 = scmp.lt.s32.totalorder %s16, 1
          %s235 = scalar_select %p234, %s16, 1
          %s236 = smul.addr %s235, 32
          %s237 = smul.addr %s236, 4
          %s238 = scalar_lea.vmem %s0, %s237
        $region44: #{encoder_forward.1} parent=39 // pred_fallthru
          _
      $region40: #{encoder_forward.1} parent=5 // pred_fallthru
        _
      %p239 = scmp.le.s32.totalorder 1, %s16
      %p240 = scmp.lt.s32.totalorder %s16, 3
      %p241 = pnand %p239, %p240
      %p242 = pneg %p241
      // Predicated region
      $region45: #{encoder_forward.1} parent=5 // pred_check
        _
      $region46: #{encoder_forward.1} parent=5 // pred_check_branch
        %244 = sbr.rel (%p241) target = $region48
      $region47: #{encoder_forward.1} parent=5 // pred_region
        %s245 = ssub.s32 %s16, 1
        %p246 = scmp.lt.s32.totalorder %s21, 1
        %s247 = scalar_select %p246, %s21, 1
        %s248 = smul.addr %s247, 32
        %s249 = smul.addr %s248, 4
        %s250 = scalar_lea.vmem %s0, %s249
        %p251 = pneg %p42
        %p252 = pneg %p39
        %p253 = pneg %p63
        %p254 = pneg %p60
        %p255 = pneg %p84
        %p256 = pneg %p81
        %p257 = pneg %p105
        %p258 = pneg %p102
        %p259 = pneg %p126
        %p260 = pneg %p123
        %p261 = pneg %p147
        %p262 = pneg %p144
        %p263 = pneg %p168
        %p264 = pneg %p165
        %p265 = pneg %p194
        %p266 = pneg %p191
        %s267 = sand.u32 %s181, 1
        %s268 = scalar_lea.sflag [#allocation5], %s267
        %s269 = sand.u32 %s181, 1
        %s270 = scalar_lea.vmem [#allocation4], %s269
        %p271 = scmp.lt.s32.totalorder %s21, 1
        %s272 = scalar_select %p271, %s21, 1
        %s273 = smul.addr %s272, 32
        %s274 = smul.addr %s273, 4
        %s275 = scalar_lea.vmem %s0, %s274
        %v277 = vld [vmem:[%s275] sm:$0xf]
        %v278 = vld [vmem:[%s275 + $0x4] sm:$0xf]
        %v279 = vld [vmem:[%s275 + $0x8] sm:$0xf]
        %v280 = vld [vmem:[%s275 + $0xc] sm:$0xf]
        %v281 = vld [vmem:[%s275 + $0x10] sm:$0xf]
        %v282 = vld [vmem:[%s275 + $0x14] sm:$0xf]
        %v283 = vld [vmem:[%s275 + $0x18] sm:$0xf]
        %v284 = vld [vmem:[%s275 + $0x1c] sm:$0xf]
        %v285 = vld [vmem:[%s275 + $0x20] sm:$0xf]
        %v286 = vld [vmem:[%s275 + $0x24] sm:$0xf]
        %v287 = vld [vmem:[%s275 + $0x28] sm:$0xf]
        %v288 = vld [vmem:[%s275 + $0x2c] sm:$0xf]
        %v289 = vld [vmem:[%s275 + $0x30] sm:$0xf]
        %v290 = vld [vmem:[%s275 + $0x34] sm:$0xf]
        %v291 = vld [vmem:[%s275 + $0x38] sm:$0xf]
        %v292 = vld [vmem:[%s275 + $0x3c] sm:$0xf]
        %v293 = vld [vmem:[%s275 + $0x40] sm:$0xf]
        %v294 = vld [vmem:[%s275 + $0x44] sm:$0xf]
        %v295 = vld [vmem:[%s275 + $0x48] sm:$0xf]
        %v296 = vld [vmem:[%s275 + $0x4c] sm:$0xf]
        %v297 = vld [vmem:[%s275 + $0x50] sm:$0xf]
        %v298 = vld [vmem:[%s275 + $0x54] sm:$0xf]
        %v299 = vld [vmem:[%s275 + $0x58] sm:$0xf]
        %v300 = vld [vmem:[%s275 + $0x5c] sm:$0xf]
        %v301 = vld [vmem:[%s275 + $0x60] sm:$0xf]
        %v302 = vld [vmem:[%s275 + $0x64] sm:$0xf]
        %v303 = vld [vmem:[%s275 + $0x68] sm:$0xf]
        %v304 = vld [vmem:[%s275 + $0x6c] sm:$0xf]
        %v305 = vld [vmem:[%s275 + $0x70] sm:$0xf]
        %v306 = vld [vmem:[%s275 + $0x74] sm:$0xf]
        %v307 = vld [vmem:[%s275 + $0x78] sm:$0xf]
        %v308 = vld [vmem:[%s275 + $0x7c] sm:$0xf]
        %v309 = vld [vmem:[%s1] sm:$0xf]
        %v310 = vld [vmem:[%s1 + $0x4] sm:$0xf]
        %v311 = vld [vmem:[%s1 + $0x8] sm:$0xf]
        %v312 = vld [vmem:[%s1 + $0xc] sm:$0xf]
        %v313 = vld [vmem:[%s2] sm:$0x1]
        %v315 = vlaneseq
        %v316 = vshrl.u32 %v315, 7
        %v317 = vsub.s32 0, %v316
        %v318 = vrot.slane %v313, %v317
        %v352 = vunpack.c.l.b16 %v277
        %v353 = vunpack.c.l.b16 %v278
        %v354 = vunpack.c.l.b16 %v279
        %v355 = vunpack.c.l.b16 %v280
        %v356 = vunpack.c.l.b16 %v281
        %v357 = vunpack.c.l.b16 %v282
        %v358 = vunpack.c.l.b16 %v283
        %v359 = vunpack.c.l.b16 %v284
        %v360 = vunpack.c.l.b16 %v285
        %v361 = vunpack.c.l.b16 %v286
        %v362 = vunpack.c.l.b16 %v287
        %v363 = vunpack.c.l.b16 %v288
        %v364 = vunpack.c.l.b16 %v289
        %v365 = vunpack.c.l.b16 %v290
        %v366 = vunpack.c.l.b16 %v291
        %v367 = vunpack.c.l.b16 %v292
        %v368 = vunpack.c.l.b16 %v293
        %v369 = vunpack.c.l.b16 %v294
        %v370 = vunpack.c.l.b16 %v295
        %v371 = vunpack.c.l.b16 %v296
        %v372 = vunpack.c.l.b16 %v297
        %v373 = vunpack.c.l.b16 %v298
        %v374 = vunpack.c.l.b16 %v299
        %v375 = vunpack.c.l.b16 %v300
        %v376 = vunpack.c.l.b16 %v301
        %v377 = vunpack.c.l.b16 %v302
        %v378 = vunpack.c.l.b16 %v303
        %v379 = vunpack.c.l.b16 %v304
        %v380 = vunpack.c.l.b16 %v305
        %v381 = vunpack.c.l.b16 %v306
        %v382 = vunpack.c.l.b16 %v307
        %v383 = vunpack.c.l.b16 %v308
        %v384 = vpack.c.b16 %v353, %v352
        %v385 = vpack.c.b16 %v355, %v354
        %v386 = vpack.c.b16 %v357, %v356
        %v387 = vpack.c.b16 %v359, %v358
        %v388 = vpack.c.b16 %v361, %v360
        %v389 = vpack.c.b16 %v363, %v362
        %v390 = vpack.c.b16 %v365, %v364
        %v391 = vpack.c.b16 %v367, %v366
        %v392 = vpack.c.b16 %v369, %v368
        %v393 = vpack.c.b16 %v371, %v370
        %v394 = vpack.c.b16 %v373, %v372
        %v395 = vpack.c.b16 %v375, %v374
        %v396 = vpack.c.b16 %v377, %v376
        %v397 = vpack.c.b16 %v379, %v378
        %v398 = vpack.c.b16 %v381, %v380
        %v399 = vpack.c.b16 %v383, %v382
        %v404 = vunpack.c.l.b16 %v309
        %v405 = vunpack.c.l.b16 %v310
        %v406 = vunpack.c.l.b16 %v311
        %v407 = vunpack.c.l.b16 %v312
        %v408 = vpack.c.b16 %v405, %v404
        %v409 = vpack.c.b16 %v407, %v406
        %vm412 = vcmask 261120
        %v414 = vsel %vm412, %v384, 0
        %v417 = vsel %vm412, %v385, 0
        %v420 = vsel %vm412, %v386, 0
        %v423 = vsel %vm412, %v387, 0
        %v426 = vsel %vm412, %v388, 0
        %v429 = vsel %vm412, %v389, 0
        %v432 = vsel %vm412, %v390, 0
        %v435 = vsel %vm412, %v391, 0
        %v438 = vsel %vm412, %v392, 0
        %v441 = vsel %vm412, %v393, 0
        %v444 = vsel %vm412, %v394, 0
        %v447 = vsel %vm412, %v395, 0
        %v450 = vsel %vm412, %v396, 0
        %v453 = vsel %vm412, %v397, 0
        %v456 = vsel %vm412, %v398, 0
        %v459 = vsel %vm412, %v399, 0
        %461 = vmatprep.subr.bf16.mxu0 0
        %462 = vmatpush1.bf16.msra.mxu0 0
        %463 = vmatprep.subr.bf16.mxu0 0
        %464 = vmatpush1.bf16.msra.mxu0 0
        %465 = vmatprep.subr.bf16.mxu0 0
        %466 = vmatpush1.bf16.msra.mxu0 0
        %467 = vmatprep.subr.bf16.mxu0 0
        %468 = vmatpush1.bf16.msra.mxu0 0
        %469 = vmatprep.subr.bf16.mxu0 0
        %470 = vmatpush1.bf16.msra.mxu0 0
        %471 = vmatprep.subr.bf16.mxu0 0
        %472 = vmatpush1.bf16.msra.mxu0 0
        %473 = vmatprep.subr.bf16.mxu0 0
        %474 = vmatpush1.bf16.msra.mxu0 %v409
        %475 = vmatprep.subr.bf16.mxu0 0
        %476 = vmatpush1.bf16.msra.mxu0 %v408
        %477 = vmatprep.subr.bf16.mxu0 0
        %478 = vmatpush2.bf16.msra.mxu0 0
        %479 = vmatprep.subr.bf16.mxu0 0
        %480 = vmatpush2.bf16.msra.mxu0 0
        %481 = vmatprep.subr.bf16.mxu0 0
        %482 = vmatpush2.bf16.msra.mxu0 0
        %483 = vmatprep.subr.bf16.mxu0 0
        %484 = vmatpush2.bf16.msra.mxu0 0
        %485 = vmatprep.subr.bf16.mxu0 0
        %486 = vmatpush2.bf16.msra.mxu0 0
        %487 = vmatprep.subr.bf16.mxu0 0
        %488 = vmatpush2.bf16.msra.mxu0 0
        %489 = vmatprep.subr.bf16.mxu0 0
        %490 = vmatpush2.bf16.msra.mxu0 0
        %491 = vmatprep.subr.bf16.mxu0 0
        %492 = vmatpush2.bf16.msra.mxu0 0
        %493 = vmatprep.mubr.bf16.mxu0 0
        %494 = vmatmul.mubr.bf16.gmra.mxu0 %v414
        %v495 = vpop.f32.mrf.mxu0
        %v496 = vadd.f32 %v318, %v495
        %v497 = vpop.f32.mrf.mxu0
        %v498 = vpop.f32.mrf.mxu0
        %v499 = vadd.f32 %v318, %v498
        %v500 = vpop.f32.mrf.mxu0
        %501 = vmatprep.mubr.bf16.mxu0 0
        %502 = vmatmul.mubr.bf16.gmra.mxu0 %v417
        %v503 = vpop.f32.mrf.mxu0
        %v504 = vadd.f32 %v318, %v503
        %v505 = vpop.f32.mrf.mxu0
        %v506 = vpop.f32.mrf.mxu0
        %v507 = vadd.f32 %v318, %v506
        %v508 = vpop.f32.mrf.mxu0
        %509 = vmatprep.mubr.bf16.mxu0 0
        %510 = vmatmul.mubr.bf16.gmra.mxu0 %v420
        %v511 = vpop.f32.mrf.mxu0
        %v512 = vadd.f32 %v318, %v511
        %v513 = vpop.f32.mrf.mxu0
        %v514 = vpop.f32.mrf.mxu0
        %v515 = vadd.f32 %v318, %v514
        %v516 = vpop.f32.mrf.mxu0
        %517 = vmatprep.mubr.bf16.mxu0 0
        %518 = vmatmul.mubr.bf16.gmra.mxu0 %v423
        %v519 = vpop.f32.mrf.mxu0
        %v520 = vadd.f32 %v318, %v519
        %v521 = vpop.f32.mrf.mxu0
        %v522 = vpop.f32.mrf.mxu0
        %v523 = vadd.f32 %v318, %v522
        %v524 = vpop.f32.mrf.mxu0
        %525 = vmatprep.mubr.bf16.mxu0 0
        %526 = vmatmul.mubr.bf16.gmra.mxu0 %v426
        %v527 = vpop.f32.mrf.mxu0
        %v528 = vadd.f32 %v318, %v527
        %v529 = vpop.f32.mrf.mxu0
        %v530 = vpop.f32.mrf.mxu0
        %v531 = vadd.f32 %v318, %v530
        %v532 = vpop.f32.mrf.mxu0
        %533 = vmatprep.mubr.bf16.mxu0 0
        %534 = vmatmul.mubr.bf16.gmra.mxu0 %v429
        %v535 = vpop.f32.mrf.mxu0
        %v536 = vadd.f32 %v318, %v535
        %v537 = vpop.f32.mrf.mxu0
        %v538 = vpop.f32.mrf.mxu0
        %v539 = vadd.f32 %v318, %v538
        %v540 = vpop.f32.mrf.mxu0
        %541 = vmatprep.mubr.bf16.mxu0 0
        %542 = vmatmul.mubr.bf16.gmra.mxu0 %v432
        %v543 = vpop.f32.mrf.mxu0
        %v544 = vadd.f32 %v318, %v543
        %v545 = vpop.f32.mrf.mxu0
        %v546 = vpop.f32.mrf.mxu0
        %v547 = vadd.f32 %v318, %v546
        %v548 = vpop.f32.mrf.mxu0
        %549 = vmatprep.mubr.bf16.mxu0 0
        %550 = vmatmul.mubr.bf16.gmra.mxu0 %v435
        %v551 = vpop.f32.mrf.mxu0
        %v552 = vadd.f32 %v318, %v551
        %v553 = vpop.f32.mrf.mxu0
        %v554 = vpop.f32.mrf.mxu0
        %v555 = vadd.f32 %v318, %v554
        %v556 = vpop.f32.mrf.mxu0
        %557 = vmatprep.mubr.bf16.mxu0 0
        %558 = vmatmul.mubr.bf16.gmra.mxu0 %v438
        %v559 = vpop.f32.mrf.mxu0
        %v560 = vadd.f32 %v318, %v559
        %v561 = vpop.f32.mrf.mxu0
        %v562 = vpop.f32.mrf.mxu0
        %v563 = vadd.f32 %v318, %v562
        %v564 = vpop.f32.mrf.mxu0
        %565 = vmatprep.mubr.bf16.mxu0 0
        %566 = vmatmul.mubr.bf16.gmra.mxu0 %v441
        %v567 = vpop.f32.mrf.mxu0
        %v568 = vadd.f32 %v318, %v567
        %v569 = vpop.f32.mrf.mxu0
        %v570 = vpop.f32.mrf.mxu0
        %v571 = vadd.f32 %v318, %v570
        %v572 = vpop.f32.mrf.mxu0
        %573 = vmatprep.mubr.bf16.mxu0 0
        %574 = vmatmul.mubr.bf16.gmra.mxu0 %v444
        %v575 = vpop.f32.mrf.mxu0
        %v576 = vadd.f32 %v318, %v575
        %v577 = vpop.f32.mrf.mxu0
        %v578 = vpop.f32.mrf.mxu0
        %v579 = vadd.f32 %v318, %v578
        %v580 = vpop.f32.mrf.mxu0
        %581 = vmatprep.mubr.bf16.mxu0 0
        %582 = vmatmul.mubr.bf16.gmra.mxu0 %v447
        %v583 = vpop.f32.mrf.mxu0
        %v584 = vadd.f32 %v318, %v583
        %v585 = vpop.f32.mrf.mxu0
        %v586 = vpop.f32.mrf.mxu0
        %v587 = vadd.f32 %v318, %v586
        %v588 = vpop.f32.mrf.mxu0
        %589 = vmatprep.mubr.bf16.mxu0 0
        %590 = vmatmul.mubr.bf16.gmra.mxu0 %v450
        %v591 = vpop.f32.mrf.mxu0
        %v592 = vadd.f32 %v318, %v591
        %v593 = vpop.f32.mrf.mxu0
        %v594 = vpop.f32.mrf.mxu0
        %v595 = vadd.f32 %v318, %v594
        %v596 = vpop.f32.mrf.mxu0
        %597 = vmatprep.mubr.bf16.mxu0 0
        %598 = vmatmul.mubr.bf16.gmra.mxu0 %v453
        %v599 = vpop.f32.mrf.mxu0
        %v600 = vadd.f32 %v318, %v599
        %v601 = vpop.f32.mrf.mxu0
        %v602 = vpop.f32.mrf.mxu0
        %v603 = vadd.f32 %v318, %v602
        %v604 = vpop.f32.mrf.mxu0
        %605 = vmatprep.mubr.bf16.mxu0 0
        %606 = vmatmul.mubr.bf16.gmra.mxu0 %v456
        %v607 = vpop.f32.mrf.mxu0
        %v608 = vadd.f32 %v318, %v607
        %v609 = vpop.f32.mrf.mxu0
        %v610 = vpop.f32.mrf.mxu0
        %v611 = vadd.f32 %v318, %v610
        %v612 = vpop.f32.mrf.mxu0
        %613 = vmatprep.mubr.bf16.mxu0 0
        %614 = vmatmul.mubr.bf16.gmra.mxu0 %v459
        %v615 = vpop.f32.mrf.mxu0
        %v616 = vadd.f32 %v318, %v615
        %v617 = vpop.f32.mrf.mxu0
        %v618 = vpop.f32.mrf.mxu0
        %v619 = vadd.f32 %v318, %v618
        %v620 = vpop.f32.mrf.mxu0
        %621 = vdwg.mxu0
        %v622 = vmax.f32 %v496, 0.0
        %v623 = vmax.f32 %v499, 0.0
        %v624 = vmax.f32 %v504, 0.0
        %v625 = vmax.f32 %v507, 0.0
        %v626 = vmax.f32 %v512, 0.0
        %v627 = vmax.f32 %v515, 0.0
        %v628 = vmax.f32 %v520, 0.0
        %v629 = vmax.f32 %v523, 0.0
        %v630 = vmax.f32 %v528, 0.0
        %v631 = vmax.f32 %v531, 0.0
        %v632 = vmax.f32 %v536, 0.0
        %v633 = vmax.f32 %v539, 0.0
        %v634 = vmax.f32 %v544, 0.0
        %v635 = vmax.f32 %v547, 0.0
        %v636 = vmax.f32 %v552, 0.0
        %v637 = vmax.f32 %v555, 0.0
        %v638 = vmax.f32 %v560, 0.0
        %v639 = vmax.f32 %v563, 0.0
        %v640 = vmax.f32 %v568, 0.0
        %v641 = vmax.f32 %v571, 0.0
        %v642 = vmax.f32 %v576, 0.0
        %v643 = vmax.f32 %v579, 0.0
        %v644 = vmax.f32 %v584, 0.0
        %v645 = vmax.f32 %v587, 0.0
        %v646 = vmax.f32 %v592, 0.0
        %v647 = vmax.f32 %v595, 0.0
        %v648 = vmax.f32 %v600, 0.0
        %v649 = vmax.f32 %v603, 0.0
        %v650 = vmax.f32 %v608, 0.0
        %v651 = vmax.f32 %v611, 0.0
        %v652 = vmax.f32 %v616, 0.0
        %v653 = vmax.f32 %v619, 0.0
        %vm654 = vcmask 519168
        %655 = vst.msk [vmem:[#allocation2] sm:$0xf] %vm654, 0
        %656 = vst.msk [vmem:[#allocation2 + $0x4] sm:$0xf] %vm654, 0
        %vm657 = vcmask 516096
        %658 = vst.msk [vmem:[#allocation2 + $0x8] sm:$0x1] %vm657, 0
        %659 = vst.msk [vmem:[#allocation2 + $0xc] sm:$0xf] %vm654, 0
        %660 = vst.msk [vmem:[#allocation2 + $0x10] sm:$0xf] %vm654, 0
        %661 = vst.msk [vmem:[#allocation2 + $0x14] sm:$0x1] %vm657, 0
        %662 = vst.msk [vmem:[#allocation2 + $0x18] sm:$0xf] %vm654, 0
        %663 = vst.msk [vmem:[#allocation2 + $0x1c] sm:$0xf] %vm654, 0
        %664 = vst.msk [vmem:[#allocation2 + $0x20] sm:$0x1] %vm657, 0
        %665 = vst.msk [vmem:[#allocation2 + $0x24] sm:$0xf] %vm654, 0
        %666 = vst.msk [vmem:[#allocation2 + $0x28] sm:$0xf] %vm654, 0
        %667 = vst.msk [vmem:[#allocation2 + $0x2c] sm:$0x1] %vm657, 0
        %668 = vst.msk [vmem:[#allocation2 + $0x30] sm:$0xf] %vm654, 0
        %669 = vst.msk [vmem:[#allocation2 + $0x34] sm:$0xf] %vm654, 0
        %670 = vst.msk [vmem:[#allocation2 + $0x38] sm:$0x1] %vm657, 0
        %671 = vst.msk [vmem:[#allocation2 + $0x3c] sm:$0xf] %vm654, 0
        %672 = vst.msk [vmem:[#allocation2 + $0x40] sm:$0xf] %vm654, 0
        %673 = vst.msk [vmem:[#allocation2 + $0x44] sm:$0x1] %vm657, 0
        %674 = vst.msk [vmem:[#allocation2 + $0x48] sm:$0xf] %vm654, 0
        %675 = vst.msk [vmem:[#allocation2 + $0x4c] sm:$0xf] %vm654, 0
        %676 = vst.msk [vmem:[#allocation2 + $0x50] sm:$0x1] %vm657, 0
        %677 = vst.msk [vmem:[#allocation2 + $0x54] sm:$0xf] %vm654, 0
        %678 = vst.msk [vmem:[#allocation2 + $0x58] sm:$0xf] %vm654, 0
        %679 = vst.msk [vmem:[#allocation2 + $0x5c] sm:$0x1] %vm657, 0
        %680 = vst.msk [vmem:[#allocation2 + $0x60] sm:$0xf] %vm654, 0
        %681 = vst.msk [vmem:[#allocation2 + $0x64] sm:$0xf] %vm654, 0
        %682 = vst.msk [vmem:[#allocation2 + $0x68] sm:$0x1] %vm657, 0
        %683 = vst.msk [vmem:[#allocation2 + $0x6c] sm:$0xf] %vm654, 0
        %684 = vst.msk [vmem:[#allocation2 + $0x70] sm:$0xf] %vm654, 0
        %685 = vst.msk [vmem:[#allocation2 + $0x74] sm:$0x1] %vm657, 0
        %686 = vst.msk [vmem:[#allocation2 + $0x78] sm:$0xf] %vm654, 0
        %687 = vst.msk [vmem:[#allocation2 + $0x7c] sm:$0xf] %vm654, 0
        %688 = vst.msk [vmem:[#allocation2 + $0x80] sm:$0x1] %vm657, 0
        %689 = vst.msk [vmem:[#allocation2 + $0x84] sm:$0xf] %vm654, 0
        %690 = vst.msk [vmem:[#allocation2 + $0x88] sm:$0xf] %vm654, 0
        %691 = vst.msk [vmem:[#allocation2 + $0x8c] sm:$0x1] %vm657, 0
        %692 = vst.msk [vmem:[#allocation2 + $0x90] sm:$0xf] %vm654, 0
        %693 = vst.msk [vmem:[#allocation2 + $0x94] sm:$0xf] %vm654, 0
        %694 = vst.msk [vmem:[#allocation2 + $0x98] sm:$0x1] %vm657, 0
        %695 = vst.msk [vmem:[#allocation2 + $0x9c] sm:$0xf] %vm654, 0
        %696 = vst.msk [vmem:[#allocation2 + $0xa0] sm:$0xf] %vm654, 0
        %697 = vst.msk [vmem:[#allocation2 + $0xa4] sm:$0x1] %vm657, 0
        %698 = vst.msk [vmem:[#allocation2 + $0xa8] sm:$0xf] %vm654, 0
        %699 = vst.msk [vmem:[#allocation2 + $0xac] sm:$0xf] %vm654, 0
        %700 = vst.msk [vmem:[#allocation2 + $0xb0] sm:$0x1] %vm657, 0
        %701 = vst.msk [vmem:[#allocation2 + $0xb4] sm:$0xf] %vm654, 0
        %702 = vst.msk [vmem:[#allocation2 + $0xb8] sm:$0xf] %vm654, 0
        %703 = vst.msk [vmem:[#allocation2 + $0xbc] sm:$0x1] %vm657, 0
        %704 = vst.msk [vmem:[#allocation2 + $0xc0] sm:$0xf] %vm654, 0
        %705 = vst.msk [vmem:[#allocation2 + $0xc4] sm:$0xf] %vm654, 0
        %706 = vst.msk [vmem:[#allocation2 + $0xc8] sm:$0x1] %vm657, 0
        %707 = vst.msk [vmem:[#allocation2 + $0xcc] sm:$0xf] %vm654, 0
        %708 = vst.msk [vmem:[#allocation2 + $0xd0] sm:$0xf] %vm654, 0
        %709 = vst.msk [vmem:[#allocation2 + $0xd4] sm:$0x1] %vm657, 0
        %v710 = vpack.c.bf16 %v623, %v622
        %v711 = vpack.c.bf16 %v625, %v624
        %v712 = vpack.c.bf16 %v627, %v626
        %v713 = vpack.c.bf16 %v629, %v628
        %v714 = vpack.c.bf16 %v631, %v630
        %v715 = vpack.c.bf16 %v633, %v632
        %v716 = vpack.c.bf16 %v635, %v634
        %v717 = vpack.c.bf16 %v637, %v636
        %v718 = vpack.c.bf16 %v639, %v638
        %v719 = vpack.c.bf16 %v641, %v640
        %v720 = vpack.c.bf16 %v643, %v642
        %v721 = vpack.c.bf16 %v645, %v644
        %v722 = vpack.c.bf16 %v647, %v646
        %v723 = vpack.c.bf16 %v649, %v648
        %v724 = vpack.c.bf16 %v651, %v650
        %v725 = vpack.c.bf16 %v653, %v652
        %v742 = vunpack.c.l.b16 %v710
        %v743 = vunpack.c.h.b16 %v710
        %v744 = vunpack.c.l.b16 %v711
        %v745 = vunpack.c.h.b16 %v711
        %v746 = vunpack.c.l.b16 %v712
        %v747 = vunpack.c.h.b16 %v712
        %v748 = vunpack.c.l.b16 %v713
        %v749 = vunpack.c.h.b16 %v713
        %v750 = vunpack.c.l.b16 %v714
        %v751 = vunpack.c.h.b16 %v714
        %v752 = vunpack.c.l.b16 %v715
        %v753 = vunpack.c.h.b16 %v715
        %v754 = vunpack.c.l.b16 %v716
        %v755 = vunpack.c.h.b16 %v716
        %v756 = vunpack.c.l.b16 %v717
        %v757 = vunpack.c.h.b16 %v717
        %v758 = vunpack.c.l.b16 %v718
        %v759 = vunpack.c.h.b16 %v718
        %v760 = vunpack.c.l.b16 %v719
        %v761 = vunpack.c.h.b16 %v719
        %v762 = vunpack.c.l.b16 %v720
        %v763 = vunpack.c.h.b16 %v720
        %v764 = vunpack.c.l.b16 %v721
        %v765 = vunpack.c.h.b16 %v721
        %v766 = vunpack.c.l.b16 %v722
        %v767 = vunpack.c.h.b16 %v722
        %v768 = vunpack.c.l.b16 %v723
        %v769 = vunpack.c.h.b16 %v723
        %v770 = vunpack.c.l.b16 %v724
        %v771 = vunpack.c.h.b16 %v724
        %v772 = vunpack.c.l.b16 %v725
        %v773 = vunpack.c.h.b16 %v725
        %v774 = vpack.c.b16 %v742, %v742
        %v775 = vpack.c.b16 %v743, %v743
        %v776 = vpack.c.b16 %v744, %v744
        %v777 = vpack.c.b16 %v745, %v745
        %v778 = vpack.c.b16 %v746, %v746
        %v779 = vpack.c.b16 %v747, %v747
        %v780 = vpack.c.b16 %v748, %v748
        %v781 = vpack.c.b16 %v749, %v749
        %v782 = vpack.c.b16 %v750, %v750
        %v783 = vpack.c.b16 %v751, %v751
        %v784 = vpack.c.b16 %v752, %v752
        %v785 = vpack.c.b16 %v753, %v753
        %v786 = vpack.c.b16 %v754, %v754
        %v787 = vpack.c.b16 %v755, %v755
        %v788 = vpack.c.b16 %v756, %v756
        %v789 = vpack.c.b16 %v757, %v757
        %v790 = vpack.c.b16 %v758, %v758
        %v791 = vpack.c.b16 %v759, %v759
        %v792 = vpack.c.b16 %v760, %v760
        %v793 = vpack.c.b16 %v761, %v761
        %v794 = vpack.c.b16 %v762, %v762
        %v795 = vpack.c.b16 %v763, %v763
        %v796 = vpack.c.b16 %v764, %v764
        %v797 = vpack.c.b16 %v765, %v765
        %v798 = vpack.c.b16 %v766, %v766
        %v799 = vpack.c.b16 %v767, %v767
        %v800 = vpack.c.b16 %v768, %v768
        %v801 = vpack.c.b16 %v769, %v769
        %v802 = vpack.c.b16 %v770, %v770
        %v803 = vpack.c.b16 %v771, %v771
        %v804 = vpack.c.b16 %v772, %v772
        %v805 = vpack.c.b16 %v773, %v773
        %vm806 = vsmask.f32 256
        %vm807 = vsmask.f32 4368
        %vm808 = vmor %vm806, %vm807
        %v810 = vshrl.u32 %v774, 16
        %v812 = vrot.slane %v810, 7
        %v813 = vshll.u32 %v774, 16
        %v815 = vor.u32 %v812, %v813
        %v816 = vrot.slane %v812, 4
        %v818 = vshrl.u32 %v775, 16
        %v820 = vrot.slane %v818, 7
        %v821 = vshll.u32 %v775, 16
        %v823 = vor.u32 %v820, %v821
        %v824 = vsel %vm808, %v816, %v823
        %v825 = vrot.slane %v820, 4
        %v827 = vshrl.u32 %v776, 16
        %v829 = vrot.slane %v827, 7
        %v830 = vshll.u32 %v776, 16
        %v832 = vor.u32 %v829, %v830
        %v833 = vrot.slane %v829, 4
        %v835 = vshrl.u32 %v777, 16
        %v837 = vrot.slane %v835, 7
        %v838 = vshll.u32 %v777, 16
        %v840 = vor.u32 %v837, %v838
        %v841 = vsel %vm808, %v833, %v840
        %v842 = vrot.slane %v837, 4
        %v844 = vshrl.u32 %v778, 16
        %v846 = vrot.slane %v844, 7
        %v847 = vshll.u32 %v778, 16
        %v849 = vor.u32 %v846, %v847
        %v850 = vrot.slane %v846, 4
        %v852 = vshrl.u32 %v779, 16
        %v854 = vrot.slane %v852, 7
        %v855 = vshll.u32 %v779, 16
        %v857 = vor.u32 %v854, %v855
        %v858 = vsel %vm808, %v850, %v857
        %v859 = vrot.slane %v854, 4
        %v861 = vshrl.u32 %v780, 16
        %v863 = vrot.slane %v861, 7
        %v864 = vshll.u32 %v780, 16
        %v866 = vor.u32 %v863, %v864
        %v867 = vrot.slane %v863, 4
        %v869 = vshrl.u32 %v781, 16
        %v871 = vrot.slane %v869, 7
        %v872 = vshll.u32 %v781, 16
        %v874 = vor.u32 %v871, %v872
        %v875 = vsel %vm808, %v867, %v874
        %v876 = vrot.slane %v871, 4
        %v878 = vshrl.u32 %v782, 16
        %v880 = vrot.slane %v878, 7
        %v881 = vshll.u32 %v782, 16
        %v883 = vor.u32 %v880, %v881
        %v884 = vrot.slane %v880, 4
        %v886 = vshrl.u32 %v783, 16
        %v888 = vrot.slane %v886, 7
        %v889 = vshll.u32 %v783, 16
        %v891 = vor.u32 %v888, %v889
        %v892 = vsel %vm808, %v884, %v891
        %v893 = vrot.slane %v888, 4
        %v895 = vshrl.u32 %v784, 16
        %v897 = vrot.slane %v895, 7
        %v898 = vshll.u32 %v784, 16
        %v900 = vor.u32 %v897, %v898
        %v901 = vrot.slane %v897, 4
        %v903 = vshrl.u32 %v785, 16
        %v905 = vrot.slane %v903, 7
        %v906 = vshll.u32 %v785, 16
        %v908 = vor.u32 %v905, %v906
        %v909 = vsel %vm808, %v901, %v908
        %v910 = vrot.slane %v905, 4
        %v912 = vshrl.u32 %v786, 16
        %v914 = vrot.slane %v912, 7
        %v915 = vshll.u32 %v786, 16
        %v917 = vor.u32 %v914, %v915
        %v918 = vrot.slane %v914, 4
        %v920 = vshrl.u32 %v787, 16
        %v922 = vrot.slane %v920, 7
        %v923 = vshll.u32 %v787, 16
        %v925 = vor.u32 %v922, %v923
        %v926 = vsel %vm808, %v918, %v925
        %v927 = vrot.slane %v922, 4
        %v929 = vshrl.u32 %v788, 16
        %v931 = vrot.slane %v929, 7
        %v932 = vshll.u32 %v788, 16
        %v934 = vor.u32 %v931, %v932
        %v935 = vrot.slane %v931, 4
        %v937 = vshrl.u32 %v789, 16
        %v939 = vrot.slane %v937, 7
        %v940 = vshll.u32 %v789, 16
        %v942 = vor.u32 %v939, %v940
        %v943 = vsel %vm808, %v935, %v942
        %v944 = vrot.slane %v939, 4
        %v946 = vshrl.u32 %v790, 16
        %v948 = vrot.slane %v946, 7
        %v949 = vshll.u32 %v790, 16
        %v951 = vor.u32 %v948, %v949
        %v952 = vrot.slane %v948, 4
        %v954 = vshrl.u32 %v791, 16
        %v956 = vrot.slane %v954, 7
        %v957 = vshll.u32 %v791, 16
        %v959 = vor.u32 %v956, %v957
        %v960 = vsel %vm808, %v952, %v959
        %v961 = vrot.slane %v956, 4
        %v963 = vshrl.u32 %v792, 16
        %v965 = vrot.slane %v963, 7
        %v966 = vshll.u32 %v792, 16
        %v968 = vor.u32 %v965, %v966
        %v969 = vrot.slane %v965, 4
        %v971 = vshrl.u32 %v793, 16
        %v973 = vrot.slane %v971, 7
        %v974 = vshll.u32 %v793, 16
        %v976 = vor.u32 %v973, %v974
        %v977 = vsel %vm808, %v969, %v976
        %v978 = vrot.slane %v973, 4
        %v980 = vshrl.u32 %v794, 16
        %v982 = vrot.slane %v980, 7
        %v983 = vshll.u32 %v794, 16
        %v985 = vor.u32 %v982, %v983
        %v986 = vrot.slane %v982, 4
        %v988 = vshrl.u32 %v795, 16
        %v990 = vrot.slane %v988, 7
        %v991 = vshll.u32 %v795, 16
        %v993 = vor.u32 %v990, %v991
        %v994 = vsel %vm808, %v986, %v993
        %v995 = vrot.slane %v990, 4
        %v997 = vshrl.u32 %v796, 16
        %v999 = vrot.slane %v997, 7
        %v1000 = vshll.u32 %v796, 16
        %v1002 = vor.u32 %v999, %v1000
        %v1003 = vrot.slane %v999, 4
        %v1005 = vshrl.u32 %v797, 16
        %v1007 = vrot.slane %v1005, 7
        %v1008 = vshll.u32 %v797, 16
        %v1010 = vor.u32 %v1007, %v1008
        %v1011 = vsel %vm808, %v1003, %v1010
        %v1012 = vrot.slane %v1007, 4
        %v1014 = vshrl.u32 %v798, 16
        %v1016 = vrot.slane %v1014, 7
        %v1017 = vshll.u32 %v798, 16
        %v1019 = vor.u32 %v1016, %v1017
        %v1020 = vrot.slane %v1016, 4
        %v1022 = vshrl.u32 %v799, 16
        %v1024 = vrot.slane %v1022, 7
        %v1025 = vshll.u32 %v799, 16
        %v1027 = vor.u32 %v1024, %v1025
        %v1028 = vsel %vm808, %v1020, %v1027
        %v1029 = vrot.slane %v1024, 4
        %v1031 = vshrl.u32 %v800, 16
        %v1033 = vrot.slane %v1031, 7
        %v1034 = vshll.u32 %v800, 16
        %v1036 = vor.u32 %v1033, %v1034
        %v1037 = vrot.slane %v1033, 4
        %v1039 = vshrl.u32 %v801, 16
        %v1041 = vrot.slane %v1039, 7
        %v1042 = vshll.u32 %v801, 16
        %v1044 = vor.u32 %v1041, %v1042
        %v1045 = vsel %vm808, %v1037, %v1044
        %v1046 = vrot.slane %v1041, 4
        %v1048 = vshrl.u32 %v802, 16
        %v1050 = vrot.slane %v1048, 7
        %v1051 = vshll.u32 %v802, 16
        %v1053 = vor.u32 %v1050, %v1051
        %v1054 = vrot.slane %v1050, 4
        %v1056 = vshrl.u32 %v803, 16
        %v1058 = vrot.slane %v1056, 7
        %v1059 = vshll.u32 %v803, 16
        %v1061 = vor.u32 %v1058, %v1059
        %v1062 = vsel %vm808, %v1054, %v1061
        %v1063 = vrot.slane %v1058, 4
        %v1065 = vshrl.u32 %v804, 16
        %v1067 = vrot.slane %v1065, 7
        %v1068 = vshll.u32 %v804, 16
        %v1070 = vor.u32 %v1067, %v1068
        %v1071 = vrot.slane %v1067, 4
        %v1073 = vshrl.u32 %v805, 16
        %v1075 = vrot.slane %v1073, 7
        %v1076 = vshll.u32 %v805, 16
        %v1078 = vor.u32 %v1075, %v1076
        %v1079 = vsel %vm808, %v1071, %v1078
        %v1080 = vrot.slane %v1075, 4
        %s1129 = scalar_lea.vmem [#allocation2], 12
        %vm1130 = vcmask 519168
        %vm1131 = vsmask.f32 7938
        %vm1132 = vmand %vm1130, %vm1131
        %v1133 = vld [vmem:[%s1129] sm:$0xf]
        %v1134 = vsel %vm1132, %v815, %v1133
        %1135 = vst [vmem:[%s1129] sm:$0xf] %v1134
        %1136 = vst.msk [vmem:[%s1129 + $0x4] sm:$0xf] %vm654, %v824
        %vm1137 = vcmask 516096
        %vm1138 = vmand %vm1137, %vm806
        %v1139 = vld [vmem:[%s1129 + $0x8] sm:$0x1]
        %v1140 = vsel %vm1138, %v825, %v1139
        %1141 = vst [vmem:[%s1129 + $0x8] sm:$0x1] %v1140
        %v1142 = vld [vmem:[%s1129 + $0xc] sm:$0xf]
        %v1143 = vsel %vm1132, %v832, %v1142
        %1144 = vst [vmem:[%s1129 + $0xc] sm:$0xf] %v1143
        %1145 = vst.msk [vmem:[%s1129 + $0x10] sm:$0xf] %vm654, %v841
        %v1146 = vld [vmem:[%s1129 + $0x14] sm:$0x1]
        %v1147 = vsel %vm1138, %v842, %v1146
        %1148 = vst [vmem:[%s1129 + $0x14] sm:$0x1] %v1147
        %v1149 = vld [vmem:[%s1129 + $0x18] sm:$0xf]
        %v1150 = vsel %vm1132, %v849, %v1149
        %1151 = vst [vmem:[%s1129 + $0x18] sm:$0xf] %v1150
        %1152 = vst.msk [vmem:[%s1129 + $0x1c] sm:$0xf] %vm654, %v858
        %v1153 = vld [vmem:[%s1129 + $0x20] sm:$0x1]
        %v1154 = vsel %vm1138, %v859, %v1153
        %1155 = vst [vmem:[%s1129 + $0x20] sm:$0x1] %v1154
        %v1156 = vld [vmem:[%s1129 + $0x24] sm:$0xf]
        %v1157 = vsel %vm1132, %v866, %v1156
        %1158 = vst [vmem:[%s1129 + $0x24] sm:$0xf] %v1157
        %1159 = vst.msk [vmem:[%s1129 + $0x28] sm:$0xf] %vm654, %v875
        %v1160 = vld [vmem:[%s1129 + $0x2c] sm:$0x1]
        %v1161 = vsel %vm1138, %v876, %v1160
        %1162 = vst [vmem:[%s1129 + $0x2c] sm:$0x1] %v1161
        %v1163 = vld [vmem:[%s1129 + $0x30] sm:$0xf]
        %v1164 = vsel %vm1132, %v883, %v1163
        %1165 = vst [vmem:[%s1129 + $0x30] sm:$0xf] %v1164
        %1166 = vst.msk [vmem:[%s1129 + $0x34] sm:$0xf] %vm654, %v892
        %v1167 = vld [vmem:[%s1129 + $0x38] sm:$0x1]
        %v1168 = vsel %vm1138, %v893, %v1167
        %1169 = vst [vmem:[%s1129 + $0x38] sm:$0x1] %v1168
        %v1170 = vld [vmem:[%s1129 + $0x3c] sm:$0xf]
        %v1171 = vsel %vm1132, %v900, %v1170
        %1172 = vst [vmem:[%s1129 + $0x3c] sm:$0xf] %v1171
        %1173 = vst.msk [vmem:[%s1129 + $0x40] sm:$0xf] %vm654, %v909
        %v1174 = vld [vmem:[%s1129 + $0x44] sm:$0x1]
        %v1175 = vsel %vm1138, %v910, %v1174
        %1176 = vst [vmem:[%s1129 + $0x44] sm:$0x1] %v1175
        %v1177 = vld [vmem:[%s1129 + $0x48] sm:$0xf]
        %v1178 = vsel %vm1132, %v917, %v1177
        %1179 = vst [vmem:[%s1129 + $0x48] sm:$0xf] %v1178
        %1180 = vst.msk [vmem:[%s1129 + $0x4c] sm:$0xf] %vm654, %v926
        %v1181 = vld [vmem:[%s1129 + $0x50] sm:$0x1]
        %v1182 = vsel %vm1138, %v927, %v1181
        %1183 = vst [vmem:[%s1129 + $0x50] sm:$0x1] %v1182
        %v1184 = vld [vmem:[%s1129 + $0x54] sm:$0xf]
        %v1185 = vsel %vm1132, %v934, %v1184
        %1186 = vst [vmem:[%s1129 + $0x54] sm:$0xf] %v1185
        %1187 = vst.msk [vmem:[%s1129 + $0x58] sm:$0xf] %vm654, %v943
        %v1188 = vld [vmem:[%s1129 + $0x5c] sm:$0x1]
        %v1189 = vsel %vm1138, %v944, %v1188
        %1190 = vst [vmem:[%s1129 + $0x5c] sm:$0x1] %v1189
        %v1191 = vld [vmem:[%s1129 + $0x60] sm:$0xf]
        %v1192 = vsel %vm1132, %v951, %v1191
        %1193 = vst [vmem:[%s1129 + $0x60] sm:$0xf] %v1192
        %1194 = vst.msk [vmem:[%s1129 + $0x64] sm:$0xf] %vm654, %v960
        %v1195 = vld [vmem:[%s1129 + $0x68] sm:$0x1]
        %v1196 = vsel %vm1138, %v961, %v1195
        %1197 = vst [vmem:[%s1129 + $0x68] sm:$0x1] %v1196
        %v1198 = vld [vmem:[%s1129 + $0x6c] sm:$0xf]
        %v1199 = vsel %vm1132, %v968, %v1198
        %1200 = vst [vmem:[%s1129 + $0x6c] sm:$0xf] %v1199
        %1201 = vst.msk [vmem:[%s1129 + $0x70] sm:$0xf] %vm654, %v977
        %v1202 = vld [vmem:[%s1129 + $0x74] sm:$0x1]
        %v1203 = vsel %vm1138, %v978, %v1202
        %1204 = vst [vmem:[%s1129 + $0x74] sm:$0x1] %v1203
        %v1205 = vld [vmem:[%s1129 + $0x78] sm:$0xf]
        %v1206 = vsel %vm1132, %v985, %v1205
        %1207 = vst [vmem:[%s1129 + $0x78] sm:$0xf] %v1206
        %1208 = vst.msk [vmem:[%s1129 + $0x7c] sm:$0xf] %vm654, %v994
        %v1209 = vld [vmem:[%s1129 + $0x80] sm:$0x1]
        %v1210 = vsel %vm1138, %v995, %v1209
        %1211 = vst [vmem:[%s1129 + $0x80] sm:$0x1] %v1210
        %v1212 = vld [vmem:[%s1129 + $0x84] sm:$0xf]
        %v1213 = vsel %vm1132, %v1002, %v1212
        %1214 = vst [vmem:[%s1129 + $0x84] sm:$0xf] %v1213
        %1215 = vst.msk [vmem:[%s1129 + $0x88] sm:$0xf] %vm654, %v1011
        %v1216 = vld [vmem:[%s1129 + $0x8c] sm:$0x1]
        %v1217 = vsel %vm1138, %v1012, %v1216
        %1218 = vst [vmem:[%s1129 + $0x8c] sm:$0x1] %v1217
        %v1219 = vld [vmem:[%s1129 + $0x90] sm:$0xf]
        %v1220 = vsel %vm1132, %v1019, %v1219
        %1221 = vst [vmem:[%s1129 + $0x90] sm:$0xf] %v1220
        %1222 = vst.msk [vmem:[%s1129 + $0x94] sm:$0xf] %vm654, %v1028
        %v1223 = vld [vmem:[%s1129 + $0x98] sm:$0x1]
        %v1224 = vsel %vm1138, %v1029, %v1223
        %1225 = vst [vmem:[%s1129 + $0x98] sm:$0x1] %v1224
        %v1226 = vld [vmem:[%s1129 + $0x9c] sm:$0xf]
        %v1227 = vsel %vm1132, %v1036, %v1226
        %1228 = vst [vmem:[%s1129 + $0x9c] sm:$0xf] %v1227
        %1229 = vst.msk [vmem:[%s1129 + $0xa0] sm:$0xf] %vm654, %v1045
        %v1230 = vld [vmem:[%s1129 + $0xa4] sm:$0x1]
        %v1231 = vsel %vm1138, %v1046, %v1230
        %1232 = vst [vmem:[%s1129 + $0xa4] sm:$0x1] %v1231
        %v1233 = vld [vmem:[%s1129 + $0xa8] sm:$0xf]
        %v1234 = vsel %vm1132, %v1053, %v1233
        %1235 = vst [vmem:[%s1129 + $0xa8] sm:$0xf] %v1234
        %1236 = vst.msk [vmem:[%s1129 + $0xac] sm:$0xf] %vm654, %v1062
        %v1237 = vld [vmem:[%s1129 + $0xb0] sm:$0x1]
        %v1238 = vsel %vm1138, %v1063, %v1237
        %1239 = vst [vmem:[%s1129 + $0xb0] sm:$0x1] %v1238
        %v1240 = vld [vmem:[%s1129 + $0xb4] sm:$0xf]
        %v1241 = vsel %vm1132, %v1070, %v1240
        %1242 = vst [vmem:[%s1129 + $0xb4] sm:$0xf] %v1241
        %1243 = vst.msk [vmem:[%s1129 + $0xb8] sm:$0xf] %vm654, %v1079
        %v1244 = vld [vmem:[%s1129 + $0xbc] sm:$0x1]
        %v1245 = vsel %vm1138, %v1080, %v1244
        %1246 = vst [vmem:[%s1129 + $0xbc] sm:$0x1] %v1245
        %v1247 = vld [vmem:[#allocation2] sm:$0xf]
        %v1248 = vld [vmem:[#allocation2 + $0x4] sm:$0xf]
        %v1249 = vld [vmem:[#allocation2 + $0xc] sm:$0xf]
        %v1250 = vld [vmem:[#allocation2 + $0x10] sm:$0xf]
        %v1251 = vld [vmem:[#allocation2 + $0x18] sm:$0xf]
        %v1252 = vld [vmem:[#allocation2 + $0x1c] sm:$0xf]
        %v1253 = vld [vmem:[#allocation2 + $0x24] sm:$0xf]
        %v1254 = vld [vmem:[#allocation2 + $0x28] sm:$0xf]
        %v1255 = vld [vmem:[#allocation2 + $0x30] sm:$0xf]
        %v1256 = vld [vmem:[#allocation2 + $0x34] sm:$0xf]
        %v1257 = vld [vmem:[#allocation2 + $0x3c] sm:$0xf]
        %v1258 = vld [vmem:[#allocation2 + $0x40] sm:$0xf]
        %v1259 = vld [vmem:[#allocation2 + $0x48] sm:$0xf]
        %v1260 = vld [vmem:[#allocation2 + $0x4c] sm:$0xf]
        %v1261 = vld [vmem:[#allocation2 + $0x54] sm:$0xf]
        %v1262 = vld [vmem:[#allocation2 + $0x58] sm:$0xf]
        %v1263 = vld [vmem:[#allocation2 + $0x60] sm:$0xf]
        %v1264 = vld [vmem:[#allocation2 + $0x64] sm:$0xf]
        %v1265 = vld [vmem:[#allocation2 + $0x6c] sm:$0xf]
        %v1266 = vld [vmem:[#allocation2 + $0x70] sm:$0xf]
        %v1267 = vld [vmem:[#allocation2 + $0x78] sm:$0xf]
        %v1268 = vld [vmem:[#allocation2 + $0x7c] sm:$0xf]
        %v1269 = vld [vmem:[#allocation2 + $0x84] sm:$0xf]
        %v1270 = vld [vmem:[#allocation2 + $0x88] sm:$0xf]
        %v1271 = vld [vmem:[#allocation2 + $0x90] sm:$0xf]
        %v1272 = vld [vmem:[#allocation2 + $0x94] sm:$0xf]
        %v1273 = vld [vmem:[#allocation2 + $0x9c] sm:$0xf]
        %v1274 = vld [vmem:[#allocation2 + $0xa0] sm:$0xf]
        %v1275 = vld [vmem:[#allocation2 + $0xa8] sm:$0xf]
        %v1276 = vld [vmem:[#allocation2 + $0xac] sm:$0xf]
        %v1277 = vld [vmem:[#allocation2 + $0xb4] sm:$0xf]
        %v1278 = vld [vmem:[#allocation2 + $0xb8] sm:$0xf]
        %1279 = vst.msk [vmem:[#allocation3] sm:$0xf] %vm654, %v1247
        %1280 = vst.msk [vmem:[#allocation3 + $0x14] sm:$0xf] %vm654, %v1248
        %1281 = vst.msk [vmem:[#allocation3 + $0x28] sm:$0xf] %vm654, %v1249
        %1282 = vst.msk [vmem:[#allocation3 + $0x3c] sm:$0xf] %vm654, %v1250
        %1283 = vst.msk [vmem:[#allocation3 + $0x50] sm:$0xf] %vm654, %v1251
        %1284 = vst.msk [vmem:[#allocation3 + $0x64] sm:$0xf] %vm654, %v1252
        %1285 = vst.msk [vmem:[#allocation3 + $0x78] sm:$0xf] %vm654, %v1253
        %1286 = vst.msk [vmem:[#allocation3 + $0x8c] sm:$0xf] %vm654, %v1254
        %1287 = vst.msk [vmem:[#allocation3 + $0xa0] sm:$0xf] %vm654, %v1255
        %1288 = vst.msk [vmem:[#allocation3 + $0xb4] sm:$0xf] %vm654, %v1256
        %1289 = vst.msk [vmem:[#allocation3 + $0xc8] sm:$0xf] %vm654, %v1257
        %1290 = vst.msk [vmem:[#allocation3 + $0xdc] sm:$0xf] %vm654, %v1258
        %1291 = vst.msk [vmem:[#allocation3 + $0xf0] sm:$0xf] %vm654, %v1259
        %1292 = vst.msk [vmem:[#allocation3 + $0x104] sm:$0xf] %vm654, %v1260
        %1293 = vst.msk [vmem:[#allocation3 + $0x118] sm:$0xf] %vm654, %v1261
        %1294 = vst.msk [vmem:[#allocation3 + $0x12c] sm:$0xf] %vm654, %v1262
        %1295 = vst.msk [vmem:[#allocation3 + $0x140] sm:$0xf] %vm654, %v1263
        %1296 = vst.msk [vmem:[#allocation3 + $0x154] sm:$0xf] %vm654, %v1264
        %1297 = vst.msk [vmem:[#allocation3 + $0x168] sm:$0xf] %vm654, %v1265
        %1298 = vst.msk [vmem:[#allocation3 + $0x17c] sm:$0xf] %vm654, %v1266
        %1299 = vst.msk [vmem:[#allocation3 + $0x190] sm:$0xf] %vm654, %v1267
        %1300 = vst.msk [vmem:[#allocation3 + $0x1a4] sm:$0xf] %vm654, %v1268
        %1301 = vst.msk [vmem:[#allocation3 + $0x1b8] sm:$0xf] %vm654, %v1269
        %1302 = vst.msk [vmem:[#allocation3 + $0x1cc] sm:$0xf] %vm654, %v1270
        %1303 = vst.msk [vmem:[#allocation3 + $0x1e0] sm:$0xf] %vm654, %v1271
        %1304 = vst.msk [vmem:[#allocation3 + $0x1f4] sm:$0xf] %vm654, %v1272
        %1305 = vst.msk [vmem:[#allocation3 + $0x208] sm:$0xf] %vm654, %v1273
        %1306 = vst.msk [vmem:[#allocation3 + $0x21c] sm:$0xf] %vm654, %v1274
        %1307 = vst.msk [vmem:[#allocation3 + $0x230] sm:$0xf] %vm654, %v1275
        %1308 = vst.msk [vmem:[#allocation3 + $0x244] sm:$0xf] %vm654, %v1276
        %1309 = vst.msk [vmem:[#allocation3 + $0x258] sm:$0xf] %vm654, %v1277
        %1310 = vst.msk [vmem:[#allocation3 + $0x26c] sm:$0xf] %vm654, %v1278
        %v1311 = vld [vmem:[#allocation2] sm:$0xf]
        %v1312 = vld [vmem:[#allocation2 + $0x4] sm:$0xf]
        %v1313 = vld [vmem:[#allocation2 + $0x8] sm:$0x1]
        %v1314 = vld [vmem:[#allocation2 + $0xc] sm:$0xf]
        %v1315 = vld [vmem:[#allocation2 + $0x10] sm:$0xf]
        %v1316 = vld [vmem:[#allocation2 + $0x14] sm:$0x1]
        %v1317 = vld [vmem:[#allocation2 + $0x18] sm:$0xf]
        %v1318 = vld [vmem:[#allocation2 + $0x1c] sm:$0xf]
        %v1319 = vld [vmem:[#allocation2 + $0x20] sm:$0x1]
        %v1320 = vld [vmem:[#allocation2 + $0x24] sm:$0xf]
        %v1321 = vld [vmem:[#allocation2 + $0x28] sm:$0xf]
        %v1322 = vld [vmem:[#allocation2 + $0x2c] sm:$0x1]
        %v1323 = vld [vmem:[#allocation2 + $0x30] sm:$0xf]
        %v1324 = vld [vmem:[#allocation2 + $0x34] sm:$0xf]
        %v1325 = vld [vmem:[#allocation2 + $0x38] sm:$0x1]
        %v1326 = vld [vmem:[#allocation2 + $0x3c] sm:$0xf]
        %v1327 = vld [vmem:[#allocation2 + $0x40] sm:$0xf]
        %v1328 = vld [vmem:[#allocation2 + $0x44] sm:$0x1]
        %v1329 = vld [vmem:[#allocation2 + $0x48] sm:$0xf]
        %v1330 = vld [vmem:[#allocation2 + $0x4c] sm:$0xf]
        %v1331 = vld [vmem:[#allocation2 + $0x50] sm:$0x1]
        %v1332 = vld [vmem:[#allocation2 + $0x54] sm:$0xf]
        %v1333 = vld [vmem:[#allocation2 + $0x58] sm:$0xf]
        %v1334 = vld [vmem:[#allocation2 + $0x5c] sm:$0x1]
        %v1335 = vld [vmem:[#allocation2 + $0x60] sm:$0xf]
        %v1336 = vld [vmem:[#allocation2 + $0x64] sm:$0xf]
        %v1337 = vld [vmem:[#allocation2 + $0x68] sm:$0x1]
        %v1338 = vld [vmem:[#allocation2 + $0x6c] sm:$0xf]
        %v1339 = vld [vmem:[#allocation2 + $0x70] sm:$0xf]
        %v1340 = vld [vmem:[#allocation2 + $0x74] sm:$0x1]
        %v1341 = vld [vmem:[#allocation2 + $0x78] sm:$0xf]
        %v1342 = vld [vmem:[#allocation2 + $0x7c] sm:$0xf]
        %v1343 = vld [vmem:[#allocation2 + $0x80] sm:$0x1]
        %v1344 = vld [vmem:[#allocation2 + $0x84] sm:$0xf]
        %v1345 = vld [vmem:[#allocation2 + $0x88] sm:$0xf]
        %v1346 = vld [vmem:[#allocation2 + $0x8c] sm:$0x1]
        %v1347 = vld [vmem:[#allocation2 + $0x90] sm:$0xf]
        %v1348 = vld [vmem:[#allocation2 + $0x94] sm:$0xf]
        %v1349 = vld [vmem:[#allocation2 + $0x98] sm:$0x1]
        %v1350 = vld [vmem:[#allocation2 + $0x9c] sm:$0xf]
        %v1351 = vld [vmem:[#allocation2 + $0xa0] sm:$0xf]
        %v1352 = vld [vmem:[#allocation2 + $0xa4] sm:$0x1]
        %v1353 = vld [vmem:[#allocation2 + $0xa8] sm:$0xf]
        %v1354 = vld [vmem:[#allocation2 + $0xac] sm:$0xf]
        %v1355 = vld [vmem:[#allocation2 + $0xb0] sm:$0x1]
        %v1356 = vld [vmem:[#allocation2 + $0xb4] sm:$0xf]
        %v1357 = vld [vmem:[#allocation2 + $0xb8] sm:$0xf]
        %v1358 = vld [vmem:[#allocation2 + $0xbc] sm:$0x1]
        %vm1359 = vsmask.f32 3328
        %vm1360 = vsmask.f32 7440
        %vm1361 = vmor %vm1359, %vm1360
        %v1363 = vshrl.u32 %v1311, 16
        %v1365 = vrot.slane %v1363, 4
        %v1366 = vshll.u32 %v1311, 16
        %v1368 = vrot.slane %v1366, 5
        %v1369 = vor.u32 %v1365, %v1368
        %v1370 = vrot.slane %v1369, 4
        %v1372 = vshll.u32 %v1312, 16
        %v1374 = vrot.slane %v1372, 5
        %v1375 = vsel %vm1361, %v1370, %v1374
        %v1376 = vshrl.u32 %v1312, 16
        %v1378 = vrot.slane %v1376, 4
        %v1379 = vor.u32 %v1378, %v1374
        %v1380 = vrot.slane %v1379, 4
        %v1382 = vshll.u32 %v1313, 16
        %v1384 = vrot.slane %v1382, 5
        %v1385 = vsel %vm1361, %v1380, %v1384
        %v1387 = vshrl.u32 %v1314, 16
        %v1389 = vrot.slane %v1387, 4
        %v1390 = vshll.u32 %v1314, 16
        %v1392 = vrot.slane %v1390, 5
        %v1393 = vor.u32 %v1389, %v1392
        %v1394 = vrot.slane %v1393, 4
        %v1396 = vshll.u32 %v1315, 16
        %v1398 = vrot.slane %v1396, 5
        %v1399 = vsel %vm1361, %v1394, %v1398
        %v1400 = vshrl.u32 %v1315, 16
        %v1402 = vrot.slane %v1400, 4
        %v1403 = vor.u32 %v1402, %v1398
        %v1404 = vrot.slane %v1403, 4
        %v1406 = vshll.u32 %v1316, 16
        %v1408 = vrot.slane %v1406, 5
        %v1409 = vsel %vm1361, %v1404, %v1408
        %v1411 = vshrl.u32 %v1317, 16
        %v1413 = vrot.slane %v1411, 4
        %v1414 = vshll.u32 %v1317, 16
        %v1416 = vrot.slane %v1414, 5
        %v1417 = vor.u32 %v1413, %v1416
        %v1418 = vrot.slane %v1417, 4
        %v1420 = vshll.u32 %v1318, 16
        %v1422 = vrot.slane %v1420, 5
        %v1423 = vsel %vm1361, %v1418, %v1422
        %v1424 = vshrl.u32 %v1318, 16
        %v1426 = vrot.slane %v1424, 4
        %v1427 = vor.u32 %v1426, %v1422
        %v1428 = vrot.slane %v1427, 4
        %v1430 = vshll.u32 %v1319, 16
        %v1432 = vrot.slane %v1430, 5
        %v1433 = vsel %vm1361, %v1428, %v1432
        %v1435 = vshrl.u32 %v1320, 16
        %v1437 = vrot.slane %v1435, 4
        %v1438 = vshll.u32 %v1320, 16
        %v1440 = vrot.slane %v1438, 5
        %v1441 = vor.u32 %v1437, %v1440
        %v1442 = vrot.slane %v1441, 4
        %v1444 = vshll.u32 %v1321, 16
        %v1446 = vrot.slane %v1444, 5
        %v1447 = vsel %vm1361, %v1442, %v1446
        %v1448 = vshrl.u32 %v1321, 16
        %v1450 = vrot.slane %v1448, 4
        %v1451 = vor.u32 %v1450, %v1446
        %v1452 = vrot.slane %v1451, 4
        %v1454 = vshll.u32 %v1322, 16
        %v1456 = vrot.slane %v1454, 5
        %v1457 = vsel %vm1361, %v1452, %v1456
        %v1459 = vshrl.u32 %v1323, 16
        %v1461 = vrot.slane %v1459, 4
        %v1462 = vshll.u32 %v1323, 16
        %v1464 = vrot.slane %v1462, 5
        %v1465 = vor.u32 %v1461, %v1464
        %v1466 = vrot.slane %v1465, 4
        %v1468 = vshll.u32 %v1324, 16
        %v1470 = vrot.slane %v1468, 5
        %v1471 = vsel %vm1361, %v1466, %v1470
        %v1472 = vshrl.u32 %v1324, 16
        %v1474 = vrot.slane %v1472, 4
        %v1475 = vor.u32 %v1474, %v1470
        %v1476 = vrot.slane %v1475, 4
        %v1478 = vshll.u32 %v1325, 16
        %v1480 = vrot.slane %v1478, 5
        %v1481 = vsel %vm1361, %v1476, %v1480
        %v1483 = vshrl.u32 %v1326, 16
        %v1485 = vrot.slane %v1483, 4
        %v1486 = vshll.u32 %v1326, 16
        %v1488 = vrot.slane %v1486, 5
        %v1489 = vor.u32 %v1485, %v1488
        %v1490 = vrot.slane %v1489, 4
        %v1492 = vshll.u32 %v1327, 16
        %v1494 = vrot.slane %v1492, 5
        %v1495 = vsel %vm1361, %v1490, %v1494
        %v1496 = vshrl.u32 %v1327, 16
        %v1498 = vrot.slane %v1496, 4
        %v1499 = vor.u32 %v1498, %v1494
        %v1500 = vrot.slane %v1499, 4
        %v1502 = vshll.u32 %v1328, 16
        %v1504 = vrot.slane %v1502, 5
        %v1505 = vsel %vm1361, %v1500, %v1504
        %v1507 = vshrl.u32 %v1329, 16
        %v1509 = vrot.slane %v1507, 4
        %v1510 = vshll.u32 %v1329, 16
        %v1512 = vrot.slane %v1510, 5
        %v1513 = vor.u32 %v1509, %v1512
        %v1514 = vrot.slane %v1513, 4
        %v1516 = vshll.u32 %v1330, 16
        %v1518 = vrot.slane %v1516, 5
        %v1519 = vsel %vm1361, %v1514, %v1518
        %v1520 = vshrl.u32 %v1330, 16
        %v1522 = vrot.slane %v1520, 4
        %v1523 = vor.u32 %v1522, %v1518
        %v1524 = vrot.slane %v1523, 4
        %v1526 = vshll.u32 %v1331, 16
        %v1528 = vrot.slane %v1526, 5
        %v1529 = vsel %vm1361, %v1524, %v1528
        %v1531 = vshrl.u32 %v1332, 16
        %v1533 = vrot.slane %v1531, 4
        %v1534 = vshll.u32 %v1332, 16
        %v1536 = vrot.slane %v1534, 5
        %v1537 = vor.u32 %v1533, %v1536
        %v1538 = vrot.slane %v1537, 4
        %v1540 = vshll.u32 %v1333, 16
        %v1542 = vrot.slane %v1540, 5
        %v1543 = vsel %vm1361, %v1538, %v1542
        %v1544 = vshrl.u32 %v1333, 16
        %v1546 = vrot.slane %v1544, 4
        %v1547 = vor.u32 %v1546, %v1542
        %v1548 = vrot.slane %v1547, 4
        %v1550 = vshll.u32 %v1334, 16
        %v1552 = vrot.slane %v1550, 5
        %v1553 = vsel %vm1361, %v1548, %v1552
        %v1555 = vshrl.u32 %v1335, 16
        %v1557 = vrot.slane %v1555, 4
        %v1558 = vshll.u32 %v1335, 16
        %v1560 = vrot.slane %v1558, 5
        %v1561 = vor.u32 %v1557, %v1560
        %v1562 = vrot.slane %v1561, 4
        %v1564 = vshll.u32 %v1336, 16
        %v1566 = vrot.slane %v1564, 5
        %v1567 = vsel %vm1361, %v1562, %v1566
        %v1568 = vshrl.u32 %v1336, 16
        %v1570 = vrot.slane %v1568, 4
        %v1571 = vor.u32 %v1570, %v1566
        %v1572 = vrot.slane %v1571, 4
        %v1574 = vshll.u32 %v1337, 16
        %v1576 = vrot.slane %v1574, 5
        %v1577 = vsel %vm1361, %v1572, %v1576
        %v1579 = vshrl.u32 %v1338, 16
        %v1581 = vrot.slane %v1579, 4
        %v1582 = vshll.u32 %v1338, 16
        %v1584 = vrot.slane %v1582, 5
        %v1585 = vor.u32 %v1581, %v1584
        %v1586 = vrot.slane %v1585, 4
        %v1588 = vshll.u32 %v1339, 16
        %v1590 = vrot.slane %v1588, 5
        %v1591 = vsel %vm1361, %v1586, %v1590
        %v1592 = vshrl.u32 %v1339, 16
        %v1594 = vrot.slane %v1592, 4
        %v1595 = vor.u32 %v1594, %v1590
        %v1596 = vrot.slane %v1595, 4
        %v1598 = vshll.u32 %v1340, 16
        %v1600 = vrot.slane %v1598, 5
        %v1601 = vsel %vm1361, %v1596, %v1600
        %v1603 = vshrl.u32 %v1341, 16
        %v1605 = vrot.slane %v1603, 4
        %v1606 = vshll.u32 %v1341, 16
        %v1608 = vrot.slane %v1606, 5
        %v1609 = vor.u32 %v1605, %v1608
        %v1610 = vrot.slane %v1609, 4
        %v1612 = vshll.u32 %v1342, 16
        %v1614 = vrot.slane %v1612, 5
        %v1615 = vsel %vm1361, %v1610, %v1614
        %v1616 = vshrl.u32 %v1342, 16
        %v1618 = vrot.slane %v1616, 4
        %v1619 = vor.u32 %v1618, %v1614
        %v1620 = vrot.slane %v1619, 4
        %v1622 = vshll.u32 %v1343, 16
        %v1624 = vrot.slane %v1622, 5
        %v1625 = vsel %vm1361, %v1620, %v1624
        %v1627 = vshrl.u32 %v1344, 16
        %v1629 = vrot.slane %v1627, 4
        %v1630 = vshll.u32 %v1344, 16
        %v1632 = vrot.slane %v1630, 5
        %v1633 = vor.u32 %v1629, %v1632
        %v1634 = vrot.slane %v1633, 4
        %v1636 = vshll.u32 %v1345, 16
        %v1638 = vrot.slane %v1636, 5
        %v1639 = vsel %vm1361, %v1634, %v1638
        %v1640 = vshrl.u32 %v1345, 16
        %v1642 = vrot.slane %v1640, 4
        %v1643 = vor.u32 %v1642, %v1638
        %v1644 = vrot.slane %v1643, 4
        %v1646 = vshll.u32 %v1346, 16
        %v1648 = vrot.slane %v1646, 5
        %v1649 = vsel %vm1361, %v1644, %v1648
        %v1651 = vshrl.u32 %v1347, 16
        %v1653 = vrot.slane %v1651, 4
        %v1654 = vshll.u32 %v1347, 16
        %v1656 = vrot.slane %v1654, 5
        %v1657 = vor.u32 %v1653, %v1656
        %v1658 = vrot.slane %v1657, 4
        %v1660 = vshll.u32 %v1348, 16
        %v1662 = vrot.slane %v1660, 5
        %v1663 = vsel %vm1361, %v1658, %v1662
        %v1664 = vshrl.u32 %v1348, 16
        %v1666 = vrot.slane %v1664, 4
        %v1667 = vor.u32 %v1666, %v1662
        %v1668 = vrot.slane %v1667, 4
        %v1670 = vshll.u32 %v1349, 16
        %v1672 = vrot.slane %v1670, 5
        %v1673 = vsel %vm1361, %v1668, %v1672
        %v1675 = vshrl.u32 %v1350, 16
        %v1677 = vrot.slane %v1675, 4
        %v1678 = vshll.u32 %v1350, 16
        %v1680 = vrot.slane %v1678, 5
        %v1681 = vor.u32 %v1677, %v1680
        %v1682 = vrot.slane %v1681, 4
        %v1684 = vshll.u32 %v1351, 16
        %v1686 = vrot.slane %v1684, 5
        %v1687 = vsel %vm1361, %v1682, %v1686
        %v1688 = vshrl.u32 %v1351, 16
        %v1690 = vrot.slane %v1688, 4
        %v1691 = vor.u32 %v1690, %v1686
        %v1692 = vrot.slane %v1691, 4
        %v1694 = vshll.u32 %v1352, 16
        %v1696 = vrot.slane %v1694, 5
        %v1697 = vsel %vm1361, %v1692, %v1696
        %v1699 = vshrl.u32 %v1353, 16
        %v1701 = vrot.slane %v1699, 4
        %v1702 = vshll.u32 %v1353, 16
        %v1704 = vrot.slane %v1702, 5
        %v1705 = vor.u32 %v1701, %v1704
        %v1706 = vrot.slane %v1705, 4
        %v1708 = vshll.u32 %v1354, 16
        %v1710 = vrot.slane %v1708, 5
        %v1711 = vsel %vm1361, %v1706, %v1710
        %v1712 = vshrl.u32 %v1354, 16
        %v1714 = vrot.slane %v1712, 4
        %v1715 = vor.u32 %v1714, %v1710
        %v1716 = vrot.slane %v1715, 4
        %v1718 = vshll.u32 %v1355, 16
        %v1720 = vrot.slane %v1718, 5
        %v1721 = vsel %vm1361, %v1716, %v1720
        %v1723 = vshrl.u32 %v1356, 16
        %v1725 = vrot.slane %v1723, 4
        %v1726 = vshll.u32 %v1356, 16
        %v1728 = vrot.slane %v1726, 5
        %v1729 = vor.u32 %v1725, %v1728
        %v1730 = vrot.slane %v1729, 4
        %v1732 = vshll.u32 %v1357, 16
        %v1734 = vrot.slane %v1732, 5
        %v1735 = vsel %vm1361, %v1730, %v1734
        %v1736 = vshrl.u32 %v1357, 16
        %v1738 = vrot.slane %v1736, 4
        %v1739 = vor.u32 %v1738, %v1734
        %v1740 = vrot.slane %v1739, 4
        %v1742 = vshll.u32 %v1358, 16
        %v1744 = vrot.slane %v1742, 5
        %v1745 = vsel %vm1361, %v1740, %v1744
        %1746 = vrot.lane.b32.xlu0 %v1375, 64
        %v1747 = vpop.permute.xlu0 %1746
        %1748 = vrot.lane.b32.xlu0 %v1385, 64
        %v1749 = vpop.permute.xlu0 %1748
        %1750 = vrot.lane.b32.xlu0 %v1399, 64
        %v1751 = vpop.permute.xlu0 %1750
        %1752 = vrot.lane.b32.xlu0 %v1409, 64
        %v1753 = vpop.permute.xlu0 %1752
        %1754 = vrot.lane.b32.xlu0 %v1423, 64
        %v1755 = vpop.permute.xlu0 %1754
        %1756 = vrot.lane.b32.xlu0 %v1433, 64
        %v1757 = vpop.permute.xlu0 %1756
        %1758 = vrot.lane.b32.xlu0 %v1447, 64
        %v1759 = vpop.permute.xlu0 %1758
        %1760 = vrot.lane.b32.xlu0 %v1457, 64
        %v1761 = vpop.permute.xlu0 %1760
        %1762 = vrot.lane.b32.xlu0 %v1471, 64
        %v1763 = vpop.permute.xlu0 %1762
        %1764 = vrot.lane.b32.xlu0 %v1481, 64
        %v1765 = vpop.permute.xlu0 %1764
        %1766 = vrot.lane.b32.xlu0 %v1495, 64
        %v1767 = vpop.permute.xlu0 %1766
        %1768 = vrot.lane.b32.xlu0 %v1505, 64
        %v1769 = vpop.permute.xlu0 %1768
        %1770 = vrot.lane.b32.xlu0 %v1519, 64
        %v1771 = vpop.permute.xlu0 %1770
        %1772 = vrot.lane.b32.xlu0 %v1529, 64
        %v1773 = vpop.permute.xlu0 %1772
        %1774 = vrot.lane.b32.xlu0 %v1543, 64
        %v1775 = vpop.permute.xlu0 %1774
        %1776 = vrot.lane.b32.xlu0 %v1553, 64
        %v1777 = vpop.permute.xlu0 %1776
        %1778 = vrot.lane.b32.xlu0 %v1567, 64
        %v1779 = vpop.permute.xlu0 %1778
        %1780 = vrot.lane.b32.xlu0 %v1577, 64
        %v1781 = vpop.permute.xlu0 %1780
        %1782 = vrot.lane.b32.xlu0 %v1591, 64
        %v1783 = vpop.permute.xlu0 %1782
        %1784 = vrot.lane.b32.xlu0 %v1601, 64
        %v1785 = vpop.permute.xlu0 %1784
        %1786 = vrot.lane.b32.xlu0 %v1615, 64
        %v1787 = vpop.permute.xlu0 %1786
        %1788 = vrot.lane.b32.xlu0 %v1625, 64
        %v1789 = vpop.permute.xlu0 %1788
        %1790 = vrot.lane.b32.xlu0 %v1639, 64
        %v1791 = vpop.permute.xlu0 %1790
        %1792 = vrot.lane.b32.xlu0 %v1649, 64
        %v1793 = vpop.permute.xlu0 %1792
        %1794 = vrot.lane.b32.xlu0 %v1663, 64
        %v1795 = vpop.permute.xlu0 %1794
        %1796 = vrot.lane.b32.xlu0 %v1673, 64
        %v1797 = vpop.permute.xlu0 %1796
        %1798 = vrot.lane.b32.xlu0 %v1687, 64
        %v1799 = vpop.permute.xlu0 %1798
        %1800 = vrot.lane.b32.xlu0 %v1697, 64
        %v1801 = vpop.permute.xlu0 %1800
        %1802 = vrot.lane.b32.xlu0 %v1711, 64
        %v1803 = vpop.permute.xlu0 %1802
        %1804 = vrot.lane.b32.xlu0 %v1721, 64
        %v1805 = vpop.permute.xlu0 %1804
        %1806 = vrot.lane.b32.xlu0 %v1735, 64
        %v1807 = vpop.permute.xlu0 %1806
        %1808 = vrot.lane.b32.xlu0 %v1745, 64
        %v1809 = vpop.permute.xlu0 %1808
        %vm1842 = vcmask 1043968
        %1843 = vst.msk [vmem:[#allocation3] sm:$0xf] %vm1842, %v1747
        %1844 = vst.msk [vmem:[#allocation3 + $0x14] sm:$0xf] %vm1842, %v1749
        %1845 = vst.msk [vmem:[#allocation3 + $0x28] sm:$0xf] %vm1842, %v1751
        %1846 = vst.msk [vmem:[#allocation3 + $0x3c] sm:$0xf] %vm1842, %v1753
        %1847 = vst.msk [vmem:[#allocation3 + $0x50] sm:$0xf] %vm1842, %v1755
        %1848 = vst.msk [vmem:[#allocation3 + $0x64] sm:$0xf] %vm1842, %v1757
        %1849 = vst.msk [vmem:[#allocation3 + $0x78] sm:$0xf] %vm1842, %v1759
        %1850 = vst.msk [vmem:[#allocation3 + $0x8c] sm:$0xf] %vm1842, %v1761
        %1851 = vst.msk [vmem:[#allocation3 + $0xa0] sm:$0xf] %vm1842, %v1763
        %1852 = vst.msk [vmem:[#allocation3 + $0xb4] sm:$0xf] %vm1842, %v1765
        %1853 = vst.msk [vmem:[#allocation3 + $0xc8] sm:$0xf] %vm1842, %v1767
        %1854 = vst.msk [vmem:[#allocation3 + $0xdc] sm:$0xf] %vm1842, %v1769
        %1855 = vst.msk [vmem:[#allocation3 + $0xf0] sm:$0xf] %vm1842, %v1771
        %1856 = vst.msk [vmem:[#allocation3 + $0x104] sm:$0xf] %vm1842, %v1773
        %1857 = vst.msk [vmem:[#allocation3 + $0x118] sm:$0xf] %vm1842, %v1775
        %1858 = vst.msk [vmem:[#allocation3 + $0x12c] sm:$0xf] %vm1842, %v1777
        %1859 = vst.msk [vmem:[#allocation3 + $0x140] sm:$0xf] %vm1842, %v1779
        %1860 = vst.msk [vmem:[#allocation3 + $0x154] sm:$0xf] %vm1842, %v1781
        %1861 = vst.msk [vmem:[#allocation3 + $0x168] sm:$0xf] %vm1842, %v1783
        %1862 = vst.msk [vmem:[#allocation3 + $0x17c] sm:$0xf] %vm1842, %v1785
        %1863 = vst.msk [vmem:[#allocation3 + $0x190] sm:$0xf] %vm1842, %v1787
        %1864 = vst.msk [vmem:[#allocation3 + $0x1a4] sm:$0xf] %vm1842, %v1789
        %1865 = vst.msk [vmem:[#allocation3 + $0x1b8] sm:$0xf] %vm1842, %v1791
        %1866 = vst.msk [vmem:[#allocation3 + $0x1cc] sm:$0xf] %vm1842, %v1793
        %1867 = vst.msk [vmem:[#allocation3 + $0x1e0] sm:$0xf] %vm1842, %v1795
        %1868 = vst.msk [vmem:[#allocation3 + $0x1f4] sm:$0xf] %vm1842, %v1797
        %1869 = vst.msk [vmem:[#allocation3 + $0x208] sm:$0xf] %vm1842, %v1799
        %1870 = vst.msk [vmem:[#allocation3 + $0x21c] sm:$0xf] %vm1842, %v1801
        %1871 = vst.msk [vmem:[#allocation3 + $0x230] sm:$0xf] %vm1842, %v1803
        %1872 = vst.msk [vmem:[#allocation3 + $0x244] sm:$0xf] %vm1842, %v1805
        %1873 = vst.msk [vmem:[#allocation3 + $0x258] sm:$0xf] %vm1842, %v1807
        %1874 = vst.msk [vmem:[#allocation3 + $0x26c] sm:$0xf] %vm1842, %v1809
        %v1875 = vld [vmem:[#allocation2] sm:$0xe]
        %v1876 = vld [vmem:[#allocation2 + $0x4] sm:$0xf]
        %v1877 = vld [vmem:[#allocation2 + $0x8] sm:$0x1]
        %v1878 = vld [vmem:[#allocation2 + $0xc] sm:$0xe]
        %v1879 = vld [vmem:[#allocation2 + $0x10] sm:$0xf]
        %v1880 = vld [vmem:[#allocation2 + $0x14] sm:$0x1]
        %v1881 = vld [vmem:[#allocation2 + $0x18] sm:$0xe]
        %v1882 = vld [vmem:[#allocation2 + $0x1c] sm:$0xf]
        %v1883 = vld [vmem:[#allocation2 + $0x20] sm:$0x1]
        %v1884 = vld [vmem:[#allocation2 + $0x24] sm:$0xe]
        %v1885 = vld [vmem:[#allocation2 + $0x28] sm:$0xf]
        %v1886 = vld [vmem:[#allocation2 + $0x2c] sm:$0x1]
        %v1887 = vld [vmem:[#allocation2 + $0x30] sm:$0xe]
        %v1888 = vld [vmem:[#allocation2 + $0x34] sm:$0xf]
        %v1889 = vld [vmem:[#allocation2 + $0x38] sm:$0x1]
        %v1890 = vld [vmem:[#allocation2 + $0x3c] sm:$0xe]
        %v1891 = vld [vmem:[#allocation2 + $0x40] sm:$0xf]
        %v1892 = vld [vmem:[#allocation2 + $0x44] sm:$0x1]
        %v1893 = vld [vmem:[#allocation2 + $0x48] sm:$0xe]
        %v1894 = vld [vmem:[#allocation2 + $0x4c] sm:$0xf]
        %v1895 = vld [vmem:[#allocation2 + $0x50] sm:$0x1]
        %v1896 = vld [vmem:[#allocation2 + $0x54] sm:$0xe]
        %v1897 = vld [vmem:[#allocation2 + $0x58] sm:$0xf]
        %v1898 = vld [vmem:[#allocation2 + $0x5c] sm:$0x1]
        %v1899 = vld [vmem:[#allocation2 + $0x60] sm:$0xe]
        %v1900 = vld [vmem:[#allocation2 + $0x64] sm:$0xf]
        %v1901 = vld [vmem:[#allocation2 + $0x68] sm:$0x1]
        %v1902 = vld [vmem:[#allocation2 + $0x6c] sm:$0xe]
        %v1903 = vld [vmem:[#allocation2 + $0x70] sm:$0xf]
        %v1904 = vld [vmem:[#allocation2 + $0x74] sm:$0x1]
        %v1905 = vld [vmem:[#allocation2 + $0x78] sm:$0xe]
        %v1906 = vld [vmem:[#allocation2 + $0x7c] sm:$0xf]
        %v1907 = vld [vmem:[#allocation2 + $0x80] sm:$0x1]
        %v1908 = vld [vmem:[#allocation2 + $0x84] sm:$0xe]
        %v1909 = vld [vmem:[#allocation2 + $0x88] sm:$0xf]
        %v1910 = vld [vmem:[#allocation2 + $0x8c] sm:$0x1]
        %v1911 = vld [vmem:[#allocation2 + $0x90] sm:$0xe]
        %v1912 = vld [vmem:[#allocation2 + $0x94] sm:$0xf]
        %v1913 = vld [vmem:[#allocation2 + $0x98] sm:$0x1]
        %v1914 = vld [vmem:[#allocation2 + $0x9c] sm:$0xe]
        %v1915 = vld [vmem:[#allocation2 + $0xa0] sm:$0xf]
        %v1916 = vld [vmem:[#allocation2 + $0xa4] sm:$0x1]
        %v1917 = vld [vmem:[#allocation2 + $0xa8] sm:$0xe]
        %v1918 = vld [vmem:[#allocation2 + $0xac] sm:$0xf]
        %v1919 = vld [vmem:[#allocation2 + $0xb0] sm:$0x1]
        %v1920 = vld [vmem:[#allocation2 + $0xb4] sm:$0xe]
        %v1921 = vld [vmem:[#allocation2 + $0xb8] sm:$0xf]
        %v1922 = vld [vmem:[#allocation2 + $0xbc] sm:$0x1]
        %vm1971 = vcmask 1042432
        %vm1972 = vcmask 1046532
        %vm1973 = vmor %vm1971, %vm1972
        %v1974 = vrot.slane %v1875, 5
        %v1975 = vrot.slane %v1974, 4
        %v1976 = vrot.slane %v1876, 5
        %v1977 = vsel %vm1973, %v1975, %v1976
        %v1978 = vrot.slane %v1976, 4
        %v1979 = vrot.slane %v1877, 5
        %v1980 = vsel %vm1973, %v1978, %v1979
        %v1981 = vrot.slane %v1878, 5
        %v1982 = vrot.slane %v1981, 4
        %v1983 = vrot.slane %v1879, 5
        %v1984 = vsel %vm1973, %v1982, %v1983
        %v1985 = vrot.slane %v1983, 4
        %v1986 = vrot.slane %v1880, 5
        %v1987 = vsel %vm1973, %v1985, %v1986
        %v1988 = vrot.slane %v1881, 5
        %v1989 = vrot.slane %v1988, 4
        %v1990 = vrot.slane %v1882, 5
        %v1991 = vsel %vm1973, %v1989, %v1990
        %v1992 = vrot.slane %v1990, 4
        %v1993 = vrot.slane %v1883, 5
        %v1994 = vsel %vm1973, %v1992, %v1993
        %v1995 = vrot.slane %v1884, 5
        %v1996 = vrot.slane %v1995, 4
        %v1997 = vrot.slane %v1885, 5
        %v1998 = vsel %vm1973, %v1996, %v1997
        %v1999 = vrot.slane %v1997, 4
        %v2000 = vrot.slane %v1886, 5
        %v2001 = vsel %vm1973, %v1999, %v2000
        %v2002 = vrot.slane %v1887, 5
        %v2003 = vrot.slane %v2002, 4
        %v2004 = vrot.slane %v1888, 5
        %v2005 = vsel %vm1973, %v2003, %v2004
        %v2006 = vrot.slane %v2004, 4
        %v2007 = vrot.slane %v1889, 5
        %v2008 = vsel %vm1973, %v2006, %v2007
        %v2009 = vrot.slane %v1890, 5
        %v2010 = vrot.slane %v2009, 4
        %v2011 = vrot.slane %v1891, 5
        %v2012 = vsel %vm1973, %v2010, %v2011
        %v2013 = vrot.slane %v2011, 4
        %v2014 = vrot.slane %v1892, 5
        %v2015 = vsel %vm1973, %v2013, %v2014
        %v2016 = vrot.slane %v1893, 5
        %v2017 = vrot.slane %v2016, 4
        %v2018 = vrot.slane %v1894, 5
        %v2019 = vsel %vm1973, %v2017, %v2018
        %v2020 = vrot.slane %v2018, 4
        %v2021 = vrot.slane %v1895, 5
        %v2022 = vsel %vm1973, %v2020, %v2021
        %v2023 = vrot.slane %v1896, 5
        %v2024 = vrot.slane %v2023, 4
        %v2025 = vrot.slane %v1897, 5
        %v2026 = vsel %vm1973, %v2024, %v2025
        %v2027 = vrot.slane %v2025, 4
        %v2028 = vrot.slane %v1898, 5
        %v2029 = vsel %vm1973, %v2027, %v2028
        %v2030 = vrot.slane %v1899, 5
        %v2031 = vrot.slane %v2030, 4
        %v2032 = vrot.slane %v1900, 5
        %v2033 = vsel %vm1973, %v2031, %v2032
        %v2034 = vrot.slane %v2032, 4
        %v2035 = vrot.slane %v1901, 5
        %v2036 = vsel %vm1973, %v2034, %v2035
        %v2037 = vrot.slane %v1902, 5
        %v2038 = vrot.slane %v2037, 4
        %v2039 = vrot.slane %v1903, 5
        %v2040 = vsel %vm1973, %v2038, %v2039
        %v2041 = vrot.slane %v2039, 4
        %v2042 = vrot.slane %v1904, 5
        %v2043 = vsel %vm1973, %v2041, %v2042
        %v2044 = vrot.slane %v1905, 5
        %v2045 = vrot.slane %v2044, 4
        %v2046 = vrot.slane %v1906, 5
        %v2047 = vsel %vm1973, %v2045, %v2046
        %v2048 = vrot.slane %v2046, 4
        %v2049 = vrot.slane %v1907, 5
        %v2050 = vsel %vm1973, %v2048, %v2049
        %v2051 = vrot.slane %v1908, 5
        %v2052 = vrot.slane %v2051, 4
        %v2053 = vrot.slane %v1909, 5
        %v2054 = vsel %vm1973, %v2052, %v2053
        %v2055 = vrot.slane %v2053, 4
        %v2056 = vrot.slane %v1910, 5
        %v2057 = vsel %vm1973, %v2055, %v2056
        %v2058 = vrot.slane %v1911, 5
        %v2059 = vrot.slane %v2058, 4
        %v2060 = vrot.slane %v1912, 5
        %v2061 = vsel %vm1973, %v2059, %v2060
        %v2062 = vrot.slane %v2060, 4
        %v2063 = vrot.slane %v1913, 5
        %v2064 = vsel %vm1973, %v2062, %v2063
        %v2065 = vrot.slane %v1914, 5
        %v2066 = vrot.slane %v2065, 4
        %v2067 = vrot.slane %v1915, 5
        %v2068 = vsel %vm1973, %v2066, %v2067
        %v2069 = vrot.slane %v2067, 4
        %v2070 = vrot.slane %v1916, 5
        %v2071 = vsel %vm1973, %v2069, %v2070
        %v2072 = vrot.slane %v1917, 5
        %v2073 = vrot.slane %v2072, 4
        %v2074 = vrot.slane %v1918, 5
        %v2075 = vsel %vm1973, %v2073, %v2074
        %v2076 = vrot.slane %v2074, 4
        %v2077 = vrot.slane %v1919, 5
        %v2078 = vsel %vm1973, %v2076, %v2077
        %v2079 = vrot.slane %v1920, 5
        %v2080 = vrot.slane %v2079, 4
        %v2081 = vrot.slane %v1921, 5
        %v2082 = vsel %vm1973, %v2080, %v2081
        %v2083 = vrot.slane %v2081, 4
        %v2084 = vrot.slane %v1922, 5
        %v2085 = vsel %vm1973, %v2083, %v2084
        %2118 = vst.msk [vmem:[#allocation3 + $0x4] sm:$0xf] %vm654, %v1977
        %2119 = vst.msk [vmem:[#allocation3 + $0x18] sm:$0xf] %vm654, %v1980
        %2120 = vst.msk [vmem:[#allocation3 + $0x2c] sm:$0xf] %vm654, %v1984
        %2121 = vst.msk [vmem:[#allocation3 + $0x40] sm:$0xf] %vm654, %v1987
        %2122 = vst.msk [vmem:[#allocation3 + $0x54] sm:$0xf] %vm654, %v1991
        %2123 = vst.msk [vmem:[#allocation3 + $0x68] sm:$0xf] %vm654, %v1994
        %2124 = vst.msk [vmem:[#allocation3 + $0x7c] sm:$0xf] %vm654, %v1998
        %2125 = vst.msk [vmem:[#allocation3 + $0x90] sm:$0xf] %vm654, %v2001
        %2126 = vst.msk [vmem:[#allocation3 + $0xa4] sm:$0xf] %vm654, %v2005
        %2127 = vst.msk [vmem:[#allocation3 + $0xb8] sm:$0xf] %vm654, %v2008
        %2128 = vst.msk [vmem:[#allocation3 + $0xcc] sm:$0xf] %vm654, %v2012
        %2129 = vst.msk [vmem:[#allocation3 + $0xe0] sm:$0xf] %vm654, %v2015
        %2130 = vst.msk [vmem:[#allocation3 + $0xf4] sm:$0xf] %vm654, %v2019
        %2131 = vst.msk [vmem:[#allocation3 + $0x108] sm:$0xf] %vm654, %v2022
        %2132 = vst.msk [vmem:[#allocation3 + $0x11c] sm:$0xf] %vm654, %v2026
        %2133 = vst.msk [vmem:[#allocation3 + $0x130] sm:$0xf] %vm654, %v2029
        %2134 = vst.msk [vmem:[#allocation3 + $0x144] sm:$0xf] %vm654, %v2033
        %2135 = vst.msk [vmem:[#allocation3 + $0x158] sm:$0xf] %vm654, %v2036
        %2136 = vst.msk [vmem:[#allocation3 + $0x16c] sm:$0xf] %vm654, %v2040
        %2137 = vst.msk [vmem:[#allocation3 + $0x180] sm:$0xf] %vm654, %v2043
        %2138 = vst.msk [vmem:[#allocation3 + $0x194] sm:$0xf] %vm654, %v2047
        %2139 = vst.msk [vmem:[#allocation3 + $0x1a8] sm:$0xf] %vm654, %v2050
        %2140 = vst.msk [vmem:[#allocation3 + $0x1bc] sm:$0xf] %vm654, %v2054
        %2141 = vst.msk [vmem:[#allocation3 + $0x1d0] sm:$0xf] %vm654, %v2057
        %2142 = vst.msk [vmem:[#allocation3 + $0x1e4] sm:$0xf] %vm654, %v2061
        %2143 = vst.msk [vmem:[#allocation3 + $0x1f8] sm:$0xf] %vm654, %v2064
        %2144 = vst.msk [vmem:[#allocation3 + $0x20c] sm:$0xf] %vm654, %v2068
        %2145 = vst.msk [vmem:[#allocation3 + $0x220] sm:$0xf] %vm654, %v2071
        %2146 = vst.msk [vmem:[#allocation3 + $0x234] sm:$0xf] %vm654, %v2075
        %2147 = vst.msk [vmem:[#allocation3 + $0x248] sm:$0xf] %vm654, %v2078
        %2148 = vst.msk [vmem:[#allocation3 + $0x25c] sm:$0xf] %vm654, %v2082
        %2149 = vst.msk [vmem:[#allocation3 + $0x270] sm:$0xf] %vm654, %v2085
        %v2150 = vld [vmem:[%s1129] sm:$0xf]
        %v2151 = vld [vmem:[%s1129 + $0x4] sm:$0xf]
        %v2152 = vld [vmem:[%s1129 + $0xc] sm:$0xf]
        %v2153 = vld [vmem:[%s1129 + $0x10] sm:$0xf]
        %v2154 = vld [vmem:[%s1129 + $0x18] sm:$0xf]
        %v2155 = vld [vmem:[%s1129 + $0x1c] sm:$0xf]
        %v2156 = vld [vmem:[%s1129 + $0x24] sm:$0xf]
        %v2157 = vld [vmem:[%s1129 + $0x28] sm:$0xf]
        %v2158 = vld [vmem:[%s1129 + $0x30] sm:$0xf]
        %v2159 = vld [vmem:[%s1129 + $0x34] sm:$0xf]
        %v2160 = vld [vmem:[%s1129 + $0x3c] sm:$0xf]
        %v2161 = vld [vmem:[%s1129 + $0x40] sm:$0xf]
        %v2162 = vld [vmem:[%s1129 + $0x48] sm:$0xf]
        %v2163 = vld [vmem:[%s1129 + $0x4c] sm:$0xf]
        %v2164 = vld [vmem:[%s1129 + $0x54] sm:$0xf]
        %v2165 = vld [vmem:[%s1129 + $0x58] sm:$0xf]
        %v2166 = vld [vmem:[%s1129 + $0x60] sm:$0xf]
        %v2167 = vld [vmem:[%s1129 + $0x64] sm:$0xf]
        %v2168 = vld [vmem:[%s1129 + $0x6c] sm:$0xf]
        %v2169 = vld [vmem:[%s1129 + $0x70] sm:$0xf]
        %v2170 = vld [vmem:[%s1129 + $0x78] sm:$0xf]
        %v2171 = vld [vmem:[%s1129 + $0x7c] sm:$0xf]
        %v2172 = vld [vmem:[%s1129 + $0x84] sm:$0xf]
        %v2173 = vld [vmem:[%s1129 + $0x88] sm:$0xf]
        %v2174 = vld [vmem:[%s1129 + $0x90] sm:$0xf]
        %v2175 = vld [vmem:[%s1129 + $0x94] sm:$0xf]
        %v2176 = vld [vmem:[%s1129 + $0x9c] sm:$0xf]
        %v2177 = vld [vmem:[%s1129 + $0xa0] sm:$0xf]
        %v2178 = vld [vmem:[%s1129 + $0xa8] sm:$0xf]
        %v2179 = vld [vmem:[%s1129 + $0xac] sm:$0xf]
        %v2180 = vld [vmem:[%s1129 + $0xb4] sm:$0xf]
        %v2181 = vld [vmem:[%s1129 + $0xb8] sm:$0xf]
        %2214 = vrot.lane.b32.xlu0 %v2150, 64
        %v2215 = vpop.permute.xlu0 %2214
        %2216 = vrot.lane.b32.xlu0 %v2151, 64
        %v2217 = vpop.permute.xlu0 %2216
        %2218 = vrot.lane.b32.xlu0 %v2152, 64
        %v2219 = vpop.permute.xlu0 %2218
        %2220 = vrot.lane.b32.xlu0 %v2153, 64
        %v2221 = vpop.permute.xlu0 %2220
        %2222 = vrot.lane.b32.xlu0 %v2154, 64
        %v2223 = vpop.permute.xlu0 %2222
        %2224 = vrot.lane.b32.xlu0 %v2155, 64
        %v2225 = vpop.permute.xlu0 %2224
        %2226 = vrot.lane.b32.xlu0 %v2156, 64
        %v2227 = vpop.permute.xlu0 %2226
        %2228 = vrot.lane.b32.xlu0 %v2157, 64
        %v2229 = vpop.permute.xlu0 %2228
        %2230 = vrot.lane.b32.xlu0 %v2158, 64
        %v2231 = vpop.permute.xlu0 %2230
        %2232 = vrot.lane.b32.xlu0 %v2159, 64
        %v2233 = vpop.permute.xlu0 %2232
        %2234 = vrot.lane.b32.xlu0 %v2160, 64
        %v2235 = vpop.permute.xlu0 %2234
        %2236 = vrot.lane.b32.xlu0 %v2161, 64
        %v2237 = vpop.permute.xlu0 %2236
        %2238 = vrot.lane.b32.xlu0 %v2162, 64
        %v2239 = vpop.permute.xlu0 %2238
        %2240 = vrot.lane.b32.xlu0 %v2163, 64
        %v2241 = vpop.permute.xlu0 %2240
        %2242 = vrot.lane.b32.xlu0 %v2164, 64
        %v2243 = vpop.permute.xlu0 %2242
        %2244 = vrot.lane.b32.xlu0 %v2165, 64
        %v2245 = vpop.permute.xlu0 %2244
        %2246 = vrot.lane.b32.xlu0 %v2166, 64
        %v2247 = vpop.permute.xlu0 %2246
        %2248 = vrot.lane.b32.xlu0 %v2167, 64
        %v2249 = vpop.permute.xlu0 %2248
        %2250 = vrot.lane.b32.xlu0 %v2168, 64
        %v2251 = vpop.permute.xlu0 %2250
        %2252 = vrot.lane.b32.xlu0 %v2169, 64
        %v2253 = vpop.permute.xlu0 %2252
        %2254 = vrot.lane.b32.xlu0 %v2170, 64
        %v2255 = vpop.permute.xlu0 %2254
        %2256 = vrot.lane.b32.xlu0 %v2171, 64
        %v2257 = vpop.permute.xlu0 %2256
        %2258 = vrot.lane.b32.xlu0 %v2172, 64
        %v2259 = vpop.permute.xlu0 %2258
        %2260 = vrot.lane.b32.xlu0 %v2173, 64
        %v2261 = vpop.permute.xlu0 %2260
        %2262 = vrot.lane.b32.xlu0 %v2174, 64
        %v2263 = vpop.permute.xlu0 %2262
        %2264 = vrot.lane.b32.xlu0 %v2175, 64
        %v2265 = vpop.permute.xlu0 %2264
        %2266 = vrot.lane.b32.xlu0 %v2176, 64
        %v2267 = vpop.permute.xlu0 %2266
        %2268 = vrot.lane.b32.xlu0 %v2177, 64
        %v2269 = vpop.permute.xlu0 %2268
        %2270 = vrot.lane.b32.xlu0 %v2178, 64
        %v2271 = vpop.permute.xlu0 %2270
        %2272 = vrot.lane.b32.xlu0 %v2179, 64
        %v2273 = vpop.permute.xlu0 %2272
        %2274 = vrot.lane.b32.xlu0 %v2180, 64
        %v2275 = vpop.permute.xlu0 %2274
        %2276 = vrot.lane.b32.xlu0 %v2181, 64
        %v2277 = vpop.permute.xlu0 %2276
        %2310 = vst.msk [vmem:[#allocation3 + $0x4] sm:$0xf] %vm1842, %v2215
        %2311 = vst.msk [vmem:[#allocation3 + $0x18] sm:$0xf] %vm1842, %v2217
        %2312 = vst.msk [vmem:[#allocation3 + $0x2c] sm:$0xf] %vm1842, %v2219
        %2313 = vst.msk [vmem:[#allocation3 + $0x40] sm:$0xf] %vm1842, %v2221
        %2314 = vst.msk [vmem:[#allocation3 + $0x54] sm:$0xf] %vm1842, %v2223
        %2315 = vst.msk [vmem:[#allocation3 + $0x68] sm:$0xf] %vm1842, %v2225
        %2316 = vst.msk [vmem:[#allocation3 + $0x7c] sm:$0xf] %vm1842, %v2227
        %2317 = vst.msk [vmem:[#allocation3 + $0x90] sm:$0xf] %vm1842, %v2229
        %2318 = vst.msk [vmem:[#allocation3 + $0xa4] sm:$0xf] %vm1842, %v2231
        %2319 = vst.msk [vmem:[#allocation3 + $0xb8] sm:$0xf] %vm1842, %v2233
        %2320 = vst.msk [vmem:[#allocation3 + $0xcc] sm:$0xf] %vm1842, %v2235
        %2321 = vst.msk [vmem:[#allocation3 + $0xe0] sm:$0xf] %vm1842, %v2237
        %2322 = vst.msk [vmem:[#allocation3 + $0xf4] sm:$0xf] %vm1842, %v2239
        %2323 = vst.msk [vmem:[#allocation3 + $0x108] sm:$0xf] %vm1842, %v2241
        %2324 = vst.msk [vmem:[#allocation3 + $0x11c] sm:$0xf] %vm1842, %v2243
        %2325 = vst.msk [vmem:[#allocation3 + $0x130] sm:$0xf] %vm1842, %v2245
        %2326 = vst.msk [vmem:[#allocation3 + $0x144] sm:$0xf] %vm1842, %v2247
        %2327 = vst.msk [vmem:[#allocation3 + $0x158] sm:$0xf] %vm1842, %v2249
        %2328 = vst.msk [vmem:[#allocation3 + $0x16c] sm:$0xf] %vm1842, %v2251
        %2329 = vst.msk [vmem:[#allocation3 + $0x180] sm:$0xf] %vm1842, %v2253
        %2330 = vst.msk [vmem:[#allocation3 + $0x194] sm:$0xf] %vm1842, %v2255
        %2331 = vst.msk [vmem:[#allocation3 + $0x1a8] sm:$0xf] %vm1842, %v2257
        %2332 = vst.msk [vmem:[#allocation3 + $0x1bc] sm:$0xf] %vm1842, %v2259
        %2333 = vst.msk [vmem:[#allocation3 + $0x1d0] sm:$0xf] %vm1842, %v2261
        %2334 = vst.msk [vmem:[#allocation3 + $0x1e4] sm:$0xf] %vm1842, %v2263
        %2335 = vst.msk [vmem:[#allocation3 + $0x1f8] sm:$0xf] %vm1842, %v2265
        %2336 = vst.msk [vmem:[#allocation3 + $0x20c] sm:$0xf] %vm1842, %v2267
        %2337 = vst.msk [vmem:[#allocation3 + $0x220] sm:$0xf] %vm1842, %v2269
        %2338 = vst.msk [vmem:[#allocation3 + $0x234] sm:$0xf] %vm1842, %v2271
        %2339 = vst.msk [vmem:[#allocation3 + $0x248] sm:$0xf] %vm1842, %v2273
        %2340 = vst.msk [vmem:[#allocation3 + $0x25c] sm:$0xf] %vm1842, %v2275
        %2341 = vst.msk [vmem:[#allocation3 + $0x270] sm:$0xf] %vm1842, %v2277
        %v2342 = vld [vmem:[%s1129] sm:$0xf]
        %v2343 = vld [vmem:[%s1129 + $0x4] sm:$0xf]
        %v2344 = vld [vmem:[%s1129 + $0x8] sm:$0x1]
        %v2345 = vld [vmem:[%s1129 + $0xc] sm:$0xf]
        %v2346 = vld [vmem:[%s1129 + $0x10] sm:$0xf]
        %v2347 = vld [vmem:[%s1129 + $0x14] sm:$0x1]
        %v2348 = vld [vmem:[%s1129 + $0x18] sm:$0xf]
        %v2349 = vld [vmem:[%s1129 + $0x1c] sm:$0xf]
        %v2350 = vld [vmem:[%s1129 + $0x20] sm:$0x1]
        %v2351 = vld [vmem:[%s1129 + $0x24] sm:$0xf]
        %v2352 = vld [vmem:[%s1129 + $0x28] sm:$0xf]
        %v2353 = vld [vmem:[%s1129 + $0x2c] sm:$0x1]
        %v2354 = vld [vmem:[%s1129 + $0x30] sm:$0xf]
        %v2355 = vld [vmem:[%s1129 + $0x34] sm:$0xf]
        %v2356 = vld [vmem:[%s1129 + $0x38] sm:$0x1]
        %v2357 = vld [vmem:[%s1129 + $0x3c] sm:$0xf]
        %v2358 = vld [vmem:[%s1129 + $0x40] sm:$0xf]
        %v2359 = vld [vmem:[%s1129 + $0x44] sm:$0x1]
        %v2360 = vld [vmem:[%s1129 + $0x48] sm:$0xf]
        %v2361 = vld [vmem:[%s1129 + $0x4c] sm:$0xf]
        %v2362 = vld [vmem:[%s1129 + $0x50] sm:$0x1]
        %v2363 = vld [vmem:[%s1129 + $0x54] sm:$0xf]
        %v2364 = vld [vmem:[%s1129 + $0x58] sm:$0xf]
        %v2365 = vld [vmem:[%s1129 + $0x5c] sm:$0x1]
        %v2366 = vld [vmem:[%s1129 + $0x60] sm:$0xf]
        %v2367 = vld [vmem:[%s1129 + $0x64] sm:$0xf]
        %v2368 = vld [vmem:[%s1129 + $0x68] sm:$0x1]
        %v2369 = vld [vmem:[%s1129 + $0x6c] sm:$0xf]
        %v2370 = vld [vmem:[%s1129 + $0x70] sm:$0xf]
        %v2371 = vld [vmem:[%s1129 + $0x74] sm:$0x1]
        %v2372 = vld [vmem:[%s1129 + $0x78] sm:$0xf]
        %v2373 = vld [vmem:[%s1129 + $0x7c] sm:$0xf]
        %v2374 = vld [vmem:[%s1129 + $0x80] sm:$0x1]
        %v2375 = vld [vmem:[%s1129 + $0x84] sm:$0xf]
        %v2376 = vld [vmem:[%s1129 + $0x88] sm:$0xf]
        %v2377 = vld [vmem:[%s1129 + $0x8c] sm:$0x1]
        %v2378 = vld [vmem:[%s1129 + $0x90] sm:$0xf]
        %v2379 = vld [vmem:[%s1129 + $0x94] sm:$0xf]
        %v2380 = vld [vmem:[%s1129 + $0x98] sm:$0x1]
        %v2381 = vld [vmem:[%s1129 + $0x9c] sm:$0xf]
        %v2382 = vld [vmem:[%s1129 + $0xa0] sm:$0xf]
        %v2383 = vld [vmem:[%s1129 + $0xa4] sm:$0x1]
        %v2384 = vld [vmem:[%s1129 + $0xa8] sm:$0xf]
        %v2385 = vld [vmem:[%s1129 + $0xac] sm:$0xf]
        %v2386 = vld [vmem:[%s1129 + $0xb0] sm:$0x1]
        %v2387 = vld [vmem:[%s1129 + $0xb4] sm:$0xf]
        %v2388 = vld [vmem:[%s1129 + $0xb8] sm:$0xf]
        %v2389 = vld [vmem:[%s1129 + $0xbc] sm:$0x1]
        %v2391 = vshrl.u32 %v2342, 16
        %v2393 = vrot.slane %v2391, 4
        %v2394 = vshll.u32 %v2342, 16
        %v2396 = vrot.slane %v2394, 5
        %v2397 = vor.u32 %v2393, %v2396
        %v2398 = vrot.slane %v2397, 4
        %v2400 = vshll.u32 %v2343, 16
        %v2402 = vrot.slane %v2400, 5
        %v2403 = vsel %vm1361, %v2398, %v2402
        %v2404 = vshrl.u32 %v2343, 16
        %v2406 = vrot.slane %v2404, 4
        %v2407 = vor.u32 %v2406, %v2402
        %v2408 = vrot.slane %v2407, 4
        %v2410 = vshll.u32 %v2344, 16
        %v2412 = vrot.slane %v2410, 5
        %v2413 = vsel %vm1361, %v2408, %v2412
        %v2415 = vshrl.u32 %v2345, 16
        %v2417 = vrot.slane %v2415, 4
        %v2418 = vshll.u32 %v2345, 16
        %v2420 = vrot.slane %v2418, 5
        %v2421 = vor.u32 %v2417, %v2420
        %v2422 = vrot.slane %v2421, 4
        %v2424 = vshll.u32 %v2346, 16
        %v2426 = vrot.slane %v2424, 5
        %v2427 = vsel %vm1361, %v2422, %v2426
        %v2428 = vshrl.u32 %v2346, 16
        %v2430 = vrot.slane %v2428, 4
        %v2431 = vor.u32 %v2430, %v2426
        %v2432 = vrot.slane %v2431, 4
        %v2434 = vshll.u32 %v2347, 16
        %v2436 = vrot.slane %v2434, 5
        %v2437 = vsel %vm1361, %v2432, %v2436
        %v2439 = vshrl.u32 %v2348, 16
        %v2441 = vrot.slane %v2439, 4
        %v2442 = vshll.u32 %v2348, 16
        %v2444 = vrot.slane %v2442, 5
        %v2445 = vor.u32 %v2441, %v2444
        %v2446 = vrot.slane %v2445, 4
        %v2448 = vshll.u32 %v2349, 16
        %v2450 = vrot.slane %v2448, 5
        %v2451 = vsel %vm1361, %v2446, %v2450
        %v2452 = vshrl.u32 %v2349, 16
        %v2454 = vrot.slane %v2452, 4
        %v2455 = vor.u32 %v2454, %v2450
        %v2456 = vrot.slane %v2455, 4
        %v2458 = vshll.u32 %v2350, 16
        %v2460 = vrot.slane %v2458, 5
        %v2461 = vsel %vm1361, %v2456, %v2460
        %v2463 = vshrl.u32 %v2351, 16
        %v2465 = vrot.slane %v2463, 4
        %v2466 = vshll.u32 %v2351, 16
        %v2468 = vrot.slane %v2466, 5
        %v2469 = vor.u32 %v2465, %v2468
        %v2470 = vrot.slane %v2469, 4
        %v2472 = vshll.u32 %v2352, 16
        %v2474 = vrot.slane %v2472, 5
        %v2475 = vsel %vm1361, %v2470, %v2474
        %v2476 = vshrl.u32 %v2352, 16
        %v2478 = vrot.slane %v2476, 4
        %v2479 = vor.u32 %v2478, %v2474
        %v2480 = vrot.slane %v2479, 4
        %v2482 = vshll.u32 %v2353, 16
        %v2484 = vrot.slane %v2482, 5
        %v2485 = vsel %vm1361, %v2480, %v2484
        %v2487 = vshrl.u32 %v2354, 16
        %v2489 = vrot.slane %v2487, 4
        %v2490 = vshll.u32 %v2354, 16
        %v2492 = vrot.slane %v2490, 5
        %v2493 = vor.u32 %v2489, %v2492
        %v2494 = vrot.slane %v2493, 4
        %v2496 = vshll.u32 %v2355, 16
        %v2498 = vrot.slane %v2496, 5
        %v2499 = vsel %vm1361, %v2494, %v2498
        %v2500 = vshrl.u32 %v2355, 16
        %v2502 = vrot.slane %v2500, 4
        %v2503 = vor.u32 %v2502, %v2498
        %v2504 = vrot.slane %v2503, 4
        %v2506 = vshll.u32 %v2356, 16
        %v2508 = vrot.slane %v2506, 5
        %v2509 = vsel %vm1361, %v2504, %v2508
        %v2511 = vshrl.u32 %v2357, 16
        %v2513 = vrot.slane %v2511, 4
        %v2514 = vshll.u32 %v2357, 16
        %v2516 = vrot.slane %v2514, 5
        %v2517 = vor.u32 %v2513, %v2516
        %v2518 = vrot.slane %v2517, 4
        %v2520 = vshll.u32 %v2358, 16
        %v2522 = vrot.slane %v2520, 5
        %v2523 = vsel %vm1361, %v2518, %v2522
        %v2524 = vshrl.u32 %v2358, 16
        %v2526 = vrot.slane %v2524, 4
        %v2527 = vor.u32 %v2526, %v2522
        %v2528 = vrot.slane %v2527, 4
        %v2530 = vshll.u32 %v2359, 16
        %v2532 = vrot.slane %v2530, 5
        %v2533 = vsel %vm1361, %v2528, %v2532
        %v2535 = vshrl.u32 %v2360, 16
        %v2537 = vrot.slane %v2535, 4
        %v2538 = vshll.u32 %v2360, 16
        %v2540 = vrot.slane %v2538, 5
        %v2541 = vor.u32 %v2537, %v2540
        %v2542 = vrot.slane %v2541, 4
        %v2544 = vshll.u32 %v2361, 16
        %v2546 = vrot.slane %v2544, 5
        %v2547 = vsel %vm1361, %v2542, %v2546
        %v2548 = vshrl.u32 %v2361, 16
        %v2550 = vrot.slane %v2548, 4
        %v2551 = vor.u32 %v2550, %v2546
        %v2552 = vrot.slane %v2551, 4
        %v2554 = vshll.u32 %v2362, 16
        %v2556 = vrot.slane %v2554, 5
        %v2557 = vsel %vm1361, %v2552, %v2556
        %v2559 = vshrl.u32 %v2363, 16
        %v2561 = vrot.slane %v2559, 4
        %v2562 = vshll.u32 %v2363, 16
        %v2564 = vrot.slane %v2562, 5
        %v2565 = vor.u32 %v2561, %v2564
        %v2566 = vrot.slane %v2565, 4
        %v2568 = vshll.u32 %v2364, 16
        %v2570 = vrot.slane %v2568, 5
        %v2571 = vsel %vm1361, %v2566, %v2570
        %v2572 = vshrl.u32 %v2364, 16
        %v2574 = vrot.slane %v2572, 4
        %v2575 = vor.u32 %v2574, %v2570
        %v2576 = vrot.slane %v2575, 4
        %v2578 = vshll.u32 %v2365, 16
        %v2580 = vrot.slane %v2578, 5
        %v2581 = vsel %vm1361, %v2576, %v2580
        %v2583 = vshrl.u32 %v2366, 16
        %v2585 = vrot.slane %v2583, 4
        %v2586 = vshll.u32 %v2366, 16
        %v2588 = vrot.slane %v2586, 5
        %v2589 = vor.u32 %v2585, %v2588
        %v2590 = vrot.slane %v2589, 4
        %v2592 = vshll.u32 %v2367, 16
        %v2594 = vrot.slane %v2592, 5
        %v2595 = vsel %vm1361, %v2590, %v2594
        %v2596 = vshrl.u32 %v2367, 16
        %v2598 = vrot.slane %v2596, 4
        %v2599 = vor.u32 %v2598, %v2594
        %v2600 = vrot.slane %v2599, 4
        %v2602 = vshll.u32 %v2368, 16
        %v2604 = vrot.slane %v2602, 5
        %v2605 = vsel %vm1361, %v2600, %v2604
        %v2607 = vshrl.u32 %v2369, 16
        %v2609 = vrot.slane %v2607, 4
        %v2610 = vshll.u32 %v2369, 16
        %v2612 = vrot.slane %v2610, 5
        %v2613 = vor.u32 %v2609, %v2612
        %v2614 = vrot.slane %v2613, 4
        %v2616 = vshll.u32 %v2370, 16
        %v2618 = vrot.slane %v2616, 5
        %v2619 = vsel %vm1361, %v2614, %v2618
        %v2620 = vshrl.u32 %v2370, 16
        %v2622 = vrot.slane %v2620, 4
        %v2623 = vor.u32 %v2622, %v2618
        %v2624 = vrot.slane %v2623, 4
        %v2626 = vshll.u32 %v2371, 16
        %v2628 = vrot.slane %v2626, 5
        %v2629 = vsel %vm1361, %v2624, %v2628
        %v2631 = vshrl.u32 %v2372, 16
        %v2633 = vrot.slane %v2631, 4
        %v2634 = vshll.u32 %v2372, 16
        %v2636 = vrot.slane %v2634, 5
        %v2637 = vor.u32 %v2633, %v2636
        %v2638 = vrot.slane %v2637, 4
        %v2640 = vshll.u32 %v2373, 16
        %v2642 = vrot.slane %v2640, 5
        %v2643 = vsel %vm1361, %v2638, %v2642
        %v2644 = vshrl.u32 %v2373, 16
        %v2646 = vrot.slane %v2644, 4
        %v2647 = vor.u32 %v2646, %v2642
        %v2648 = vrot.slane %v2647, 4
        %v2650 = vshll.u32 %v2374, 16
        %v2652 = vrot.slane %v2650, 5
        %v2653 = vsel %vm1361, %v2648, %v2652
        %v2655 = vshrl.u32 %v2375, 16
        %v2657 = vrot.slane %v2655, 4
        %v2658 = vshll.u32 %v2375, 16
        %v2660 = vrot.slane %v2658, 5
        %v2661 = vor.u32 %v2657, %v2660
        %v2662 = vrot.slane %v2661, 4
        %v2664 = vshll.u32 %v2376, 16
        %v2666 = vrot.slane %v2664, 5
        %v2667 = vsel %vm1361, %v2662, %v2666
        %v2668 = vshrl.u32 %v2376, 16
        %v2670 = vrot.slane %v2668, 4
        %v2671 = vor.u32 %v2670, %v2666
        %v2672 = vrot.slane %v2671, 4
        %v2674 = vshll.u32 %v2377, 16
        %v2676 = vrot.slane %v2674, 5
        %v2677 = vsel %vm1361, %v2672, %v2676
        %v2679 = vshrl.u32 %v2378, 16
        %v2681 = vrot.slane %v2679, 4
        %v2682 = vshll.u32 %v2378, 16
        %v2684 = vrot.slane %v2682, 5
        %v2685 = vor.u32 %v2681, %v2684
        %v2686 = vrot.slane %v2685, 4
        %v2688 = vshll.u32 %v2379, 16
        %v2690 = vrot.slane %v2688, 5
        %v2691 = vsel %vm1361, %v2686, %v2690
        %v2692 = vshrl.u32 %v2379, 16
        %v2694 = vrot.slane %v2692, 4
        %v2695 = vor.u32 %v2694, %v2690
        %v2696 = vrot.slane %v2695, 4
        %v2698 = vshll.u32 %v2380, 16
        %v2700 = vrot.slane %v2698, 5
        %v2701 = vsel %vm1361, %v2696, %v2700
        %v2703 = vshrl.u32 %v2381, 16
        %v2705 = vrot.slane %v2703, 4
        %v2706 = vshll.u32 %v2381, 16
        %v2708 = vrot.slane %v2706, 5
        %v2709 = vor.u32 %v2705, %v2708
        %v2710 = vrot.slane %v2709, 4
        %v2712 = vshll.u32 %v2382, 16
        %v2714 = vrot.slane %v2712, 5
        %v2715 = vsel %vm1361, %v2710, %v2714
        %v2716 = vshrl.u32 %v2382, 16
        %v2718 = vrot.slane %v2716, 4
        %v2719 = vor.u32 %v2718, %v2714
        %v2720 = vrot.slane %v2719, 4
        %v2722 = vshll.u32 %v2383, 16
        %v2724 = vrot.slane %v2722, 5
        %v2725 = vsel %vm1361, %v2720, %v2724
        %v2727 = vshrl.u32 %v2384, 16
        %v2729 = vrot.slane %v2727, 4
        %v2730 = vshll.u32 %v2384, 16
        %v2732 = vrot.slane %v2730, 5
        %v2733 = vor.u32 %v2729, %v2732
        %v2734 = vrot.slane %v2733, 4
        %v2736 = vshll.u32 %v2385, 16
        %v2738 = vrot.slane %v2736, 5
        %v2739 = vsel %vm1361, %v2734, %v2738
        %v2740 = vshrl.u32 %v2385, 16
        %v2742 = vrot.slane %v2740, 4
        %v2743 = vor.u32 %v2742, %v2738
        %v2744 = vrot.slane %v2743, 4
        %v2746 = vshll.u32 %v2386, 16
        %v2748 = vrot.slane %v2746, 5
        %v2749 = vsel %vm1361, %v2744, %v2748
        %v2751 = vshrl.u32 %v2387, 16
        %v2753 = vrot.slane %v2751, 4
        %v2754 = vshll.u32 %v2387, 16
        %v2756 = vrot.slane %v2754, 5
        %v2757 = vor.u32 %v2753, %v2756
        %v2758 = vrot.slane %v2757, 4
        %v2760 = vshll.u32 %v2388, 16
        %v2762 = vrot.slane %v2760, 5
        %v2763 = vsel %vm1361, %v2758, %v2762
        %v2764 = vshrl.u32 %v2388, 16
        %v2766 = vrot.slane %v2764, 4
        %v2767 = vor.u32 %v2766, %v2762
        %v2768 = vrot.slane %v2767, 4
        %v2770 = vshll.u32 %v2389, 16
        %v2772 = vrot.slane %v2770, 5
        %v2773 = vsel %vm1361, %v2768, %v2772
        %2806 = vst.msk [vmem:[#allocation3 + $0x8] sm:$0xf] %vm654, %v2403
        %2807 = vst.msk [vmem:[#allocation3 + $0x1c] sm:$0xf] %vm654, %v2413
        %2808 = vst.msk [vmem:[#allocation3 + $0x30] sm:$0xf] %vm654, %v2427
        %2809 = vst.msk [vmem:[#allocation3 + $0x44] sm:$0xf] %vm654, %v2437
        %2810 = vst.msk [vmem:[#allocation3 + $0x58] sm:$0xf] %vm654, %v2451
        %2811 = vst.msk [vmem:[#allocation3 + $0x6c] sm:$0xf] %vm654, %v2461
        %2812 = vst.msk [vmem:[#allocation3 + $0x80] sm:$0xf] %vm654, %v2475
        %2813 = vst.msk [vmem:[#allocation3 + $0x94] sm:$0xf] %vm654, %v2485
        %2814 = vst.msk [vmem:[#allocation3 + $0xa8] sm:$0xf] %vm654, %v2499
        %2815 = vst.msk [vmem:[#allocation3 + $0xbc] sm:$0xf] %vm654, %v2509
        %2816 = vst.msk [vmem:[#allocation3 + $0xd0] sm:$0xf] %vm654, %v2523
        %2817 = vst.msk [vmem:[#allocation3 + $0xe4] sm:$0xf] %vm654, %v2533
        %2818 = vst.msk [vmem:[#allocation3 + $0xf8] sm:$0xf] %vm654, %v2547
        %2819 = vst.msk [vmem:[#allocation3 + $0x10c] sm:$0xf] %vm654, %v2557
        %2820 = vst.msk [vmem:[#allocation3 + $0x120] sm:$0xf] %vm654, %v2571
        %2821 = vst.msk [vmem:[#allocation3 + $0x134] sm:$0xf] %vm654, %v2581
        %2822 = vst.msk [vmem:[#allocation3 + $0x148] sm:$0xf] %vm654, %v2595
        %2823 = vst.msk [vmem:[#allocation3 + $0x15c] sm:$0xf] %vm654, %v2605
        %2824 = vst.msk [vmem:[#allocation3 + $0x170] sm:$0xf] %vm654, %v2619
        %2825 = vst.msk [vmem:[#allocation3 + $0x184] sm:$0xf] %vm654, %v2629
        %2826 = vst.msk [vmem:[#allocation3 + $0x198] sm:$0xf] %vm654, %v2643
        %2827 = vst.msk [vmem:[#allocation3 + $0x1ac] sm:$0xf] %vm654, %v2653
        %2828 = vst.msk [vmem:[#allocation3 + $0x1c0] sm:$0xf] %vm654, %v2667
        %2829 = vst.msk [vmem:[#allocation3 + $0x1d4] sm:$0xf] %vm654, %v2677
        %2830 = vst.msk [vmem:[#allocation3 + $0x1e8] sm:$0xf] %vm654, %v2691
        %2831 = vst.msk [vmem:[#allocation3 + $0x1fc] sm:$0xf] %vm654, %v2701
        %2832 = vst.msk [vmem:[#allocation3 + $0x210] sm:$0xf] %vm654, %v2715
        %2833 = vst.msk [vmem:[#allocation3 + $0x224] sm:$0xf] %vm654, %v2725
        %2834 = vst.msk [vmem:[#allocation3 + $0x238] sm:$0xf] %vm654, %v2739
        %2835 = vst.msk [vmem:[#allocation3 + $0x24c] sm:$0xf] %vm654, %v2749
        %2836 = vst.msk [vmem:[#allocation3 + $0x260] sm:$0xf] %vm654, %v2763
        %2837 = vst.msk [vmem:[#allocation3 + $0x274] sm:$0xf] %vm654, %v2773
        %v2838 = vld [vmem:[%s1129] sm:$0xe]
        %v2839 = vld [vmem:[%s1129 + $0x4] sm:$0xf]
        %v2840 = vld [vmem:[%s1129 + $0x8] sm:$0x1]
        %v2841 = vld [vmem:[%s1129 + $0xc] sm:$0xe]
        %v2842 = vld [vmem:[%s1129 + $0x10] sm:$0xf]
        %v2843 = vld [vmem:[%s1129 + $0x14] sm:$0x1]
        %v2844 = vld [vmem:[%s1129 + $0x18] sm:$0xe]
        %v2845 = vld [vmem:[%s1129 + $0x1c] sm:$0xf]
        %v2846 = vld [vmem:[%s1129 + $0x20] sm:$0x1]
        %v2847 = vld [vmem:[%s1129 + $0x24] sm:$0xe]
        %v2848 = vld [vmem:[%s1129 + $0x28] sm:$0xf]
        %v2849 = vld [vmem:[%s1129 + $0x2c] sm:$0x1]
        %v2850 = vld [vmem:[%s1129 + $0x30] sm:$0xe]
        %v2851 = vld [vmem:[%s1129 + $0x34] sm:$0xf]
        %v2852 = vld [vmem:[%s1129 + $0x38] sm:$0x1]
        %v2853 = vld [vmem:[%s1129 + $0x3c] sm:$0xe]
        %v2854 = vld [vmem:[%s1129 + $0x40] sm:$0xf]
        %v2855 = vld [vmem:[%s1129 + $0x44] sm:$0x1]
        %v2856 = vld [vmem:[%s1129 + $0x48] sm:$0xe]
        %v2857 = vld [vmem:[%s1129 + $0x4c] sm:$0xf]
        %v2858 = vld [vmem:[%s1129 + $0x50] sm:$0x1]
        %v2859 = vld [vmem:[%s1129 + $0x54] sm:$0xe]
        %v2860 = vld [vmem:[%s1129 + $0x58] sm:$0xf]
        %v2861 = vld [vmem:[%s1129 + $0x5c] sm:$0x1]
        %v2862 = vld [vmem:[%s1129 + $0x60] sm:$0xe]
        %v2863 = vld [vmem:[%s1129 + $0x64] sm:$0xf]
        %v2864 = vld [vmem:[%s1129 + $0x68] sm:$0x1]
        %v2865 = vld [vmem:[%s1129 + $0x6c] sm:$0xe]
        %v2866 = vld [vmem:[%s1129 + $0x70] sm:$0xf]
        %v2867 = vld [vmem:[%s1129 + $0x74] sm:$0x1]
        %v2868 = vld [vmem:[%s1129 + $0x78] sm:$0xe]
        %v2869 = vld [vmem:[%s1129 + $0x7c] sm:$0xf]
        %v2870 = vld [vmem:[%s1129 + $0x80] sm:$0x1]
        %v2871 = vld [vmem:[%s1129 + $0x84] sm:$0xe]
        %v2872 = vld [vmem:[%s1129 + $0x88] sm:$0xf]
        %v2873 = vld [vmem:[%s1129 + $0x8c] sm:$0x1]
        %v2874 = vld [vmem:[%s1129 + $0x90] sm:$0xe]
        %v2875 = vld [vmem:[%s1129 + $0x94] sm:$0xf]
        %v2876 = vld [vmem:[%s1129 + $0x98] sm:$0x1]
        %v2877 = vld [vmem:[%s1129 + $0x9c] sm:$0xe]
        %v2878 = vld [vmem:[%s1129 + $0xa0] sm:$0xf]
        %v2879 = vld [vmem:[%s1129 + $0xa4] sm:$0x1]
        %v2880 = vld [vmem:[%s1129 + $0xa8] sm:$0xe]
        %v2881 = vld [vmem:[%s1129 + $0xac] sm:$0xf]
        %v2882 = vld [vmem:[%s1129 + $0xb0] sm:$0x1]
        %v2883 = vld [vmem:[%s1129 + $0xb4] sm:$0xe]
        %v2884 = vld [vmem:[%s1129 + $0xb8] sm:$0xf]
        %v2885 = vld [vmem:[%s1129 + $0xbc] sm:$0x1]
        %v2934 = vrot.slane %v2838, 5
        %v2935 = vrot.slane %v2934, 4
        %v2936 = vrot.slane %v2839, 5
        %v2937 = vsel %vm1973, %v2935, %v2936
        %v2938 = vrot.slane %v2936, 4
        %v2939 = vrot.slane %v2840, 5
        %v2940 = vsel %vm1973, %v2938, %v2939
        %v2941 = vrot.slane %v2841, 5
        %v2942 = vrot.slane %v2941, 4
        %v2943 = vrot.slane %v2842, 5
        %v2944 = vsel %vm1973, %v2942, %v2943
        %v2945 = vrot.slane %v2943, 4
        %v2946 = vrot.slane %v2843, 5
        %v2947 = vsel %vm1973, %v2945, %v2946
        %v2948 = vrot.slane %v2844, 5
        %v2949 = vrot.slane %v2948, 4
        %v2950 = vrot.slane %v2845, 5
        %v2951 = vsel %vm1973, %v2949, %v2950
        %v2952 = vrot.slane %v2950, 4
        %v2953 = vrot.slane %v2846, 5
        %v2954 = vsel %vm1973, %v2952, %v2953
        %v2955 = vrot.slane %v2847, 5
        %v2956 = vrot.slane %v2955, 4
        %v2957 = vrot.slane %v2848, 5
        %v2958 = vsel %vm1973, %v2956, %v2957
        %v2959 = vrot.slane %v2957, 4
        %v2960 = vrot.slane %v2849, 5
        %v2961 = vsel %vm1973, %v2959, %v2960
        %v2962 = vrot.slane %v2850, 5
        %v2963 = vrot.slane %v2962, 4
        %v2964 = vrot.slane %v2851, 5
        %v2965 = vsel %vm1973, %v2963, %v2964
        %v2966 = vrot.slane %v2964, 4
        %v2967 = vrot.slane %v2852, 5
        %v2968 = vsel %vm1973, %v2966, %v2967
        %v2969 = vrot.slane %v2853, 5
        %v2970 = vrot.slane %v2969, 4
        %v2971 = vrot.slane %v2854, 5
        %v2972 = vsel %vm1973, %v2970, %v2971
        %v2973 = vrot.slane %v2971, 4
        %v2974 = vrot.slane %v2855, 5
        %v2975 = vsel %vm1973, %v2973, %v2974
        %v2976 = vrot.slane %v2856, 5
        %v2977 = vrot.slane %v2976, 4
        %v2978 = vrot.slane %v2857, 5
        %v2979 = vsel %vm1973, %v2977, %v2978
        %v2980 = vrot.slane %v2978, 4
        %v2981 = vrot.slane %v2858, 5
        %v2982 = vsel %vm1973, %v2980, %v2981
        %v2983 = vrot.slane %v2859, 5
        %v2984 = vrot.slane %v2983, 4
        %v2985 = vrot.slane %v2860, 5
        %v2986 = vsel %vm1973, %v2984, %v2985
        %v2987 = vrot.slane %v2985, 4
        %v2988 = vrot.slane %v2861, 5
        %v2989 = vsel %vm1973, %v2987, %v2988
        %v2990 = vrot.slane %v2862, 5
        %v2991 = vrot.slane %v2990, 4
        %v2992 = vrot.slane %v2863, 5
        %v2993 = vsel %vm1973, %v2991, %v2992
        %v2994 = vrot.slane %v2992, 4
        %v2995 = vrot.slane %v2864, 5
        %v2996 = vsel %vm1973, %v2994, %v2995
        %v2997 = vrot.slane %v2865, 5
        %v2998 = vrot.slane %v2997, 4
        %v2999 = vrot.slane %v2866, 5
        %v3000 = vsel %vm1973, %v2998, %v2999
        %v3001 = vrot.slane %v2999, 4
        %v3002 = vrot.slane %v2867, 5
        %v3003 = vsel %vm1973, %v3001, %v3002
        %v3004 = vrot.slane %v2868, 5
        %v3005 = vrot.slane %v3004, 4
        %v3006 = vrot.slane %v2869, 5
        %v3007 = vsel %vm1973, %v3005, %v3006
        %v3008 = vrot.slane %v3006, 4
        %v3009 = vrot.slane %v2870, 5
        %v3010 = vsel %vm1973, %v3008, %v3009
        %v3011 = vrot.slane %v2871, 5
        %v3012 = vrot.slane %v3011, 4
        %v3013 = vrot.slane %v2872, 5
        %v3014 = vsel %vm1973, %v3012, %v3013
        %v3015 = vrot.slane %v3013, 4
        %v3016 = vrot.slane %v2873, 5
        %v3017 = vsel %vm1973, %v3015, %v3016
        %v3018 = vrot.slane %v2874, 5
        %v3019 = vrot.slane %v3018, 4
        %v3020 = vrot.slane %v2875, 5
        %v3021 = vsel %vm1973, %v3019, %v3020
        %v3022 = vrot.slane %v3020, 4
        %v3023 = vrot.slane %v2876, 5
        %v3024 = vsel %vm1973, %v3022, %v3023
        %v3025 = vrot.slane %v2877, 5
        %v3026 = vrot.slane %v3025, 4
        %v3027 = vrot.slane %v2878, 5
        %v3028 = vsel %vm1973, %v3026, %v3027
        %v3029 = vrot.slane %v3027, 4
        %v3030 = vrot.slane %v2879, 5
        %v3031 = vsel %vm1973, %v3029, %v3030
        %v3032 = vrot.slane %v2880, 5
        %v3033 = vrot.slane %v3032, 4
        %v3034 = vrot.slane %v2881, 5
        %v3035 = vsel %vm1973, %v3033, %v3034
        %v3036 = vrot.slane %v3034, 4
        %v3037 = vrot.slane %v2882, 5
        %v3038 = vsel %vm1973, %v3036, %v3037
        %v3039 = vrot.slane %v2883, 5
        %v3040 = vrot.slane %v3039, 4
        %v3041 = vrot.slane %v2884, 5
        %v3042 = vsel %vm1973, %v3040, %v3041
        %v3043 = vrot.slane %v3041, 4
        %v3044 = vrot.slane %v2885, 5
        %v3045 = vsel %vm1973, %v3043, %v3044
        %3046 = vrot.lane.b32.xlu0 %v2937, 64
        %v3047 = vpop.permute.xlu0 %3046
        %3048 = vrot.lane.b32.xlu0 %v2940, 64
        %v3049 = vpop.permute.xlu0 %3048
        %3050 = vrot.lane.b32.xlu0 %v2944, 64
        %v3051 = vpop.permute.xlu0 %3050
        %3052 = vrot.lane.b32.xlu0 %v2947, 64
        %v3053 = vpop.permute.xlu0 %3052
        %3054 = vrot.lane.b32.xlu0 %v2951, 64
        %v3055 = vpop.permute.xlu0 %3054
        %3056 = vrot.lane.b32.xlu0 %v2954, 64
        %v3057 = vpop.permute.xlu0 %3056
        %3058 = vrot.lane.b32.xlu0 %v2958, 64
        %v3059 = vpop.permute.xlu0 %3058
        %3060 = vrot.lane.b32.xlu0 %v2961, 64
        %v3061 = vpop.permute.xlu0 %3060
        %3062 = vrot.lane.b32.xlu0 %v2965, 64
        %v3063 = vpop.permute.xlu0 %3062
        %3064 = vrot.lane.b32.xlu0 %v2968, 64
        %v3065 = vpop.permute.xlu0 %3064
        %3066 = vrot.lane.b32.xlu0 %v2972, 64
        %v3067 = vpop.permute.xlu0 %3066
        %3068 = vrot.lane.b32.xlu0 %v2975, 64
        %v3069 = vpop.permute.xlu0 %3068
        %3070 = vrot.lane.b32.xlu0 %v2979, 64
        %v3071 = vpop.permute.xlu0 %3070
        %3072 = vrot.lane.b32.xlu0 %v2982, 64
        %v3073 = vpop.permute.xlu0 %3072
        %3074 = vrot.lane.b32.xlu0 %v2986, 64
        %v3075 = vpop.permute.xlu0 %3074
        %3076 = vrot.lane.b32.xlu0 %v2989, 64
        %v3077 = vpop.permute.xlu0 %3076
        %3078 = vrot.lane.b32.xlu0 %v2993, 64
        %v3079 = vpop.permute.xlu0 %3078
        %3080 = vrot.lane.b32.xlu0 %v2996, 64
        %v3081 = vpop.permute.xlu0 %3080
        %3082 = vrot.lane.b32.xlu0 %v3000, 64
        %v3083 = vpop.permute.xlu0 %3082
        %3084 = vrot.lane.b32.xlu0 %v3003, 64
        %v3085 = vpop.permute.xlu0 %3084
        %3086 = vrot.lane.b32.xlu0 %v3007, 64
        %v3087 = vpop.permute.xlu0 %3086
        %3088 = vrot.lane.b32.xlu0 %v3010, 64
        %v3089 = vpop.permute.xlu0 %3088
        %3090 = vrot.lane.b32.xlu0 %v3014, 64
        %v3091 = vpop.permute.xlu0 %3090
        %3092 = vrot.lane.b32.xlu0 %v3017, 64
        %v3093 = vpop.permute.xlu0 %3092
        %3094 = vrot.lane.b32.xlu0 %v3021, 64
        %v3095 = vpop.permute.xlu0 %3094
        %3096 = vrot.lane.b32.xlu0 %v3024, 64
        %v3097 = vpop.permute.xlu0 %3096
        %3098 = vrot.lane.b32.xlu0 %v3028, 64
        %v3099 = vpop.permute.xlu0 %3098
        %3100 = vrot.lane.b32.xlu0 %v3031, 64
        %v3101 = vpop.permute.xlu0 %3100
        %3102 = vrot.lane.b32.xlu0 %v3035, 64
        %v3103 = vpop.permute.xlu0 %3102
        %3104 = vrot.lane.b32.xlu0 %v3038, 64
        %v3105 = vpop.permute.xlu0 %3104
        %3106 = vrot.lane.b32.xlu0 %v3042, 64
        %v3107 = vpop.permute.xlu0 %3106
        %3108 = vrot.lane.b32.xlu0 %v3045, 64
        %v3109 = vpop.permute.xlu0 %3108
        %3142 = vst.msk [vmem:[#allocation3 + $0x8] sm:$0xf] %vm1842, %v3047
        %3143 = vst.msk [vmem:[#allocation3 + $0x1c] sm:$0xf] %vm1842, %v3049
        %3144 = vst.msk [vmem:[#allocation3 + $0x30] sm:$0xf] %vm1842, %v3051
        %3145 = vst.msk [vmem:[#allocation3 + $0x44] sm:$0xf] %vm1842, %v3053
        %3146 = vst.msk [vmem:[#allocation3 + $0x58] sm:$0xf] %vm1842, %v3055
        %3147 = vst.msk [vmem:[#allocation3 + $0x6c] sm:$0xf] %vm1842, %v3057
        %3148 = vst.msk [vmem:[#allocation3 + $0x80] sm:$0xf] %vm1842, %v3059
        %3149 = vst.msk [vmem:[#allocation3 + $0x94] sm:$0xf] %vm1842, %v3061
        %3150 = vst.msk [vmem:[#allocation3 + $0xa8] sm:$0xf] %vm1842, %v3063
        %3151 = vst.msk [vmem:[#allocation3 + $0xbc] sm:$0xf] %vm1842, %v3065
        %3152 = vst.msk [vmem:[#allocation3 + $0xd0] sm:$0xf] %vm1842, %v3067
        %3153 = vst.msk [vmem:[#allocation3 + $0xe4] sm:$0xf] %vm1842, %v3069
        %3154 = vst.msk [vmem:[#allocation3 + $0xf8] sm:$0xf] %vm1842, %v3071
        %3155 = vst.msk [vmem:[#allocation3 + $0x10c] sm:$0xf] %vm1842, %v3073
        %3156 = vst.msk [vmem:[#allocation3 + $0x120] sm:$0xf] %vm1842, %v3075
        %3157 = vst.msk [vmem:[#allocation3 + $0x134] sm:$0xf] %vm1842, %v3077
        %3158 = vst.msk [vmem:[#allocation3 + $0x148] sm:$0xf] %vm1842, %v3079
        %3159 = vst.msk [vmem:[#allocation3 + $0x15c] sm:$0xf] %vm1842, %v3081
        %3160 = vst.msk [vmem:[#allocation3 + $0x170] sm:$0xf] %vm1842, %v3083
        %3161 = vst.msk [vmem:[#allocation3 + $0x184] sm:$0xf] %vm1842, %v3085
        %3162 = vst.msk [vmem:[#allocation3 + $0x198] sm:$0xf] %vm1842, %v3087
        %3163 = vst.msk [vmem:[#allocation3 + $0x1ac] sm:$0xf] %vm1842, %v3089
        %3164 = vst.msk [vmem:[#allocation3 + $0x1c0] sm:$0xf] %vm1842, %v3091
        %3165 = vst.msk [vmem:[#allocation3 + $0x1d4] sm:$0xf] %vm1842, %v3093
        %3166 = vst.msk [vmem:[#allocation3 + $0x1e8] sm:$0xf] %vm1842, %v3095
        %3167 = vst.msk [vmem:[#allocation3 + $0x1fc] sm:$0xf] %vm1842, %v3097
        %3168 = vst.msk [vmem:[#allocation3 + $0x210] sm:$0xf] %vm1842, %v3099
        %3169 = vst.msk [vmem:[#allocation3 + $0x224] sm:$0xf] %vm1842, %v3101
        %3170 = vst.msk [vmem:[#allocation3 + $0x238] sm:$0xf] %vm1842, %v3103
        %3171 = vst.msk [vmem:[#allocation3 + $0x24c] sm:$0xf] %vm1842, %v3105
        %3172 = vst.msk [vmem:[#allocation3 + $0x260] sm:$0xf] %vm1842, %v3107
        %3173 = vst.msk [vmem:[#allocation3 + $0x274] sm:$0xf] %vm1842, %v3109
        %s3174 = scalar_lea.vmem [#allocation2], 24
        %v3175 = vld [vmem:[%s3174] sm:$0xf]
        %v3176 = vld [vmem:[%s3174 + $0x4] sm:$0xf]
        %v3177 = vld [vmem:[%s3174 + $0xc] sm:$0xf]
        %v3178 = vld [vmem:[%s3174 + $0x10] sm:$0xf]
        %v3179 = vld [vmem:[%s3174 + $0x18] sm:$0xf]
        %v3180 = vld [vmem:[%s3174 + $0x1c] sm:$0xf]
        %v3181 = vld [vmem:[%s3174 + $0x24] sm:$0xf]
        %v3182 = vld [vmem:[%s3174 + $0x28] sm:$0xf]
        %v3183 = vld [vmem:[%s3174 + $0x30] sm:$0xf]
        %v3184 = vld [vmem:[%s3174 + $0x34] sm:$0xf]
        %v3185 = vld [vmem:[%s3174 + $0x3c] sm:$0xf]
        %v3186 = vld [vmem:[%s3174 + $0x40] sm:$0xf]
        %v3187 = vld [vmem:[%s3174 + $0x48] sm:$0xf]
        %v3188 = vld [vmem:[%s3174 + $0x4c] sm:$0xf]
        %v3189 = vld [vmem:[%s3174 + $0x54] sm:$0xf]
        %v3190 = vld [vmem:[%s3174 + $0x58] sm:$0xf]
        %v3191 = vld [vmem:[%s3174 + $0x60] sm:$0xf]
        %v3192 = vld [vmem:[%s3174 + $0x64] sm:$0xf]
        %v3193 = vld [vmem:[%s3174 + $0x6c] sm:$0xf]
        %v3194 = vld [vmem:[%s3174 + $0x70] sm:$0xf]
        %v3195 = vld [vmem:[%s3174 + $0x78] sm:$0xf]
        %v3196 = vld [vmem:[%s3174 + $0x7c] sm:$0xf]
        %v3197 = vld [vmem:[%s3174 + $0x84] sm:$0xf]
        %v3198 = vld [vmem:[%s3174 + $0x88] sm:$0xf]
        %v3199 = vld [vmem:[%s3174 + $0x90] sm:$0xf]
        %v3200 = vld [vmem:[%s3174 + $0x94] sm:$0xf]
        %v3201 = vld [vmem:[%s3174 + $0x9c] sm:$0xf]
        %v3202 = vld [vmem:[%s3174 + $0xa0] sm:$0xf]
        %v3203 = vld [vmem:[%s3174 + $0xa8] sm:$0xf]
        %v3204 = vld [vmem:[%s3174 + $0xac] sm:$0xf]
        %v3205 = vld [vmem:[%s3174 + $0xb4] sm:$0xf]
        %v3206 = vld [vmem:[%s3174 + $0xb8] sm:$0xf]
        %3207 = vst.msk [vmem:[#allocation3 + $0xc] sm:$0xf] %vm654, %v3175
        %3208 = vst.msk [vmem:[#allocation3 + $0x20] sm:$0xf] %vm654, %v3176
        %3209 = vst.msk [vmem:[#allocation3 + $0x34] sm:$0xf] %vm654, %v3177
        %3210 = vst.msk [vmem:[#allocation3 + $0x48] sm:$0xf] %vm654, %v3178
        %3211 = vst.msk [vmem:[#allocation3 + $0x5c] sm:$0xf] %vm654, %v3179
        %3212 = vst.msk [vmem:[#allocation3 + $0x70] sm:$0xf] %vm654, %v3180
        %3213 = vst.msk [vmem:[#allocation3 + $0x84] sm:$0xf] %vm654, %v3181
        %3214 = vst.msk [vmem:[#allocation3 + $0x98] sm:$0xf] %vm654, %v3182
        %3215 = vst.msk [vmem:[#allocation3 + $0xac] sm:$0xf] %vm654, %v3183
        %3216 = vst.msk [vmem:[#allocation3 + $0xc0] sm:$0xf] %vm654, %v3184
        %3217 = vst.msk [vmem:[#allocation3 + $0xd4] sm:$0xf] %vm654, %v3185
        %3218 = vst.msk [vmem:[#allocation3 + $0xe8] sm:$0xf] %vm654, %v3186
        %3219 = vst.msk [vmem:[#allocation3 + $0xfc] sm:$0xf] %vm654, %v3187
        %3220 = vst.msk [vmem:[#allocation3 + $0x110] sm:$0xf] %vm654, %v3188
        %3221 = vst.msk [vmem:[#allocation3 + $0x124] sm:$0xf] %vm654, %v3189
        %3222 = vst.msk [vmem:[#allocation3 + $0x138] sm:$0xf] %vm654, %v3190
        %3223 = vst.msk [vmem:[#allocation3 + $0x14c] sm:$0xf] %vm654, %v3191
        %3224 = vst.msk [vmem:[#allocation3 + $0x160] sm:$0xf] %vm654, %v3192
        %3225 = vst.msk [vmem:[#allocation3 + $0x174] sm:$0xf] %vm654, %v3193
        %3226 = vst.msk [vmem:[#allocation3 + $0x188] sm:$0xf] %vm654, %v3194
        %3227 = vst.msk [vmem:[#allocation3 + $0x19c] sm:$0xf] %vm654, %v3195
        %3228 = vst.msk [vmem:[#allocation3 + $0x1b0] sm:$0xf] %vm654, %v3196
        %3229 = vst.msk [vmem:[#allocation3 + $0x1c4] sm:$0xf] %vm654, %v3197
        %3230 = vst.msk [vmem:[#allocation3 + $0x1d8] sm:$0xf] %vm654, %v3198
        %3231 = vst.msk [vmem:[#allocation3 + $0x1ec] sm:$0xf] %vm654, %v3199
        %3232 = vst.msk [vmem:[#allocation3 + $0x200] sm:$0xf] %vm654, %v3200
        %3233 = vst.msk [vmem:[#allocation3 + $0x214] sm:$0xf] %vm654, %v3201
        %3234 = vst.msk [vmem:[#allocation3 + $0x228] sm:$0xf] %vm654, %v3202
        %3235 = vst.msk [vmem:[#allocation3 + $0x23c] sm:$0xf] %vm654, %v3203
        %3236 = vst.msk [vmem:[#allocation3 + $0x250] sm:$0xf] %vm654, %v3204
        %3237 = vst.msk [vmem:[#allocation3 + $0x264] sm:$0xf] %vm654, %v3205
        %3238 = vst.msk [vmem:[#allocation3 + $0x278] sm:$0xf] %vm654, %v3206
        %v3239 = vld [vmem:[%s3174] sm:$0xf]
        %v3240 = vld [vmem:[%s3174 + $0x4] sm:$0xf]
        %v3241 = vld [vmem:[%s3174 + $0x8] sm:$0x1]
        %v3242 = vld [vmem:[%s3174 + $0xc] sm:$0xf]
        %v3243 = vld [vmem:[%s3174 + $0x10] sm:$0xf]
        %v3244 = vld [vmem:[%s3174 + $0x14] sm:$0x1]
        %v3245 = vld [vmem:[%s3174 + $0x18] sm:$0xf]
        %v3246 = vld [vmem:[%s3174 + $0x1c] sm:$0xf]
        %v3247 = vld [vmem:[%s3174 + $0x20] sm:$0x1]
        %v3248 = vld [vmem:[%s3174 + $0x24] sm:$0xf]
        %v3249 = vld [vmem:[%s3174 + $0x28] sm:$0xf]
        %v3250 = vld [vmem:[%s3174 + $0x2c] sm:$0x1]
        %v3251 = vld [vmem:[%s3174 + $0x30] sm:$0xf]
        %v3252 = vld [vmem:[%s3174 + $0x34] sm:$0xf]
        %v3253 = vld [vmem:[%s3174 + $0x38] sm:$0x1]
        %v3254 = vld [vmem:[%s3174 + $0x3c] sm:$0xf]
        %v3255 = vld [vmem:[%s3174 + $0x40] sm:$0xf]
        %v3256 = vld [vmem:[%s3174 + $0x44] sm:$0x1]
        %v3257 = vld [vmem:[%s3174 + $0x48] sm:$0xf]
        %v3258 = vld [vmem:[%s3174 + $0x4c] sm:$0xf]
        %v3259 = vld [vmem:[%s3174 + $0x50] sm:$0x1]
        %v3260 = vld [vmem:[%s3174 + $0x54] sm:$0xf]
        %v3261 = vld [vmem:[%s3174 + $0x58] sm:$0xf]
        %v3262 = vld [vmem:[%s3174 + $0x5c] sm:$0x1]
        %v3263 = vld [vmem:[%s3174 + $0x60] sm:$0xf]
        %v3264 = vld [vmem:[%s3174 + $0x64] sm:$0xf]
        %v3265 = vld [vmem:[%s3174 + $0x68] sm:$0x1]
        %v3266 = vld [vmem:[%s3174 + $0x6c] sm:$0xf]
        %v3267 = vld [vmem:[%s3174 + $0x70] sm:$0xf]
        %v3268 = vld [vmem:[%s3174 + $0x74] sm:$0x1]
        %v3269 = vld [vmem:[%s3174 + $0x78] sm:$0xf]
        %v3270 = vld [vmem:[%s3174 + $0x7c] sm:$0xf]
        %v3271 = vld [vmem:[%s3174 + $0x80] sm:$0x1]
        %v3272 = vld [vmem:[%s3174 + $0x84] sm:$0xf]
        %v3273 = vld [vmem:[%s3174 + $0x88] sm:$0xf]
        %v3274 = vld [vmem:[%s3174 + $0x8c] sm:$0x1]
        %v3275 = vld [vmem:[%s3174 + $0x90] sm:$0xf]
        %v3276 = vld [vmem:[%s3174 + $0x94] sm:$0xf]
        %v3277 = vld [vmem:[%s3174 + $0x98] sm:$0x1]
        %v3278 = vld [vmem:[%s3174 + $0x9c] sm:$0xf]
        %v3279 = vld [vmem:[%s3174 + $0xa0] sm:$0xf]
        %v3280 = vld [vmem:[%s3174 + $0xa4] sm:$0x1]
        %v3281 = vld [vmem:[%s3174 + $0xa8] sm:$0xf]
        %v3282 = vld [vmem:[%s3174 + $0xac] sm:$0xf]
        %v3283 = vld [vmem:[%s3174 + $0xb0] sm:$0x1]
        %v3284 = vld [vmem:[%s3174 + $0xb4] sm:$0xf]
        %v3285 = vld [vmem:[%s3174 + $0xb8] sm:$0xf]
        %v3286 = vld [vmem:[%s3174 + $0xbc] sm:$0x1]
        %v3288 = vshrl.u32 %v3239, 16
        %v3290 = vrot.slane %v3288, 4
        %v3291 = vshll.u32 %v3239, 16
        %v3293 = vrot.slane %v3291, 5
        %v3294 = vor.u32 %v3290, %v3293
        %v3295 = vrot.slane %v3294, 4
        %v3297 = vshll.u32 %v3240, 16
        %v3299 = vrot.slane %v3297, 5
        %v3300 = vsel %vm1361, %v3295, %v3299
        %v3301 = vshrl.u32 %v3240, 16
        %v3303 = vrot.slane %v3301, 4
        %v3304 = vor.u32 %v3303, %v3299
        %v3305 = vrot.slane %v3304, 4
        %v3307 = vshll.u32 %v3241, 16
        %v3309 = vrot.slane %v3307, 5
        %v3310 = vsel %vm1361, %v3305, %v3309
        %v3312 = vshrl.u32 %v3242, 16
        %v3314 = vrot.slane %v3312, 4
        %v3315 = vshll.u32 %v3242, 16
        %v3317 = vrot.slane %v3315, 5
        %v3318 = vor.u32 %v3314, %v3317
        %v3319 = vrot.slane %v3318, 4
        %v3321 = vshll.u32 %v3243, 16
        %v3323 = vrot.slane %v3321, 5
        %v3324 = vsel %vm1361, %v3319, %v3323
        %v3325 = vshrl.u32 %v3243, 16
        %v3327 = vrot.slane %v3325, 4
        %v3328 = vor.u32 %v3327, %v3323
        %v3329 = vrot.slane %v3328, 4
        %v3331 = vshll.u32 %v3244, 16
        %v3333 = vrot.slane %v3331, 5
        %v3334 = vsel %vm1361, %v3329, %v3333
        %v3336 = vshrl.u32 %v3245, 16
        %v3338 = vrot.slane %v3336, 4
        %v3339 = vshll.u32 %v3245, 16
        %v3341 = vrot.slane %v3339, 5
        %v3342 = vor.u32 %v3338, %v3341
        %v3343 = vrot.slane %v3342, 4
        %v3345 = vshll.u32 %v3246, 16
        %v3347 = vrot.slane %v3345, 5
        %v3348 = vsel %vm1361, %v3343, %v3347
        %v3349 = vshrl.u32 %v3246, 16
        %v3351 = vrot.slane %v3349, 4
        %v3352 = vor.u32 %v3351, %v3347
        %v3353 = vrot.slane %v3352, 4
        %v3355 = vshll.u32 %v3247, 16
        %v3357 = vrot.slane %v3355, 5
        %v3358 = vsel %vm1361, %v3353, %v3357
        %v3360 = vshrl.u32 %v3248, 16
        %v3362 = vrot.slane %v3360, 4
        %v3363 = vshll.u32 %v3248, 16
        %v3365 = vrot.slane %v3363, 5
        %v3366 = vor.u32 %v3362, %v3365
        %v3367 = vrot.slane %v3366, 4
        %v3369 = vshll.u32 %v3249, 16
        %v3371 = vrot.slane %v3369, 5
        %v3372 = vsel %vm1361, %v3367, %v3371
        %v3373 = vshrl.u32 %v3249, 16
        %v3375 = vrot.slane %v3373, 4
        %v3376 = vor.u32 %v3375, %v3371
        %v3377 = vrot.slane %v3376, 4
        %v3379 = vshll.u32 %v3250, 16
        %v3381 = vrot.slane %v3379, 5
        %v3382 = vsel %vm1361, %v3377, %v3381
        %v3384 = vshrl.u32 %v3251, 16
        %v3386 = vrot.slane %v3384, 4
        %v3387 = vshll.u32 %v3251, 16
        %v3389 = vrot.slane %v3387, 5
        %v3390 = vor.u32 %v3386, %v3389
        %v3391 = vrot.slane %v3390, 4
        %v3393 = vshll.u32 %v3252, 16
        %v3395 = vrot.slane %v3393, 5
        %v3396 = vsel %vm1361, %v3391, %v3395
        %v3397 = vshrl.u32 %v3252, 16
        %v3399 = vrot.slane %v3397, 4
        %v3400 = vor.u32 %v3399, %v3395
        %v3401 = vrot.slane %v3400, 4
        %v3403 = vshll.u32 %v3253, 16
        %v3405 = vrot.slane %v3403, 5
        %v3406 = vsel %vm1361, %v3401, %v3405
        %v3408 = vshrl.u32 %v3254, 16
        %v3410 = vrot.slane %v3408, 4
        %v3411 = vshll.u32 %v3254, 16
        %v3413 = vrot.slane %v3411, 5
        %v3414 = vor.u32 %v3410, %v3413
        %v3415 = vrot.slane %v3414, 4
        %v3417 = vshll.u32 %v3255, 16
        %v3419 = vrot.slane %v3417, 5
        %v3420 = vsel %vm1361, %v3415, %v3419
        %v3421 = vshrl.u32 %v3255, 16
        %v3423 = vrot.slane %v3421, 4
        %v3424 = vor.u32 %v3423, %v3419
        %v3425 = vrot.slane %v3424, 4
        %v3427 = vshll.u32 %v3256, 16
        %v3429 = vrot.slane %v3427, 5
        %v3430 = vsel %vm1361, %v3425, %v3429
        %v3432 = vshrl.u32 %v3257, 16
        %v3434 = vrot.slane %v3432, 4
        %v3435 = vshll.u32 %v3257, 16
        %v3437 = vrot.slane %v3435, 5
        %v3438 = vor.u32 %v3434, %v3437
        %v3439 = vrot.slane %v3438, 4
        %v3441 = vshll.u32 %v3258, 16
        %v3443 = vrot.slane %v3441, 5
        %v3444 = vsel %vm1361, %v3439, %v3443
        %v3445 = vshrl.u32 %v3258, 16
        %v3447 = vrot.slane %v3445, 4
        %v3448 = vor.u32 %v3447, %v3443
        %v3449 = vrot.slane %v3448, 4
        %v3451 = vshll.u32 %v3259, 16
        %v3453 = vrot.slane %v3451, 5
        %v3454 = vsel %vm1361, %v3449, %v3453
        %v3456 = vshrl.u32 %v3260, 16
        %v3458 = vrot.slane %v3456, 4
        %v3459 = vshll.u32 %v3260, 16
        %v3461 = vrot.slane %v3459, 5
        %v3462 = vor.u32 %v3458, %v3461
        %v3463 = vrot.slane %v3462, 4
        %v3465 = vshll.u32 %v3261, 16
        %v3467 = vrot.slane %v3465, 5
        %v3468 = vsel %vm1361, %v3463, %v3467
        %v3469 = vshrl.u32 %v3261, 16
        %v3471 = vrot.slane %v3469, 4
        %v3472 = vor.u32 %v3471, %v3467
        %v3473 = vrot.slane %v3472, 4
        %v3475 = vshll.u32 %v3262, 16
        %v3477 = vrot.slane %v3475, 5
        %v3478 = vsel %vm1361, %v3473, %v3477
        %v3480 = vshrl.u32 %v3263, 16
        %v3482 = vrot.slane %v3480, 4
        %v3483 = vshll.u32 %v3263, 16
        %v3485 = vrot.slane %v3483, 5
        %v3486 = vor.u32 %v3482, %v3485
        %v3487 = vrot.slane %v3486, 4
        %v3489 = vshll.u32 %v3264, 16
        %v3491 = vrot.slane %v3489, 5
        %v3492 = vsel %vm1361, %v3487, %v3491
        %v3493 = vshrl.u32 %v3264, 16
        %v3495 = vrot.slane %v3493, 4
        %v3496 = vor.u32 %v3495, %v3491
        %v3497 = vrot.slane %v3496, 4
        %v3499 = vshll.u32 %v3265, 16
        %v3501 = vrot.slane %v3499, 5
        %v3502 = vsel %vm1361, %v3497, %v3501
        %v3504 = vshrl.u32 %v3266, 16
        %v3506 = vrot.slane %v3504, 4
        %v3507 = vshll.u32 %v3266, 16
        %v3509 = vrot.slane %v3507, 5
        %v3510 = vor.u32 %v3506, %v3509
        %v3511 = vrot.slane %v3510, 4
        %v3513 = vshll.u32 %v3267, 16
        %v3515 = vrot.slane %v3513, 5
        %v3516 = vsel %vm1361, %v3511, %v3515
        %v3517 = vshrl.u32 %v3267, 16
        %v3519 = vrot.slane %v3517, 4
        %v3520 = vor.u32 %v3519, %v3515
        %v3521 = vrot.slane %v3520, 4
        %v3523 = vshll.u32 %v3268, 16
        %v3525 = vrot.slane %v3523, 5
        %v3526 = vsel %vm1361, %v3521, %v3525
        %v3528 = vshrl.u32 %v3269, 16
        %v3530 = vrot.slane %v3528, 4
        %v3531 = vshll.u32 %v3269, 16
        %v3533 = vrot.slane %v3531, 5
        %v3534 = vor.u32 %v3530, %v3533
        %v3535 = vrot.slane %v3534, 4
        %v3537 = vshll.u32 %v3270, 16
        %v3539 = vrot.slane %v3537, 5
        %v3540 = vsel %vm1361, %v3535, %v3539
        %v3541 = vshrl.u32 %v3270, 16
        %v3543 = vrot.slane %v3541, 4
        %v3544 = vor.u32 %v3543, %v3539
        %v3545 = vrot.slane %v3544, 4
        %v3547 = vshll.u32 %v3271, 16
        %v3549 = vrot.slane %v3547, 5
        %v3550 = vsel %vm1361, %v3545, %v3549
        %v3552 = vshrl.u32 %v3272, 16
        %v3554 = vrot.slane %v3552, 4
        %v3555 = vshll.u32 %v3272, 16
        %v3557 = vrot.slane %v3555, 5
        %v3558 = vor.u32 %v3554, %v3557
        %v3559 = vrot.slane %v3558, 4
        %v3561 = vshll.u32 %v3273, 16
        %v3563 = vrot.slane %v3561, 5
        %v3564 = vsel %vm1361, %v3559, %v3563
        %v3565 = vshrl.u32 %v3273, 16
        %v3567 = vrot.slane %v3565, 4
        %v3568 = vor.u32 %v3567, %v3563
        %v3569 = vrot.slane %v3568, 4
        %v3571 = vshll.u32 %v3274, 16
        %v3573 = vrot.slane %v3571, 5
        %v3574 = vsel %vm1361, %v3569, %v3573
        %v3576 = vshrl.u32 %v3275, 16
        %v3578 = vrot.slane %v3576, 4
        %v3579 = vshll.u32 %v3275, 16
        %v3581 = vrot.slane %v3579, 5
        %v3582 = vor.u32 %v3578, %v3581
        %v3583 = vrot.slane %v3582, 4
        %v3585 = vshll.u32 %v3276, 16
        %v3587 = vrot.slane %v3585, 5
        %v3588 = vsel %vm1361, %v3583, %v3587
        %v3589 = vshrl.u32 %v3276, 16
        %v3591 = vrot.slane %v3589, 4
        %v3592 = vor.u32 %v3591, %v3587
        %v3593 = vrot.slane %v3592, 4
        %v3595 = vshll.u32 %v3277, 16
        %v3597 = vrot.slane %v3595, 5
        %v3598 = vsel %vm1361, %v3593, %v3597
        %v3600 = vshrl.u32 %v3278, 16
        %v3602 = vrot.slane %v3600, 4
        %v3603 = vshll.u32 %v3278, 16
        %v3605 = vrot.slane %v3603, 5
        %v3606 = vor.u32 %v3602, %v3605
        %v3607 = vrot.slane %v3606, 4
        %v3609 = vshll.u32 %v3279, 16
        %v3611 = vrot.slane %v3609, 5
        %v3612 = vsel %vm1361, %v3607, %v3611
        %v3613 = vshrl.u32 %v3279, 16
        %v3615 = vrot.slane %v3613, 4
        %v3616 = vor.u32 %v3615, %v3611
        %v3617 = vrot.slane %v3616, 4
        %v3619 = vshll.u32 %v3280, 16
        %v3621 = vrot.slane %v3619, 5
        %v3622 = vsel %vm1361, %v3617, %v3621
        %v3624 = vshrl.u32 %v3281, 16
        %v3626 = vrot.slane %v3624, 4
        %v3627 = vshll.u32 %v3281, 16
        %v3629 = vrot.slane %v3627, 5
        %v3630 = vor.u32 %v3626, %v3629
        %v3631 = vrot.slane %v3630, 4
        %v3633 = vshll.u32 %v3282, 16
        %v3635 = vrot.slane %v3633, 5
        %v3636 = vsel %vm1361, %v3631, %v3635
        %v3637 = vshrl.u32 %v3282, 16
        %v3639 = vrot.slane %v3637, 4
        %v3640 = vor.u32 %v3639, %v3635
        %v3641 = vrot.slane %v3640, 4
        %v3643 = vshll.u32 %v3283, 16
        %v3645 = vrot.slane %v3643, 5
        %v3646 = vsel %vm1361, %v3641, %v3645
        %v3648 = vshrl.u32 %v3284, 16
        %v3650 = vrot.slane %v3648, 4
        %v3651 = vshll.u32 %v3284, 16
        %v3653 = vrot.slane %v3651, 5
        %v3654 = vor.u32 %v3650, %v3653
        %v3655 = vrot.slane %v3654, 4
        %v3657 = vshll.u32 %v3285, 16
        %v3659 = vrot.slane %v3657, 5
        %v3660 = vsel %vm1361, %v3655, %v3659
        %v3661 = vshrl.u32 %v3285, 16
        %v3663 = vrot.slane %v3661, 4
        %v3664 = vor.u32 %v3663, %v3659
        %v3665 = vrot.slane %v3664, 4
        %v3667 = vshll.u32 %v3286, 16
        %v3669 = vrot.slane %v3667, 5
        %v3670 = vsel %vm1361, %v3665, %v3669
        %3671 = vrot.lane.b32.xlu0 %v3300, 64
        %v3672 = vpop.permute.xlu0 %3671
        %3673 = vrot.lane.b32.xlu0 %v3310, 64
        %v3674 = vpop.permute.xlu0 %3673
        %3675 = vrot.lane.b32.xlu0 %v3324, 64
        %v3676 = vpop.permute.xlu0 %3675
        %3677 = vrot.lane.b32.xlu0 %v3334, 64
        %v3678 = vpop.permute.xlu0 %3677
        %3679 = vrot.lane.b32.xlu0 %v3348, 64
        %v3680 = vpop.permute.xlu0 %3679
        %3681 = vrot.lane.b32.xlu0 %v3358, 64
        %v3682 = vpop.permute.xlu0 %3681
        %3683 = vrot.lane.b32.xlu0 %v3372, 64
        %v3684 = vpop.permute.xlu0 %3683
        %3685 = vrot.lane.b32.xlu0 %v3382, 64
        %v3686 = vpop.permute.xlu0 %3685
        %3687 = vrot.lane.b32.xlu0 %v3396, 64
        %v3688 = vpop.permute.xlu0 %3687
        %3689 = vrot.lane.b32.xlu0 %v3406, 64
        %v3690 = vpop.permute.xlu0 %3689
        %3691 = vrot.lane.b32.xlu0 %v3420, 64
        %v3692 = vpop.permute.xlu0 %3691
        %3693 = vrot.lane.b32.xlu0 %v3430, 64
        %v3694 = vpop.permute.xlu0 %3693
        %3695 = vrot.lane.b32.xlu0 %v3444, 64
        %v3696 = vpop.permute.xlu0 %3695
        %3697 = vrot.lane.b32.xlu0 %v3454, 64
        %v3698 = vpop.permute.xlu0 %3697
        %3699 = vrot.lane.b32.xlu0 %v3468, 64
        %v3700 = vpop.permute.xlu0 %3699
        %3701 = vrot.lane.b32.xlu0 %v3478, 64
        %v3702 = vpop.permute.xlu0 %3701
        %3703 = vrot.lane.b32.xlu0 %v3492, 64
        %v3704 = vpop.permute.xlu0 %3703
        %3705 = vrot.lane.b32.xlu0 %v3502, 64
        %v3706 = vpop.permute.xlu0 %3705
        %3707 = vrot.lane.b32.xlu0 %v3516, 64
        %v3708 = vpop.permute.xlu0 %3707
        %3709 = vrot.lane.b32.xlu0 %v3526, 64
        %v3710 = vpop.permute.xlu0 %3709
        %3711 = vrot.lane.b32.xlu0 %v3540, 64
        %v3712 = vpop.permute.xlu0 %3711
        %3713 = vrot.lane.b32.xlu0 %v3550, 64
        %v3714 = vpop.permute.xlu0 %3713
        %3715 = vrot.lane.b32.xlu0 %v3564, 64
        %v3716 = vpop.permute.xlu0 %3715
        %3717 = vrot.lane.b32.xlu0 %v3574, 64
        %v3718 = vpop.permute.xlu0 %3717
        %3719 = vrot.lane.b32.xlu0 %v3588, 64
        %v3720 = vpop.permute.xlu0 %3719
        %3721 = vrot.lane.b32.xlu0 %v3598, 64
        %v3722 = vpop.permute.xlu0 %3721
        %3723 = vrot.lane.b32.xlu0 %v3612, 64
        %v3724 = vpop.permute.xlu0 %3723
        %3725 = vrot.lane.b32.xlu0 %v3622, 64
        %v3726 = vpop.permute.xlu0 %3725
        %3727 = vrot.lane.b32.xlu0 %v3636, 64
        %v3728 = vpop.permute.xlu0 %3727
        %3729 = vrot.lane.b32.xlu0 %v3646, 64
        %v3730 = vpop.permute.xlu0 %3729
        %3731 = vrot.lane.b32.xlu0 %v3660, 64
        %v3732 = vpop.permute.xlu0 %3731
        %3733 = vrot.lane.b32.xlu0 %v3670, 64
        %v3734 = vpop.permute.xlu0 %3733
        %3767 = vst.msk [vmem:[#allocation3 + $0xc] sm:$0xf] %vm1842, %v3672
        %3768 = vst.msk [vmem:[#allocation3 + $0x20] sm:$0xf] %vm1842, %v3674
        %3769 = vst.msk [vmem:[#allocation3 + $0x34] sm:$0xf] %vm1842, %v3676
        %3770 = vst.msk [vmem:[#allocation3 + $0x48] sm:$0xf] %vm1842, %v3678
        %3771 = vst.msk [vmem:[#allocation3 + $0x5c] sm:$0xf] %vm1842, %v3680
        %3772 = vst.msk [vmem:[#allocation3 + $0x70] sm:$0xf] %vm1842, %v3682
        %3773 = vst.msk [vmem:[#allocation3 + $0x84] sm:$0xf] %vm1842, %v3684
        %3774 = vst.msk [vmem:[#allocation3 + $0x98] sm:$0xf] %vm1842, %v3686
        %3775 = vst.msk [vmem:[#allocation3 + $0xac] sm:$0xf] %vm1842, %v3688
        %3776 = vst.msk [vmem:[#allocation3 + $0xc0] sm:$0xf] %vm1842, %v3690
        %3777 = vst.msk [vmem:[#allocation3 + $0xd4] sm:$0xf] %vm1842, %v3692
        %3778 = vst.msk [vmem:[#allocation3 + $0xe8] sm:$0xf] %vm1842, %v3694
        %3779 = vst.msk [vmem:[#allocation3 + $0xfc] sm:$0xf] %vm1842, %v3696
        %3780 = vst.msk [vmem:[#allocation3 + $0x110] sm:$0xf] %vm1842, %v3698
        %3781 = vst.msk [vmem:[#allocation3 + $0x124] sm:$0xf] %vm1842, %v3700
        %3782 = vst.msk [vmem:[#allocation3 + $0x138] sm:$0xf] %vm1842, %v3702
        %3783 = vst.msk [vmem:[#allocation3 + $0x14c] sm:$0xf] %vm1842, %v3704
        %3784 = vst.msk [vmem:[#allocation3 + $0x160] sm:$0xf] %vm1842, %v3706
        %3785 = vst.msk [vmem:[#allocation3 + $0x174] sm:$0xf] %vm1842, %v3708
        %3786 = vst.msk [vmem:[#allocation3 + $0x188] sm:$0xf] %vm1842, %v3710
        %3787 = vst.msk [vmem:[#allocation3 + $0x19c] sm:$0xf] %vm1842, %v3712
        %3788 = vst.msk [vmem:[#allocation3 + $0x1b0] sm:$0xf] %vm1842, %v3714
        %3789 = vst.msk [vmem:[#allocation3 + $0x1c4] sm:$0xf] %vm1842, %v3716
        %3790 = vst.msk [vmem:[#allocation3 + $0x1d8] sm:$0xf] %vm1842, %v3718
        %3791 = vst.msk [vmem:[#allocation3 + $0x1ec] sm:$0xf] %vm1842, %v3720
        %3792 = vst.msk [vmem:[#allocation3 + $0x200] sm:$0xf] %vm1842, %v3722
        %3793 = vst.msk [vmem:[#allocation3 + $0x214] sm:$0xf] %vm1842, %v3724
        %3794 = vst.msk [vmem:[#allocation3 + $0x228] sm:$0xf] %vm1842, %v3726
        %3795 = vst.msk [vmem:[#allocation3 + $0x23c] sm:$0xf] %vm1842, %v3728
        %3796 = vst.msk [vmem:[#allocation3 + $0x250] sm:$0xf] %vm1842, %v3730
        %3797 = vst.msk [vmem:[#allocation3 + $0x264] sm:$0xf] %vm1842, %v3732
        %3798 = vst.msk [vmem:[#allocation3 + $0x278] sm:$0xf] %vm1842, %v3734
        %v3799 = vld [vmem:[%s3174] sm:$0xe]
        %v3800 = vld [vmem:[%s3174 + $0x4] sm:$0xf]
        %v3801 = vld [vmem:[%s3174 + $0x8] sm:$0x1]
        %v3802 = vld [vmem:[%s3174 + $0xc] sm:$0xe]
        %v3803 = vld [vmem:[%s3174 + $0x10] sm:$0xf]
        %v3804 = vld [vmem:[%s3174 + $0x14] sm:$0x1]
        %v3805 = vld [vmem:[%s3174 + $0x18] sm:$0xe]
        %v3806 = vld [vmem:[%s3174 + $0x1c] sm:$0xf]
        %v3807 = vld [vmem:[%s3174 + $0x20] sm:$0x1]
        %v3808 = vld [vmem:[%s3174 + $0x24] sm:$0xe]
        %v3809 = vld [vmem:[%s3174 + $0x28] sm:$0xf]
        %v3810 = vld [vmem:[%s3174 + $0x2c] sm:$0x1]
        %v3811 = vld [vmem:[%s3174 + $0x30] sm:$0xe]
        %v3812 = vld [vmem:[%s3174 + $0x34] sm:$0xf]
        %v3813 = vld [vmem:[%s3174 + $0x38] sm:$0x1]
        %v3814 = vld [vmem:[%s3174 + $0x3c] sm:$0xe]
        %v3815 = vld [vmem:[%s3174 + $0x40] sm:$0xf]
        %v3816 = vld [vmem:[%s3174 + $0x44] sm:$0x1]
        %v3817 = vld [vmem:[%s3174 + $0x48] sm:$0xe]
        %v3818 = vld [vmem:[%s3174 + $0x4c] sm:$0xf]
        %v3819 = vld [vmem:[%s3174 + $0x50] sm:$0x1]
        %v3820 = vld [vmem:[%s3174 + $0x54] sm:$0xe]
        %v3821 = vld [vmem:[%s3174 + $0x58] sm:$0xf]
        %v3822 = vld [vmem:[%s3174 + $0x5c] sm:$0x1]
        %v3823 = vld [vmem:[%s3174 + $0x60] sm:$0xe]
        %v3824 = vld [vmem:[%s3174 + $0x64] sm:$0xf]
        %v3825 = vld [vmem:[%s3174 + $0x68] sm:$0x1]
        %v3826 = vld [vmem:[%s3174 + $0x6c] sm:$0xe]
        %v3827 = vld [vmem:[%s3174 + $0x70] sm:$0xf]
        %v3828 = vld [vmem:[%s3174 + $0x74] sm:$0x1]
        %v3829 = vld [vmem:[%s3174 + $0x78] sm:$0xe]
        %v3830 = vld [vmem:[%s3174 + $0x7c] sm:$0xf]
        %v3831 = vld [vmem:[%s3174 + $0x80] sm:$0x1]
        %v3832 = vld [vmem:[%s3174 + $0x84] sm:$0xe]
        %v3833 = vld [vmem:[%s3174 + $0x88] sm:$0xf]
        %v3834 = vld [vmem:[%s3174 + $0x8c] sm:$0x1]
        %v3835 = vld [vmem:[%s3174 + $0x90] sm:$0xe]
        %v3836 = vld [vmem:[%s3174 + $0x94] sm:$0xf]
        %v3837 = vld [vmem:[%s3174 + $0x98] sm:$0x1]
        %v3838 = vld [vmem:[%s3174 + $0x9c] sm:$0xe]
        %v3839 = vld [vmem:[%s3174 + $0xa0] sm:$0xf]
        %v3840 = vld [vmem:[%s3174 + $0xa4] sm:$0x1]
        %v3841 = vld [vmem:[%s3174 + $0xa8] sm:$0xe]
        %v3842 = vld [vmem:[%s3174 + $0xac] sm:$0xf]
        %v3843 = vld [vmem:[%s3174 + $0xb0] sm:$0x1]
        %v3844 = vld [vmem:[%s3174 + $0xb4] sm:$0xe]
        %v3845 = vld [vmem:[%s3174 + $0xb8] sm:$0xf]
        %v3846 = vld [vmem:[%s3174 + $0xbc] sm:$0x1]
        %v3895 = vrot.slane %v3799, 5
        %v3896 = vrot.slane %v3895, 4
        %v3897 = vrot.slane %v3800, 5
        %v3898 = vsel %vm1973, %v3896, %v3897
        %v3899 = vrot.slane %v3897, 4
        %v3900 = vrot.slane %v3801, 5
        %v3901 = vsel %vm1973, %v3899, %v3900
        %v3902 = vrot.slane %v3802, 5
        %v3903 = vrot.slane %v3902, 4
        %v3904 = vrot.slane %v3803, 5
        %v3905 = vsel %vm1973, %v3903, %v3904
        %v3906 = vrot.slane %v3904, 4
        %v3907 = vrot.slane %v3804, 5
        %v3908 = vsel %vm1973, %v3906, %v3907
        %v3909 = vrot.slane %v3805, 5
        %v3910 = vrot.slane %v3909, 4
        %v3911 = vrot.slane %v3806, 5
        %v3912 = vsel %vm1973, %v3910, %v3911
        %v3913 = vrot.slane %v3911, 4
        %v3914 = vrot.slane %v3807, 5
        %v3915 = vsel %vm1973, %v3913, %v3914
        %v3916 = vrot.slane %v3808, 5
        %v3917 = vrot.slane %v3916, 4
        %v3918 = vrot.slane %v3809, 5
        %v3919 = vsel %vm1973, %v3917, %v3918
        %v3920 = vrot.slane %v3918, 4
        %v3921 = vrot.slane %v3810, 5
        %v3922 = vsel %vm1973, %v3920, %v3921
        %v3923 = vrot.slane %v3811, 5
        %v3924 = vrot.slane %v3923, 4
        %v3925 = vrot.slane %v3812, 5
        %v3926 = vsel %vm1973, %v3924, %v3925
        %v3927 = vrot.slane %v3925, 4
        %v3928 = vrot.slane %v3813, 5
        %v3929 = vsel %vm1973, %v3927, %v3928
        %v3930 = vrot.slane %v3814, 5
        %v3931 = vrot.slane %v3930, 4
        %v3932 = vrot.slane %v3815, 5
        %v3933 = vsel %vm1973, %v3931, %v3932
        %v3934 = vrot.slane %v3932, 4
        %v3935 = vrot.slane %v3816, 5
        %v3936 = vsel %vm1973, %v3934, %v3935
        %v3937 = vrot.slane %v3817, 5
        %v3938 = vrot.slane %v3937, 4
        %v3939 = vrot.slane %v3818, 5
        %v3940 = vsel %vm1973, %v3938, %v3939
        %v3941 = vrot.slane %v3939, 4
        %v3942 = vrot.slane %v3819, 5
        %v3943 = vsel %vm1973, %v3941, %v3942
        %v3944 = vrot.slane %v3820, 5
        %v3945 = vrot.slane %v3944, 4
        %v3946 = vrot.slane %v3821, 5
        %v3947 = vsel %vm1973, %v3945, %v3946
        %v3948 = vrot.slane %v3946, 4
        %v3949 = vrot.slane %v3822, 5
        %v3950 = vsel %vm1973, %v3948, %v3949
        %v3951 = vrot.slane %v3823, 5
        %v3952 = vrot.slane %v3951, 4
        %v3953 = vrot.slane %v3824, 5
        %v3954 = vsel %vm1973, %v3952, %v3953
        %v3955 = vrot.slane %v3953, 4
        %v3956 = vrot.slane %v3825, 5
        %v3957 = vsel %vm1973, %v3955, %v3956
        %v3958 = vrot.slane %v3826, 5
        %v3959 = vrot.slane %v3958, 4
        %v3960 = vrot.slane %v3827, 5
        %v3961 = vsel %vm1973, %v3959, %v3960
        %v3962 = vrot.slane %v3960, 4
        %v3963 = vrot.slane %v3828, 5
        %v3964 = vsel %vm1973, %v3962, %v3963
        %v3965 = vrot.slane %v3829, 5
        %v3966 = vrot.slane %v3965, 4
        %v3967 = vrot.slane %v3830, 5
        %v3968 = vsel %vm1973, %v3966, %v3967
        %v3969 = vrot.slane %v3967, 4
        %v3970 = vrot.slane %v3831, 5
        %v3971 = vsel %vm1973, %v3969, %v3970
        %v3972 = vrot.slane %v3832, 5
        %v3973 = vrot.slane %v3972, 4
        %v3974 = vrot.slane %v3833, 5
        %v3975 = vsel %vm1973, %v3973, %v3974
        %v3976 = vrot.slane %v3974, 4
        %v3977 = vrot.slane %v3834, 5
        %v3978 = vsel %vm1973, %v3976, %v3977
        %v3979 = vrot.slane %v3835, 5
        %v3980 = vrot.slane %v3979, 4
        %v3981 = vrot.slane %v3836, 5
        %v3982 = vsel %vm1973, %v3980, %v3981
        %v3983 = vrot.slane %v3981, 4
        %v3984 = vrot.slane %v3837, 5
        %v3985 = vsel %vm1973, %v3983, %v3984
        %v3986 = vrot.slane %v3838, 5
        %v3987 = vrot.slane %v3986, 4
        %v3988 = vrot.slane %v3839, 5
        %v3989 = vsel %vm1973, %v3987, %v3988
        %v3990 = vrot.slane %v3988, 4
        %v3991 = vrot.slane %v3840, 5
        %v3992 = vsel %vm1973, %v3990, %v3991
        %v3993 = vrot.slane %v3841, 5
        %v3994 = vrot.slane %v3993, 4
        %v3995 = vrot.slane %v3842, 5
        %v3996 = vsel %vm1973, %v3994, %v3995
        %v3997 = vrot.slane %v3995, 4
        %v3998 = vrot.slane %v3843, 5
        %v3999 = vsel %vm1973, %v3997, %v3998
        %v4000 = vrot.slane %v3844, 5
        %v4001 = vrot.slane %v4000, 4
        %v4002 = vrot.slane %v3845, 5
        %v4003 = vsel %vm1973, %v4001, %v4002
        %v4004 = vrot.slane %v4002, 4
        %v4005 = vrot.slane %v3846, 5
        %v4006 = vsel %vm1973, %v4004, %v4005
        %4039 = vst.msk [vmem:[#allocation3 + $0x10] sm:$0xf] %vm654, %v3898
        %4040 = vst.msk [vmem:[#allocation3 + $0x24] sm:$0xf] %vm654, %v3901
        %4041 = vst.msk [vmem:[#allocation3 + $0x38] sm:$0xf] %vm654, %v3905
        %4042 = vst.msk [vmem:[#allocation3 + $0x4c] sm:$0xf] %vm654, %v3908
        %4043 = vst.msk [vmem:[#allocation3 + $0x60] sm:$0xf] %vm654, %v3912
        %4044 = vst.msk [vmem:[#allocation3 + $0x74] sm:$0xf] %vm654, %v3915
        %4045 = vst.msk [vmem:[#allocation3 + $0x88] sm:$0xf] %vm654, %v3919
        %4046 = vst.msk [vmem:[#allocation3 + $0x9c] sm:$0xf] %vm654, %v3922
        %4047 = vst.msk [vmem:[#allocation3 + $0xb0] sm:$0xf] %vm654, %v3926
        %4048 = vst.msk [vmem:[#allocation3 + $0xc4] sm:$0xf] %vm654, %v3929
        %4049 = vst.msk [vmem:[#allocation3 + $0xd8] sm:$0xf] %vm654, %v3933
        %4050 = vst.msk [vmem:[#allocation3 + $0xec] sm:$0xf] %vm654, %v3936
        %4051 = vst.msk [vmem:[#allocation3 + $0x100] sm:$0xf] %vm654, %v3940
        %4052 = vst.msk [vmem:[#allocation3 + $0x114] sm:$0xf] %vm654, %v3943
        %4053 = vst.msk [vmem:[#allocation3 + $0x128] sm:$0xf] %vm654, %v3947
        %4054 = vst.msk [vmem:[#allocation3 + $0x13c] sm:$0xf] %vm654, %v3950
        %4055 = vst.msk [vmem:[#allocation3 + $0x150] sm:$0xf] %vm654, %v3954
        %4056 = vst.msk [vmem:[#allocation3 + $0x164] sm:$0xf] %vm654, %v3957
        %4057 = vst.msk [vmem:[#allocation3 + $0x178] sm:$0xf] %vm654, %v3961
        %4058 = vst.msk [vmem:[#allocation3 + $0x18c] sm:$0xf] %vm654, %v3964
        %4059 = vst.msk [vmem:[#allocation3 + $0x1a0] sm:$0xf] %vm654, %v3968
        %4060 = vst.msk [vmem:[#allocation3 + $0x1b4] sm:$0xf] %vm654, %v3971
        %4061 = vst.msk [vmem:[#allocation3 + $0x1c8] sm:$0xf] %vm654, %v3975
        %4062 = vst.msk [vmem:[#allocation3 + $0x1dc] sm:$0xf] %vm654, %v3978
        %4063 = vst.msk [vmem:[#allocation3 + $0x1f0] sm:$0xf] %vm654, %v3982
        %4064 = vst.msk [vmem:[#allocation3 + $0x204] sm:$0xf] %vm654, %v3985
        %4065 = vst.msk [vmem:[#allocation3 + $0x218] sm:$0xf] %vm654, %v3989
        %4066 = vst.msk [vmem:[#allocation3 + $0x22c] sm:$0xf] %vm654, %v3992
        %4067 = vst.msk [vmem:[#allocation3 + $0x240] sm:$0xf] %vm654, %v3996
        %4068 = vst.msk [vmem:[#allocation3 + $0x254] sm:$0xf] %vm654, %v3999
        %4069 = vst.msk [vmem:[#allocation3 + $0x268] sm:$0xf] %vm654, %v4003
        %4070 = vst.msk [vmem:[#allocation3 + $0x27c] sm:$0xf] %vm654, %v4006
        %v4071 = vld [vmem:[#allocation3] sm:$0xff]
        %v4072 = vld [vmem:[#allocation3 + $0x8] sm:$0xff]
        %v4073 = vld [vmem:[#allocation3 + $0x10] sm:$0xf]
        %v4074 = vld [vmem:[#allocation3 + $0x14] sm:$0xff]
        %v4075 = vld [vmem:[#allocation3 + $0x1c] sm:$0xff]
        %v4076 = vld [vmem:[#allocation3 + $0x24] sm:$0xf]
        %v4077 = vld [vmem:[#allocation3 + $0x28] sm:$0xff]
        %v4078 = vld [vmem:[#allocation3 + $0x30] sm:$0xff]
        %v4079 = vld [vmem:[#allocation3 + $0x38] sm:$0xf]
        %v4080 = vld [vmem:[#allocation3 + $0x3c] sm:$0xff]
        %v4081 = vld [vmem:[#allocation3 + $0x44] sm:$0xff]
        %v4082 = vld [vmem:[#allocation3 + $0x4c] sm:$0xf]
        %v4083 = vld [vmem:[#allocation3 + $0x50] sm:$0xff]
        %v4084 = vld [vmem:[#allocation3 + $0x58] sm:$0xff]
        %v4085 = vld [vmem:[#allocation3 + $0x60] sm:$0xf]
        %v4086 = vld [vmem:[#allocation3 + $0x64] sm:$0xff]
        %v4087 = vld [vmem:[#allocation3 + $0x6c] sm:$0xff]
        %v4088 = vld [vmem:[#allocation3 + $0x74] sm:$0xf]
        %v4089 = vld [vmem:[#allocation3 + $0x78] sm:$0xff]
        %v4090 = vld [vmem:[#allocation3 + $0x80] sm:$0xff]
        %v4091 = vld [vmem:[#allocation3 + $0x88] sm:$0xf]
        %v4092 = vld [vmem:[#allocation3 + $0x8c] sm:$0xff]
        %v4093 = vld [vmem:[#allocation3 + $0x94] sm:$0xff]
        %v4094 = vld [vmem:[#allocation3 + $0x9c] sm:$0xf]
        %v4095 = vld [vmem:[#allocation3 + $0xa0] sm:$0xff]
        %v4096 = vld [vmem:[#allocation3 + $0xa8] sm:$0xff]
        %v4097 = vld [vmem:[#allocation3 + $0xb0] sm:$0xf]
        %v4098 = vld [vmem:[#allocation3 + $0xb4] sm:$0xff]
        %v4099 = vld [vmem:[#allocation3 + $0xbc] sm:$0xff]
        %v4100 = vld [vmem:[#allocation3 + $0xc4] sm:$0xf]
        %v4101 = vld [vmem:[#allocation3 + $0xc8] sm:$0xff]
        %v4102 = vld [vmem:[#allocation3 + $0xd0] sm:$0xff]
        %v4103 = vld [vmem:[#allocation3 + $0xd8] sm:$0xf]
        %v4104 = vld [vmem:[#allocation3 + $0xdc] sm:$0xff]
        %v4105 = vld [vmem:[#allocation3 + $0xe4] sm:$0xff]
        %v4106 = vld [vmem:[#allocation3 + $0xec] sm:$0xf]
        %v4107 = vld [vmem:[#allocation3 + $0xf0] sm:$0xff]
        %v4108 = vld [vmem:[#allocation3 + $0xf8] sm:$0xff]
        %v4109 = vld [vmem:[#allocation3 + $0x100] sm:$0xf]
        %v4110 = vld [vmem:[#allocation3 + $0x104] sm:$0xff]
        %v4111 = vld [vmem:[#allocation3 + $0x10c] sm:$0xff]
        %v4112 = vld [vmem:[#allocation3 + $0x114] sm:$0xf]
        %v4113 = vld [vmem:[#allocation3 + $0x118] sm:$0xff]
        %v4114 = vld [vmem:[#allocation3 + $0x120] sm:$0xff]
        %v4115 = vld [vmem:[#allocation3 + $0x128] sm:$0xf]
        %v4116 = vld [vmem:[#allocation3 + $0x12c] sm:$0xff]
        %v4117 = vld [vmem:[#allocation3 + $0x134] sm:$0xff]
        %v4118 = vld [vmem:[#allocation3 + $0x13c] sm:$0xf]
        %v4119 = vld [vmem:[#allocation3 + $0x140] sm:$0xff]
        %v4120 = vld [vmem:[#allocation3 + $0x148] sm:$0xff]
        %v4121 = vld [vmem:[#allocation3 + $0x150] sm:$0xf]
        %v4122 = vld [vmem:[#allocation3 + $0x154] sm:$0xff]
        %v4123 = vld [vmem:[#allocation3 + $0x15c] sm:$0xff]
        %v4124 = vld [vmem:[#allocation3 + $0x164] sm:$0xf]
        %v4125 = vld [vmem:[#allocation3 + $0x168] sm:$0xff]
        %v4126 = vld [vmem:[#allocation3 + $0x170] sm:$0xff]
        %v4127 = vld [vmem:[#allocation3 + $0x178] sm:$0xf]
        %v4128 = vld [vmem:[#allocation3 + $0x17c] sm:$0xff]
        %v4129 = vld [vmem:[#allocation3 + $0x184] sm:$0xff]
        %v4130 = vld [vmem:[#allocation3 + $0x18c] sm:$0xf]
        %v4131 = vld [vmem:[#allocation3 + $0x190] sm:$0xff]
        %v4132 = vld [vmem:[#allocation3 + $0x198] sm:$0xff]
        %v4133 = vld [vmem:[#allocation3 + $0x1a0] sm:$0xf]
        %v4134 = vld [vmem:[#allocation3 + $0x1a4] sm:$0xff]
        %v4135 = vld [vmem:[#allocation3 + $0x1ac] sm:$0xff]
        %v4136 = vld [vmem:[#allocation3 + $0x1b4] sm:$0xf]
        %v4137 = vld [vmem:[#allocation3 + $0x1b8] sm:$0xff]
        %v4138 = vld [vmem:[#allocation3 + $0x1c0] sm:$0xff]
        %v4139 = vld [vmem:[#allocation3 + $0x1c8] sm:$0xf]
        %v4140 = vld [vmem:[#allocation3 + $0x1cc] sm:$0xff]
        %v4141 = vld [vmem:[#allocation3 + $0x1d4] sm:$0xff]
        %v4142 = vld [vmem:[#allocation3 + $0x1dc] sm:$0xf]
        %v4143 = vld [vmem:[#allocation3 + $0x1e0] sm:$0xff]
        %v4144 = vld [vmem:[#allocation3 + $0x1e8] sm:$0xff]
        %v4145 = vld [vmem:[#allocation3 + $0x1f0] sm:$0xf]
        %v4146 = vld [vmem:[#allocation3 + $0x1f4] sm:$0xff]
        %v4147 = vld [vmem:[#allocation3 + $0x1fc] sm:$0xff]
        %v4148 = vld [vmem:[#allocation3 + $0x204] sm:$0xf]
        %v4149 = vld [vmem:[#allocation3 + $0x208] sm:$0xff]
        %v4150 = vld [vmem:[#allocation3 + $0x210] sm:$0xff]
        %v4151 = vld [vmem:[#allocation3 + $0x218] sm:$0xf]
        %v4152 = vld [vmem:[#allocation3 + $0x21c] sm:$0xff]
        %v4153 = vld [vmem:[#allocation3 + $0x224] sm:$0xff]
        %v4154 = vld [vmem:[#allocation3 + $0x22c] sm:$0xf]
        %v4155 = vld [vmem:[#allocation3 + $0x230] sm:$0xff]
        %v4156 = vld [vmem:[#allocation3 + $0x238] sm:$0xff]
        %v4157 = vld [vmem:[#allocation3 + $0x240] sm:$0xf]
        %v4158 = vld [vmem:[#allocation3 + $0x244] sm:$0xff]
        %v4159 = vld [vmem:[#allocation3 + $0x24c] sm:$0xff]
        %v4160 = vld [vmem:[#allocation3 + $0x254] sm:$0xf]
        %v4161 = vld [vmem:[#allocation3 + $0x258] sm:$0xff]
        %v4162 = vld [vmem:[#allocation3 + $0x260] sm:$0xff]
        %v4163 = vld [vmem:[#allocation3 + $0x268] sm:$0xf]
        %v4164 = vld [vmem:[#allocation3 + $0x26c] sm:$0xff]
        %v4165 = vld [vmem:[#allocation3 + $0x274] sm:$0xff]
        %v4166 = vld [vmem:[#allocation3 + $0x27c] sm:$0xf]
        %v4167 = vld [vmem:[%s3] sm:$0xf]
        %v4168 = vld [vmem:[%s3 + $0x4] sm:$0xf]
        %v4169 = vld [vmem:[%s3 + $0x8] sm:$0xf]
        %v4170 = vld [vmem:[%s3 + $0xc] sm:$0xf]
        %v4171 = vld [vmem:[%s3 + $0x10] sm:$0xf]
        %v4172 = vld [vmem:[%s3 + $0x14] sm:$0xf]
        %v4173 = vld [vmem:[%s3 + $0x18] sm:$0xf]
        %v4174 = vld [vmem:[%s3 + $0x1c] sm:$0xf]
        %v4175 = vld [vmem:[%s3 + $0x20] sm:$0xf]
        %v4176 = vld [vmem:[%s3 + $0x24] sm:$0xf]
        %v4177 = vld [vmem:[%s3 + $0x28] sm:$0xf]
        %v4178 = vld [vmem:[%s3 + $0x2c] sm:$0xf]
        %v4179 = vld [vmem:[%s3 + $0x30] sm:$0xf]
        %v4180 = vld [vmem:[%s3 + $0x34] sm:$0xf]
        %v4181 = vld [vmem:[%s3 + $0x38] sm:$0xf]
        %v4182 = vld [vmem:[%s3 + $0x3c] sm:$0xf]
        %v4183 = vld [vmem:[%s3 + $0x40] sm:$0xf]
        %v4184 = vld [vmem:[%s3 + $0x44] sm:$0xf]
        %v4185 = vld [vmem:[%s3 + $0x48] sm:$0xf]
        %v4186 = vld [vmem:[%s3 + $0x4c] sm:$0xf]
        %v4187 = vld [vmem:[%s3 + $0x50] sm:$0xf]
        %v4188 = vld [vmem:[%s3 + $0x54] sm:$0xf]
        %v4189 = vld [vmem:[%s3 + $0x58] sm:$0xf]
        %v4190 = vld [vmem:[%s3 + $0x5c] sm:$0xf]
        %v4191 = vld [vmem:[%s3 + $0x60] sm:$0xf]
        %v4192 = vld [vmem:[%s3 + $0x64] sm:$0xf]
        %v4193 = vld [vmem:[%s3 + $0x68] sm:$0xf]
        %v4194 = vld [vmem:[%s3 + $0x6c] sm:$0xf]
        %v4195 = vld [vmem:[%s3 + $0x70] sm:$0xf]
        %v4196 = vld [vmem:[%s3 + $0x74] sm:$0xf]
        %v4197 = vld [vmem:[%s3 + $0x78] sm:$0xf]
        %v4198 = vld [vmem:[%s3 + $0x7c] sm:$0xf]
        %v4199 = vld [vmem:[%s3 + $0x80] sm:$0xf]
        %v4200 = vld [vmem:[%s3 + $0x84] sm:$0xf]
        %v4201 = vld [vmem:[%s3 + $0x88] sm:$0xf]
        %v4202 = vld [vmem:[%s3 + $0x8c] sm:$0xf]
        %v4203 = vld [vmem:[%s3 + $0x90] sm:$0xf]
        %v4204 = vld [vmem:[%s3 + $0x94] sm:$0xf]
        %v4205 = vld [vmem:[%s3 + $0x98] sm:$0xf]
        %v4206 = vld [vmem:[%s3 + $0x9c] sm:$0xf]
        %v4207 = vld [vmem:[%s3 + $0xa0] sm:$0xf]
        %v4208 = vld [vmem:[%s3 + $0xa4] sm:$0xf]
        %v4209 = vld [vmem:[%s3 + $0xa8] sm:$0xf]
        %v4210 = vld [vmem:[%s3 + $0xac] sm:$0xf]
        %v4211 = vld [vmem:[%s3 + $0xb0] sm:$0xf]
        %v4212 = vld [vmem:[%s3 + $0xb4] sm:$0xf]
        %v4213 = vld [vmem:[%s3 + $0xb8] sm:$0xf]
        %v4214 = vld [vmem:[%s3 + $0xbc] sm:$0xf]
        %v4215 = vld [vmem:[%s3 + $0xc0] sm:$0xf]
        %v4216 = vld [vmem:[%s3 + $0xc4] sm:$0xf]
        %v4217 = vld [vmem:[%s3 + $0xc8] sm:$0xf]
        %v4218 = vld [vmem:[%s3 + $0xcc] sm:$0xf]
        %v4219 = vld [vmem:[%s3 + $0xd0] sm:$0xf]
        %v4220 = vld [vmem:[%s3 + $0xd4] sm:$0xf]
        %v4221 = vld [vmem:[%s3 + $0xd8] sm:$0xf]
        %v4222 = vld [vmem:[%s3 + $0xdc] sm:$0xf]
        %v4223 = vld [vmem:[%s3 + $0xe0] sm:$0xf]
        %v4224 = vld [vmem:[%s3 + $0xe4] sm:$0xf]
        %v4225 = vld [vmem:[%s3 + $0xe8] sm:$0xf]
        %v4226 = vld [vmem:[%s3 + $0xec] sm:$0xf]
        %v4227 = vld [vmem:[%s3 + $0xf0] sm:$0xf]
        %v4228 = vld [vmem:[%s3 + $0xf4] sm:$0xf]
        %v4229 = vld [vmem:[%s3 + $0xf8] sm:$0xf]
        %v4230 = vld [vmem:[%s3 + $0xfc] sm:$0xf]
        %v4231 = vld [vmem:[%s3 + $0x100] sm:$0xf]
        %v4232 = vld [vmem:[%s3 + $0x104] sm:$0xf]
        %v4233 = vld [vmem:[%s3 + $0x108] sm:$0xf]
        %v4234 = vld [vmem:[%s3 + $0x10c] sm:$0xf]
        %v4235 = vld [vmem:[%s3 + $0x110] sm:$0xf]
        %v4236 = vld [vmem:[%s3 + $0x114] sm:$0xf]
        %v4237 = vld [vmem:[%s3 + $0x118] sm:$0xf]
        %v4238 = vld [vmem:[%s3 + $0x11c] sm:$0xf]
        %v4239 = vld [vmem:[%s4] sm:$0x1]
        %v4241 = vlaneseq
        %v4242 = vshrl.u32 %v4241, 7
        %v4243 = vsub.s32 0, %v4242
        %v4244 = vrot.slane %v4239, %v4243
        %v4342 = vunpack.c.l.b16 %v4071
        %v4343 = vunpack.c.h.b16 %v4071
        %v4344 = vunpack.c.l.b16 %v4072
        %v4345 = vunpack.c.h.b16 %v4072
        %v4346 = vunpack.c.l.b16 %v4073
        %v4347 = vunpack.c.l.b16 %v4074
        %v4348 = vunpack.c.h.b16 %v4074
        %v4349 = vunpack.c.l.b16 %v4075
        %v4350 = vunpack.c.h.b16 %v4075
        %v4351 = vunpack.c.l.b16 %v4076
        %v4352 = vunpack.c.l.b16 %v4077
        %v4353 = vunpack.c.h.b16 %v4077
        %v4354 = vunpack.c.l.b16 %v4078
        %v4355 = vunpack.c.h.b16 %v4078
        %v4356 = vunpack.c.l.b16 %v4079
        %v4357 = vunpack.c.l.b16 %v4080
        %v4358 = vunpack.c.h.b16 %v4080
        %v4359 = vunpack.c.l.b16 %v4081
        %v4360 = vunpack.c.h.b16 %v4081
        %v4361 = vunpack.c.l.b16 %v4082
        %v4362 = vunpack.c.l.b16 %v4083
        %v4363 = vunpack.c.h.b16 %v4083
        %v4364 = vunpack.c.l.b16 %v4084
        %v4365 = vunpack.c.h.b16 %v4084
        %v4366 = vunpack.c.l.b16 %v4085
        %v4367 = vunpack.c.l.b16 %v4086
        %v4368 = vunpack.c.h.b16 %v4086
        %v4369 = vunpack.c.l.b16 %v4087
        %v4370 = vunpack.c.h.b16 %v4087
        %v4371 = vunpack.c.l.b16 %v4088
        %v4372 = vunpack.c.l.b16 %v4089
        %v4373 = vunpack.c.h.b16 %v4089
        %v4374 = vunpack.c.l.b16 %v4090
        %v4375 = vunpack.c.h.b16 %v4090
        %v4376 = vunpack.c.l.b16 %v4091
        %v4377 = vunpack.c.l.b16 %v4092
        %v4378 = vunpack.c.h.b16 %v4092
        %v4379 = vunpack.c.l.b16 %v4093
        %v4380 = vunpack.c.h.b16 %v4093
        %v4381 = vunpack.c.l.b16 %v4094
        %v4382 = vunpack.c.l.b16 %v4095
        %v4383 = vunpack.c.h.b16 %v4095
        %v4384 = vunpack.c.l.b16 %v4096
        %v4385 = vunpack.c.h.b16 %v4096
        %v4386 = vunpack.c.l.b16 %v4097
        %v4387 = vunpack.c.l.b16 %v4098
        %v4388 = vunpack.c.h.b16 %v4098
        %v4389 = vunpack.c.l.b16 %v4099
        %v4390 = vunpack.c.h.b16 %v4099
        %v4391 = vunpack.c.l.b16 %v4100
        %v4392 = vunpack.c.l.b16 %v4101
        %v4393 = vunpack.c.h.b16 %v4101
        %v4394 = vunpack.c.l.b16 %v4102
        %v4395 = vunpack.c.h.b16 %v4102
        %v4396 = vunpack.c.l.b16 %v4103
        %v4397 = vunpack.c.l.b16 %v4104
        %v4398 = vunpack.c.h.b16 %v4104
        %v4399 = vunpack.c.l.b16 %v4105
        %v4400 = vunpack.c.h.b16 %v4105
        %v4401 = vunpack.c.l.b16 %v4106
        %v4402 = vunpack.c.l.b16 %v4107
        %v4403 = vunpack.c.h.b16 %v4107
        %v4404 = vunpack.c.l.b16 %v4108
        %v4405 = vunpack.c.h.b16 %v4108
        %v4406 = vunpack.c.l.b16 %v4109
        %v4407 = vunpack.c.l.b16 %v4110
        %v4408 = vunpack.c.h.b16 %v4110
        %v4409 = vunpack.c.l.b16 %v4111
        %v4410 = vunpack.c.h.b16 %v4111
        %v4411 = vunpack.c.l.b16 %v4112
        %v4412 = vunpack.c.l.b16 %v4113
        %v4413 = vunpack.c.h.b16 %v4113
        %v4414 = vunpack.c.l.b16 %v4114
        %v4415 = vunpack.c.h.b16 %v4114
        %v4416 = vunpack.c.l.b16 %v4115
        %v4417 = vunpack.c.l.b16 %v4116
        %v4418 = vunpack.c.h.b16 %v4116
        %v4419 = vunpack.c.l.b16 %v4117
        %v4420 = vunpack.c.h.b16 %v4117
        %v4421 = vunpack.c.l.b16 %v4118
        %v4422 = vunpack.c.l.b16 %v4119
        %v4423 = vunpack.c.h.b16 %v4119
        %v4424 = vunpack.c.l.b16 %v4120
        %v4425 = vunpack.c.h.b16 %v4120
        %v4426 = vunpack.c.l.b16 %v4121
        %v4427 = vunpack.c.l.b16 %v4122
        %v4428 = vunpack.c.h.b16 %v4122
        %v4429 = vunpack.c.l.b16 %v4123
        %v4430 = vunpack.c.h.b16 %v4123
        %v4431 = vunpack.c.l.b16 %v4124
        %v4432 = vunpack.c.l.b16 %v4125
        %v4433 = vunpack.c.h.b16 %v4125
        %v4434 = vunpack.c.l.b16 %v4126
        %v4435 = vunpack.c.h.b16 %v4126
        %v4436 = vunpack.c.l.b16 %v4127
        %v4437 = vunpack.c.l.b16 %v4128
        %v4438 = vunpack.c.h.b16 %v4128
        %v4439 = vunpack.c.l.b16 %v4129
        %v4440 = vunpack.c.h.b16 %v4129
        %v4441 = vunpack.c.l.b16 %v4130
        %v4442 = vunpack.c.l.b16 %v4131
        %v4443 = vunpack.c.h.b16 %v4131
        %v4444 = vunpack.c.l.b16 %v4132
        %v4445 = vunpack.c.h.b16 %v4132
        %v4446 = vunpack.c.l.b16 %v4133
        %v4447 = vunpack.c.l.b16 %v4134
        %v4448 = vunpack.c.h.b16 %v4134
        %v4449 = vunpack.c.l.b16 %v4135
        %v4450 = vunpack.c.h.b16 %v4135
        %v4451 = vunpack.c.l.b16 %v4136
        %v4452 = vunpack.c.l.b16 %v4137
        %v4453 = vunpack.c.h.b16 %v4137
        %v4454 = vunpack.c.l.b16 %v4138
        %v4455 = vunpack.c.h.b16 %v4138
        %v4456 = vunpack.c.l.b16 %v4139
        %v4457 = vunpack.c.l.b16 %v4140
        %v4458 = vunpack.c.h.b16 %v4140
        %v4459 = vunpack.c.l.b16 %v4141
        %v4460 = vunpack.c.h.b16 %v4141
        %v4461 = vunpack.c.l.b16 %v4142
        %v4462 = vunpack.c.l.b16 %v4143
        %v4463 = vunpack.c.h.b16 %v4143
        %v4464 = vunpack.c.l.b16 %v4144
        %v4465 = vunpack.c.h.b16 %v4144
        %v4466 = vunpack.c.l.b16 %v4145
        %v4467 = vunpack.c.l.b16 %v4146
        %v4468 = vunpack.c.h.b16 %v4146
        %v4469 = vunpack.c.l.b16 %v4147
        %v4470 = vunpack.c.h.b16 %v4147
        %v4471 = vunpack.c.l.b16 %v4148
        %v4472 = vunpack.c.l.b16 %v4149
        %v4473 = vunpack.c.h.b16 %v4149
        %v4474 = vunpack.c.l.b16 %v4150
        %v4475 = vunpack.c.h.b16 %v4150
        %v4476 = vunpack.c.l.b16 %v4151
        %v4477 = vunpack.c.l.b16 %v4152
        %v4478 = vunpack.c.h.b16 %v4152
        %v4479 = vunpack.c.l.b16 %v4153
        %v4480 = vunpack.c.h.b16 %v4153
        %v4481 = vunpack.c.l.b16 %v4154
        %v4482 = vunpack.c.l.b16 %v4155
        %v4483 = vunpack.c.h.b16 %v4155
        %v4484 = vunpack.c.l.b16 %v4156
        %v4485 = vunpack.c.h.b16 %v4156
        %v4486 = vunpack.c.l.b16 %v4157
        %v4487 = vunpack.c.l.b16 %v4158
        %v4488 = vunpack.c.h.b16 %v4158
        %v4489 = vunpack.c.l.b16 %v4159
        %v4490 = vunpack.c.h.b16 %v4159
        %v4491 = vunpack.c.l.b16 %v4160
        %v4492 = vunpack.c.l.b16 %v4161
        %v4493 = vunpack.c.h.b16 %v4161
        %v4494 = vunpack.c.l.b16 %v4162
        %v4495 = vunpack.c.h.b16 %v4162
        %v4496 = vunpack.c.l.b16 %v4163
        %v4497 = vunpack.c.l.b16 %v4164
        %v4498 = vunpack.c.h.b16 %v4164
        %v4499 = vunpack.c.l.b16 %v4165
        %v4500 = vunpack.c.h.b16 %v4165
        %v4501 = vunpack.c.l.b16 %v4166
        %v4502 = vpack.c.b16 %v4347, %v4342
        %v4503 = vpack.c.b16 %v4348, %v4343
        %v4504 = vpack.c.b16 %v4349, %v4344
        %v4505 = vpack.c.b16 %v4350, %v4345
        %v4506 = vpack.c.b16 %v4351, %v4346
        %v4507 = vpack.c.b16 %v4357, %v4352
        %v4508 = vpack.c.b16 %v4358, %v4353
        %v4509 = vpack.c.b16 %v4359, %v4354
        %v4510 = vpack.c.b16 %v4360, %v4355
        %v4511 = vpack.c.b16 %v4361, %v4356
        %v4512 = vpack.c.b16 %v4367, %v4362
        %v4513 = vpack.c.b16 %v4368, %v4363
        %v4514 = vpack.c.b16 %v4369, %v4364
        %v4515 = vpack.c.b16 %v4370, %v4365
        %v4516 = vpack.c.b16 %v4371, %v4366
        %v4517 = vpack.c.b16 %v4377, %v4372
        %v4518 = vpack.c.b16 %v4378, %v4373
        %v4519 = vpack.c.b16 %v4379, %v4374
        %v4520 = vpack.c.b16 %v4380, %v4375
        %v4521 = vpack.c.b16 %v4381, %v4376
        %v4522 = vpack.c.b16 %v4387, %v4382
        %v4523 = vpack.c.b16 %v4388, %v4383
        %v4524 = vpack.c.b16 %v4389, %v4384
        %v4525 = vpack.c.b16 %v4390, %v4385
        %v4526 = vpack.c.b16 %v4391, %v4386
        %v4527 = vpack.c.b16 %v4397, %v4392
        %v4528 = vpack.c.b16 %v4398, %v4393
        %v4529 = vpack.c.b16 %v4399, %v4394
        %v4530 = vpack.c.b16 %v4400, %v4395
        %v4531 = vpack.c.b16 %v4401, %v4396
        %v4532 = vpack.c.b16 %v4407, %v4402
        %v4533 = vpack.c.b16 %v4408, %v4403
        %v4534 = vpack.c.b16 %v4409, %v4404
        %v4535 = vpack.c.b16 %v4410, %v4405
        %v4536 = vpack.c.b16 %v4411, %v4406
        %v4537 = vpack.c.b16 %v4417, %v4412
        %v4538 = vpack.c.b16 %v4418, %v4413
        %v4539 = vpack.c.b16 %v4419, %v4414
        %v4540 = vpack.c.b16 %v4420, %v4415
        %v4541 = vpack.c.b16 %v4421, %v4416
        %v4542 = vpack.c.b16 %v4427, %v4422
        %v4543 = vpack.c.b16 %v4428, %v4423
        %v4544 = vpack.c.b16 %v4429, %v4424
        %v4545 = vpack.c.b16 %v4430, %v4425
        %v4546 = vpack.c.b16 %v4431, %v4426
        %v4547 = vpack.c.b16 %v4437, %v4432
        %v4548 = vpack.c.b16 %v4438, %v4433
        %v4549 = vpack.c.b16 %v4439, %v4434
        %v4550 = vpack.c.b16 %v4440, %v4435
        %v4551 = vpack.c.b16 %v4441, %v4436
        %v4552 = vpack.c.b16 %v4447, %v4442
        %v4553 = vpack.c.b16 %v4448, %v4443
        %v4554 = vpack.c.b16 %v4449, %v4444
        %v4555 = vpack.c.b16 %v4450, %v4445
        %v4556 = vpack.c.b16 %v4451, %v4446
        %v4557 = vpack.c.b16 %v4457, %v4452
        %v4558 = vpack.c.b16 %v4458, %v4453
        %v4559 = vpack.c.b16 %v4459, %v4454
        %v4560 = vpack.c.b16 %v4460, %v4455
        %v4561 = vpack.c.b16 %v4461, %v4456
        %v4562 = vpack.c.b16 %v4467, %v4462
        %v4563 = vpack.c.b16 %v4468, %v4463
        %v4564 = vpack.c.b16 %v4469, %v4464
        %v4565 = vpack.c.b16 %v4470, %v4465
        %v4566 = vpack.c.b16 %v4471, %v4466
        %v4567 = vpack.c.b16 %v4477, %v4472
        %v4568 = vpack.c.b16 %v4478, %v4473
        %v4569 = vpack.c.b16 %v4479, %v4474
        %v4570 = vpack.c.b16 %v4480, %v4475
        %v4571 = vpack.c.b16 %v4481, %v4476
        %v4572 = vpack.c.b16 %v4487, %v4482
        %v4573 = vpack.c.b16 %v4488, %v4483
        %v4574 = vpack.c.b16 %v4489, %v4484
        %v4575 = vpack.c.b16 %v4490, %v4485
        %v4576 = vpack.c.b16 %v4491, %v4486
        %v4577 = vpack.c.b16 %v4497, %v4492
        %v4578 = vpack.c.b16 %v4498, %v4493
        %v4579 = vpack.c.b16 %v4499, %v4494
        %v4580 = vpack.c.b16 %v4500, %v4495
        %v4581 = vpack.c.b16 %v4501, %v4496
        %v4718 = vunpack.c.l.b16 %v4167
        %v4719 = vunpack.c.l.b16 %v4168
        %v4720 = vunpack.c.l.b16 %v4169
        %v4721 = vunpack.c.l.b16 %v4170
        %v4722 = vunpack.c.l.b16 %v4171
        %v4723 = vunpack.c.l.b16 %v4172
        %v4724 = vunpack.c.l.b16 %v4173
        %v4725 = vunpack.c.l.b16 %v4174
        %v4726 = vunpack.c.l.b16 %v4175
        %v4727 = vunpack.c.l.b16 %v4176
        %v4728 = vunpack.c.l.b16 %v4177
        %v4729 = vunpack.c.l.b16 %v4178
        %v4730 = vunpack.c.l.b16 %v4179
        %v4731 = vunpack.c.l.b16 %v4180
        %v4732 = vunpack.c.l.b16 %v4181
        %v4733 = vunpack.c.l.b16 %v4182
        %v4734 = vunpack.c.l.b16 %v4183
        %v4735 = vunpack.c.l.b16 %v4184
        %v4736 = vunpack.c.l.b16 %v4185
        %v4737 = vunpack.c.l.b16 %v4186
        %v4738 = vunpack.c.l.b16 %v4187
        %v4739 = vunpack.c.l.b16 %v4188
        %v4740 = vunpack.c.l.b16 %v4189
        %v4741 = vunpack.c.l.b16 %v4190
        %v4742 = vunpack.c.l.b16 %v4191
        %v4743 = vunpack.c.l.b16 %v4192
        %v4744 = vunpack.c.l.b16 %v4193
        %v4745 = vunpack.c.l.b16 %v4194
        %v4746 = vunpack.c.l.b16 %v4195
        %v4747 = vunpack.c.l.b16 %v4196
        %v4748 = vunpack.c.l.b16 %v4197
        %v4749 = vunpack.c.l.b16 %v4198
        %v4750 = vunpack.c.l.b16 %v4199
        %v4751 = vunpack.c.l.b16 %v4200
        %v4752 = vunpack.c.l.b16 %v4201
        %v4753 = vunpack.c.l.b16 %v4202
        %v4754 = vunpack.c.l.b16 %v4203
        %v4755 = vunpack.c.l.b16 %v4204
        %v4756 = vunpack.c.l.b16 %v4205
        %v4757 = vunpack.c.l.b16 %v4206
        %v4758 = vunpack.c.l.b16 %v4207
        %v4759 = vunpack.c.l.b16 %v4208
        %v4760 = vunpack.c.l.b16 %v4209
        %v4761 = vunpack.c.l.b16 %v4210
        %v4762 = vunpack.c.l.b16 %v4211
        %v4763 = vunpack.c.l.b16 %v4212
        %v4764 = vunpack.c.l.b16 %v4213
        %v4765 = vunpack.c.l.b16 %v4214
        %v4766 = vunpack.c.l.b16 %v4215
        %v4767 = vunpack.c.l.b16 %v4216
        %v4768 = vunpack.c.l.b16 %v4217
        %v4769 = vunpack.c.l.b16 %v4218
        %v4770 = vunpack.c.l.b16 %v4219
        %v4771 = vunpack.c.l.b16 %v4220
        %v4772 = vunpack.c.l.b16 %v4221
        %v4773 = vunpack.c.l.b16 %v4222
        %v4774 = vunpack.c.l.b16 %v4223
        %v4775 = vunpack.c.l.b16 %v4224
        %v4776 = vunpack.c.l.b16 %v4225
        %v4777 = vunpack.c.l.b16 %v4226
        %v4778 = vunpack.c.l.b16 %v4227
        %v4779 = vunpack.c.l.b16 %v4228
        %v4780 = vunpack.c.l.b16 %v4229
        %v4781 = vunpack.c.l.b16 %v4230
        %v4782 = vunpack.c.l.b16 %v4231
        %v4783 = vunpack.c.l.b16 %v4232
        %v4784 = vunpack.c.l.b16 %v4233
        %v4785 = vunpack.c.l.b16 %v4234
        %v4786 = vunpack.c.l.b16 %v4235
        %v4787 = vunpack.c.l.b16 %v4236
        %v4788 = vunpack.c.l.b16 %v4237
        %v4789 = vunpack.c.l.b16 %v4238
        %v4790 = vpack.c.b16 %v4719, %v4718
        %v4791 = vpack.c.b16 %v4721, %v4720
        %v4792 = vpack.c.b16 %v4723, %v4722
        %v4793 = vpack.c.b16 %v4725, %v4724
        %v4794 = vpack.c.b16 %v4727, %v4726
        %v4795 = vpack.c.b16 %v4729, %v4728
        %v4796 = vpack.c.b16 %v4731, %v4730
        %v4797 = vpack.c.b16 %v4733, %v4732
        %v4798 = vpack.c.b16 %v4735, %v4734
        %v4799 = vpack.c.b16 %v4737, %v4736
        %v4800 = vpack.c.b16 %v4739, %v4738
        %v4801 = vpack.c.b16 %v4741, %v4740
        %v4802 = vpack.c.b16 %v4743, %v4742
        %v4803 = vpack.c.b16 %v4745, %v4744
        %v4804 = vpack.c.b16 %v4747, %v4746
        %v4805 = vpack.c.b16 %v4749, %v4748
        %v4806 = vpack.c.b16 %v4751, %v4750
        %v4807 = vpack.c.b16 %v4753, %v4752
        %v4808 = vpack.c.b16 %v4755, %v4754
        %v4809 = vpack.c.b16 %v4757, %v4756
        %v4810 = vpack.c.b16 %v4759, %v4758
        %v4811 = vpack.c.b16 %v4761, %v4760
        %v4812 = vpack.c.b16 %v4763, %v4762
        %v4813 = vpack.c.b16 %v4765, %v4764
        %v4814 = vpack.c.b16 %v4767, %v4766
        %v4815 = vpack.c.b16 %v4769, %v4768
        %v4816 = vpack.c.b16 %v4771, %v4770
        %v4817 = vpack.c.b16 %v4773, %v4772
        %v4818 = vpack.c.b16 %v4775, %v4774
        %v4819 = vpack.c.b16 %v4777, %v4776
        %v4820 = vpack.c.b16 %v4779, %v4778
        %v4821 = vpack.c.b16 %v4781, %v4780
        %v4822 = vpack.c.b16 %v4783, %v4782
        %v4823 = vpack.c.b16 %v4785, %v4784
        %v4824 = vpack.c.b16 %v4787, %v4786
        %v4825 = vpack.c.b16 %v4789, %v4788
        %vm4862 = vcmask 523264
        %v4864 = vsel %vm4862, %v4506, 0
        %v4867 = vsel %vm4862, %v4511, 0
        %v4870 = vsel %vm4862, %v4516, 0
        %v4873 = vsel %vm4862, %v4521, 0
        %v4876 = vsel %vm4862, %v4526, 0
        %v4879 = vsel %vm4862, %v4531, 0
        %v4882 = vsel %vm4862, %v4536, 0
        %v4885 = vsel %vm4862, %v4541, 0
        %v4888 = vsel %vm4862, %v4546, 0
        %v4891 = vsel %vm4862, %v4551, 0
        %v4894 = vsel %vm4862, %v4556, 0
        %v4897 = vsel %vm4862, %v4561, 0
        %v4900 = vsel %vm4862, %v4566, 0
        %v4903 = vsel %vm4862, %v4571, 0
        %v4906 = vsel %vm4862, %v4576, 0
        %v4909 = vsel %vm4862, %v4581, 0
        %4911 = vmatprep.subr.bf16.mxu0 0
        %4912 = vmatpush1.bf16.msra.mxu0 %v4797
        %4913 = vmatprep.subr.bf16.mxu0 0
        %4914 = vmatpush1.bf16.msra.mxu0 %v4796
        %4915 = vmatprep.subr.bf16.mxu0 0
        %4916 = vmatpush1.bf16.msra.mxu0 %v4795
        %4917 = vmatprep.subr.bf16.mxu0 0
        %4918 = vmatpush1.bf16.msra.mxu0 %v4794
        %4919 = vmatprep.subr.bf16.mxu0 0
        %4920 = vmatpush1.bf16.msra.mxu0 %v4793
        %4921 = vmatprep.subr.bf16.mxu0 0
        %4922 = vmatpush1.bf16.msra.mxu0 %v4792
        %4923 = vmatprep.subr.bf16.mxu0 0
        %4924 = vmatpush1.bf16.msra.mxu0 %v4791
        %4925 = vmatprep.subr.bf16.mxu0 0
        %4926 = vmatpush1.bf16.msra.mxu0 %v4790
        %4927 = vmatprep.subr.bf16.mxu0 0
        %4928 = vmatpush2.bf16.msra.mxu0 %v4805
        %4929 = vmatprep.subr.bf16.mxu0 0
        %4930 = vmatpush2.bf16.msra.mxu0 %v4804
        %4931 = vmatprep.subr.bf16.mxu0 0
        %4932 = vmatpush2.bf16.msra.mxu0 %v4803
        %4933 = vmatprep.subr.bf16.mxu0 0
        %4934 = vmatpush2.bf16.msra.mxu0 %v4802
        %4935 = vmatprep.subr.bf16.mxu0 0
        %4936 = vmatpush2.bf16.msra.mxu0 %v4801
        %4937 = vmatprep.subr.bf16.mxu0 0
        %4938 = vmatpush2.bf16.msra.mxu0 %v4800
        %4939 = vmatprep.subr.bf16.mxu0 0
        %4940 = vmatpush2.bf16.msra.mxu0 %v4799
        %4941 = vmatprep.subr.bf16.mxu0 0
        %4942 = vmatpush2.bf16.msra.mxu0 %v4798
        %4943 = vmatprep.mubr.bf16.mxu0 %v4503
        %4944 = vmatmul.mubr.bf16.gmra.mxu0 %v4502
        %v4945 = vpop.f32.mrf.mxu0
        %v4946 = vadd.f32 %v4244, %v4945
        %v4947 = vpop.f32.mrf.mxu0
        %v4948 = vpop.f32.mrf.mxu0
        %v4949 = vadd.f32 %v4244, %v4948
        %v4950 = vpop.f32.mrf.mxu0
        %4951 = vmatprep.mubr.bf16.mxu0 %v4508
        %4952 = vmatmul.mubr.bf16.gmra.mxu0 %v4507
        %v4953 = vpop.f32.mrf.mxu0
        %v4954 = vadd.f32 %v4244, %v4953
        %v4955 = vpop.f32.mrf.mxu0
        %v4956 = vpop.f32.mrf.mxu0
        %v4957 = vadd.f32 %v4244, %v4956
        %v4958 = vpop.f32.mrf.mxu0
        %4959 = vmatprep.mubr.bf16.mxu0 %v4513
        %4960 = vmatmul.mubr.bf16.gmra.mxu0 %v4512
        %v4961 = vpop.f32.mrf.mxu0
        %v4962 = vadd.f32 %v4244, %v4961
        %v4963 = vpop.f32.mrf.mxu0
        %v4964 = vpop.f32.mrf.mxu0
        %v4965 = vadd.f32 %v4244, %v4964
        %v4966 = vpop.f32.mrf.mxu0
        %4967 = vmatprep.mubr.bf16.mxu0 %v4518
        %4968 = vmatmul.mubr.bf16.gmra.mxu0 %v4517
        %v4969 = vpop.f32.mrf.mxu0
        %v4970 = vadd.f32 %v4244, %v4969
        %v4971 = vpop.f32.mrf.mxu0
        %v4972 = vpop.f32.mrf.mxu0
        %v4973 = vadd.f32 %v4244, %v4972
        %v4974 = vpop.f32.mrf.mxu0
        %4975 = vmatprep.mubr.bf16.mxu0 %v4523
        %4976 = vmatmul.mubr.bf16.gmra.mxu0 %v4522
        %v4977 = vpop.f32.mrf.mxu0
        %v4978 = vadd.f32 %v4244, %v4977
        %v4979 = vpop.f32.mrf.mxu0
        %v4980 = vpop.f32.mrf.mxu0
        %v4981 = vadd.f32 %v4244, %v4980
        %v4982 = vpop.f32.mrf.mxu0
        %4983 = vmatprep.mubr.bf16.mxu0 %v4528
        %4984 = vmatmul.mubr.bf16.gmra.mxu0 %v4527
        %v4985 = vpop.f32.mrf.mxu0
        %v4986 = vadd.f32 %v4244, %v4985
        %v4987 = vpop.f32.mrf.mxu0
        %v4988 = vpop.f32.mrf.mxu0
        %v4989 = vadd.f32 %v4244, %v4988
        %v4990 = vpop.f32.mrf.mxu0
        %4991 = vmatprep.mubr.bf16.mxu0 %v4533
        %4992 = vmatmul.mubr.bf16.gmra.mxu0 %v4532
        %v4993 = vpop.f32.mrf.mxu0
        %v4994 = vadd.f32 %v4244, %v4993
        %v4995 = vpop.f32.mrf.mxu0
        %v4996 = vpop.f32.mrf.mxu0
        %v4997 = vadd.f32 %v4244, %v4996
        %v4998 = vpop.f32.mrf.mxu0
        %4999 = vmatprep.mubr.bf16.mxu0 %v4538
        %5000 = vmatmul.mubr.bf16.gmra.mxu0 %v4537
        %v5001 = vpop.f32.mrf.mxu0
        %v5002 = vadd.f32 %v4244, %v5001
        %v5003 = vpop.f32.mrf.mxu0
        %v5004 = vpop.f32.mrf.mxu0
        %v5005 = vadd.f32 %v4244, %v5004
        %v5006 = vpop.f32.mrf.mxu0
        %5007 = vmatprep.mubr.bf16.mxu0 %v4543
        %5008 = vmatmul.mubr.bf16.gmra.mxu0 %v4542
        %v5009 = vpop.f32.mrf.mxu0
        %v5010 = vadd.f32 %v4244, %v5009
        %v5011 = vpop.f32.mrf.mxu0
        %v5012 = vpop.f32.mrf.mxu0
        %v5013 = vadd.f32 %v4244, %v5012
        %v5014 = vpop.f32.mrf.mxu0
        %5015 = vmatprep.mubr.bf16.mxu0 %v4548
        %5016 = vmatmul.mubr.bf16.gmra.mxu0 %v4547
        %v5017 = vpop.f32.mrf.mxu0
        %v5018 = vadd.f32 %v4244, %v5017
        %v5019 = vpop.f32.mrf.mxu0
        %v5020 = vpop.f32.mrf.mxu0
        %v5021 = vadd.f32 %v4244, %v5020
        %v5022 = vpop.f32.mrf.mxu0
        %5023 = vmatprep.mubr.bf16.mxu0 %v4553
        %5024 = vmatmul.mubr.bf16.gmra.mxu0 %v4552
        %v5025 = vpop.f32.mrf.mxu0
        %v5026 = vadd.f32 %v4244, %v5025
        %v5027 = vpop.f32.mrf.mxu0
        %v5028 = vpop.f32.mrf.mxu0
        %v5029 = vadd.f32 %v4244, %v5028
        %v5030 = vpop.f32.mrf.mxu0
        %5031 = vmatprep.mubr.bf16.mxu0 %v4558
        %5032 = vmatmul.mubr.bf16.gmra.mxu0 %v4557
        %v5033 = vpop.f32.mrf.mxu0
        %v5034 = vadd.f32 %v4244, %v5033
        %v5035 = vpop.f32.mrf.mxu0
        %v5036 = vpop.f32.mrf.mxu0
        %v5037 = vadd.f32 %v4244, %v5036
        %v5038 = vpop.f32.mrf.mxu0
        %5039 = vmatprep.mubr.bf16.mxu0 %v4563
        %5040 = vmatmul.mubr.bf16.gmra.mxu0 %v4562
        %v5041 = vpop.f32.mrf.mxu0
        %v5042 = vadd.f32 %v4244, %v5041
        %v5043 = vpop.f32.mrf.mxu0
        %v5044 = vpop.f32.mrf.mxu0
        %v5045 = vadd.f32 %v4244, %v5044
        %v5046 = vpop.f32.mrf.mxu0
        %5047 = vmatprep.mubr.bf16.mxu0 %v4568
        %5048 = vmatmul.mubr.bf16.gmra.mxu0 %v4567
        %v5049 = vpop.f32.mrf.mxu0
        %v5050 = vadd.f32 %v4244, %v5049
        %v5051 = vpop.f32.mrf.mxu0
        %v5052 = vpop.f32.mrf.mxu0
        %v5053 = vadd.f32 %v4244, %v5052
        %v5054 = vpop.f32.mrf.mxu0
        %5055 = vmatprep.mubr.bf16.mxu0 %v4573
        %5056 = vmatmul.mubr.bf16.gmra.mxu0 %v4572
        %v5057 = vpop.f32.mrf.mxu0
        %v5058 = vadd.f32 %v4244, %v5057
        %v5059 = vpop.f32.mrf.mxu0
        %v5060 = vpop.f32.mrf.mxu0
        %v5061 = vadd.f32 %v4244, %v5060
        %v5062 = vpop.f32.mrf.mxu0
        %5063 = vmatprep.mubr.bf16.mxu0 %v4578
        %5064 = vmatmul.mubr.bf16.gmra.mxu0 %v4577
        %v5065 = vpop.f32.mrf.mxu0
        %v5066 = vadd.f32 %v4244, %v5065
        %v5067 = vpop.f32.mrf.mxu0
        %v5068 = vpop.f32.mrf.mxu0
        %v5069 = vadd.f32 %v4244, %v5068
        %v5070 = vpop.f32.mrf.mxu0
        %5071 = vdwg.mxu0
        %5072 = vmatprep.subr.bf16.mxu0 0
        %5073 = vmatpush1.bf16.msra.mxu0 %v4813
        %5074 = vmatprep.subr.bf16.mxu0 0
        %5075 = vmatpush1.bf16.msra.mxu0 %v4812
        %5076 = vmatprep.subr.bf16.mxu0 0
        %5077 = vmatpush1.bf16.msra.mxu0 %v4811
        %5078 = vmatprep.subr.bf16.mxu0 0
        %5079 = vmatpush1.bf16.msra.mxu0 %v4810
        %5080 = vmatprep.subr.bf16.mxu0 0
        %5081 = vmatpush1.bf16.msra.mxu0 %v4809
        %5082 = vmatprep.subr.bf16.mxu0 0
        %5083 = vmatpush1.bf16.msra.mxu0 %v4808
        %5084 = vmatprep.subr.bf16.mxu0 0
        %5085 = vmatpush1.bf16.msra.mxu0 %v4807
        %5086 = vmatprep.subr.bf16.mxu0 0
        %5087 = vmatpush1.bf16.msra.mxu0 %v4806
        %5088 = vmatprep.subr.bf16.mxu0 0
        %5089 = vmatpush2.bf16.msra.mxu0 %v4821
        %5090 = vmatprep.subr.bf16.mxu0 0
        %5091 = vmatpush2.bf16.msra.mxu0 %v4820
        %5092 = vmatprep.subr.bf16.mxu0 0
        %5093 = vmatpush2.bf16.msra.mxu0 %v4819
        %5094 = vmatprep.subr.bf16.mxu0 0
        %5095 = vmatpush2.bf16.msra.mxu0 %v4818
        %5096 = vmatprep.subr.bf16.mxu0 0
        %5097 = vmatpush2.bf16.msra.mxu0 %v4817
        %5098 = vmatprep.subr.bf16.mxu0 0
        %5099 = vmatpush2.bf16.msra.mxu0 %v4816
        %5100 = vmatprep.subr.bf16.mxu0 0
        %5101 = vmatpush2.bf16.msra.mxu0 %v4815
        %5102 = vmatprep.subr.bf16.mxu0 0
        %5103 = vmatpush2.bf16.msra.mxu0 %v4814
        %5104 = vmatprep.mubr.bf16.mxu0 %v4505
        %5105 = vmatmul.mubr.bf16.gmra.mxu0 %v4504
        %v5106 = vpop.f32.mrf.mxu0
        %v5107 = vadd.f32 %v4946, %v5106
        %v5108 = vpop.f32.mrf.mxu0
        %v5109 = vpop.f32.mrf.mxu0
        %v5110 = vadd.f32 %v4949, %v5109
        %v5111 = vpop.f32.mrf.mxu0
        %5112 = vmatprep.mubr.bf16.mxu0 %v4510
        %5113 = vmatmul.mubr.bf16.gmra.mxu0 %v4509
        %v5114 = vpop.f32.mrf.mxu0
        %v5115 = vadd.f32 %v4954, %v5114
        %v5116 = vpop.f32.mrf.mxu0
        %v5117 = vpop.f32.mrf.mxu0
        %v5118 = vadd.f32 %v4957, %v5117
        %v5119 = vpop.f32.mrf.mxu0
        %5120 = vmatprep.mubr.bf16.mxu0 %v4515
        %5121 = vmatmul.mubr.bf16.gmra.mxu0 %v4514
        %v5122 = vpop.f32.mrf.mxu0
        %v5123 = vadd.f32 %v4962, %v5122
        %v5124 = vpop.f32.mrf.mxu0
        %v5125 = vpop.f32.mrf.mxu0
        %v5126 = vadd.f32 %v4965, %v5125
        %v5127 = vpop.f32.mrf.mxu0
        %5128 = vmatprep.mubr.bf16.mxu0 %v4520
        %5129 = vmatmul.mubr.bf16.gmra.mxu0 %v4519
        %v5130 = vpop.f32.mrf.mxu0
        %v5131 = vadd.f32 %v4970, %v5130
        %v5132 = vpop.f32.mrf.mxu0
        %v5133 = vpop.f32.mrf.mxu0
        %v5134 = vadd.f32 %v4973, %v5133
        %v5135 = vpop.f32.mrf.mxu0
        %5136 = vmatprep.mubr.bf16.mxu0 %v4525
        %5137 = vmatmul.mubr.bf16.gmra.mxu0 %v4524
        %v5138 = vpop.f32.mrf.mxu0
        %v5139 = vadd.f32 %v4978, %v5138
        %v5140 = vpop.f32.mrf.mxu0
        %v5141 = vpop.f32.mrf.mxu0
        %v5142 = vadd.f32 %v4981, %v5141
        %v5143 = vpop.f32.mrf.mxu0
        %5144 = vmatprep.mubr.bf16.mxu0 %v4530
        %5145 = vmatmul.mubr.bf16.gmra.mxu0 %v4529
        %v5146 = vpop.f32.mrf.mxu0
        %v5147 = vadd.f32 %v4986, %v5146
        %v5148 = vpop.f32.mrf.mxu0
        %v5149 = vpop.f32.mrf.mxu0
        %v5150 = vadd.f32 %v4989, %v5149
        %v5151 = vpop.f32.mrf.mxu0
        %5152 = vmatprep.mubr.bf16.mxu0 %v4535
        %5153 = vmatmul.mubr.bf16.gmra.mxu0 %v4534
        %v5154 = vpop.f32.mrf.mxu0
        %v5155 = vadd.f32 %v4994, %v5154
        %v5156 = vpop.f32.mrf.mxu0
        %v5157 = vpop.f32.mrf.mxu0
        %v5158 = vadd.f32 %v4997, %v5157
        %v5159 = vpop.f32.mrf.mxu0
        %5160 = vmatprep.mubr.bf16.mxu0 %v4540
        %5161 = vmatmul.mubr.bf16.gmra.mxu0 %v4539
        %v5162 = vpop.f32.mrf.mxu0
        %v5163 = vadd.f32 %v5002, %v5162
        %v5164 = vpop.f32.mrf.mxu0
        %v5165 = vpop.f32.mrf.mxu0
        %v5166 = vadd.f32 %v5005, %v5165
        %v5167 = vpop.f32.mrf.mxu0
        %5168 = vmatprep.mubr.bf16.mxu0 %v4545
        %5169 = vmatmul.mubr.bf16.gmra.mxu0 %v4544
        %v5170 = vpop.f32.mrf.mxu0
        %v5171 = vadd.f32 %v5010, %v5170
        %v5172 = vpop.f32.mrf.mxu0
        %v5173 = vpop.f32.mrf.mxu0
        %v5174 = vadd.f32 %v5013, %v5173
        %v5175 = vpop.f32.mrf.mxu0
        %5176 = vmatprep.mubr.bf16.mxu0 %v4550
        %5177 = vmatmul.mubr.bf16.gmra.mxu0 %v4549
        %v5178 = vpop.f32.mrf.mxu0
        %v5179 = vadd.f32 %v5018, %v5178
        %v5180 = vpop.f32.mrf.mxu0
        %v5181 = vpop.f32.mrf.mxu0
        %v5182 = vadd.f32 %v5021, %v5181
        %v5183 = vpop.f32.mrf.mxu0
        %5184 = vmatprep.mubr.bf16.mxu0 %v4555
        %5185 = vmatmul.mubr.bf16.gmra.mxu0 %v4554
        %v5186 = vpop.f32.mrf.mxu0
        %v5187 = vadd.f32 %v5026, %v5186
        %v5188 = vpop.f32.mrf.mxu0
        %v5189 = vpop.f32.mrf.mxu0
        %v5190 = vadd.f32 %v5029, %v5189
        %v5191 = vpop.f32.mrf.mxu0
        %5192 = vmatprep.mubr.bf16.mxu0 %v4560
        %5193 = vmatmul.mubr.bf16.gmra.mxu0 %v4559
        %v5194 = vpop.f32.mrf.mxu0
        %v5195 = vadd.f32 %v5034, %v5194
        %v5196 = vpop.f32.mrf.mxu0
        %v5197 = vpop.f32.mrf.mxu0
        %v5198 = vadd.f32 %v5037, %v5197
        %v5199 = vpop.f32.mrf.mxu0
        %5200 = vmatprep.mubr.bf16.mxu0 %v4565
        %5201 = vmatmul.mubr.bf16.gmra.mxu0 %v4564
        %v5202 = vpop.f32.mrf.mxu0
        %v5203 = vadd.f32 %v5042, %v5202
        %v5204 = vpop.f32.mrf.mxu0
        %v5205 = vpop.f32.mrf.mxu0
        %v5206 = vadd.f32 %v5045, %v5205
        %v5207 = vpop.f32.mrf.mxu0
        %5208 = vmatprep.mubr.bf16.mxu0 %v4570
        %5209 = vmatmul.mubr.bf16.gmra.mxu0 %v4569
        %v5210 = vpop.f32.mrf.mxu0
        %v5211 = vadd.f32 %v5050, %v5210
        %v5212 = vpop.f32.mrf.mxu0
        %v5213 = vpop.f32.mrf.mxu0
        %v5214 = vadd.f32 %v5053, %v5213
        %v5215 = vpop.f32.mrf.mxu0
        %5216 = vmatprep.mubr.bf16.mxu0 %v4575
        %5217 = vmatmul.mubr.bf16.gmra.mxu0 %v4574
        %v5218 = vpop.f32.mrf.mxu0
        %v5219 = vadd.f32 %v5058, %v5218
        %v5220 = vpop.f32.mrf.mxu0
        %v5221 = vpop.f32.mrf.mxu0
        %v5222 = vadd.f32 %v5061, %v5221
        %v5223 = vpop.f32.mrf.mxu0
        %5224 = vmatprep.mubr.bf16.mxu0 %v4580
        %5225 = vmatmul.mubr.bf16.gmra.mxu0 %v4579
        %v5226 = vpop.f32.mrf.mxu0
        %v5227 = vadd.f32 %v5066, %v5226
        %v5228 = vpop.f32.mrf.mxu0
        %v5229 = vpop.f32.mrf.mxu0
        %v5230 = vadd.f32 %v5069, %v5229
        %v5231 = vpop.f32.mrf.mxu0
        %5232 = vdwg.mxu0
        %5233 = vmatprep.subr.bf16.mxu0 0
        %5234 = vmatpush1.bf16.msra.mxu0 0
        %5235 = vmatprep.subr.bf16.mxu0 0
        %5236 = vmatpush1.bf16.msra.mxu0 0
        %5237 = vmatprep.subr.bf16.mxu0 0
        %5238 = vmatpush1.bf16.msra.mxu0 0
        %5239 = vmatprep.subr.bf16.mxu0 0
        %5240 = vmatpush1.bf16.msra.mxu0 0
        %5241 = vmatprep.subr.bf16.mxu0 0
        %5242 = vmatpush1.bf16.msra.mxu0 %v4825
        %5243 = vmatprep.subr.bf16.mxu0 0
        %5244 = vmatpush1.bf16.msra.mxu0 %v4824
        %5245 = vmatprep.subr.bf16.mxu0 0
        %5246 = vmatpush1.bf16.msra.mxu0 %v4823
        %5247 = vmatprep.subr.bf16.mxu0 0
        %5248 = vmatpush1.bf16.msra.mxu0 %v4822
        %5249 = vmatprep.subr.bf16.mxu0 0
        %5250 = vmatpush2.bf16.msra.mxu0 0
        %5251 = vmatprep.subr.bf16.mxu0 0
        %5252 = vmatpush2.bf16.msra.mxu0 0
        %5253 = vmatprep.subr.bf16.mxu0 0
        %5254 = vmatpush2.bf16.msra.mxu0 0
        %5255 = vmatprep.subr.bf16.mxu0 0
        %5256 = vmatpush2.bf16.msra.mxu0 0
        %5257 = vmatprep.subr.bf16.mxu0 0
        %5258 = vmatpush2.bf16.msra.mxu0 0
        %5259 = vmatprep.subr.bf16.mxu0 0
        %5260 = vmatpush2.bf16.msra.mxu0 0
        %5261 = vmatprep.subr.bf16.mxu0 0
        %5262 = vmatpush2.bf16.msra.mxu0 0
        %5263 = vmatprep.subr.bf16.mxu0 0
        %5264 = vmatpush2.bf16.msra.mxu0 0
        %5265 = vmatprep.mubr.bf16.mxu0 0
        %5266 = vmatmul.mubr.bf16.gmra.mxu0 %v4864
        %v5267 = vpop.f32.mrf.mxu0
        %v5268 = vadd.f32 %v5107, %v5267
        %v5269 = vpop.f32.mrf.mxu0
        %v5270 = vpop.f32.mrf.mxu0
        %v5271 = vadd.f32 %v5110, %v5270
        %v5272 = vpop.f32.mrf.mxu0
        %5273 = vmatprep.mubr.bf16.mxu0 0
        %5274 = vmatmul.mubr.bf16.gmra.mxu0 %v4867
        %v5275 = vpop.f32.mrf.mxu0
        %v5276 = vadd.f32 %v5115, %v5275
        %v5277 = vpop.f32.mrf.mxu0
        %v5278 = vpop.f32.mrf.mxu0
        %v5279 = vadd.f32 %v5118, %v5278
        %v5280 = vpop.f32.mrf.mxu0
        %5281 = vmatprep.mubr.bf16.mxu0 0
        %5282 = vmatmul.mubr.bf16.gmra.mxu0 %v4870
        %v5283 = vpop.f32.mrf.mxu0
        %v5284 = vadd.f32 %v5123, %v5283
        %v5285 = vpop.f32.mrf.mxu0
        %v5286 = vpop.f32.mrf.mxu0
        %v5287 = vadd.f32 %v5126, %v5286
        %v5288 = vpop.f32.mrf.mxu0
        %5289 = vmatprep.mubr.bf16.mxu0 0
        %5290 = vmatmul.mubr.bf16.gmra.mxu0 %v4873
        %v5291 = vpop.f32.mrf.mxu0
        %v5292 = vadd.f32 %v5131, %v5291
        %v5293 = vpop.f32.mrf.mxu0
        %v5294 = vpop.f32.mrf.mxu0
        %v5295 = vadd.f32 %v5134, %v5294
        %v5296 = vpop.f32.mrf.mxu0
        %5297 = vmatprep.mubr.bf16.mxu0 0
        %5298 = vmatmul.mubr.bf16.gmra.mxu0 %v4876
        %v5299 = vpop.f32.mrf.mxu0
        %v5300 = vadd.f32 %v5139, %v5299
        %v5301 = vpop.f32.mrf.mxu0
        %v5302 = vpop.f32.mrf.mxu0
        %v5303 = vadd.f32 %v5142, %v5302
        %v5304 = vpop.f32.mrf.mxu0
        %5305 = vmatprep.mubr.bf16.mxu0 0
        %5306 = vmatmul.mubr.bf16.gmra.mxu0 %v4879
        %v5307 = vpop.f32.mrf.mxu0
        %v5308 = vadd.f32 %v5147, %v5307
        %v5309 = vpop.f32.mrf.mxu0
        %v5310 = vpop.f32.mrf.mxu0
        %v5311 = vadd.f32 %v5150, %v5310
        %v5312 = vpop.f32.mrf.mxu0
        %5313 = vmatprep.mubr.bf16.mxu0 0
        %5314 = vmatmul.mubr.bf16.gmra.mxu0 %v4882
        %v5315 = vpop.f32.mrf.mxu0
        %v5316 = vadd.f32 %v5155, %v5315
        %v5317 = vpop.f32.mrf.mxu0
        %v5318 = vpop.f32.mrf.mxu0
        %v5319 = vadd.f32 %v5158, %v5318
        %v5320 = vpop.f32.mrf.mxu0
        %5321 = vmatprep.mubr.bf16.mxu0 0
        %5322 = vmatmul.mubr.bf16.gmra.mxu0 %v4885
        %v5323 = vpop.f32.mrf.mxu0
        %v5324 = vadd.f32 %v5163, %v5323
        %v5325 = vpop.f32.mrf.mxu0
        %v5326 = vpop.f32.mrf.mxu0
        %v5327 = vadd.f32 %v5166, %v5326
        %v5328 = vpop.f32.mrf.mxu0
        %5329 = vmatprep.mubr.bf16.mxu0 0
        %5330 = vmatmul.mubr.bf16.gmra.mxu0 %v4888
        %v5331 = vpop.f32.mrf.mxu0
        %v5332 = vadd.f32 %v5171, %v5331
        %v5333 = vpop.f32.mrf.mxu0
        %v5334 = vpop.f32.mrf.mxu0
        %v5335 = vadd.f32 %v5174, %v5334
        %v5336 = vpop.f32.mrf.mxu0
        %5337 = vmatprep.mubr.bf16.mxu0 0
        %5338 = vmatmul.mubr.bf16.gmra.mxu0 %v4891
        %v5339 = vpop.f32.mrf.mxu0
        %v5340 = vadd.f32 %v5179, %v5339
        %v5341 = vpop.f32.mrf.mxu0
        %v5342 = vpop.f32.mrf.mxu0
        %v5343 = vadd.f32 %v5182, %v5342
        %v5344 = vpop.f32.mrf.mxu0
        %5345 = vmatprep.mubr.bf16.mxu0 0
        %5346 = vmatmul.mubr.bf16.gmra.mxu0 %v4894
        %v5347 = vpop.f32.mrf.mxu0
        %v5348 = vadd.f32 %v5187, %v5347
        %v5349 = vpop.f32.mrf.mxu0
        %v5350 = vpop.f32.mrf.mxu0
        %v5351 = vadd.f32 %v5190, %v5350
        %v5352 = vpop.f32.mrf.mxu0
        %5353 = vmatprep.mubr.bf16.mxu0 0
        %5354 = vmatmul.mubr.bf16.gmra.mxu0 %v4897
        %v5355 = vpop.f32.mrf.mxu0
        %v5356 = vadd.f32 %v5195, %v5355
        %v5357 = vpop.f32.mrf.mxu0
        %v5358 = vpop.f32.mrf.mxu0
        %v5359 = vadd.f32 %v5198, %v5358
        %v5360 = vpop.f32.mrf.mxu0
        %5361 = vmatprep.mubr.bf16.mxu0 0
        %5362 = vmatmul.mubr.bf16.gmra.mxu0 %v4900
        %v5363 = vpop.f32.mrf.mxu0
        %v5364 = vadd.f32 %v5203, %v5363
        %v5365 = vpop.f32.mrf.mxu0
        %v5366 = vpop.f32.mrf.mxu0
        %v5367 = vadd.f32 %v5206, %v5366
        %v5368 = vpop.f32.mrf.mxu0
        %5369 = vmatprep.mubr.bf16.mxu0 0
        %5370 = vmatmul.mubr.bf16.gmra.mxu0 %v4903
        %v5371 = vpop.f32.mrf.mxu0
        %v5372 = vadd.f32 %v5211, %v5371
        %v5373 = vpop.f32.mrf.mxu0
        %v5374 = vpop.f32.mrf.mxu0
        %v5375 = vadd.f32 %v5214, %v5374
        %v5376 = vpop.f32.mrf.mxu0
        %5377 = vmatprep.mubr.bf16.mxu0 0
        %5378 = vmatmul.mubr.bf16.gmra.mxu0 %v4906
        %v5379 = vpop.f32.mrf.mxu0
        %v5380 = vadd.f32 %v5219, %v5379
        %v5381 = vpop.f32.mrf.mxu0
        %v5382 = vpop.f32.mrf.mxu0
        %v5383 = vadd.f32 %v5222, %v5382
        %v5384 = vpop.f32.mrf.mxu0
        %5385 = vmatprep.mubr.bf16.mxu0 0
        %5386 = vmatmul.mubr.bf16.gmra.mxu0 %v4909
        %v5387 = vpop.f32.mrf.mxu0
        %v5388 = vadd.f32 %v5227, %v5387
        %v5389 = vpop.f32.mrf.mxu0
        %v5390 = vpop.f32.mrf.mxu0
        %v5391 = vadd.f32 %v5230, %v5390
        %v5392 = vpop.f32.mrf.mxu0
        %5393 = vdwg.mxu0
        %v5394 = vmax.f32 %v5268, 0.0
        %v5395 = vmax.f32 %v5271, 0.0
        %v5396 = vmax.f32 %v5276, 0.0
        %v5397 = vmax.f32 %v5279, 0.0
        %v5398 = vmax.f32 %v5284, 0.0
        %v5399 = vmax.f32 %v5287, 0.0
        %v5400 = vmax.f32 %v5292, 0.0
        %v5401 = vmax.f32 %v5295, 0.0
        %v5402 = vmax.f32 %v5300, 0.0
        %v5403 = vmax.f32 %v5303, 0.0
        %v5404 = vmax.f32 %v5308, 0.0
        %v5405 = vmax.f32 %v5311, 0.0
        %v5406 = vmax.f32 %v5316, 0.0
        %v5407 = vmax.f32 %v5319, 0.0
        %v5408 = vmax.f32 %v5324, 0.0
        %v5409 = vmax.f32 %v5327, 0.0
        %v5410 = vmax.f32 %v5332, 0.0
        %v5411 = vmax.f32 %v5335, 0.0
        %v5412 = vmax.f32 %v5340, 0.0
        %v5413 = vmax.f32 %v5343, 0.0
        %v5414 = vmax.f32 %v5348, 0.0
        %v5415 = vmax.f32 %v5351, 0.0
        %v5416 = vmax.f32 %v5356, 0.0
        %v5417 = vmax.f32 %v5359, 0.0
        %v5418 = vmax.f32 %v5364, 0.0
        %v5419 = vmax.f32 %v5367, 0.0
        %v5420 = vmax.f32 %v5372, 0.0
        %v5421 = vmax.f32 %v5375, 0.0
        %v5422 = vmax.f32 %v5380, 0.0
        %v5423 = vmax.f32 %v5383, 0.0
        %v5424 = vmax.f32 %v5388, 0.0
        %v5425 = vmax.f32 %v5391, 0.0
        %v5426 = vpack.c.bf16 %v5395, %v5394
        %v5427 = vpack.c.bf16 %v5397, %v5396
        %v5428 = vpack.c.bf16 %v5399, %v5398
        %v5429 = vpack.c.bf16 %v5401, %v5400
        %v5430 = vpack.c.bf16 %v5403, %v5402
        %v5431 = vpack.c.bf16 %v5405, %v5404
        %v5432 = vpack.c.bf16 %v5407, %v5406
        %v5433 = vpack.c.bf16 %v5409, %v5408
        %v5434 = vpack.c.bf16 %v5411, %v5410
        %v5435 = vpack.c.bf16 %v5413, %v5412
        %v5436 = vpack.c.bf16 %v5415, %v5414
        %v5437 = vpack.c.bf16 %v5417, %v5416
        %v5438 = vpack.c.bf16 %v5419, %v5418
        %v5439 = vpack.c.bf16 %v5421, %v5420
        %v5440 = vpack.c.bf16 %v5423, %v5422
        %v5441 = vpack.c.bf16 %v5425, %v5424
        %v5458 = vunpack.c.l.b16 %v5426
        %v5459 = vunpack.c.h.b16 %v5426
        %v5460 = vunpack.c.l.b16 %v5427
        %v5461 = vunpack.c.h.b16 %v5427
        %v5462 = vunpack.c.l.b16 %v5428
        %v5463 = vunpack.c.h.b16 %v5428
        %v5464 = vunpack.c.l.b16 %v5429
        %v5465 = vunpack.c.h.b16 %v5429
        %v5466 = vunpack.c.l.b16 %v5430
        %v5467 = vunpack.c.h.b16 %v5430
        %v5468 = vunpack.c.l.b16 %v5431
        %v5469 = vunpack.c.h.b16 %v5431
        %v5470 = vunpack.c.l.b16 %v5432
        %v5471 = vunpack.c.h.b16 %v5432
        %v5472 = vunpack.c.l.b16 %v5433
        %v5473 = vunpack.c.h.b16 %v5433
        %v5474 = vunpack.c.l.b16 %v5434
        %v5475 = vunpack.c.h.b16 %v5434
        %v5476 = vunpack.c.l.b16 %v5435
        %v5477 = vunpack.c.h.b16 %v5435
        %v5478 = vunpack.c.l.b16 %v5436
        %v5479 = vunpack.c.h.b16 %v5436
        %v5480 = vunpack.c.l.b16 %v5437
        %v5481 = vunpack.c.h.b16 %v5437
        %v5482 = vunpack.c.l.b16 %v5438
        %v5483 = vunpack.c.h.b16 %v5438
        %v5484 = vunpack.c.l.b16 %v5439
        %v5485 = vunpack.c.h.b16 %v5439
        %v5486 = vunpack.c.l.b16 %v5440
        %v5487 = vunpack.c.h.b16 %v5440
        %v5488 = vunpack.c.l.b16 %v5441
        %v5489 = vunpack.c.h.b16 %v5441
        %v5490 = vpack.c.b16 %v5458, %v5458
        %v5491 = vpack.c.b16 %v5459, %v5459
        %v5492 = vpack.c.b16 %v5460, %v5460
        %v5493 = vpack.c.b16 %v5461, %v5461
        %v5494 = vpack.c.b16 %v5462, %v5462
        %v5495 = vpack.c.b16 %v5463, %v5463
        %v5496 = vpack.c.b16 %v5464, %v5464
        %v5497 = vpack.c.b16 %v5465, %v5465
        %v5498 = vpack.c.b16 %v5466, %v5466
        %v5499 = vpack.c.b16 %v5467, %v5467
        %v5500 = vpack.c.b16 %v5468, %v5468
        %v5501 = vpack.c.b16 %v5469, %v5469
        %v5502 = vpack.c.b16 %v5470, %v5470
        %v5503 = vpack.c.b16 %v5471, %v5471
        %v5504 = vpack.c.b16 %v5472, %v5472
        %v5505 = vpack.c.b16 %v5473, %v5473
        %v5506 = vpack.c.b16 %v5474, %v5474
        %v5507 = vpack.c.b16 %v5475, %v5475
        %v5508 = vpack.c.b16 %v5476, %v5476
        %v5509 = vpack.c.b16 %v5477, %v5477
        %v5510 = vpack.c.b16 %v5478, %v5478
        %v5511 = vpack.c.b16 %v5479, %v5479
        %v5512 = vpack.c.b16 %v5480, %v5480
        %v5513 = vpack.c.b16 %v5481, %v5481
        %v5514 = vpack.c.b16 %v5482, %v5482
        %v5515 = vpack.c.b16 %v5483, %v5483
        %v5516 = vpack.c.b16 %v5484, %v5484
        %v5517 = vpack.c.b16 %v5485, %v5485
        %v5518 = vpack.c.b16 %v5486, %v5486
        %v5519 = vpack.c.b16 %v5487, %v5487
        %v5520 = vpack.c.b16 %v5488, %v5488
        %v5521 = vpack.c.b16 %v5489, %v5489
        %v5523 = vshrl.u32 %v5490, 16
        %v5525 = vrot.slane %v5523, 7
        %v5526 = vshll.u32 %v5490, 16
        %v5528 = vor.u32 %v5525, %v5526
        %v5529 = vrot.slane %v5525, 4
        %v5531 = vshrl.u32 %v5491, 16
        %v5533 = vrot.slane %v5531, 7
        %v5534 = vshll.u32 %v5491, 16
        %v5536 = vor.u32 %v5533, %v5534
        %v5537 = vsel %vm808, %v5529, %v5536
        %v5538 = vrot.slane %v5533, 4
        %v5540 = vshrl.u32 %v5492, 16
        %v5542 = vrot.slane %v5540, 7
        %v5543 = vshll.u32 %v5492, 16
        %v5545 = vor.u32 %v5542, %v5543
        %v5546 = vrot.slane %v5542, 4
        %v5548 = vshrl.u32 %v5493, 16
        %v5550 = vrot.slane %v5548, 7
        %v5551 = vshll.u32 %v5493, 16
        %v5553 = vor.u32 %v5550, %v5551
        %v5554 = vsel %vm808, %v5546, %v5553
        %v5555 = vrot.slane %v5550, 4
        %v5557 = vshrl.u32 %v5494, 16
        %v5559 = vrot.slane %v5557, 7
        %v5560 = vshll.u32 %v5494, 16
        %v5562 = vor.u32 %v5559, %v5560
        %v5563 = vrot.slane %v5559, 4
        %v5565 = vshrl.u32 %v5495, 16
        %v5567 = vrot.slane %v5565, 7
        %v5568 = vshll.u32 %v5495, 16
        %v5570 = vor.u32 %v5567, %v5568
        %v5571 = vsel %vm808, %v5563, %v5570
        %v5572 = vrot.slane %v5567, 4
        %v5574 = vshrl.u32 %v5496, 16
        %v5576 = vrot.slane %v5574, 7
        %v5577 = vshll.u32 %v5496, 16
        %v5579 = vor.u32 %v5576, %v5577
        %v5580 = vrot.slane %v5576, 4
        %v5582 = vshrl.u32 %v5497, 16
        %v5584 = vrot.slane %v5582, 7
        %v5585 = vshll.u32 %v5497, 16
        %v5587 = vor.u32 %v5584, %v5585
        %v5588 = vsel %vm808, %v5580, %v5587
        %v5589 = vrot.slane %v5584, 4
        %v5591 = vshrl.u32 %v5498, 16
        %v5593 = vrot.slane %v5591, 7
        %v5594 = vshll.u32 %v5498, 16
        %v5596 = vor.u32 %v5593, %v5594
        %v5597 = vrot.slane %v5593, 4
        %v5599 = vshrl.u32 %v5499, 16
        %v5601 = vrot.slane %v5599, 7
        %v5602 = vshll.u32 %v5499, 16
        %v5604 = vor.u32 %v5601, %v5602
        %v5605 = vsel %vm808, %v5597, %v5604
        %v5606 = vrot.slane %v5601, 4
        %v5608 = vshrl.u32 %v5500, 16
        %v5610 = vrot.slane %v5608, 7
        %v5611 = vshll.u32 %v5500, 16
        %v5613 = vor.u32 %v5610, %v5611
        %v5614 = vrot.slane %v5610, 4
        %v5616 = vshrl.u32 %v5501, 16
        %v5618 = vrot.slane %v5616, 7
        %v5619 = vshll.u32 %v5501, 16
        %v5621 = vor.u32 %v5618, %v5619
        %v5622 = vsel %vm808, %v5614, %v5621
        %v5623 = vrot.slane %v5618, 4
        %v5625 = vshrl.u32 %v5502, 16
        %v5627 = vrot.slane %v5625, 7
        %v5628 = vshll.u32 %v5502, 16
        %v5630 = vor.u32 %v5627, %v5628
        %v5631 = vrot.slane %v5627, 4
        %v5633 = vshrl.u32 %v5503, 16
        %v5635 = vrot.slane %v5633, 7
        %v5636 = vshll.u32 %v5503, 16
        %v5638 = vor.u32 %v5635, %v5636
        %v5639 = vsel %vm808, %v5631, %v5638
        %v5640 = vrot.slane %v5635, 4
        %v5642 = vshrl.u32 %v5504, 16
        %v5644 = vrot.slane %v5642, 7
        %v5645 = vshll.u32 %v5504, 16
        %v5647 = vor.u32 %v5644, %v5645
        %v5648 = vrot.slane %v5644, 4
        %v5650 = vshrl.u32 %v5505, 16
        %v5652 = vrot.slane %v5650, 7
        %v5653 = vshll.u32 %v5505, 16
        %v5655 = vor.u32 %v5652, %v5653
        %v5656 = vsel %vm808, %v5648, %v5655
        %v5657 = vrot.slane %v5652, 4
        %v5659 = vshrl.u32 %v5506, 16
        %v5661 = vrot.slane %v5659, 7
        %v5662 = vshll.u32 %v5506, 16
        %v5664 = vor.u32 %v5661, %v5662
        %v5665 = vrot.slane %v5661, 4
        %v5667 = vshrl.u32 %v5507, 16
        %v5669 = vrot.slane %v5667, 7
        %v5670 = vshll.u32 %v5507, 16
        %v5672 = vor.u32 %v5669, %v5670
        %v5673 = vsel %vm808, %v5665, %v5672
        %v5674 = vrot.slane %v5669, 4
        %v5676 = vshrl.u32 %v5508, 16
        %v5678 = vrot.slane %v5676, 7
        %v5679 = vshll.u32 %v5508, 16
        %v5681 = vor.u32 %v5678, %v5679
        %v5682 = vrot.slane %v5678, 4
        %v5684 = vshrl.u32 %v5509, 16
        %v5686 = vrot.slane %v5684, 7
        %v5687 = vshll.u32 %v5509, 16
        %v5689 = vor.u32 %v5686, %v5687
        %v5690 = vsel %vm808, %v5682, %v5689
        %v5691 = vrot.slane %v5686, 4
        %v5693 = vshrl.u32 %v5510, 16
        %v5695 = vrot.slane %v5693, 7
        %v5696 = vshll.u32 %v5510, 16
        %v5698 = vor.u32 %v5695, %v5696
        %v5699 = vrot.slane %v5695, 4
        %v5701 = vshrl.u32 %v5511, 16
        %v5703 = vrot.slane %v5701, 7
        %v5704 = vshll.u32 %v5511, 16
        %v5706 = vor.u32 %v5703, %v5704
        %v5707 = vsel %vm808, %v5699, %v5706
        %v5708 = vrot.slane %v5703, 4
        %v5710 = vshrl.u32 %v5512, 16
        %v5712 = vrot.slane %v5710, 7
        %v5713 = vshll.u32 %v5512, 16
        %v5715 = vor.u32 %v5712, %v5713
        %v5716 = vrot.slane %v5712, 4
        %v5718 = vshrl.u32 %v5513, 16
        %v5720 = vrot.slane %v5718, 7
        %v5721 = vshll.u32 %v5513, 16
        %v5723 = vor.u32 %v5720, %v5721
        %v5724 = vsel %vm808, %v5716, %v5723
        %v5725 = vrot.slane %v5720, 4
        %v5727 = vshrl.u32 %v5514, 16
        %v5729 = vrot.slane %v5727, 7
        %v5730 = vshll.u32 %v5514, 16
        %v5732 = vor.u32 %v5729, %v5730
        %v5733 = vrot.slane %v5729, 4
        %v5735 = vshrl.u32 %v5515, 16
        %v5737 = vrot.slane %v5735, 7
        %v5738 = vshll.u32 %v5515, 16
        %v5740 = vor.u32 %v5737, %v5738
        %v5741 = vsel %vm808, %v5733, %v5740
        %v5742 = vrot.slane %v5737, 4
        %v5744 = vshrl.u32 %v5516, 16
        %v5746 = vrot.slane %v5744, 7
        %v5747 = vshll.u32 %v5516, 16
        %v5749 = vor.u32 %v5746, %v5747
        %v5750 = vrot.slane %v5746, 4
        %v5752 = vshrl.u32 %v5517, 16
        %v5754 = vrot.slane %v5752, 7
        %v5755 = vshll.u32 %v5517, 16
        %v5757 = vor.u32 %v5754, %v5755
        %v5758 = vsel %vm808, %v5750, %v5757
        %v5759 = vrot.slane %v5754, 4
        %v5761 = vshrl.u32 %v5518, 16
        %v5763 = vrot.slane %v5761, 7
        %v5764 = vshll.u32 %v5518, 16
        %v5766 = vor.u32 %v5763, %v5764
        %v5767 = vrot.slane %v5763, 4
        %v5769 = vshrl.u32 %v5519, 16
        %v5771 = vrot.slane %v5769, 7
        %v5772 = vshll.u32 %v5519, 16
        %v5774 = vor.u32 %v5771, %v5772
        %v5775 = vsel %vm808, %v5767, %v5774
        %v5776 = vrot.slane %v5771, 4
        %v5778 = vshrl.u32 %v5520, 16
        %v5780 = vrot.slane %v5778, 7
        %v5781 = vshll.u32 %v5520, 16
        %v5783 = vor.u32 %v5780, %v5781
        %v5784 = vrot.slane %v5780, 4
        %v5786 = vshrl.u32 %v5521, 16
        %v5788 = vrot.slane %v5786, 7
        %v5789 = vshll.u32 %v5521, 16
        %v5791 = vor.u32 %v5788, %v5789
        %v5792 = vsel %vm808, %v5784, %v5791
        %v5793 = vrot.slane %v5788, 4
        %v5842 = vld [vmem:[%s1129] sm:$0xf]
        %v5843 = vsel %vm1132, %v5528, %v5842
        %5844 = vst [vmem:[%s1129] sm:$0xf] %v5843
        %5845 = vst.msk [vmem:[%s1129 + $0x4] sm:$0xf] %vm654, %v5537
        %v5846 = vld [vmem:[%s1129 + $0x8] sm:$0x1]
        %v5847 = vsel %vm1138, %v5538, %v5846
        %5848 = vst [vmem:[%s1129 + $0x8] sm:$0x1] %v5847
        %v5849 = vld [vmem:[%s1129 + $0xc] sm:$0xf]
        %v5850 = vsel %vm1132, %v5545, %v5849
        %5851 = vst [vmem:[%s1129 + $0xc] sm:$0xf] %v5850
        %5852 = vst.msk [vmem:[%s1129 + $0x10] sm:$0xf] %vm654, %v5554
        %v5853 = vld [vmem:[%s1129 + $0x14] sm:$0x1]
        %v5854 = vsel %vm1138, %v5555, %v5853
        %5855 = vst [vmem:[%s1129 + $0x14] sm:$0x1] %v5854
        %v5856 = vld [vmem:[%s1129 + $0x18] sm:$0xf]
        %v5857 = vsel %vm1132, %v5562, %v5856
        %5858 = vst [vmem:[%s1129 + $0x18] sm:$0xf] %v5857
        %5859 = vst.msk [vmem:[%s1129 + $0x1c] sm:$0xf] %vm654, %v5571
        %v5860 = vld [vmem:[%s1129 + $0x20] sm:$0x1]
        %v5861 = vsel %vm1138, %v5572, %v5860
        %5862 = vst [vmem:[%s1129 + $0x20] sm:$0x1] %v5861
        %v5863 = vld [vmem:[%s1129 + $0x24] sm:$0xf]
        %v5864 = vsel %vm1132, %v5579, %v5863
        %5865 = vst [vmem:[%s1129 + $0x24] sm:$0xf] %v5864
        %5866 = vst.msk [vmem:[%s1129 + $0x28] sm:$0xf] %vm654, %v5588
        %v5867 = vld [vmem:[%s1129 + $0x2c] sm:$0x1]
        %v5868 = vsel %vm1138, %v5589, %v5867
        %5869 = vst [vmem:[%s1129 + $0x2c] sm:$0x1] %v5868
        %v5870 = vld [vmem:[%s1129 + $0x30] sm:$0xf]
        %v5871 = vsel %vm1132, %v5596, %v5870
        %5872 = vst [vmem:[%s1129 + $0x30] sm:$0xf] %v5871
        %5873 = vst.msk [vmem:[%s1129 + $0x34] sm:$0xf] %vm654, %v5605
        %v5874 = vld [vmem:[%s1129 + $0x38] sm:$0x1]
        %v5875 = vsel %vm1138, %v5606, %v5874
        %5876 = vst [vmem:[%s1129 + $0x38] sm:$0x1] %v5875
        %v5877 = vld [vmem:[%s1129 + $0x3c] sm:$0xf]
        %v5878 = vsel %vm1132, %v5613, %v5877
        %5879 = vst [vmem:[%s1129 + $0x3c] sm:$0xf] %v5878
        %5880 = vst.msk [vmem:[%s1129 + $0x40] sm:$0xf] %vm654, %v5622
        %v5881 = vld [vmem:[%s1129 + $0x44] sm:$0x1]
        %v5882 = vsel %vm1138, %v5623, %v5881
        %5883 = vst [vmem:[%s1129 + $0x44] sm:$0x1] %v5882
        %v5884 = vld [vmem:[%s1129 + $0x48] sm:$0xf]
        %v5885 = vsel %vm1132, %v5630, %v5884
        %5886 = vst [vmem:[%s1129 + $0x48] sm:$0xf] %v5885
        %5887 = vst.msk [vmem:[%s1129 + $0x4c] sm:$0xf] %vm654, %v5639
        %v5888 = vld [vmem:[%s1129 + $0x50] sm:$0x1]
        %v5889 = vsel %vm1138, %v5640, %v5888
        %5890 = vst [vmem:[%s1129 + $0x50] sm:$0x1] %v5889
        %v5891 = vld [vmem:[%s1129 + $0x54] sm:$0xf]
        %v5892 = vsel %vm1132, %v5647, %v5891
        %5893 = vst [vmem:[%s1129 + $0x54] sm:$0xf] %v5892
        %5894 = vst.msk [vmem:[%s1129 + $0x58] sm:$0xf] %vm654, %v5656
        %v5895 = vld [vmem:[%s1129 + $0x5c] sm:$0x1]
        %v5896 = vsel %vm1138, %v5657, %v5895
        %5897 = vst [vmem:[%s1129 + $0x5c] sm:$0x1] %v5896
        %v5898 = vld [vmem:[%s1129 + $0x60] sm:$0xf]
        %v5899 = vsel %vm1132, %v5664, %v5898
        %5900 = vst [vmem:[%s1129 + $0x60] sm:$0xf] %v5899
        %5901 = vst.msk [vmem:[%s1129 + $0x64] sm:$0xf] %vm654, %v5673
        %v5902 = vld [vmem:[%s1129 + $0x68] sm:$0x1]
        %v5903 = vsel %vm1138, %v5674, %v5902
        %5904 = vst [vmem:[%s1129 + $0x68] sm:$0x1] %v5903
        %v5905 = vld [vmem:[%s1129 + $0x6c] sm:$0xf]
        %v5906 = vsel %vm1132, %v5681, %v5905
        %5907 = vst [vmem:[%s1129 + $0x6c] sm:$0xf] %v5906
        %5908 = vst.msk [vmem:[%s1129 + $0x70] sm:$0xf] %vm654, %v5690
        %v5909 = vld [vmem:[%s1129 + $0x74] sm:$0x1]
        %v5910 = vsel %vm1138, %v5691, %v5909
        %5911 = vst [vmem:[%s1129 + $0x74] sm:$0x1] %v5910
        %v5912 = vld [vmem:[%s1129 + $0x78] sm:$0xf]
        %v5913 = vsel %vm1132, %v5698, %v5912
        %5914 = vst [vmem:[%s1129 + $0x78] sm:$0xf] %v5913
        %5915 = vst.msk [vmem:[%s1129 + $0x7c] sm:$0xf] %vm654, %v5707
        %v5916 = vld [vmem:[%s1129 + $0x80] sm:$0x1]
        %v5917 = vsel %vm1138, %v5708, %v5916
        %5918 = vst [vmem:[%s1129 + $0x80] sm:$0x1] %v5917
        %v5919 = vld [vmem:[%s1129 + $0x84] sm:$0xf]
        %v5920 = vsel %vm1132, %v5715, %v5919
        %5921 = vst [vmem:[%s1129 + $0x84] sm:$0xf] %v5920
        %5922 = vst.msk [vmem:[%s1129 + $0x88] sm:$0xf] %vm654, %v5724
        %v5923 = vld [vmem:[%s1129 + $0x8c] sm:$0x1]
        %v5924 = vsel %vm1138, %v5725, %v5923
        %5925 = vst [vmem:[%s1129 + $0x8c] sm:$0x1] %v5924
        %v5926 = vld [vmem:[%s1129 + $0x90] sm:$0xf]
        %v5927 = vsel %vm1132, %v5732, %v5926
        %5928 = vst [vmem:[%s1129 + $0x90] sm:$0xf] %v5927
        %5929 = vst.msk [vmem:[%s1129 + $0x94] sm:$0xf] %vm654, %v5741
        %v5930 = vld [vmem:[%s1129 + $0x98] sm:$0x1]
        %v5931 = vsel %vm1138, %v5742, %v5930
        %5932 = vst [vmem:[%s1129 + $0x98] sm:$0x1] %v5931
        %v5933 = vld [vmem:[%s1129 + $0x9c] sm:$0xf]
        %v5934 = vsel %vm1132, %v5749, %v5933
        %5935 = vst [vmem:[%s1129 + $0x9c] sm:$0xf] %v5934
        %5936 = vst.msk [vmem:[%s1129 + $0xa0] sm:$0xf] %vm654, %v5758
        %v5937 = vld [vmem:[%s1129 + $0xa4] sm:$0x1]
        %v5938 = vsel %vm1138, %v5759, %v5937
        %5939 = vst [vmem:[%s1129 + $0xa4] sm:$0x1] %v5938
        %v5940 = vld [vmem:[%s1129 + $0xa8] sm:$0xf]
        %v5941 = vsel %vm1132, %v5766, %v5940
        %5942 = vst [vmem:[%s1129 + $0xa8] sm:$0xf] %v5941
        %5943 = vst.msk [vmem:[%s1129 + $0xac] sm:$0xf] %vm654, %v5775
        %v5944 = vld [vmem:[%s1129 + $0xb0] sm:$0x1]
        %v5945 = vsel %vm1138, %v5776, %v5944
        %5946 = vst [vmem:[%s1129 + $0xb0] sm:$0x1] %v5945
        %v5947 = vld [vmem:[%s1129 + $0xb4] sm:$0xf]
        %v5948 = vsel %vm1132, %v5783, %v5947
        %5949 = vst [vmem:[%s1129 + $0xb4] sm:$0xf] %v5948
        %5950 = vst.msk [vmem:[%s1129 + $0xb8] sm:$0xf] %vm654, %v5792
        %v5951 = vld [vmem:[%s1129 + $0xbc] sm:$0x1]
        %v5952 = vsel %vm1138, %v5793, %v5951
        %5953 = vst [vmem:[%s1129 + $0xbc] sm:$0x1] %v5952
        %v5954 = vld [vmem:[#allocation2] sm:$0xf]
        %v5955 = vld [vmem:[#allocation2 + $0x4] sm:$0xf]
        %v5956 = vld [vmem:[#allocation2 + $0xc] sm:$0xf]
        %v5957 = vld [vmem:[#allocation2 + $0x10] sm:$0xf]
        %v5958 = vld [vmem:[#allocation2 + $0x18] sm:$0xf]
        %v5959 = vld [vmem:[#allocation2 + $0x1c] sm:$0xf]
        %v5960 = vld [vmem:[#allocation2 + $0x24] sm:$0xf]
        %v5961 = vld [vmem:[#allocation2 + $0x28] sm:$0xf]
        %v5962 = vld [vmem:[#allocation2 + $0x30] sm:$0xf]
        %v5963 = vld [vmem:[#allocation2 + $0x34] sm:$0xf]
        %v5964 = vld [vmem:[#allocation2 + $0x3c] sm:$0xf]
        %v5965 = vld [vmem:[#allocation2 + $0x40] sm:$0xf]
        %v5966 = vld [vmem:[#allocation2 + $0x48] sm:$0xf]
        %v5967 = vld [vmem:[#allocation2 + $0x4c] sm:$0xf]
        %v5968 = vld [vmem:[#allocation2 + $0x54] sm:$0xf]
        %v5969 = vld [vmem:[#allocation2 + $0x58] sm:$0xf]
        %v5970 = vld [vmem:[#allocation2 + $0x60] sm:$0xf]
        %v5971 = vld [vmem:[#allocation2 + $0x64] sm:$0xf]
        %v5972 = vld [vmem:[#allocation2 + $0x6c] sm:$0xf]
        %v5973 = vld [vmem:[#allocation2 + $0x70] sm:$0xf]
        %v5974 = vld [vmem:[#allocation2 + $0x78] sm:$0xf]
        %v5975 = vld [vmem:[#allocation2 + $0x7c] sm:$0xf]
        %v5976 = vld [vmem:[#allocation2 + $0x84] sm:$0xf]
        %v5977 = vld [vmem:[#allocation2 + $0x88] sm:$0xf]
        %v5978 = vld [vmem:[#allocation2 + $0x90] sm:$0xf]
        %v5979 = vld [vmem:[#allocation2 + $0x94] sm:$0xf]
        %v5980 = vld [vmem:[#allocation2 + $0x9c] sm:$0xf]
        %v5981 = vld [vmem:[#allocation2 + $0xa0] sm:$0xf]
        %v5982 = vld [vmem:[#allocation2 + $0xa8] sm:$0xf]
        %v5983 = vld [vmem:[#allocation2 + $0xac] sm:$0xf]
        %v5984 = vld [vmem:[#allocation2 + $0xb4] sm:$0xf]
        %v5985 = vld [vmem:[#allocation2 + $0xb8] sm:$0xf]
        %5986 = vst.msk [vmem:[#allocation3] sm:$0xf] %vm654, %v5954
        %5987 = vst.msk [vmem:[#allocation3 + $0x14] sm:$0xf] %vm654, %v5955
        %5988 = vst.msk [vmem:[#allocation3 + $0x28] sm:$0xf] %vm654, %v5956
        %5989 = vst.msk [vmem:[#allocation3 + $0x3c] sm:$0xf] %vm654, %v5957
        %5990 = vst.msk [vmem:[#allocation3 + $0x50] sm:$0xf] %vm654, %v5958
        %5991 = vst.msk [vmem:[#allocation3 + $0x64] sm:$0xf] %vm654, %v5959
        %5992 = vst.msk [vmem:[#allocation3 + $0x78] sm:$0xf] %vm654, %v5960
        %5993 = vst.msk [vmem:[#allocation3 + $0x8c] sm:$0xf] %vm654, %v5961
        %5994 = vst.msk [vmem:[#allocation3 + $0xa0] sm:$0xf] %vm654, %v5962
        %5995 = vst.msk [vmem:[#allocation3 + $0xb4] sm:$0xf] %vm654, %v5963
        %5996 = vst.msk [vmem:[#allocation3 + $0xc8] sm:$0xf] %vm654, %v5964
        %5997 = vst.msk [vmem:[#allocation3 + $0xdc] sm:$0xf] %vm654, %v5965
        %5998 = vst.msk [vmem:[#allocation3 + $0xf0] sm:$0xf] %vm654, %v5966
        %5999 = vst.msk [vmem:[#allocation3 + $0x104] sm:$0xf] %vm654, %v5967
        %6000 = vst.msk [vmem:[#allocation3 + $0x118] sm:$0xf] %vm654, %v5968
        %6001 = vst.msk [vmem:[#allocation3 + $0x12c] sm:$0xf] %vm654, %v5969
        %6002 = vst.msk [vmem:[#allocation3 + $0x140] sm:$0xf] %vm654, %v5970
        %6003 = vst.msk [vmem:[#allocation3 + $0x154] sm:$0xf] %vm654, %v5971
        %6004 = vst.msk [vmem:[#allocation3 + $0x168] sm:$0xf] %vm654, %v5972
        %6005 = vst.msk [vmem:[#allocation3 + $0x17c] sm:$0xf] %vm654, %v5973
        %6006 = vst.msk [vmem:[#allocation3 + $0x190] sm:$0xf] %vm654, %v5974
        %6007 = vst.msk [vmem:[#allocation3 + $0x1a4] sm:$0xf] %vm654, %v5975
        %6008 = vst.msk [vmem:[#allocation3 + $0x1b8] sm:$0xf] %vm654, %v5976
        %6009 = vst.msk [vmem:[#allocation3 + $0x1cc] sm:$0xf] %vm654, %v5977
        %6010 = vst.msk [vmem:[#allocation3 + $0x1e0] sm:$0xf] %vm654, %v5978
        %6011 = vst.msk [vmem:[#allocation3 + $0x1f4] sm:$0xf] %vm654, %v5979
        %6012 = vst.msk [vmem:[#allocation3 + $0x208] sm:$0xf] %vm654, %v5980
        %6013 = vst.msk [vmem:[#allocation3 + $0x21c] sm:$0xf] %vm654, %v5981
        %6014 = vst.msk [vmem:[#allocation3 + $0x230] sm:$0xf] %vm654, %v5982
        %6015 = vst.msk [vmem:[#allocation3 + $0x244] sm:$0xf] %vm654, %v5983
        %6016 = vst.msk [vmem:[#allocation3 + $0x258] sm:$0xf] %vm654, %v5984
        %6017 = vst.msk [vmem:[#allocation3 + $0x26c] sm:$0xf] %vm654, %v5985
        %v6018 = vld [vmem:[#allocation2] sm:$0xf]
        %v6019 = vld [vmem:[#allocation2 + $0x4] sm:$0xf]
        %v6020 = vld [vmem:[#allocation2 + $0x8] sm:$0x1]
        %v6021 = vld [vmem:[#allocation2 + $0xc] sm:$0xf]
        %v6022 = vld [vmem:[#allocation2 + $0x10] sm:$0xf]
        %v6023 = vld [vmem:[#allocation2 + $0x14] sm:$0x1]
        %v6024 = vld [vmem:[#allocation2 + $0x18] sm:$0xf]
        %v6025 = vld [vmem:[#allocation2 + $0x1c] sm:$0xf]
        %v6026 = vld [vmem:[#allocation2 + $0x20] sm:$0x1]
        %v6027 = vld [vmem:[#allocation2 + $0x24] sm:$0xf]
        %v6028 = vld [vmem:[#allocation2 + $0x28] sm:$0xf]
        %v6029 = vld [vmem:[#allocation2 + $0x2c] sm:$0x1]
        %v6030 = vld [vmem:[#allocation2 + $0x30] sm:$0xf]
        %v6031 = vld [vmem:[#allocation2 + $0x34] sm:$0xf]
        %v6032 = vld [vmem:[#allocation2 + $0x38] sm:$0x1]
        %v6033 = vld [vmem:[#allocation2 + $0x3c] sm:$0xf]
        %v6034 = vld [vmem:[#allocation2 + $0x40] sm:$0xf]
        %v6035 = vld [vmem:[#allocation2 + $0x44] sm:$0x1]
        %v6036 = vld [vmem:[#allocation2 + $0x48] sm:$0xf]
        %v6037 = vld [vmem:[#allocation2 + $0x4c] sm:$0xf]
        %v6038 = vld [vmem:[#allocation2 + $0x50] sm:$0x1]
        %v6039 = vld [vmem:[#allocation2 + $0x54] sm:$0xf]
        %v6040 = vld [vmem:[#allocation2 + $0x58] sm:$0xf]
        %v6041 = vld [vmem:[#allocation2 + $0x5c] sm:$0x1]
        %v6042 = vld [vmem:[#allocation2 + $0x60] sm:$0xf]
        %v6043 = vld [vmem:[#allocation2 + $0x64] sm:$0xf]
        %v6044 = vld [vmem:[#allocation2 + $0x68] sm:$0x1]
        %v6045 = vld [vmem:[#allocation2 + $0x6c] sm:$0xf]
        %v6046 = vld [vmem:[#allocation2 + $0x70] sm:$0xf]
        %v6047 = vld [vmem:[#allocation2 + $0x74] sm:$0x1]
        %v6048 = vld [vmem:[#allocation2 + $0x78] sm:$0xf]
        %v6049 = vld [vmem:[#allocation2 + $0x7c] sm:$0xf]
        %v6050 = vld [vmem:[#allocation2 + $0x80] sm:$0x1]
        %v6051 = vld [vmem:[#allocation2 + $0x84] sm:$0xf]
        %v6052 = vld [vmem:[#allocation2 + $0x88] sm:$0xf]
        %v6053 = vld [vmem:[#allocation2 + $0x8c] sm:$0x1]
        %v6054 = vld [vmem:[#allocation2 + $0x90] sm:$0xf]
        %v6055 = vld [vmem:[#allocation2 + $0x94] sm:$0xf]
        %v6056 = vld [vmem:[#allocation2 + $0x98] sm:$0x1]
        %v6057 = vld [vmem:[#allocation2 + $0x9c] sm:$0xf]
        %v6058 = vld [vmem:[#allocation2 + $0xa0] sm:$0xf]
        %v6059 = vld [vmem:[#allocation2 + $0xa4] sm:$0x1]
        %v6060 = vld [vmem:[#allocation2 + $0xa8] sm:$0xf]
        %v6061 = vld [vmem:[#allocation2 + $0xac] sm:$0xf]
        %v6062 = vld [vmem:[#allocation2 + $0xb0] sm:$0x1]
        %v6063 = vld [vmem:[#allocation2 + $0xb4] sm:$0xf]
        %v6064 = vld [vmem:[#allocation2 + $0xb8] sm:$0xf]
        %v6065 = vld [vmem:[#allocation2 + $0xbc] sm:$0x1]
        %v6067 = vshrl.u32 %v6018, 16
        %v6069 = vrot.slane %v6067, 4
        %v6070 = vshll.u32 %v6018, 16
        %v6072 = vrot.slane %v6070, 5
        %v6073 = vor.u32 %v6069, %v6072
        %v6074 = vrot.slane %v6073, 4
        %v6076 = vshll.u32 %v6019, 16
        %v6078 = vrot.slane %v6076, 5
        %v6079 = vsel %vm1361, %v6074, %v6078
        %v6080 = vshrl.u32 %v6019, 16
        %v6082 = vrot.slane %v6080, 4
        %v6083 = vor.u32 %v6082, %v6078
        %v6084 = vrot.slane %v6083, 4
        %v6086 = vshll.u32 %v6020, 16
        %v6088 = vrot.slane %v6086, 5
        %v6089 = vsel %vm1361, %v6084, %v6088
        %v6091 = vshrl.u32 %v6021, 16
        %v6093 = vrot.slane %v6091, 4
        %v6094 = vshll.u32 %v6021, 16
        %v6096 = vrot.slane %v6094, 5
        %v6097 = vor.u32 %v6093, %v6096
        %v6098 = vrot.slane %v6097, 4
        %v6100 = vshll.u32 %v6022, 16
        %v6102 = vrot.slane %v6100, 5
        %v6103 = vsel %vm1361, %v6098, %v6102
        %v6104 = vshrl.u32 %v6022, 16
        %v6106 = vrot.slane %v6104, 4
        %v6107 = vor.u32 %v6106, %v6102
        %v6108 = vrot.slane %v6107, 4
        %v6110 = vshll.u32 %v6023, 16
        %v6112 = vrot.slane %v6110, 5
        %v6113 = vsel %vm1361, %v6108, %v6112
        %v6115 = vshrl.u32 %v6024, 16
        %v6117 = vrot.slane %v6115, 4
        %v6118 = vshll.u32 %v6024, 16
        %v6120 = vrot.slane %v6118, 5
        %v6121 = vor.u32 %v6117, %v6120
        %v6122 = vrot.slane %v6121, 4
        %v6124 = vshll.u32 %v6025, 16
        %v6126 = vrot.slane %v6124, 5
        %v6127 = vsel %vm1361, %v6122, %v6126
        %v6128 = vshrl.u32 %v6025, 16
        %v6130 = vrot.slane %v6128, 4
        %v6131 = vor.u32 %v6130, %v6126
        %v6132 = vrot.slane %v6131, 4
        %v6134 = vshll.u32 %v6026, 16
        %v6136 = vrot.slane %v6134, 5
        %v6137 = vsel %vm1361, %v6132, %v6136
        %v6139 = vshrl.u32 %v6027, 16
        %v6141 = vrot.slane %v6139, 4
        %v6142 = vshll.u32 %v6027, 16
        %v6144 = vrot.slane %v6142, 5
        %v6145 = vor.u32 %v6141, %v6144
        %v6146 = vrot.slane %v6145, 4
        %v6148 = vshll.u32 %v6028, 16
        %v6150 = vrot.slane %v6148, 5
        %v6151 = vsel %vm1361, %v6146, %v6150
        %v6152 = vshrl.u32 %v6028, 16
        %v6154 = vrot.slane %v6152, 4
        %v6155 = vor.u32 %v6154, %v6150
        %v6156 = vrot.slane %v6155, 4
        %v6158 = vshll.u32 %v6029, 16
        %v6160 = vrot.slane %v6158, 5
        %v6161 = vsel %vm1361, %v6156, %v6160
        %v6163 = vshrl.u32 %v6030, 16
        %v6165 = vrot.slane %v6163, 4
        %v6166 = vshll.u32 %v6030, 16
        %v6168 = vrot.slane %v6166, 5
        %v6169 = vor.u32 %v6165, %v6168
        %v6170 = vrot.slane %v6169, 4
        %v6172 = vshll.u32 %v6031, 16
        %v6174 = vrot.slane %v6172, 5
        %v6175 = vsel %vm1361, %v6170, %v6174
        %v6176 = vshrl.u32 %v6031, 16
        %v6178 = vrot.slane %v6176, 4
        %v6179 = vor.u32 %v6178, %v6174
        %v6180 = vrot.slane %v6179, 4
        %v6182 = vshll.u32 %v6032, 16
        %v6184 = vrot.slane %v6182, 5
        %v6185 = vsel %vm1361, %v6180, %v6184
        %v6187 = vshrl.u32 %v6033, 16
        %v6189 = vrot.slane %v6187, 4
        %v6190 = vshll.u32 %v6033, 16
        %v6192 = vrot.slane %v6190, 5
        %v6193 = vor.u32 %v6189, %v6192
        %v6194 = vrot.slane %v6193, 4
        %v6196 = vshll.u32 %v6034, 16
        %v6198 = vrot.slane %v6196, 5
        %v6199 = vsel %vm1361, %v6194, %v6198
        %v6200 = vshrl.u32 %v6034, 16
        %v6202 = vrot.slane %v6200, 4
        %v6203 = vor.u32 %v6202, %v6198
        %v6204 = vrot.slane %v6203, 4
        %v6206 = vshll.u32 %v6035, 16
        %v6208 = vrot.slane %v6206, 5
        %v6209 = vsel %vm1361, %v6204, %v6208
        %v6211 = vshrl.u32 %v6036, 16
        %v6213 = vrot.slane %v6211, 4
        %v6214 = vshll.u32 %v6036, 16
        %v6216 = vrot.slane %v6214, 5
        %v6217 = vor.u32 %v6213, %v6216
        %v6218 = vrot.slane %v6217, 4
        %v6220 = vshll.u32 %v6037, 16
        %v6222 = vrot.slane %v6220, 5
        %v6223 = vsel %vm1361, %v6218, %v6222
        %v6224 = vshrl.u32 %v6037, 16
        %v6226 = vrot.slane %v6224, 4
        %v6227 = vor.u32 %v6226, %v6222
        %v6228 = vrot.slane %v6227, 4
        %v6230 = vshll.u32 %v6038, 16
        %v6232 = vrot.slane %v6230, 5
        %v6233 = vsel %vm1361, %v6228, %v6232
        %v6235 = vshrl.u32 %v6039, 16
        %v6237 = vrot.slane %v6235, 4
        %v6238 = vshll.u32 %v6039, 16
        %v6240 = vrot.slane %v6238, 5
        %v6241 = vor.u32 %v6237, %v6240
        %v6242 = vrot.slane %v6241, 4
        %v6244 = vshll.u32 %v6040, 16
        %v6246 = vrot.slane %v6244, 5
        %v6247 = vsel %vm1361, %v6242, %v6246
        %v6248 = vshrl.u32 %v6040, 16
        %v6250 = vrot.slane %v6248, 4
        %v6251 = vor.u32 %v6250, %v6246
        %v6252 = vrot.slane %v6251, 4
        %v6254 = vshll.u32 %v6041, 16
        %v6256 = vrot.slane %v6254, 5
        %v6257 = vsel %vm1361, %v6252, %v6256
        %v6259 = vshrl.u32 %v6042, 16
        %v6261 = vrot.slane %v6259, 4
        %v6262 = vshll.u32 %v6042, 16
        %v6264 = vrot.slane %v6262, 5
        %v6265 = vor.u32 %v6261, %v6264
        %v6266 = vrot.slane %v6265, 4
        %v6268 = vshll.u32 %v6043, 16
        %v6270 = vrot.slane %v6268, 5
        %v6271 = vsel %vm1361, %v6266, %v6270
        %v6272 = vshrl.u32 %v6043, 16
        %v6274 = vrot.slane %v6272, 4
        %v6275 = vor.u32 %v6274, %v6270
        %v6276 = vrot.slane %v6275, 4
        %v6278 = vshll.u32 %v6044, 16
        %v6280 = vrot.slane %v6278, 5
        %v6281 = vsel %vm1361, %v6276, %v6280
        %v6283 = vshrl.u32 %v6045, 16
        %v6285 = vrot.slane %v6283, 4
        %v6286 = vshll.u32 %v6045, 16
        %v6288 = vrot.slane %v6286, 5
        %v6289 = vor.u32 %v6285, %v6288
        %v6290 = vrot.slane %v6289, 4
        %v6292 = vshll.u32 %v6046, 16
        %v6294 = vrot.slane %v6292, 5
        %v6295 = vsel %vm1361, %v6290, %v6294
        %v6296 = vshrl.u32 %v6046, 16
        %v6298 = vrot.slane %v6296, 4
        %v6299 = vor.u32 %v6298, %v6294
        %v6300 = vrot.slane %v6299, 4
        %v6302 = vshll.u32 %v6047, 16
        %v6304 = vrot.slane %v6302, 5
        %v6305 = vsel %vm1361, %v6300, %v6304
        %v6307 = vshrl.u32 %v6048, 16
        %v6309 = vrot.slane %v6307, 4
        %v6310 = vshll.u32 %v6048, 16
        %v6312 = vrot.slane %v6310, 5
        %v6313 = vor.u32 %v6309, %v6312
        %v6314 = vrot.slane %v6313, 4
        %v6316 = vshll.u32 %v6049, 16
        %v6318 = vrot.slane %v6316, 5
        %v6319 = vsel %vm1361, %v6314, %v6318
        %v6320 = vshrl.u32 %v6049, 16
        %v6322 = vrot.slane %v6320, 4
        %v6323 = vor.u32 %v6322, %v6318
        %v6324 = vrot.slane %v6323, 4
        %v6326 = vshll.u32 %v6050, 16
        %v6328 = vrot.slane %v6326, 5
        %v6329 = vsel %vm1361, %v6324, %v6328
        %v6331 = vshrl.u32 %v6051, 16
        %v6333 = vrot.slane %v6331, 4
        %v6334 = vshll.u32 %v6051, 16
        %v6336 = vrot.slane %v6334, 5
        %v6337 = vor.u32 %v6333, %v6336
        %v6338 = vrot.slane %v6337, 4
        %v6340 = vshll.u32 %v6052, 16
        %v6342 = vrot.slane %v6340, 5
        %v6343 = vsel %vm1361, %v6338, %v6342
        %v6344 = vshrl.u32 %v6052, 16
        %v6346 = vrot.slane %v6344, 4
        %v6347 = vor.u32 %v6346, %v6342
        %v6348 = vrot.slane %v6347, 4
        %v6350 = vshll.u32 %v6053, 16
        %v6352 = vrot.slane %v6350, 5
        %v6353 = vsel %vm1361, %v6348, %v6352
        %v6355 = vshrl.u32 %v6054, 16
        %v6357 = vrot.slane %v6355, 4
        %v6358 = vshll.u32 %v6054, 16
        %v6360 = vrot.slane %v6358, 5
        %v6361 = vor.u32 %v6357, %v6360
        %v6362 = vrot.slane %v6361, 4
        %v6364 = vshll.u32 %v6055, 16
        %v6366 = vrot.slane %v6364, 5
        %v6367 = vsel %vm1361, %v6362, %v6366
        %v6368 = vshrl.u32 %v6055, 16
        %v6370 = vrot.slane %v6368, 4
        %v6371 = vor.u32 %v6370, %v6366
        %v6372 = vrot.slane %v6371, 4
        %v6374 = vshll.u32 %v6056, 16
        %v6376 = vrot.slane %v6374, 5
        %v6377 = vsel %vm1361, %v6372, %v6376
        %v6379 = vshrl.u32 %v6057, 16
        %v6381 = vrot.slane %v6379, 4
        %v6382 = vshll.u32 %v6057, 16
        %v6384 = vrot.slane %v6382, 5
        %v6385 = vor.u32 %v6381, %v6384
        %v6386 = vrot.slane %v6385, 4
        %v6388 = vshll.u32 %v6058, 16
        %v6390 = vrot.slane %v6388, 5
        %v6391 = vsel %vm1361, %v6386, %v6390
        %v6392 = vshrl.u32 %v6058, 16
        %v6394 = vrot.slane %v6392, 4
        %v6395 = vor.u32 %v6394, %v6390
        %v6396 = vrot.slane %v6395, 4
        %v6398 = vshll.u32 %v6059, 16
        %v6400 = vrot.slane %v6398, 5
        %v6401 = vsel %vm1361, %v6396, %v6400
        %v6403 = vshrl.u32 %v6060, 16
        %v6405 = vrot.slane %v6403, 4
        %v6406 = vshll.u32 %v6060, 16
        %v6408 = vrot.slane %v6406, 5
        %v6409 = vor.u32 %v6405, %v6408
        %v6410 = vrot.slane %v6409, 4
        %v6412 = vshll.u32 %v6061, 16
        %v6414 = vrot.slane %v6412, 5
        %v6415 = vsel %vm1361, %v6410, %v6414
        %v6416 = vshrl.u32 %v6061, 16
        %v6418 = vrot.slane %v6416, 4
        %v6419 = vor.u32 %v6418, %v6414
        %v6420 = vrot.slane %v6419, 4
        %v6422 = vshll.u32 %v6062, 16
        %v6424 = vrot.slane %v6422, 5
        %v6425 = vsel %vm1361, %v6420, %v6424
        %v6427 = vshrl.u32 %v6063, 16
        %v6429 = vrot.slane %v6427, 4
        %v6430 = vshll.u32 %v6063, 16
        %v6432 = vrot.slane %v6430, 5
        %v6433 = vor.u32 %v6429, %v6432
        %v6434 = vrot.slane %v6433, 4
        %v6436 = vshll.u32 %v6064, 16
        %v6438 = vrot.slane %v6436, 5
        %v6439 = vsel %vm1361, %v6434, %v6438
        %v6440 = vshrl.u32 %v6064, 16
        %v6442 = vrot.slane %v6440, 4
        %v6443 = vor.u32 %v6442, %v6438
        %v6444 = vrot.slane %v6443, 4
        %v6446 = vshll.u32 %v6065, 16
        %v6448 = vrot.slane %v6446, 5
        %v6449 = vsel %vm1361, %v6444, %v6448
        %6450 = vrot.lane.b32.xlu0 %v6079, 64
        %v6451 = vpop.permute.xlu0 %6450
        %6452 = vrot.lane.b32.xlu0 %v6089, 64
        %v6453 = vpop.permute.xlu0 %6452
        %6454 = vrot.lane.b32.xlu0 %v6103, 64
        %v6455 = vpop.permute.xlu0 %6454
        %6456 = vrot.lane.b32.xlu0 %v6113, 64
        %v6457 = vpop.permute.xlu0 %6456
        %6458 = vrot.lane.b32.xlu0 %v6127, 64
        %v6459 = vpop.permute.xlu0 %6458
        %6460 = vrot.lane.b32.xlu0 %v6137, 64
        %v6461 = vpop.permute.xlu0 %6460
        %6462 = vrot.lane.b32.xlu0 %v6151, 64
        %v6463 = vpop.permute.xlu0 %6462
        %6464 = vrot.lane.b32.xlu0 %v6161, 64
        %v6465 = vpop.permute.xlu0 %6464
        %6466 = vrot.lane.b32.xlu0 %v6175, 64
        %v6467 = vpop.permute.xlu0 %6466
        %6468 = vrot.lane.b32.xlu0 %v6185, 64
        %v6469 = vpop.permute.xlu0 %6468
        %6470 = vrot.lane.b32.xlu0 %v6199, 64
        %v6471 = vpop.permute.xlu0 %6470
        %6472 = vrot.lane.b32.xlu0 %v6209, 64
        %v6473 = vpop.permute.xlu0 %6472
        %6474 = vrot.lane.b32.xlu0 %v6223, 64
        %v6475 = vpop.permute.xlu0 %6474
        %6476 = vrot.lane.b32.xlu0 %v6233, 64
        %v6477 = vpop.permute.xlu0 %6476
        %6478 = vrot.lane.b32.xlu0 %v6247, 64
        %v6479 = vpop.permute.xlu0 %6478
        %6480 = vrot.lane.b32.xlu0 %v6257, 64
        %v6481 = vpop.permute.xlu0 %6480
        %6482 = vrot.lane.b32.xlu0 %v6271, 64
        %v6483 = vpop.permute.xlu0 %6482
        %6484 = vrot.lane.b32.xlu0 %v6281, 64
        %v6485 = vpop.permute.xlu0 %6484
        %6486 = vrot.lane.b32.xlu0 %v6295, 64
        %v6487 = vpop.permute.xlu0 %6486
        %6488 = vrot.lane.b32.xlu0 %v6305, 64
        %v6489 = vpop.permute.xlu0 %6488
        %6490 = vrot.lane.b32.xlu0 %v6319, 64
        %v6491 = vpop.permute.xlu0 %6490
        %6492 = vrot.lane.b32.xlu0 %v6329, 64
        %v6493 = vpop.permute.xlu0 %6492
        %6494 = vrot.lane.b32.xlu0 %v6343, 64
        %v6495 = vpop.permute.xlu0 %6494
        %6496 = vrot.lane.b32.xlu0 %v6353, 64
        %v6497 = vpop.permute.xlu0 %6496
        %6498 = vrot.lane.b32.xlu0 %v6367, 64
        %v6499 = vpop.permute.xlu0 %6498
        %6500 = vrot.lane.b32.xlu0 %v6377, 64
        %v6501 = vpop.permute.xlu0 %6500
        %6502 = vrot.lane.b32.xlu0 %v6391, 64
        %v6503 = vpop.permute.xlu0 %6502
        %6504 = vrot.lane.b32.xlu0 %v6401, 64
        %v6505 = vpop.permute.xlu0 %6504
        %6506 = vrot.lane.b32.xlu0 %v6415, 64
        %v6507 = vpop.permute.xlu0 %6506
        %6508 = vrot.lane.b32.xlu0 %v6425, 64
        %v6509 = vpop.permute.xlu0 %6508
        %6510 = vrot.lane.b32.xlu0 %v6439, 64
        %v6511 = vpop.permute.xlu0 %6510
        %6512 = vrot.lane.b32.xlu0 %v6449, 64
        %v6513 = vpop.permute.xlu0 %6512
        %6546 = vst.msk [vmem:[#allocation3] sm:$0xf] %vm1842, %v6451
        %6547 = vst.msk [vmem:[#allocation3 + $0x14] sm:$0xf] %vm1842, %v6453
        %6548 = vst.msk [vmem:[#allocation3 + $0x28] sm:$0xf] %vm1842, %v6455
        %6549 = vst.msk [vmem:[#allocation3 + $0x3c] sm:$0xf] %vm1842, %v6457
        %6550 = vst.msk [vmem:[#allocation3 + $0x50] sm:$0xf] %vm1842, %v6459
        %6551 = vst.msk [vmem:[#allocation3 + $0x64] sm:$0xf] %vm1842, %v6461
        %6552 = vst.msk [vmem:[#allocation3 + $0x78] sm:$0xf] %vm1842, %v6463
        %6553 = vst.msk [vmem:[#allocation3 + $0x8c] sm:$0xf] %vm1842, %v6465
        %6554 = vst.msk [vmem:[#allocation3 + $0xa0] sm:$0xf] %vm1842, %v6467
        %6555 = vst.msk [vmem:[#allocation3 + $0xb4] sm:$0xf] %vm1842, %v6469
        %6556 = vst.msk [vmem:[#allocation3 + $0xc8] sm:$0xf] %vm1842, %v6471
        %6557 = vst.msk [vmem:[#allocation3 + $0xdc] sm:$0xf] %vm1842, %v6473
        %6558 = vst.msk [vmem:[#allocation3 + $0xf0] sm:$0xf] %vm1842, %v6475
        %6559 = vst.msk [vmem:[#allocation3 + $0x104] sm:$0xf] %vm1842, %v6477
        %6560 = vst.msk [vmem:[#allocation3 + $0x118] sm:$0xf] %vm1842, %v6479
        %6561 = vst.msk [vmem:[#allocation3 + $0x12c] sm:$0xf] %vm1842, %v6481
        %6562 = vst.msk [vmem:[#allocation3 + $0x140] sm:$0xf] %vm1842, %v6483
        %6563 = vst.msk [vmem:[#allocation3 + $0x154] sm:$0xf] %vm1842, %v6485
        %6564 = vst.msk [vmem:[#allocation3 + $0x168] sm:$0xf] %vm1842, %v6487
        %6565 = vst.msk [vmem:[#allocation3 + $0x17c] sm:$0xf] %vm1842, %v6489
        %6566 = vst.msk [vmem:[#allocation3 + $0x190] sm:$0xf] %vm1842, %v6491
        %6567 = vst.msk [vmem:[#allocation3 + $0x1a4] sm:$0xf] %vm1842, %v6493
        %6568 = vst.msk [vmem:[#allocation3 + $0x1b8] sm:$0xf] %vm1842, %v6495
        %6569 = vst.msk [vmem:[#allocation3 + $0x1cc] sm:$0xf] %vm1842, %v6497
        %6570 = vst.msk [vmem:[#allocation3 + $0x1e0] sm:$0xf] %vm1842, %v6499
        %6571 = vst.msk [vmem:[#allocation3 + $0x1f4] sm:$0xf] %vm1842, %v6501
        %6572 = vst.msk [vmem:[#allocation3 + $0x208] sm:$0xf] %vm1842, %v6503
        %6573 = vst.msk [vmem:[#allocation3 + $0x21c] sm:$0xf] %vm1842, %v6505
        %6574 = vst.msk [vmem:[#allocation3 + $0x230] sm:$0xf] %vm1842, %v6507
        %6575 = vst.msk [vmem:[#allocation3 + $0x244] sm:$0xf] %vm1842, %v6509
        %6576 = vst.msk [vmem:[#allocation3 + $0x258] sm:$0xf] %vm1842, %v6511
        %6577 = vst.msk [vmem:[#allocation3 + $0x26c] sm:$0xf] %vm1842, %v6513
        %v6578 = vld [vmem:[#allocation2] sm:$0xe]
        %v6579 = vld [vmem:[#allocation2 + $0x4] sm:$0xf]
        %v6580 = vld [vmem:[#allocation2 + $0x8] sm:$0x1]
        %v6581 = vld [vmem:[#allocation2 + $0xc] sm:$0xe]
        %v6582 = vld [vmem:[#allocation2 + $0x10] sm:$0xf]
        %v6583 = vld [vmem:[#allocation2 + $0x14] sm:$0x1]
        %v6584 = vld [vmem:[#allocation2 + $0x18] sm:$0xe]
        %v6585 = vld [vmem:[#allocation2 + $0x1c] sm:$0xf]
        %v6586 = vld [vmem:[#allocation2 + $0x20] sm:$0x1]
        %v6587 = vld [vmem:[#allocation2 + $0x24] sm:$0xe]
        %v6588 = vld [vmem:[#allocation2 + $0x28] sm:$0xf]
        %v6589 = vld [vmem:[#allocation2 + $0x2c] sm:$0x1]
        %v6590 = vld [vmem:[#allocation2 + $0x30] sm:$0xe]
        %v6591 = vld [vmem:[#allocation2 + $0x34] sm:$0xf]
        %v6592 = vld [vmem:[#allocation2 + $0x38] sm:$0x1]
        %v6593 = vld [vmem:[#allocation2 + $0x3c] sm:$0xe]
        %v6594 = vld [vmem:[#allocation2 + $0x40] sm:$0xf]
        %v6595 = vld [vmem:[#allocation2 + $0x44] sm:$0x1]
        %v6596 = vld [vmem:[#allocation2 + $0x48] sm:$0xe]
        %v6597 = vld [vmem:[#allocation2 + $0x4c] sm:$0xf]
        %v6598 = vld [vmem:[#allocation2 + $0x50] sm:$0x1]
        %v6599 = vld [vmem:[#allocation2 + $0x54] sm:$0xe]
        %v6600 = vld [vmem:[#allocation2 + $0x58] sm:$0xf]
        %v6601 = vld [vmem:[#allocation2 + $0x5c] sm:$0x1]
        %v6602 = vld [vmem:[#allocation2 + $0x60] sm:$0xe]
        %v6603 = vld [vmem:[#allocation2 + $0x64] sm:$0xf]
        %v6604 = vld [vmem:[#allocation2 + $0x68] sm:$0x1]
        %v6605 = vld [vmem:[#allocation2 + $0x6c] sm:$0xe]
        %v6606 = vld [vmem:[#allocation2 + $0x70] sm:$0xf]
        %v6607 = vld [vmem:[#allocation2 + $0x74] sm:$0x1]
        %v6608 = vld [vmem:[#allocation2 + $0x78] sm:$0xe]
        %v6609 = vld [vmem:[#allocation2 + $0x7c] sm:$0xf]
        %v6610 = vld [vmem:[#allocation2 + $0x80] sm:$0x1]
        %v6611 = vld [vmem:[#allocation2 + $0x84] sm:$0xe]
        %v6612 = vld [vmem:[#allocation2 + $0x88] sm:$0xf]
        %v6613 = vld [vmem:[#allocation2 + $0x8c] sm:$0x1]
        %v6614 = vld [vmem:[#allocation2 + $0x90] sm:$0xe]
        %v6615 = vld [vmem:[#allocation2 + $0x94] sm:$0xf]
        %v6616 = vld [vmem:[#allocation2 + $0x98] sm:$0x1]
        %v6617 = vld [vmem:[#allocation2 + $0x9c] sm:$0xe]
        %v6618 = vld [vmem:[#allocation2 + $0xa0] sm:$0xf]
        %v6619 = vld [vmem:[#allocation2 + $0xa4] sm:$0x1]
        %v6620 = vld [vmem:[#allocation2 + $0xa8] sm:$0xe]
        %v6621 = vld [vmem:[#allocation2 + $0xac] sm:$0xf]
        %v6622 = vld [vmem:[#allocation2 + $0xb0] sm:$0x1]
        %v6623 = vld [vmem:[#allocation2 + $0xb4] sm:$0xe]
        %v6624 = vld [vmem:[#allocation2 + $0xb8] sm:$0xf]
        %v6625 = vld [vmem:[#allocation2 + $0xbc] sm:$0x1]
        %v6674 = vrot.slane %v6578, 5
        %v6675 = vrot.slane %v6674, 4
        %v6676 = vrot.slane %v6579, 5
        %v6677 = vsel %vm1973, %v6675, %v6676
        %v6678 = vrot.slane %v6676, 4
        %v6679 = vrot.slane %v6580, 5
        %v6680 = vsel %vm1973, %v6678, %v6679
        %v6681 = vrot.slane %v6581, 5
        %v6682 = vrot.slane %v6681, 4
        %v6683 = vrot.slane %v6582, 5
        %v6684 = vsel %vm1973, %v6682, %v6683
        %v6685 = vrot.slane %v6683, 4
        %v6686 = vrot.slane %v6583, 5
        %v6687 = vsel %vm1973, %v6685, %v6686
        %v6688 = vrot.slane %v6584, 5
        %v6689 = vrot.slane %v6688, 4
        %v6690 = vrot.slane %v6585, 5
        %v6691 = vsel %vm1973, %v6689, %v6690
        %v6692 = vrot.slane %v6690, 4
        %v6693 = vrot.slane %v6586, 5
        %v6694 = vsel %vm1973, %v6692, %v6693
        %v6695 = vrot.slane %v6587, 5
        %v6696 = vrot.slane %v6695, 4
        %v6697 = vrot.slane %v6588, 5
        %v6698 = vsel %vm1973, %v6696, %v6697
        %v6699 = vrot.slane %v6697, 4
        %v6700 = vrot.slane %v6589, 5
        %v6701 = vsel %vm1973, %v6699, %v6700
        %v6702 = vrot.slane %v6590, 5
        %v6703 = vrot.slane %v6702, 4
        %v6704 = vrot.slane %v6591, 5
        %v6705 = vsel %vm1973, %v6703, %v6704
        %v6706 = vrot.slane %v6704, 4
        %v6707 = vrot.slane %v6592, 5
        %v6708 = vsel %vm1973, %v6706, %v6707
        %v6709 = vrot.slane %v6593, 5
        %v6710 = vrot.slane %v6709, 4
        %v6711 = vrot.slane %v6594, 5
        %v6712 = vsel %vm1973, %v6710, %v6711
        %v6713 = vrot.slane %v6711, 4
        %v6714 = vrot.slane %v6595, 5
        %v6715 = vsel %vm1973, %v6713, %v6714
        %v6716 = vrot.slane %v6596, 5
        %v6717 = vrot.slane %v6716, 4
        %v6718 = vrot.slane %v6597, 5
        %v6719 = vsel %vm1973, %v6717, %v6718
        %v6720 = vrot.slane %v6718, 4
        %v6721 = vrot.slane %v6598, 5
        %v6722 = vsel %vm1973, %v6720, %v6721
        %v6723 = vrot.slane %v6599, 5
        %v6724 = vrot.slane %v6723, 4
        %v6725 = vrot.slane %v6600, 5
        %v6726 = vsel %vm1973, %v6724, %v6725
        %v6727 = vrot.slane %v6725, 4
        %v6728 = vrot.slane %v6601, 5
        %v6729 = vsel %vm1973, %v6727, %v6728
        %v6730 = vrot.slane %v6602, 5
        %v6731 = vrot.slane %v6730, 4
        %v6732 = vrot.slane %v6603, 5
        %v6733 = vsel %vm1973, %v6731, %v6732
        %v6734 = vrot.slane %v6732, 4
        %v6735 = vrot.slane %v6604, 5
        %v6736 = vsel %vm1973, %v6734, %v6735
        %v6737 = vrot.slane %v6605, 5
        %v6738 = vrot.slane %v6737, 4
        %v6739 = vrot.slane %v6606, 5
        %v6740 = vsel %vm1973, %v6738, %v6739
        %v6741 = vrot.slane %v6739, 4
        %v6742 = vrot.slane %v6607, 5
        %v6743 = vsel %vm1973, %v6741, %v6742
        %v6744 = vrot.slane %v6608, 5
        %v6745 = vrot.slane %v6744, 4
        %v6746 = vrot.slane %v6609, 5
        %v6747 = vsel %vm1973, %v6745, %v6746
        %v6748 = vrot.slane %v6746, 4
        %v6749 = vrot.slane %v6610, 5
        %v6750 = vsel %vm1973, %v6748, %v6749
        %v6751 = vrot.slane %v6611, 5
        %v6752 = vrot.slane %v6751, 4
        %v6753 = vrot.slane %v6612, 5
        %v6754 = vsel %vm1973, %v6752, %v6753
        %v6755 = vrot.slane %v6753, 4
        %v6756 = vrot.slane %v6613, 5
        %v6757 = vsel %vm1973, %v6755, %v6756
        %v6758 = vrot.slane %v6614, 5
        %v6759 = vrot.slane %v6758, 4
        %v6760 = vrot.slane %v6615, 5
        %v6761 = vsel %vm1973, %v6759, %v6760
        %v6762 = vrot.slane %v6760, 4
        %v6763 = vrot.slane %v6616, 5
        %v6764 = vsel %vm1973, %v6762, %v6763
        %v6765 = vrot.slane %v6617, 5
        %v6766 = vrot.slane %v6765, 4
        %v6767 = vrot.slane %v6618, 5
        %v6768 = vsel %vm1973, %v6766, %v6767
        %v6769 = vrot.slane %v6767, 4
        %v6770 = vrot.slane %v6619, 5
        %v6771 = vsel %vm1973, %v6769, %v6770
        %v6772 = vrot.slane %v6620, 5
        %v6773 = vrot.slane %v6772, 4
        %v6774 = vrot.slane %v6621, 5
        %v6775 = vsel %vm1973, %v6773, %v6774
        %v6776 = vrot.slane %v6774, 4
        %v6777 = vrot.slane %v6622, 5
        %v6778 = vsel %vm1973, %v6776, %v6777
        %v6779 = vrot.slane %v6623, 5
        %v6780 = vrot.slane %v6779, 4
        %v6781 = vrot.slane %v6624, 5
        %v6782 = vsel %vm1973, %v6780, %v6781
        %v6783 = vrot.slane %v6781, 4
        %v6784 = vrot.slane %v6625, 5
        %v6785 = vsel %vm1973, %v6783, %v6784
        %6818 = vst.msk [vmem:[#allocation3 + $0x4] sm:$0xf] %vm654, %v6677
        %6819 = vst.msk [vmem:[#allocation3 + $0x18] sm:$0xf] %vm654, %v6680
        %6820 = vst.msk [vmem:[#allocation3 + $0x2c] sm:$0xf] %vm654, %v6684
        %6821 = vst.msk [vmem:[#allocation3 + $0x40] sm:$0xf] %vm654, %v6687
        %6822 = vst.msk [vmem:[#allocation3 + $0x54] sm:$0xf] %vm654, %v6691
        %6823 = vst.msk [vmem:[#allocation3 + $0x68] sm:$0xf] %vm654, %v6694
        %6824 = vst.msk [vmem:[#allocation3 + $0x7c] sm:$0xf] %vm654, %v6698
        %6825 = vst.msk [vmem:[#allocation3 + $0x90] sm:$0xf] %vm654, %v6701
        %6826 = vst.msk [vmem:[#allocation3 + $0xa4] sm:$0xf] %vm654, %v6705
        %6827 = vst.msk [vmem:[#allocation3 + $0xb8] sm:$0xf] %vm654, %v6708
        %6828 = vst.msk [vmem:[#allocation3 + $0xcc] sm:$0xf] %vm654, %v6712
        %6829 = vst.msk [vmem:[#allocation3 + $0xe0] sm:$0xf] %vm654, %v6715
        %6830 = vst.msk [vmem:[#allocation3 + $0xf4] sm:$0xf] %vm654, %v6719
        %6831 = vst.msk [vmem:[#allocation3 + $0x108] sm:$0xf] %vm654, %v6722
        %6832 = vst.msk [vmem:[#allocation3 + $0x11c] sm:$0xf] %vm654, %v6726
        %6833 = vst.msk [vmem:[#allocation3 + $0x130] sm:$0xf] %vm654, %v6729
        %6834 = vst.msk [vmem:[#allocation3 + $0x144] sm:$0xf] %vm654, %v6733
        %6835 = vst.msk [vmem:[#allocation3 + $0x158] sm:$0xf] %vm654, %v6736
        %6836 = vst.msk [vmem:[#allocation3 + $0x16c] sm:$0xf] %vm654, %v6740
        %6837 = vst.msk [vmem:[#allocation3 + $0x180] sm:$0xf] %vm654, %v6743
        %6838 = vst.msk [vmem:[#allocation3 + $0x194] sm:$0xf] %vm654, %v6747
        %6839 = vst.msk [vmem:[#allocation3 + $0x1a8] sm:$0xf] %vm654, %v6750
        %6840 = vst.msk [vmem:[#allocation3 + $0x1bc] sm:$0xf] %vm654, %v6754
        %6841 = vst.msk [vmem:[#allocation3 + $0x1d0] sm:$0xf] %vm654, %v6757
        %6842 = vst.msk [vmem:[#allocation3 + $0x1e4] sm:$0xf] %vm654, %v6761
        %6843 = vst.msk [vmem:[#allocation3 + $0x1f8] sm:$0xf] %vm654, %v6764
        %6844 = vst.msk [vmem:[#allocation3 + $0x20c] sm:$0xf] %vm654, %v6768
        %6845 = vst.msk [vmem:[#allocation3 + $0x220] sm:$0xf] %vm654, %v6771
        %6846 = vst.msk [vmem:[#allocation3 + $0x234] sm:$0xf] %vm654, %v6775
        %6847 = vst.msk [vmem:[#allocation3 + $0x248] sm:$0xf] %vm654, %v6778
        %6848 = vst.msk [vmem:[#allocation3 + $0x25c] sm:$0xf] %vm654, %v6782
        %6849 = vst.msk [vmem:[#allocation3 + $0x270] sm:$0xf] %vm654, %v6785
        %v6850 = vld [vmem:[%s1129] sm:$0xf]
        %v6851 = vld [vmem:[%s1129 + $0x4] sm:$0xf]
        %v6852 = vld [vmem:[%s1129 + $0xc] sm:$0xf]
        %v6853 = vld [vmem:[%s1129 + $0x10] sm:$0xf]
        %v6854 = vld [vmem:[%s1129 + $0x18] sm:$0xf]
        %v6855 = vld [vmem:[%s1129 + $0x1c] sm:$0xf]
        %v6856 = vld [vmem:[%s1129 + $0x24] sm:$0xf]
        %v6857 = vld [vmem:[%s1129 + $0x28] sm:$0xf]
        %v6858 = vld [vmem:[%s1129 + $0x30] sm:$0xf]
        %v6859 = vld [vmem:[%s1129 + $0x34] sm:$0xf]
        %v6860 = vld [vmem:[%s1129 + $0x3c] sm:$0xf]
        %v6861 = vld [vmem:[%s1129 + $0x40] sm:$0xf]
        %v6862 = vld [vmem:[%s1129 + $0x48] sm:$0xf]
        %v6863 = vld [vmem:[%s1129 + $0x4c] sm:$0xf]
        %v6864 = vld [vmem:[%s1129 + $0x54] sm:$0xf]
        %v6865 = vld [vmem:[%s1129 + $0x58] sm:$0xf]
        %v6866 = vld [vmem:[%s1129 + $0x60] sm:$0xf]
        %v6867 = vld [vmem:[%s1129 + $0x64] sm:$0xf]
        %v6868 = vld [vmem:[%s1129 + $0x6c] sm:$0xf]
        %v6869 = vld [vmem:[%s1129 + $0x70] sm:$0xf]
        %v6870 = vld [vmem:[%s1129 + $0x78] sm:$0xf]
        %v6871 = vld [vmem:[%s1129 + $0x7c] sm:$0xf]
        %v6872 = vld [vmem:[%s1129 + $0x84] sm:$0xf]
        %v6873 = vld [vmem:[%s1129 + $0x88] sm:$0xf]
        %v6874 = vld [vmem:[%s1129 + $0x90] sm:$0xf]
        %v6875 = vld [vmem:[%s1129 + $0x94] sm:$0xf]
        %v6876 = vld [vmem:[%s1129 + $0x9c] sm:$0xf]
        %v6877 = vld [vmem:[%s1129 + $0xa0] sm:$0xf]
        %v6878 = vld [vmem:[%s1129 + $0xa8] sm:$0xf]
        %v6879 = vld [vmem:[%s1129 + $0xac] sm:$0xf]
        %v6880 = vld [vmem:[%s1129 + $0xb4] sm:$0xf]
        %v6881 = vld [vmem:[%s1129 + $0xb8] sm:$0xf]
        %6914 = vrot.lane.b32.xlu0 %v6850, 64
        %v6915 = vpop.permute.xlu0 %6914
        %6916 = vrot.lane.b32.xlu0 %v6851, 64
        %v6917 = vpop.permute.xlu0 %6916
        %6918 = vrot.lane.b32.xlu0 %v6852, 64
        %v6919 = vpop.permute.xlu0 %6918
        %6920 = vrot.lane.b32.xlu0 %v6853, 64
        %v6921 = vpop.permute.xlu0 %6920
        %6922 = vrot.lane.b32.xlu0 %v6854, 64
        %v6923 = vpop.permute.xlu0 %6922
        %6924 = vrot.lane.b32.xlu0 %v6855, 64
        %v6925 = vpop.permute.xlu0 %6924
        %6926 = vrot.lane.b32.xlu0 %v6856, 64
        %v6927 = vpop.permute.xlu0 %6926
        %6928 = vrot.lane.b32.xlu0 %v6857, 64
        %v6929 = vpop.permute.xlu0 %6928
        %6930 = vrot.lane.b32.xlu0 %v6858, 64
        %v6931 = vpop.permute.xlu0 %6930
        %6932 = vrot.lane.b32.xlu0 %v6859, 64
        %v6933 = vpop.permute.xlu0 %6932
        %6934 = vrot.lane.b32.xlu0 %v6860, 64
        %v6935 = vpop.permute.xlu0 %6934
        %6936 = vrot.lane.b32.xlu0 %v6861, 64
        %v6937 = vpop.permute.xlu0 %6936
        %6938 = vrot.lane.b32.xlu0 %v6862, 64
        %v6939 = vpop.permute.xlu0 %6938
        %6940 = vrot.lane.b32.xlu0 %v6863, 64
        %v6941 = vpop.permute.xlu0 %6940
        %6942 = vrot.lane.b32.xlu0 %v6864, 64
        %v6943 = vpop.permute.xlu0 %6942
        %6944 = vrot.lane.b32.xlu0 %v6865, 64
        %v6945 = vpop.permute.xlu0 %6944
        %6946 = vrot.lane.b32.xlu0 %v6866, 64
        %v6947 = vpop.permute.xlu0 %6946
        %6948 = vrot.lane.b32.xlu0 %v6867, 64
        %v6949 = vpop.permute.xlu0 %6948
        %6950 = vrot.lane.b32.xlu0 %v6868, 64
        %v6951 = vpop.permute.xlu0 %6950
        %6952 = vrot.lane.b32.xlu0 %v6869, 64
        %v6953 = vpop.permute.xlu0 %6952
        %6954 = vrot.lane.b32.xlu0 %v6870, 64
        %v6955 = vpop.permute.xlu0 %6954
        %6956 = vrot.lane.b32.xlu0 %v6871, 64
        %v6957 = vpop.permute.xlu0 %6956
        %6958 = vrot.lane.b32.xlu0 %v6872, 64
        %v6959 = vpop.permute.xlu0 %6958
        %6960 = vrot.lane.b32.xlu0 %v6873, 64
        %v6961 = vpop.permute.xlu0 %6960
        %6962 = vrot.lane.b32.xlu0 %v6874, 64
        %v6963 = vpop.permute.xlu0 %6962
        %6964 = vrot.lane.b32.xlu0 %v6875, 64
        %v6965 = vpop.permute.xlu0 %6964
        %6966 = vrot.lane.b32.xlu0 %v6876, 64
        %v6967 = vpop.permute.xlu0 %6966
        %6968 = vrot.lane.b32.xlu0 %v6877, 64
        %v6969 = vpop.permute.xlu0 %6968
        %6970 = vrot.lane.b32.xlu0 %v6878, 64
        %v6971 = vpop.permute.xlu0 %6970
        %6972 = vrot.lane.b32.xlu0 %v6879, 64
        %v6973 = vpop.permute.xlu0 %6972
        %6974 = vrot.lane.b32.xlu0 %v6880, 64
        %v6975 = vpop.permute.xlu0 %6974
        %6976 = vrot.lane.b32.xlu0 %v6881, 64
        %v6977 = vpop.permute.xlu0 %6976
        %7010 = vst.msk [vmem:[#allocation3 + $0x4] sm:$0xf] %vm1842, %v6915
        %7011 = vst.msk [vmem:[#allocation3 + $0x18] sm:$0xf] %vm1842, %v6917
        %7012 = vst.msk [vmem:[#allocation3 + $0x2c] sm:$0xf] %vm1842, %v6919
        %7013 = vst.msk [vmem:[#allocation3 + $0x40] sm:$0xf] %vm1842, %v6921
        %7014 = vst.msk [vmem:[#allocation3 + $0x54] sm:$0xf] %vm1842, %v6923
        %7015 = vst.msk [vmem:[#allocation3 + $0x68] sm:$0xf] %vm1842, %v6925
        %7016 = vst.msk [vmem:[#allocation3 + $0x7c] sm:$0xf] %vm1842, %v6927
        %7017 = vst.msk [vmem:[#allocation3 + $0x90] sm:$0xf] %vm1842, %v6929
        %7018 = vst.msk [vmem:[#allocation3 + $0xa4] sm:$0xf] %vm1842, %v6931
        %7019 = vst.msk [vmem:[#allocation3 + $0xb8] sm:$0xf] %vm1842, %v6933
        %7020 = vst.msk [vmem:[#allocation3 + $0xcc] sm:$0xf] %vm1842, %v6935
        %7021 = vst.msk [vmem:[#allocation3 + $0xe0] sm:$0xf] %vm1842, %v6937
        %7022 = vst.msk [vmem:[#allocation3 + $0xf4] sm:$0xf] %vm1842, %v6939
        %7023 = vst.msk [vmem:[#allocation3 + $0x108] sm:$0xf] %vm1842, %v6941
        %7024 = vst.msk [vmem:[#allocation3 + $0x11c] sm:$0xf] %vm1842, %v6943
        %7025 = vst.msk [vmem:[#allocation3 + $0x130] sm:$0xf] %vm1842, %v6945
        %7026 = vst.msk [vmem:[#allocation3 + $0x144] sm:$0xf] %vm1842, %v6947
        %7027 = vst.msk [vmem:[#allocation3 + $0x158] sm:$0xf] %vm1842, %v6949
        %7028 = vst.msk [vmem:[#allocation3 + $0x16c] sm:$0xf] %vm1842, %v6951
        %7029 = vst.msk [vmem:[#allocation3 + $0x180] sm:$0xf] %vm1842, %v6953
        %7030 = vst.msk [vmem:[#allocation3 + $0x194] sm:$0xf] %vm1842, %v6955
        %7031 = vst.msk [vmem:[#allocation3 + $0x1a8] sm:$0xf] %vm1842, %v6957
        %7032 = vst.msk [vmem:[#allocation3 + $0x1bc] sm:$0xf] %vm1842, %v6959
        %7033 = vst.msk [vmem:[#allocation3 + $0x1d0] sm:$0xf] %vm1842, %v6961
        %7034 = vst.msk [vmem:[#allocation3 + $0x1e4] sm:$0xf] %vm1842, %v6963
        %7035 = vst.msk [vmem:[#allocation3 + $0x1f8] sm:$0xf] %vm1842, %v6965
        %7036 = vst.msk [vmem:[#allocation3 + $0x20c] sm:$0xf] %vm1842, %v6967
        %7037 = vst.msk [vmem:[#allocation3 + $0x220] sm:$0xf] %vm1842, %v6969
        %7038 = vst.msk [vmem:[#allocation3 + $0x234] sm:$0xf] %vm1842, %v6971
        %7039 = vst.msk [vmem:[#allocation3 + $0x248] sm:$0xf] %vm1842, %v6973
        %7040 = vst.msk [vmem:[#allocation3 + $0x25c] sm:$0xf] %vm1842, %v6975
        %7041 = vst.msk [vmem:[#allocation3 + $0x270] sm:$0xf] %vm1842, %v6977
        %v7042 = vld [vmem:[%s1129] sm:$0xf]
        %v7043 = vld [vmem:[%s1129 + $0x4] sm:$0xf]
        %v7044 = vld [vmem:[%s1129 + $0x8] sm:$0x1]
        %v7045 = vld [vmem:[%s1129 + $0xc] sm:$0xf]
        %v7046 = vld [vmem:[%s1129 + $0x10] sm:$0xf]
        %v7047 = vld [vmem:[%s1129 + $0x14] sm:$0x1]
        %v7048 = vld [vmem:[%s1129 + $0x18] sm:$0xf]
        %v7049 = vld [vmem:[%s1129 + $0x1c] sm:$0xf]
        %v7050 = vld [vmem:[%s1129 + $0x20] sm:$0x1]
        %v7051 = vld [vmem:[%s1129 + $0x24] sm:$0xf]
        %v7052 = vld [vmem:[%s1129 + $0x28] sm:$0xf]
        %v7053 = vld [vmem:[%s1129 + $0x2c] sm:$0x1]
        %v7054 = vld [vmem:[%s1129 + $0x30] sm:$0xf]
        %v7055 = vld [vmem:[%s1129 + $0x34] sm:$0xf]
        %v7056 = vld [vmem:[%s1129 + $0x38] sm:$0x1]
        %v7057 = vld [vmem:[%s1129 + $0x3c] sm:$0xf]
        %v7058 = vld [vmem:[%s1129 + $0x40] sm:$0xf]
        %v7059 = vld [vmem:[%s1129 + $0x44] sm:$0x1]
        %v7060 = vld [vmem:[%s1129 + $0x48] sm:$0xf]
        %v7061 = vld [vmem:[%s1129 + $0x4c] sm:$0xf]
        %v7062 = vld [vmem:[%s1129 + $0x50] sm:$0x1]
        %v7063 = vld [vmem:[%s1129 + $0x54] sm:$0xf]
        %v7064 = vld [vmem:[%s1129 + $0x58] sm:$0xf]
        %v7065 = vld [vmem:[%s1129 + $0x5c] sm:$0x1]
        %v7066 = vld [vmem:[%s1129 + $0x60] sm:$0xf]
        %v7067 = vld [vmem:[%s1129 + $0x64] sm:$0xf]
        %v7068 = vld [vmem:[%s1129 + $0x68] sm:$0x1]
        %v7069 = vld [vmem:[%s1129 + $0x6c] sm:$0xf]
        %v7070 = vld [vmem:[%s1129 + $0x70] sm:$0xf]
        %v7071 = vld [vmem:[%s1129 + $0x74] sm:$0x1]
        %v7072 = vld [vmem:[%s1129 + $0x78] sm:$0xf]
        %v7073 = vld [vmem:[%s1129 + $0x7c] sm:$0xf]
        %v7074 = vld [vmem:[%s1129 + $0x80] sm:$0x1]
        %v7075 = vld [vmem:[%s1129 + $0x84] sm:$0xf]
        %v7076 = vld [vmem:[%s1129 + $0x88] sm:$0xf]
        %v7077 = vld [vmem:[%s1129 + $0x8c] sm:$0x1]
        %v7078 = vld [vmem:[%s1129 + $0x90] sm:$0xf]
        %v7079 = vld [vmem:[%s1129 + $0x94] sm:$0xf]
        %v7080 = vld [vmem:[%s1129 + $0x98] sm:$0x1]
        %v7081 = vld [vmem:[%s1129 + $0x9c] sm:$0xf]
        %v7082 = vld [vmem:[%s1129 + $0xa0] sm:$0xf]
        %v7083 = vld [vmem:[%s1129 + $0xa4] sm:$0x1]
        %v7084 = vld [vmem:[%s1129 + $0xa8] sm:$0xf]
        %v7085 = vld [vmem:[%s1129 + $0xac] sm:$0xf]
        %v7086 = vld [vmem:[%s1129 + $0xb0] sm:$0x1]
        %v7087 = vld [vmem:[%s1129 + $0xb4] sm:$0xf]
        %v7088 = vld [vmem:[%s1129 + $0xb8] sm:$0xf]
        %v7089 = vld [vmem:[%s1129 + $0xbc] sm:$0x1]
        %v7091 = vshrl.u32 %v7042, 16
        %v7093 = vrot.slane %v7091, 4
        %v7094 = vshll.u32 %v7042, 16
        %v7096 = vrot.slane %v7094, 5
        %v7097 = vor.u32 %v7093, %v7096
        %v7098 = vrot.slane %v7097, 4
        %v7100 = vshll.u32 %v7043, 16
        %v7102 = vrot.slane %v7100, 5
        %v7103 = vsel %vm1361, %v7098, %v7102
        %v7104 = vshrl.u32 %v7043, 16
        %v7106 = vrot.slane %v7104, 4
        %v7107 = vor.u32 %v7106, %v7102
        %v7108 = vrot.slane %v7107, 4
        %v7110 = vshll.u32 %v7044, 16
        %v7112 = vrot.slane %v7110, 5
        %v7113 = vsel %vm1361, %v7108, %v7112
        %v7115 = vshrl.u32 %v7045, 16
        %v7117 = vrot.slane %v7115, 4
        %v7118 = vshll.u32 %v7045, 16
        %v7120 = vrot.slane %v7118, 5
        %v7121 = vor.u32 %v7117, %v7120
        %v7122 = vrot.slane %v7121, 4
        %v7124 = vshll.u32 %v7046, 16
        %v7126 = vrot.slane %v7124, 5
        %v7127 = vsel %vm1361, %v7122, %v7126
        %v7128 = vshrl.u32 %v7046, 16
        %v7130 = vrot.slane %v7128, 4
        %v7131 = vor.u32 %v7130, %v7126
        %v7132 = vrot.slane %v7131, 4
        %v7134 = vshll.u32 %v7047, 16
        %v7136 = vrot.slane %v7134, 5
        %v7137 = vsel %vm1361, %v7132, %v7136
        %v7139 = vshrl.u32 %v7048, 16
        %v7141 = vrot.slane %v7139, 4
        %v7142 = vshll.u32 %v7048, 16
        %v7144 = vrot.slane %v7142, 5
        %v7145 = vor.u32 %v7141, %v7144
        %v7146 = vrot.slane %v7145, 4
        %v7148 = vshll.u32 %v7049, 16
        %v7150 = vrot.slane %v7148, 5
        %v7151 = vsel %vm1361, %v7146, %v7150
        %v7152 = vshrl.u32 %v7049, 16
        %v7154 = vrot.slane %v7152, 4
        %v7155 = vor.u32 %v7154, %v7150
        %v7156 = vrot.slane %v7155, 4
        %v7158 = vshll.u32 %v7050, 16
        %v7160 = vrot.slane %v7158, 5
        %v7161 = vsel %vm1361, %v7156, %v7160
        %v7163 = vshrl.u32 %v7051, 16
        %v7165 = vrot.slane %v7163, 4
        %v7166 = vshll.u32 %v7051, 16
        %v7168 = vrot.slane %v7166, 5
        %v7169 = vor.u32 %v7165, %v7168
        %v7170 = vrot.slane %v7169, 4
        %v7172 = vshll.u32 %v7052, 16
        %v7174 = vrot.slane %v7172, 5
        %v7175 = vsel %vm1361, %v7170, %v7174
        %v7176 = vshrl.u32 %v7052, 16
        %v7178 = vrot.slane %v7176, 4
        %v7179 = vor.u32 %v7178, %v7174
        %v7180 = vrot.slane %v7179, 4
        %v7182 = vshll.u32 %v7053, 16
        %v7184 = vrot.slane %v7182, 5
        %v7185 = vsel %vm1361, %v7180, %v7184
        %v7187 = vshrl.u32 %v7054, 16
        %v7189 = vrot.slane %v7187, 4
        %v7190 = vshll.u32 %v7054, 16
        %v7192 = vrot.slane %v7190, 5
        %v7193 = vor.u32 %v7189, %v7192
        %v7194 = vrot.slane %v7193, 4
        %v7196 = vshll.u32 %v7055, 16
        %v7198 = vrot.slane %v7196, 5
        %v7199 = vsel %vm1361, %v7194, %v7198
        %v7200 = vshrl.u32 %v7055, 16
        %v7202 = vrot.slane %v7200, 4
        %v7203 = vor.u32 %v7202, %v7198
        %v7204 = vrot.slane %v7203, 4
        %v7206 = vshll.u32 %v7056, 16
        %v7208 = vrot.slane %v7206, 5
        %v7209 = vsel %vm1361, %v7204, %v7208
        %v7211 = vshrl.u32 %v7057, 16
        %v7213 = vrot.slane %v7211, 4
        %v7214 = vshll.u32 %v7057, 16
        %v7216 = vrot.slane %v7214, 5
        %v7217 = vor.u32 %v7213, %v7216
        %v7218 = vrot.slane %v7217, 4
        %v7220 = vshll.u32 %v7058, 16
        %v7222 = vrot.slane %v7220, 5
        %v7223 = vsel %vm1361, %v7218, %v7222
        %v7224 = vshrl.u32 %v7058, 16
        %v7226 = vrot.slane %v7224, 4
        %v7227 = vor.u32 %v7226, %v7222
        %v7228 = vrot.slane %v7227, 4
        %v7230 = vshll.u32 %v7059, 16
        %v7232 = vrot.slane %v7230, 5
        %v7233 = vsel %vm1361, %v7228, %v7232
        %v7235 = vshrl.u32 %v7060, 16
        %v7237 = vrot.slane %v7235, 4
        %v7238 = vshll.u32 %v7060, 16
        %v7240 = vrot.slane %v7238, 5
        %v7241 = vor.u32 %v7237, %v7240
        %v7242 = vrot.slane %v7241, 4
        %v7244 = vshll.u32 %v7061, 16
        %v7246 = vrot.slane %v7244, 5
        %v7247 = vsel %vm1361, %v7242, %v7246
        %v7248 = vshrl.u32 %v7061, 16
        %v7250 = vrot.slane %v7248, 4
        %v7251 = vor.u32 %v7250, %v7246
        %v7252 = vrot.slane %v7251, 4
        %v7254 = vshll.u32 %v7062, 16
        %v7256 = vrot.slane %v7254, 5
        %v7257 = vsel %vm1361, %v7252, %v7256
        %v7259 = vshrl.u32 %v7063, 16
        %v7261 = vrot.slane %v7259, 4
        %v7262 = vshll.u32 %v7063, 16
        %v7264 = vrot.slane %v7262, 5
        %v7265 = vor.u32 %v7261, %v7264
        %v7266 = vrot.slane %v7265, 4
        %v7268 = vshll.u32 %v7064, 16
        %v7270 = vrot.slane %v7268, 5
        %v7271 = vsel %vm1361, %v7266, %v7270
        %v7272 = vshrl.u32 %v7064, 16
        %v7274 = vrot.slane %v7272, 4
        %v7275 = vor.u32 %v7274, %v7270
        %v7276 = vrot.slane %v7275, 4
        %v7278 = vshll.u32 %v7065, 16
        %v7280 = vrot.slane %v7278, 5
        %v7281 = vsel %vm1361, %v7276, %v7280
        %v7283 = vshrl.u32 %v7066, 16
        %v7285 = vrot.slane %v7283, 4
        %v7286 = vshll.u32 %v7066, 16
        %v7288 = vrot.slane %v7286, 5
        %v7289 = vor.u32 %v7285, %v7288
        %v7290 = vrot.slane %v7289, 4
        %v7292 = vshll.u32 %v7067, 16
        %v7294 = vrot.slane %v7292, 5
        %v7295 = vsel %vm1361, %v7290, %v7294
        %v7296 = vshrl.u32 %v7067, 16
        %v7298 = vrot.slane %v7296, 4
        %v7299 = vor.u32 %v7298, %v7294
        %v7300 = vrot.slane %v7299, 4
        %v7302 = vshll.u32 %v7068, 16
        %v7304 = vrot.slane %v7302, 5
        %v7305 = vsel %vm1361, %v7300, %v7304
        %v7307 = vshrl.u32 %v7069, 16
        %v7309 = vrot.slane %v7307, 4
        %v7310 = vshll.u32 %v7069, 16
        %v7312 = vrot.slane %v7310, 5
        %v7313 = vor.u32 %v7309, %v7312
        %v7314 = vrot.slane %v7313, 4
        %v7316 = vshll.u32 %v7070, 16
        %v7318 = vrot.slane %v7316, 5
        %v7319 = vsel %vm1361, %v7314, %v7318
        %v7320 = vshrl.u32 %v7070, 16
        %v7322 = vrot.slane %v7320, 4
        %v7323 = vor.u32 %v7322, %v7318
        %v7324 = vrot.slane %v7323, 4
        %v7326 = vshll.u32 %v7071, 16
        %v7328 = vrot.slane %v7326, 5
        %v7329 = vsel %vm1361, %v7324, %v7328
        %v7331 = vshrl.u32 %v7072, 16
        %v7333 = vrot.slane %v7331, 4
        %v7334 = vshll.u32 %v7072, 16
        %v7336 = vrot.slane %v7334, 5
        %v7337 = vor.u32 %v7333, %v7336
        %v7338 = vrot.slane %v7337, 4
        %v7340 = vshll.u32 %v7073, 16
        %v7342 = vrot.slane %v7340, 5
        %v7343 = vsel %vm1361, %v7338, %v7342
        %v7344 = vshrl.u32 %v7073, 16
        %v7346 = vrot.slane %v7344, 4
        %v7347 = vor.u32 %v7346, %v7342
        %v7348 = vrot.slane %v7347, 4
        %v7350 = vshll.u32 %v7074, 16
        %v7352 = vrot.slane %v7350, 5
        %v7353 = vsel %vm1361, %v7348, %v7352
        %v7355 = vshrl.u32 %v7075, 16
        %v7357 = vrot.slane %v7355, 4
        %v7358 = vshll.u32 %v7075, 16
        %v7360 = vrot.slane %v7358, 5
        %v7361 = vor.u32 %v7357, %v7360
        %v7362 = vrot.slane %v7361, 4
        %v7364 = vshll.u32 %v7076, 16
        %v7366 = vrot.slane %v7364, 5
        %v7367 = vsel %vm1361, %v7362, %v7366
        %v7368 = vshrl.u32 %v7076, 16
        %v7370 = vrot.slane %v7368, 4
        %v7371 = vor.u32 %v7370, %v7366
        %v7372 = vrot.slane %v7371, 4
        %v7374 = vshll.u32 %v7077, 16
        %v7376 = vrot.slane %v7374, 5
        %v7377 = vsel %vm1361, %v7372, %v7376
        %v7379 = vshrl.u32 %v7078, 16
        %v7381 = vrot.slane %v7379, 4
        %v7382 = vshll.u32 %v7078, 16
        %v7384 = vrot.slane %v7382, 5
        %v7385 = vor.u32 %v7381, %v7384
        %v7386 = vrot.slane %v7385, 4
        %v7388 = vshll.u32 %v7079, 16
        %v7390 = vrot.slane %v7388, 5
        %v7391 = vsel %vm1361, %v7386, %v7390
        %v7392 = vshrl.u32 %v7079, 16
        %v7394 = vrot.slane %v7392, 4
        %v7395 = vor.u32 %v7394, %v7390
        %v7396 = vrot.slane %v7395, 4
        %v7398 = vshll.u32 %v7080, 16
        %v7400 = vrot.slane %v7398, 5
        %v7401 = vsel %vm1361, %v7396, %v7400
        %v7403 = vshrl.u32 %v7081, 16
        %v7405 = vrot.slane %v7403, 4
        %v7406 = vshll.u32 %v7081, 16
        %v7408 = vrot.slane %v7406, 5
        %v7409 = vor.u32 %v7405, %v7408
        %v7410 = vrot.slane %v7409, 4
        %v7412 = vshll.u32 %v7082, 16
        %v7414 = vrot.slane %v7412, 5
        %v7415 = vsel %vm1361, %v7410, %v7414
        %v7416 = vshrl.u32 %v7082, 16
        %v7418 = vrot.slane %v7416, 4
        %v7419 = vor.u32 %v7418, %v7414
        %v7420 = vrot.slane %v7419, 4
        %v7422 = vshll.u32 %v7083, 16
        %v7424 = vrot.slane %v7422, 5
        %v7425 = vsel %vm1361, %v7420, %v7424
        %v7427 = vshrl.u32 %v7084, 16
        %v7429 = vrot.slane %v7427, 4
        %v7430 = vshll.u32 %v7084, 16
        %v7432 = vrot.slane %v7430, 5
        %v7433 = vor.u32 %v7429, %v7432
        %v7434 = vrot.slane %v7433, 4
        %v7436 = vshll.u32 %v7085, 16
        %v7438 = vrot.slane %v7436, 5
        %v7439 = vsel %vm1361, %v7434, %v7438
        %v7440 = vshrl.u32 %v7085, 16
        %v7442 = vrot.slane %v7440, 4
        %v7443 = vor.u32 %v7442, %v7438
        %v7444 = vrot.slane %v7443, 4
        %v7446 = vshll.u32 %v7086, 16
        %v7448 = vrot.slane %v7446, 5
        %v7449 = vsel %vm1361, %v7444, %v7448
        %v7451 = vshrl.u32 %v7087, 16
        %v7453 = vrot.slane %v7451, 4
        %v7454 = vshll.u32 %v7087, 16
        %v7456 = vrot.slane %v7454, 5
        %v7457 = vor.u32 %v7453, %v7456
        %v7458 = vrot.slane %v7457, 4
        %v7460 = vshll.u32 %v7088, 16
        %v7462 = vrot.slane %v7460, 5
        %v7463 = vsel %vm1361, %v7458, %v7462
        %v7464 = vshrl.u32 %v7088, 16
        %v7466 = vrot.slane %v7464, 4
        %v7467 = vor.u32 %v7466, %v7462
        %v7468 = vrot.slane %v7467, 4
        %v7470 = vshll.u32 %v7089, 16
        %v7472 = vrot.slane %v7470, 5
        %v7473 = vsel %vm1361, %v7468, %v7472
        %7506 = vst.msk [vmem:[#allocation3 + $0x8] sm:$0xf] %vm654, %v7103
        %7507 = vst.msk [vmem:[#allocation3 + $0x1c] sm:$0xf] %vm654, %v7113
        %7508 = vst.msk [vmem:[#allocation3 + $0x30] sm:$0xf] %vm654, %v7127
        %7509 = vst.msk [vmem:[#allocation3 + $0x44] sm:$0xf] %vm654, %v7137
        %7510 = vst.msk [vmem:[#allocation3 + $0x58] sm:$0xf] %vm654, %v7151
        %7511 = vst.msk [vmem:[#allocation3 + $0x6c] sm:$0xf] %vm654, %v7161
        %7512 = vst.msk [vmem:[#allocation3 + $0x80] sm:$0xf] %vm654, %v7175
        %7513 = vst.msk [vmem:[#allocation3 + $0x94] sm:$0xf] %vm654, %v7185
        %7514 = vst.msk [vmem:[#allocation3 + $0xa8] sm:$0xf] %vm654, %v7199
        %7515 = vst.msk [vmem:[#allocation3 + $0xbc] sm:$0xf] %vm654, %v7209
        %7516 = vst.msk [vmem:[#allocation3 + $0xd0] sm:$0xf] %vm654, %v7223
        %7517 = vst.msk [vmem:[#allocation3 + $0xe4] sm:$0xf] %vm654, %v7233
        %7518 = vst.msk [vmem:[#allocation3 + $0xf8] sm:$0xf] %vm654, %v7247
        %7519 = vst.msk [vmem:[#allocation3 + $0x10c] sm:$0xf] %vm654, %v7257
        %7520 = vst.msk [vmem:[#allocation3 + $0x120] sm:$0xf] %vm654, %v7271
        %7521 = vst.msk [vmem:[#allocation3 + $0x134] sm:$0xf] %vm654, %v7281
        %7522 = vst.msk [vmem:[#allocation3 + $0x148] sm:$0xf] %vm654, %v7295
        %7523 = vst.msk [vmem:[#allocation3 + $0x15c] sm:$0xf] %vm654, %v7305
        %7524 = vst.msk [vmem:[#allocation3 + $0x170] sm:$0xf] %vm654, %v7319
        %7525 = vst.msk [vmem:[#allocation3 + $0x184] sm:$0xf] %vm654, %v7329
        %7526 = vst.msk [vmem:[#allocation3 + $0x198] sm:$0xf] %vm654, %v7343
        %7527 = vst.msk [vmem:[#allocation3 + $0x1ac] sm:$0xf] %vm654, %v7353
        %7528 = vst.msk [vmem:[#allocation3 + $0x1c0] sm:$0xf] %vm654, %v7367
        %7529 = vst.msk [vmem:[#allocation3 + $0x1d4] sm:$0xf] %vm654, %v7377
        %7530 = vst.msk [vmem:[#allocation3 + $0x1e8] sm:$0xf] %vm654, %v7391
        %7531 = vst.msk [vmem:[#allocation3 + $0x1fc] sm:$0xf] %vm654, %v7401
        %7532 = vst.msk [vmem:[#allocation3 + $0x210] sm:$0xf] %vm654, %v7415
        %7533 = vst.msk [vmem:[#allocation3 + $0x224] sm:$0xf] %vm654, %v7425
        %7534 = vst.msk [vmem:[#allocation3 + $0x238] sm:$0xf] %vm654, %v7439
        %7535 = vst.msk [vmem:[#allocation3 + $0x24c] sm:$0xf] %vm654, %v7449
        %7536 = vst.msk [vmem:[#allocation3 + $0x260] sm:$0xf] %vm654, %v7463
        %7537 = vst.msk [vmem:[#allocation3 + $0x274] sm:$0xf] %vm654, %v7473
        %v7538 = vld [vmem:[%s1129] sm:$0xe]
        %v7539 = vld [vmem:[%s1129 + $0x4] sm:$0xf]
        %v7540 = vld [vmem:[%s1129 + $0x8] sm:$0x1]
        %v7541 = vld [vmem:[%s1129 + $0xc] sm:$0xe]
        %v7542 = vld [vmem:[%s1129 + $0x10] sm:$0xf]
        %v7543 = vld [vmem:[%s1129 + $0x14] sm:$0x1]
        %v7544 = vld [vmem:[%s1129 + $0x18] sm:$0xe]
        %v7545 = vld [vmem:[%s1129 + $0x1c] sm:$0xf]
        %v7546 = vld [vmem:[%s1129 + $0x20] sm:$0x1]
        %v7547 = vld [vmem:[%s1129 + $0x24] sm:$0xe]
        %v7548 = vld [vmem:[%s1129 + $0x28] sm:$0xf]
        %v7549 = vld [vmem:[%s1129 + $0x2c] sm:$0x1]
        %v7550 = vld [vmem:[%s1129 + $0x30] sm:$0xe]
        %v7551 = vld [vmem:[%s1129 + $0x34] sm:$0xf]
        %v7552 = vld [vmem:[%s1129 + $0x38] sm:$0x1]
        %v7553 = vld [vmem:[%s1129 + $0x3c] sm:$0xe]
        %v7554 = vld [vmem:[%s1129 + $0x40] sm:$0xf]
        %v7555 = vld [vmem:[%s1129 + $0x44] sm:$0x1]
        %v7556 = vld [vmem:[%s1129 + $0x48] sm:$0xe]
        %v7557 = vld [vmem:[%s1129 + $0x4c] sm:$0xf]
        %v7558 = vld [vmem:[%s1129 + $0x50] sm:$0x1]
        %v7559 = vld [vmem:[%s1129 + $0x54] sm:$0xe]
        %v7560 = vld [vmem:[%s1129 + $0x58] sm:$0xf]
        %v7561 = vld [vmem:[%s1129 + $0x5c] sm:$0x1]
        %v7562 = vld [vmem:[%s1129 + $0x60] sm:$0xe]
        %v7563 = vld [vmem:[%s1129 + $0x64] sm:$0xf]
        %v7564 = vld [vmem:[%s1129 + $0x68] sm:$0x1]
        %v7565 = vld [vmem:[%s1129 + $0x6c] sm:$0xe]
        %v7566 = vld [vmem:[%s1129 + $0x70] sm:$0xf]
        %v7567 = vld [vmem:[%s1129 + $0x74] sm:$0x1]
        %v7568 = vld [vmem:[%s1129 + $0x78] sm:$0xe]
        %v7569 = vld [vmem:[%s1129 + $0x7c] sm:$0xf]
        %v7570 = vld [vmem:[%s1129 + $0x80] sm:$0x1]
        %v7571 = vld [vmem:[%s1129 + $0x84] sm:$0xe]
        %v7572 = vld [vmem:[%s1129 + $0x88] sm:$0xf]
        %v7573 = vld [vmem:[%s1129 + $0x8c] sm:$0x1]
        %v7574 = vld [vmem:[%s1129 + $0x90] sm:$0xe]
        %v7575 = vld [vmem:[%s1129 + $0x94] sm:$0xf]
        %v7576 = vld [vmem:[%s1129 + $0x98] sm:$0x1]
        %v7577 = vld [vmem:[%s1129 + $0x9c] sm:$0xe]
        %v7578 = vld [vmem:[%s1129 + $0xa0] sm:$0xf]
        %v7579 = vld [vmem:[%s1129 + $0xa4] sm:$0x1]
        %v7580 = vld [vmem:[%s1129 + $0xa8] sm:$0xe]
        %v7581 = vld [vmem:[%s1129 + $0xac] sm:$0xf]
        %v7582 = vld [vmem:[%s1129 + $0xb0] sm:$0x1]
        %v7583 = vld [vmem:[%s1129 + $0xb4] sm:$0xe]
        %v7584 = vld [vmem:[%s1129 + $0xb8] sm:$0xf]
        %v7585 = vld [vmem:[%s1129 + $0xbc] sm:$0x1]
        %v7634 = vrot.slane %v7538, 5
        %v7635 = vrot.slane %v7634, 4
        %v7636 = vrot.slane %v7539, 5
        %v7637 = vsel %vm1973, %v7635, %v7636
        %v7638 = vrot.slane %v7636, 4
        %v7639 = vrot.slane %v7540, 5
        %v7640 = vsel %vm1973, %v7638, %v7639
        %v7641 = vrot.slane %v7541, 5
        %v7642 = vrot.slane %v7641, 4
        %v7643 = vrot.slane %v7542, 5
        %v7644 = vsel %vm1973, %v7642, %v7643
        %v7645 = vrot.slane %v7643, 4
        %v7646 = vrot.slane %v7543, 5
        %v7647 = vsel %vm1973, %v7645, %v7646
        %v7648 = vrot.slane %v7544, 5
        %v7649 = vrot.slane %v7648, 4
        %v7650 = vrot.slane %v7545, 5
        %v7651 = vsel %vm1973, %v7649, %v7650
        %v7652 = vrot.slane %v7650, 4
        %v7653 = vrot.slane %v7546, 5
        %v7654 = vsel %vm1973, %v7652, %v7653
        %v7655 = vrot.slane %v7547, 5
        %v7656 = vrot.slane %v7655, 4
        %v7657 = vrot.slane %v7548, 5
        %v7658 = vsel %vm1973, %v7656, %v7657
        %v7659 = vrot.slane %v7657, 4
        %v7660 = vrot.slane %v7549, 5
        %v7661 = vsel %vm1973, %v7659, %v7660
        %v7662 = vrot.slane %v7550, 5
        %v7663 = vrot.slane %v7662, 4
        %v7664 = vrot.slane %v7551, 5
        %v7665 = vsel %vm1973, %v7663, %v7664
        %v7666 = vrot.slane %v7664, 4
        %v7667 = vrot.slane %v7552, 5
        %v7668 = vsel %vm1973, %v7666, %v7667
        %v7669 = vrot.slane %v7553, 5
        %v7670 = vrot.slane %v7669, 4
        %v7671 = vrot.slane %v7554, 5
        %v7672 = vsel %vm1973, %v7670, %v7671
        %v7673 = vrot.slane %v7671, 4
        %v7674 = vrot.slane %v7555, 5
        %v7675 = vsel %vm1973, %v7673, %v7674
        %v7676 = vrot.slane %v7556, 5
        %v7677 = vrot.slane %v7676, 4
        %v7678 = vrot.slane %v7557, 5
        %v7679 = vsel %vm1973, %v7677, %v7678
        %v7680 = vrot.slane %v7678, 4
        %v7681 = vrot.slane %v7558, 5
        %v7682 = vsel %vm1973, %v7680, %v7681
        %v7683 = vrot.slane %v7559, 5
        %v7684 = vrot.slane %v7683, 4
        %v7685 = vrot.slane %v7560, 5
        %v7686 = vsel %vm1973, %v7684, %v7685
        %v7687 = vrot.slane %v7685, 4
        %v7688 = vrot.slane %v7561, 5
        %v7689 = vsel %vm1973, %v7687, %v7688
        %v7690 = vrot.slane %v7562, 5
        %v7691 = vrot.slane %v7690, 4
        %v7692 = vrot.slane %v7563, 5
        %v7693 = vsel %vm1973, %v7691, %v7692
        %v7694 = vrot.slane %v7692, 4
        %v7695 = vrot.slane %v7564, 5
        %v7696 = vsel %vm1973, %v7694, %v7695
        %v7697 = vrot.slane %v7565, 5
        %v7698 = vrot.slane %v7697, 4
        %v7699 = vrot.slane %v7566, 5
        %v7700 = vsel %vm1973, %v7698, %v7699
        %v7701 = vrot.slane %v7699, 4
        %v7702 = vrot.slane %v7567, 5
        %v7703 = vsel %vm1973, %v7701, %v7702
        %v7704 = vrot.slane %v7568, 5
        %v7705 = vrot.slane %v7704, 4
        %v7706 = vrot.slane %v7569, 5
        %v7707 = vsel %vm1973, %v7705, %v7706
        %v7708 = vrot.slane %v7706, 4
        %v7709 = vrot.slane %v7570, 5
        %v7710 = vsel %vm1973, %v7708, %v7709
        %v7711 = vrot.slane %v7571, 5
        %v7712 = vrot.slane %v7711, 4
        %v7713 = vrot.slane %v7572, 5
        %v7714 = vsel %vm1973, %v7712, %v7713
        %v7715 = vrot.slane %v7713, 4
        %v7716 = vrot.slane %v7573, 5
        %v7717 = vsel %vm1973, %v7715, %v7716
        %v7718 = vrot.slane %v7574, 5
        %v7719 = vrot.slane %v7718, 4
        %v7720 = vrot.slane %v7575, 5
        %v7721 = vsel %vm1973, %v7719, %v7720
        %v7722 = vrot.slane %v7720, 4
        %v7723 = vrot.slane %v7576, 5
        %v7724 = vsel %vm1973, %v7722, %v7723
        %v7725 = vrot.slane %v7577, 5
        %v7726 = vrot.slane %v7725, 4
        %v7727 = vrot.slane %v7578, 5
        %v7728 = vsel %vm1973, %v7726, %v7727
        %v7729 = vrot.slane %v7727, 4
        %v7730 = vrot.slane %v7579, 5
        %v7731 = vsel %vm1973, %v7729, %v7730
        %v7732 = vrot.slane %v7580, 5
        %v7733 = vrot.slane %v7732, 4
        %v7734 = vrot.slane %v7581, 5
        %v7735 = vsel %vm1973, %v7733, %v7734
        %v7736 = vrot.slane %v7734, 4
        %v7737 = vrot.slane %v7582, 5
        %v7738 = vsel %vm1973, %v7736, %v7737
        %v7739 = vrot.slane %v7583, 5
        %v7740 = vrot.slane %v7739, 4
        %v7741 = vrot.slane %v7584, 5
        %v7742 = vsel %vm1973, %v7740, %v7741
        %v7743 = vrot.slane %v7741, 4
        %v7744 = vrot.slane %v7585, 5
        %v7745 = vsel %vm1973, %v7743, %v7744
        %7746 = vrot.lane.b32.xlu0 %v7637, 64
        %v7747 = vpop.permute.xlu0 %7746
        %7748 = vrot.lane.b32.xlu0 %v7640, 64
        %v7749 = vpop.permute.xlu0 %7748
        %7750 = vrot.lane.b32.xlu0 %v7644, 64
        %v7751 = vpop.permute.xlu0 %7750
        %7752 = vrot.lane.b32.xlu0 %v7647, 64
        %v7753 = vpop.permute.xlu0 %7752
        %7754 = vrot.lane.b32.xlu0 %v7651, 64
        %v7755 = vpop.permute.xlu0 %7754
        %7756 = vrot.lane.b32.xlu0 %v7654, 64
        %v7757 = vpop.permute.xlu0 %7756
        %7758 = vrot.lane.b32.xlu0 %v7658, 64
        %v7759 = vpop.permute.xlu0 %7758
        %7760 = vrot.lane.b32.xlu0 %v7661, 64
        %v7761 = vpop.permute.xlu0 %7760
        %7762 = vrot.lane.b32.xlu0 %v7665, 64
        %v7763 = vpop.permute.xlu0 %7762
        %7764 = vrot.lane.b32.xlu0 %v7668, 64
        %v7765 = vpop.permute.xlu0 %7764
        %7766 = vrot.lane.b32.xlu0 %v7672, 64
        %v7767 = vpop.permute.xlu0 %7766
        %7768 = vrot.lane.b32.xlu0 %v7675, 64
        %v7769 = vpop.permute.xlu0 %7768
        %7770 = vrot.lane.b32.xlu0 %v7679, 64
        %v7771 = vpop.permute.xlu0 %7770
        %7772 = vrot.lane.b32.xlu0 %v7682, 64
        %v7773 = vpop.permute.xlu0 %7772
        %7774 = vrot.lane.b32.xlu0 %v7686, 64
        %v7775 = vpop.permute.xlu0 %7774
        %7776 = vrot.lane.b32.xlu0 %v7689, 64
        %v7777 = vpop.permute.xlu0 %7776
        %7778 = vrot.lane.b32.xlu0 %v7693, 64
        %v7779 = vpop.permute.xlu0 %7778
        %7780 = vrot.lane.b32.xlu0 %v7696, 64
        %v7781 = vpop.permute.xlu0 %7780
        %7782 = vrot.lane.b32.xlu0 %v7700, 64
        %v7783 = vpop.permute.xlu0 %7782
        %7784 = vrot.lane.b32.xlu0 %v7703, 64
        %v7785 = vpop.permute.xlu0 %7784
        %7786 = vrot.lane.b32.xlu0 %v7707, 64
        %v7787 = vpop.permute.xlu0 %7786
        %7788 = vrot.lane.b32.xlu0 %v7710, 64
        %v7789 = vpop.permute.xlu0 %7788
        %7790 = vrot.lane.b32.xlu0 %v7714, 64
        %v7791 = vpop.permute.xlu0 %7790
        %7792 = vrot.lane.b32.xlu0 %v7717, 64
        %v7793 = vpop.permute.xlu0 %7792
        %7794 = vrot.lane.b32.xlu0 %v7721, 64
        %v7795 = vpop.permute.xlu0 %7794
        %7796 = vrot.lane.b32.xlu0 %v7724, 64
        %v7797 = vpop.permute.xlu0 %7796
        %7798 = vrot.lane.b32.xlu0 %v7728, 64
        %v7799 = vpop.permute.xlu0 %7798
        %7800 = vrot.lane.b32.xlu0 %v7731, 64
        %v7801 = vpop.permute.xlu0 %7800
        %7802 = vrot.lane.b32.xlu0 %v7735, 64
        %v7803 = vpop.permute.xlu0 %7802
        %7804 = vrot.lane.b32.xlu0 %v7738, 64
        %v7805 = vpop.permute.xlu0 %7804
        %7806 = vrot.lane.b32.xlu0 %v7742, 64
        %v7807 = vpop.permute.xlu0 %7806
        %7808 = vrot.lane.b32.xlu0 %v7745, 64
        %v7809 = vpop.permute.xlu0 %7808
        %7842 = vst.msk [vmem:[#allocation3 + $0x8] sm:$0xf] %vm1842, %v7747
        %7843 = vst.msk [vmem:[#allocation3 + $0x1c] sm:$0xf] %vm1842, %v7749
        %7844 = vst.msk [vmem:[#allocation3 + $0x30] sm:$0xf] %vm1842, %v7751
        %7845 = vst.msk [vmem:[#allocation3 + $0x44] sm:$0xf] %vm1842, %v7753
        %7846 = vst.msk [vmem:[#allocation3 + $0x58] sm:$0xf] %vm1842, %v7755
        %7847 = vst.msk [vmem:[#allocation3 + $0x6c] sm:$0xf] %vm1842, %v7757
        %7848 = vst.msk [vmem:[#allocation3 + $0x80] sm:$0xf] %vm1842, %v7759
        %7849 = vst.msk [vmem:[#allocation3 + $0x94] sm:$0xf] %vm1842, %v7761
        %7850 = vst.msk [vmem:[#allocation3 + $0xa8] sm:$0xf] %vm1842, %v7763
        %7851 = vst.msk [vmem:[#allocation3 + $0xbc] sm:$0xf] %vm1842, %v7765
        %7852 = vst.msk [vmem:[#allocation3 + $0xd0] sm:$0xf] %vm1842, %v7767
        %7853 = vst.msk [vmem:[#allocation3 + $0xe4] sm:$0xf] %vm1842, %v7769
        %7854 = vst.msk [vmem:[#allocation3 + $0xf8] sm:$0xf] %vm1842, %v7771
        %7855 = vst.msk [vmem:[#allocation3 + $0x10c] sm:$0xf] %vm1842, %v7773
        %7856 = vst.msk [vmem:[#allocation3 + $0x120] sm:$0xf] %vm1842, %v7775
        %7857 = vst.msk [vmem:[#allocation3 + $0x134] sm:$0xf] %vm1842, %v7777
        %7858 = vst.msk [vmem:[#allocation3 + $0x148] sm:$0xf] %vm1842, %v7779
        %7859 = vst.msk [vmem:[#allocation3 + $0x15c] sm:$0xf] %vm1842, %v7781
        %7860 = vst.msk [vmem:[#allocation3 + $0x170] sm:$0xf] %vm1842, %v7783
        %7861 = vst.msk [vmem:[#allocation3 + $0x184] sm:$0xf] %vm1842, %v7785
        %7862 = vst.msk [vmem:[#allocation3 + $0x198] sm:$0xf] %vm1842, %v7787
        %7863 = vst.msk [vmem:[#allocation3 + $0x1ac] sm:$0xf] %vm1842, %v7789
        %7864 = vst.msk [vmem:[#allocation3 + $0x1c0] sm:$0xf] %vm1842, %v7791
        %7865 = vst.msk [vmem:[#allocation3 + $0x1d4] sm:$0xf] %vm1842, %v7793
        %7866 = vst.msk [vmem:[#allocation3 + $0x1e8] sm:$0xf] %vm1842, %v7795
        %7867 = vst.msk [vmem:[#allocation3 + $0x1fc] sm:$0xf] %vm1842, %v7797
        %7868 = vst.msk [vmem:[#allocation3 + $0x210] sm:$0xf] %vm1842, %v7799
        %7869 = vst.msk [vmem:[#allocation3 + $0x224] sm:$0xf] %vm1842, %v7801
        %7870 = vst.msk [vmem:[#allocation3 + $0x238] sm:$0xf] %vm1842, %v7803
        %7871 = vst.msk [vmem:[#allocation3 + $0x24c] sm:$0xf] %vm1842, %v7805
        %7872 = vst.msk [vmem:[#allocation3 + $0x260] sm:$0xf] %vm1842, %v7807
        %7873 = vst.msk [vmem:[#allocation3 + $0x274] sm:$0xf] %vm1842, %v7809
        %v7874 = vld [vmem:[%s3174] sm:$0xf]
        %v7875 = vld [vmem:[%s3174 + $0x4] sm:$0xf]
        %v7876 = vld [vmem:[%s3174 + $0xc] sm:$0xf]
        %v7877 = vld [vmem:[%s3174 + $0x10] sm:$0xf]
        %v7878 = vld [vmem:[%s3174 + $0x18] sm:$0xf]
        %v7879 = vld [vmem:[%s3174 + $0x1c] sm:$0xf]
        %v7880 = vld [vmem:[%s3174 + $0x24] sm:$0xf]
        %v7881 = vld [vmem:[%s3174 + $0x28] sm:$0xf]
        %v7882 = vld [vmem:[%s3174 + $0x30] sm:$0xf]
        %v7883 = vld [vmem:[%s3174 + $0x34] sm:$0xf]
        %v7884 = vld [vmem:[%s3174 + $0x3c] sm:$0xf]
        %v7885 = vld [vmem:[%s3174 + $0x40] sm:$0xf]
        %v7886 = vld [vmem:[%s3174 + $0x48] sm:$0xf]
        %v7887 = vld [vmem:[%s3174 + $0x4c] sm:$0xf]
        %v7888 = vld [vmem:[%s3174 + $0x54] sm:$0xf]
        %v7889 = vld [vmem:[%s3174 + $0x58] sm:$0xf]
        %v7890 = vld [vmem:[%s3174 + $0x60] sm:$0xf]
        %v7891 = vld [vmem:[%s3174 + $0x64] sm:$0xf]
        %v7892 = vld [vmem:[%s3174 + $0x6c] sm:$0xf]
        %v7893 = vld [vmem:[%s3174 + $0x70] sm:$0xf]
        %v7894 = vld [vmem:[%s3174 + $0x78] sm:$0xf]
        %v7895 = vld [vmem:[%s3174 + $0x7c] sm:$0xf]
        %v7896 = vld [vmem:[%s3174 + $0x84] sm:$0xf]
        %v7897 = vld [vmem:[%s3174 + $0x88] sm:$0xf]
        %v7898 = vld [vmem:[%s3174 + $0x90] sm:$0xf]
        %v7899 = vld [vmem:[%s3174 + $0x94] sm:$0xf]
        %v7900 = vld [vmem:[%s3174 + $0x9c] sm:$0xf]
        %v7901 = vld [vmem:[%s3174 + $0xa0] sm:$0xf]
        %v7902 = vld [vmem:[%s3174 + $0xa8] sm:$0xf]
        %v7903 = vld [vmem:[%s3174 + $0xac] sm:$0xf]
        %v7904 = vld [vmem:[%s3174 + $0xb4] sm:$0xf]
        %v7905 = vld [vmem:[%s3174 + $0xb8] sm:$0xf]
        %7906 = vst.msk [vmem:[#allocation3 + $0xc] sm:$0xf] %vm654, %v7874
        %7907 = vst.msk [vmem:[#allocation3 + $0x20] sm:$0xf] %vm654, %v7875
        %7908 = vst.msk [vmem:[#allocation3 + $0x34] sm:$0xf] %vm654, %v7876
        %7909 = vst.msk [vmem:[#allocation3 + $0x48] sm:$0xf] %vm654, %v7877
        %7910 = vst.msk [vmem:[#allocation3 + $0x5c] sm:$0xf] %vm654, %v7878
        %7911 = vst.msk [vmem:[#allocation3 + $0x70] sm:$0xf] %vm654, %v7879
        %7912 = vst.msk [vmem:[#allocation3 + $0x84] sm:$0xf] %vm654, %v7880
        %7913 = vst.msk [vmem:[#allocation3 + $0x98] sm:$0xf] %vm654, %v7881
        %7914 = vst.msk [vmem:[#allocation3 + $0xac] sm:$0xf] %vm654, %v7882
        %7915 = vst.msk [vmem:[#allocation3 + $0xc0] sm:$0xf] %vm654, %v7883
        %7916 = vst.msk [vmem:[#allocation3 + $0xd4] sm:$0xf] %vm654, %v7884
        %7917 = vst.msk [vmem:[#allocation3 + $0xe8] sm:$0xf] %vm654, %v7885
        %7918 = vst.msk [vmem:[#allocation3 + $0xfc] sm:$0xf] %vm654, %v7886
        %7919 = vst.msk [vmem:[#allocation3 + $0x110] sm:$0xf] %vm654, %v7887
        %7920 = vst.msk [vmem:[#allocation3 + $0x124] sm:$0xf] %vm654, %v7888
        %7921 = vst.msk [vmem:[#allocation3 + $0x138] sm:$0xf] %vm654, %v7889
        %7922 = vst.msk [vmem:[#allocation3 + $0x14c] sm:$0xf] %vm654, %v7890
        %7923 = vst.msk [vmem:[#allocation3 + $0x160] sm:$0xf] %vm654, %v7891
        %7924 = vst.msk [vmem:[#allocation3 + $0x174] sm:$0xf] %vm654, %v7892
        %7925 = vst.msk [vmem:[#allocation3 + $0x188] sm:$0xf] %vm654, %v7893
        %7926 = vst.msk [vmem:[#allocation3 + $0x19c] sm:$0xf] %vm654, %v7894
        %7927 = vst.msk [vmem:[#allocation3 + $0x1b0] sm:$0xf] %vm654, %v7895
        %7928 = vst.msk [vmem:[#allocation3 + $0x1c4] sm:$0xf] %vm654, %v7896
        %7929 = vst.msk [vmem:[#allocation3 + $0x1d8] sm:$0xf] %vm654, %v7897
        %7930 = vst.msk [vmem:[#allocation3 + $0x1ec] sm:$0xf] %vm654, %v7898
        %7931 = vst.msk [vmem:[#allocation3 + $0x200] sm:$0xf] %vm654, %v7899
        %7932 = vst.msk [vmem:[#allocation3 + $0x214] sm:$0xf] %vm654, %v7900
        %7933 = vst.msk [vmem:[#allocation3 + $0x228] sm:$0xf] %vm654, %v7901
        %7934 = vst.msk [vmem:[#allocation3 + $0x23c] sm:$0xf] %vm654, %v7902
        %7935 = vst.msk [vmem:[#allocation3 + $0x250] sm:$0xf] %vm654, %v7903
        %7936 = vst.msk [vmem:[#allocation3 + $0x264] sm:$0xf] %vm654, %v7904
        %7937 = vst.msk [vmem:[#allocation3 + $0x278] sm:$0xf] %vm654, %v7905
        %v7938 = vld [vmem:[%s3174] sm:$0xf]
        %v7939 = vld [vmem:[%s3174 + $0x4] sm:$0xf]
        %v7940 = vld [vmem:[%s3174 + $0x8] sm:$0x1]
        %v7941 = vld [vmem:[%s3174 + $0xc] sm:$0xf]
        %v7942 = vld [vmem:[%s3174 + $0x10] sm:$0xf]
        %v7943 = vld [vmem:[%s3174 + $0x14] sm:$0x1]
        %v7944 = vld [vmem:[%s3174 + $0x18] sm:$0xf]
        %v7945 = vld [vmem:[%s3174 + $0x1c] sm:$0xf]
        %v7946 = vld [vmem:[%s3174 + $0x20] sm:$0x1]
        %v7947 = vld [vmem:[%s3174 + $0x24] sm:$0xf]
        %v7948 = vld [vmem:[%s3174 + $0x28] sm:$0xf]
        %v7949 = vld [vmem:[%s3174 + $0x2c] sm:$0x1]
        %v7950 = vld [vmem:[%s3174 + $0x30] sm:$0xf]
        %v7951 = vld [vmem:[%s3174 + $0x34] sm:$0xf]
        %v7952 = vld [vmem:[%s3174 + $0x38] sm:$0x1]
        %v7953 = vld [vmem:[%s3174 + $0x3c] sm:$0xf]
        %v7954 = vld [vmem:[%s3174 + $0x40] sm:$0xf]
        %v7955 = vld [vmem:[%s3174 + $0x44] sm:$0x1]
        %v7956 = vld [vmem:[%s3174 + $0x48] sm:$0xf]
        %v7957 = vld [vmem:[%s3174 + $0x4c] sm:$0xf]
        %v7958 = vld [vmem:[%s3174 + $0x50] sm:$0x1]
        %v7959 = vld [vmem:[%s3174 + $0x54] sm:$0xf]
        %v7960 = vld [vmem:[%s3174 + $0x58] sm:$0xf]
        %v7961 = vld [vmem:[%s3174 + $0x5c] sm:$0x1]
        %v7962 = vld [vmem:[%s3174 + $0x60] sm:$0xf]
        %v7963 = vld [vmem:[%s3174 + $0x64] sm:$0xf]
        %v7964 = vld [vmem:[%s3174 + $0x68] sm:$0x1]
        %v7965 = vld [vmem:[%s3174 + $0x6c] sm:$0xf]
        %v7966 = vld [vmem:[%s3174 + $0x70] sm:$0xf]
        %v7967 = vld [vmem:[%s3174 + $0x74] sm:$0x1]
        %v7968 = vld [vmem:[%s3174 + $0x78] sm:$0xf]
        %v7969 = vld [vmem:[%s3174 + $0x7c] sm:$0xf]
        %v7970 = vld [vmem:[%s3174 + $0x80] sm:$0x1]
        %v7971 = vld [vmem:[%s3174 + $0x84] sm:$0xf]
        %v7972 = vld [vmem:[%s3174 + $0x88] sm:$0xf]
        %v7973 = vld [vmem:[%s3174 + $0x8c] sm:$0x1]
        %v7974 = vld [vmem:[%s3174 + $0x90] sm:$0xf]
        %v7975 = vld [vmem:[%s3174 + $0x94] sm:$0xf]
        %v7976 = vld [vmem:[%s3174 + $0x98] sm:$0x1]
        %v7977 = vld [vmem:[%s3174 + $0x9c] sm:$0xf]
        %v7978 = vld [vmem:[%s3174 + $0xa0] sm:$0xf]
        %v7979 = vld [vmem:[%s3174 + $0xa4] sm:$0x1]
        %v7980 = vld [vmem:[%s3174 + $0xa8] sm:$0xf]
        %v7981 = vld [vmem:[%s3174 + $0xac] sm:$0xf]
        %v7982 = vld [vmem:[%s3174 + $0xb0] sm:$0x1]
        %v7983 = vld [vmem:[%s3174 + $0xb4] sm:$0xf]
        %v7984 = vld [vmem:[%s3174 + $0xb8] sm:$0xf]
        %v7985 = vld [vmem:[%s3174 + $0xbc] sm:$0x1]
        %v7987 = vshrl.u32 %v7938, 16
        %v7989 = vrot.slane %v7987, 4
        %v7990 = vshll.u32 %v7938, 16
        %v7992 = vrot.slane %v7990, 5
        %v7993 = vor.u32 %v7989, %v7992
        %v7994 = vrot.slane %v7993, 4
        %v7996 = vshll.u32 %v7939, 16
        %v7998 = vrot.slane %v7996, 5
        %v7999 = vsel %vm1361, %v7994, %v7998
        %v8000 = vshrl.u32 %v7939, 16
        %v8002 = vrot.slane %v8000, 4
        %v8003 = vor.u32 %v8002, %v7998
        %v8004 = vrot.slane %v8003, 4
        %v8006 = vshll.u32 %v7940, 16
        %v8008 = vrot.slane %v8006, 5
        %v8009 = vsel %vm1361, %v8004, %v8008
        %v8011 = vshrl.u32 %v7941, 16
        %v8013 = vrot.slane %v8011, 4
        %v8014 = vshll.u32 %v7941, 16
        %v8016 = vrot.slane %v8014, 5
        %v8017 = vor.u32 %v8013, %v8016
        %v8018 = vrot.slane %v8017, 4
        %v8020 = vshll.u32 %v7942, 16
        %v8022 = vrot.slane %v8020, 5
        %v8023 = vsel %vm1361, %v8018, %v8022
        %v8024 = vshrl.u32 %v7942, 16
        %v8026 = vrot.slane %v8024, 4
        %v8027 = vor.u32 %v8026, %v8022
        %v8028 = vrot.slane %v8027, 4
        %v8030 = vshll.u32 %v7943, 16
        %v8032 = vrot.slane %v8030, 5
        %v8033 = vsel %vm1361, %v8028, %v8032
        %v8035 = vshrl.u32 %v7944, 16
        %v8037 = vrot.slane %v8035, 4
        %v8038 = vshll.u32 %v7944, 16
        %v8040 = vrot.slane %v8038, 5
        %v8041 = vor.u32 %v8037, %v8040
        %v8042 = vrot.slane %v8041, 4
        %v8044 = vshll.u32 %v7945, 16
        %v8046 = vrot.slane %v8044, 5
        %v8047 = vsel %vm1361, %v8042, %v8046
        %v8048 = vshrl.u32 %v7945, 16
        %v8050 = vrot.slane %v8048, 4
        %v8051 = vor.u32 %v8050, %v8046
        %v8052 = vrot.slane %v8051, 4
        %v8054 = vshll.u32 %v7946, 16
        %v8056 = vrot.slane %v8054, 5
        %v8057 = vsel %vm1361, %v8052, %v8056
        %v8059 = vshrl.u32 %v7947, 16
        %v8061 = vrot.slane %v8059, 4
        %v8062 = vshll.u32 %v7947, 16
        %v8064 = vrot.slane %v8062, 5
        %v8065 = vor.u32 %v8061, %v8064
        %v8066 = vrot.slane %v8065, 4
        %v8068 = vshll.u32 %v7948, 16
        %v8070 = vrot.slane %v8068, 5
        %v8071 = vsel %vm1361, %v8066, %v8070
        %v8072 = vshrl.u32 %v7948, 16
        %v8074 = vrot.slane %v8072, 4
        %v8075 = vor.u32 %v8074, %v8070
        %v8076 = vrot.slane %v8075, 4
        %v8078 = vshll.u32 %v7949, 16
        %v8080 = vrot.slane %v8078, 5
        %v8081 = vsel %vm1361, %v8076, %v8080
        %v8083 = vshrl.u32 %v7950, 16
        %v8085 = vrot.slane %v8083, 4
        %v8086 = vshll.u32 %v7950, 16
        %v8088 = vrot.slane %v8086, 5
        %v8089 = vor.u32 %v8085, %v8088
        %v8090 = vrot.slane %v8089, 4
        %v8092 = vshll.u32 %v7951, 16
        %v8094 = vrot.slane %v8092, 5
        %v8095 = vsel %vm1361, %v8090, %v8094
        %v8096 = vshrl.u32 %v7951, 16
        %v8098 = vrot.slane %v8096, 4
        %v8099 = vor.u32 %v8098, %v8094
        %v8100 = vrot.slane %v8099, 4
        %v8102 = vshll.u32 %v7952, 16
        %v8104 = vrot.slane %v8102, 5
        %v8105 = vsel %vm1361, %v8100, %v8104
        %v8107 = vshrl.u32 %v7953, 16
        %v8109 = vrot.slane %v8107, 4
        %v8110 = vshll.u32 %v7953, 16
        %v8112 = vrot.slane %v8110, 5
        %v8113 = vor.u32 %v8109, %v8112
        %v8114 = vrot.slane %v8113, 4
        %v8116 = vshll.u32 %v7954, 16
        %v8118 = vrot.slane %v8116, 5
        %v8119 = vsel %vm1361, %v8114, %v8118
        %v8120 = vshrl.u32 %v7954, 16
        %v8122 = vrot.slane %v8120, 4
        %v8123 = vor.u32 %v8122, %v8118
        %v8124 = vrot.slane %v8123, 4
        %v8126 = vshll.u32 %v7955, 16
        %v8128 = vrot.slane %v8126, 5
        %v8129 = vsel %vm1361, %v8124, %v8128
        %v8131 = vshrl.u32 %v7956, 16
        %v8133 = vrot.slane %v8131, 4
        %v8134 = vshll.u32 %v7956, 16
        %v8136 = vrot.slane %v8134, 5
        %v8137 = vor.u32 %v8133, %v8136
        %v8138 = vrot.slane %v8137, 4
        %v8140 = vshll.u32 %v7957, 16
        %v8142 = vrot.slane %v8140, 5
        %v8143 = vsel %vm1361, %v8138, %v8142
        %v8144 = vshrl.u32 %v7957, 16
        %v8146 = vrot.slane %v8144, 4
        %v8147 = vor.u32 %v8146, %v8142
        %v8148 = vrot.slane %v8147, 4
        %v8150 = vshll.u32 %v7958, 16
        %v8152 = vrot.slane %v8150, 5
        %v8153 = vsel %vm1361, %v8148, %v8152
        %v8155 = vshrl.u32 %v7959, 16
        %v8157 = vrot.slane %v8155, 4
        %v8158 = vshll.u32 %v7959, 16
        %v8160 = vrot.slane %v8158, 5
        %v8161 = vor.u32 %v8157, %v8160
        %v8162 = vrot.slane %v8161, 4
        %v8164 = vshll.u32 %v7960, 16
        %v8166 = vrot.slane %v8164, 5
        %v8167 = vsel %vm1361, %v8162, %v8166
        %v8168 = vshrl.u32 %v7960, 16
        %v8170 = vrot.slane %v8168, 4
        %v8171 = vor.u32 %v8170, %v8166
        %v8172 = vrot.slane %v8171, 4
        %v8174 = vshll.u32 %v7961, 16
        %v8176 = vrot.slane %v8174, 5
        %v8177 = vsel %vm1361, %v8172, %v8176
        %v8179 = vshrl.u32 %v7962, 16
        %v8181 = vrot.slane %v8179, 4
        %v8182 = vshll.u32 %v7962, 16
        %v8184 = vrot.slane %v8182, 5
        %v8185 = vor.u32 %v8181, %v8184
        %v8186 = vrot.slane %v8185, 4
        %v8188 = vshll.u32 %v7963, 16
        %v8190 = vrot.slane %v8188, 5
        %v8191 = vsel %vm1361, %v8186, %v8190
        %v8192 = vshrl.u32 %v7963, 16
        %v8194 = vrot.slane %v8192, 4
        %v8195 = vor.u32 %v8194, %v8190
        %v8196 = vrot.slane %v8195, 4
        %v8198 = vshll.u32 %v7964, 16
        %v8200 = vrot.slane %v8198, 5
        %v8201 = vsel %vm1361, %v8196, %v8200
        %v8203 = vshrl.u32 %v7965, 16
        %v8205 = vrot.slane %v8203, 4
        %v8206 = vshll.u32 %v7965, 16
        %v8208 = vrot.slane %v8206, 5
        %v8209 = vor.u32 %v8205, %v8208
        %v8210 = vrot.slane %v8209, 4
        %v8212 = vshll.u32 %v7966, 16
        %v8214 = vrot.slane %v8212, 5
        %v8215 = vsel %vm1361, %v8210, %v8214
        %v8216 = vshrl.u32 %v7966, 16
        %v8218 = vrot.slane %v8216, 4
        %v8219 = vor.u32 %v8218, %v8214
        %v8220 = vrot.slane %v8219, 4
        %v8222 = vshll.u32 %v7967, 16
        %v8224 = vrot.slane %v8222, 5
        %v8225 = vsel %vm1361, %v8220, %v8224
        %v8227 = vshrl.u32 %v7968, 16
        %v8229 = vrot.slane %v8227, 4
        %v8230 = vshll.u32 %v7968, 16
        %v8232 = vrot.slane %v8230, 5
        %v8233 = vor.u32 %v8229, %v8232
        %v8234 = vrot.slane %v8233, 4
        %v8236 = vshll.u32 %v7969, 16
        %v8238 = vrot.slane %v8236, 5
        %v8239 = vsel %vm1361, %v8234, %v8238
        %v8240 = vshrl.u32 %v7969, 16
        %v8242 = vrot.slane %v8240, 4
        %v8243 = vor.u32 %v8242, %v8238
        %v8244 = vrot.slane %v8243, 4
        %v8246 = vshll.u32 %v7970, 16
        %v8248 = vrot.slane %v8246, 5
        %v8249 = vsel %vm1361, %v8244, %v8248
        %v8251 = vshrl.u32 %v7971, 16
        %v8253 = vrot.slane %v8251, 4
        %v8254 = vshll.u32 %v7971, 16
        %v8256 = vrot.slane %v8254, 5
        %v8257 = vor.u32 %v8253, %v8256
        %v8258 = vrot.slane %v8257, 4
        %v8260 = vshll.u32 %v7972, 16
        %v8262 = vrot.slane %v8260, 5
        %v8263 = vsel %vm1361, %v8258, %v8262
        %v8264 = vshrl.u32 %v7972, 16
        %v8266 = vrot.slane %v8264, 4
        %v8267 = vor.u32 %v8266, %v8262
        %v8268 = vrot.slane %v8267, 4
        %v8270 = vshll.u32 %v7973, 16
        %v8272 = vrot.slane %v8270, 5
        %v8273 = vsel %vm1361, %v8268, %v8272
        %v8275 = vshrl.u32 %v7974, 16
        %v8277 = vrot.slane %v8275, 4
        %v8278 = vshll.u32 %v7974, 16
        %v8280 = vrot.slane %v8278, 5
        %v8281 = vor.u32 %v8277, %v8280
        %v8282 = vrot.slane %v8281, 4
        %v8284 = vshll.u32 %v7975, 16
        %v8286 = vrot.slane %v8284, 5
        %v8287 = vsel %vm1361, %v8282, %v8286
        %v8288 = vshrl.u32 %v7975, 16
        %v8290 = vrot.slane %v8288, 4
        %v8291 = vor.u32 %v8290, %v8286
        %v8292 = vrot.slane %v8291, 4
        %v8294 = vshll.u32 %v7976, 16
        %v8296 = vrot.slane %v8294, 5
        %v8297 = vsel %vm1361, %v8292, %v8296
        %v8299 = vshrl.u32 %v7977, 16
        %v8301 = vrot.slane %v8299, 4
        %v8302 = vshll.u32 %v7977, 16
        %v8304 = vrot.slane %v8302, 5
        %v8305 = vor.u32 %v8301, %v8304
        %v8306 = vrot.slane %v8305, 4
        %v8308 = vshll.u32 %v7978, 16
        %v8310 = vrot.slane %v8308, 5
        %v8311 = vsel %vm1361, %v8306, %v8310
        %v8312 = vshrl.u32 %v7978, 16
        %v8314 = vrot.slane %v8312, 4
        %v8315 = vor.u32 %v8314, %v8310
        %v8316 = vrot.slane %v8315, 4
        %v8318 = vshll.u32 %v7979, 16
        %v8320 = vrot.slane %v8318, 5
        %v8321 = vsel %vm1361, %v8316, %v8320
        %v8323 = vshrl.u32 %v7980, 16
        %v8325 = vrot.slane %v8323, 4
        %v8326 = vshll.u32 %v7980, 16
        %v8328 = vrot.slane %v8326, 5
        %v8329 = vor.u32 %v8325, %v8328
        %v8330 = vrot.slane %v8329, 4
        %v8332 = vshll.u32 %v7981, 16
        %v8334 = vrot.slane %v8332, 5
        %v8335 = vsel %vm1361, %v8330, %v8334
        %v8336 = vshrl.u32 %v7981, 16
        %v8338 = vrot.slane %v8336, 4
        %v8339 = vor.u32 %v8338, %v8334
        %v8340 = vrot.slane %v8339, 4
        %v8342 = vshll.u32 %v7982, 16
        %v8344 = vrot.slane %v8342, 5
        %v8345 = vsel %vm1361, %v8340, %v8344
        %v8347 = vshrl.u32 %v7983, 16
        %v8349 = vrot.slane %v8347, 4
        %v8350 = vshll.u32 %v7983, 16
        %v8352 = vrot.slane %v8350, 5
        %v8353 = vor.u32 %v8349, %v8352
        %v8354 = vrot.slane %v8353, 4
        %v8356 = vshll.u32 %v7984, 16
        %v8358 = vrot.slane %v8356, 5
        %v8359 = vsel %vm1361, %v8354, %v8358
        %v8360 = vshrl.u32 %v7984, 16
        %v8362 = vrot.slane %v8360, 4
        %v8363 = vor.u32 %v8362, %v8358
        %v8364 = vrot.slane %v8363, 4
        %v8366 = vshll.u32 %v7985, 16
        %v8368 = vrot.slane %v8366, 5
        %v8369 = vsel %vm1361, %v8364, %v8368
        %8370 = vrot.lane.b32.xlu0 %v7999, 64
        %v8371 = vpop.permute.xlu0 %8370
        %8372 = vrot.lane.b32.xlu0 %v8009, 64
        %v8373 = vpop.permute.xlu0 %8372
        %8374 = vrot.lane.b32.xlu0 %v8023, 64
        %v8375 = vpop.permute.xlu0 %8374
        %8376 = vrot.lane.b32.xlu0 %v8033, 64
        %v8377 = vpop.permute.xlu0 %8376
        %8378 = vrot.lane.b32.xlu0 %v8047, 64
        %v8379 = vpop.permute.xlu0 %8378
        %8380 = vrot.lane.b32.xlu0 %v8057, 64
        %v8381 = vpop.permute.xlu0 %8380
        %8382 = vrot.lane.b32.xlu0 %v8071, 64
        %v8383 = vpop.permute.xlu0 %8382
        %8384 = vrot.lane.b32.xlu0 %v8081, 64
        %v8385 = vpop.permute.xlu0 %8384
        %8386 = vrot.lane.b32.xlu0 %v8095, 64
        %v8387 = vpop.permute.xlu0 %8386
        %8388 = vrot.lane.b32.xlu0 %v8105, 64
        %v8389 = vpop.permute.xlu0 %8388
        %8390 = vrot.lane.b32.xlu0 %v8119, 64
        %v8391 = vpop.permute.xlu0 %8390
        %8392 = vrot.lane.b32.xlu0 %v8129, 64
        %v8393 = vpop.permute.xlu0 %8392
        %8394 = vrot.lane.b32.xlu0 %v8143, 64
        %v8395 = vpop.permute.xlu0 %8394
        %8396 = vrot.lane.b32.xlu0 %v8153, 64
        %v8397 = vpop.permute.xlu0 %8396
        %8398 = vrot.lane.b32.xlu0 %v8167, 64
        %v8399 = vpop.permute.xlu0 %8398
        %8400 = vrot.lane.b32.xlu0 %v8177, 64
        %v8401 = vpop.permute.xlu0 %8400
        %8402 = vrot.lane.b32.xlu0 %v8191, 64
        %v8403 = vpop.permute.xlu0 %8402
        %8404 = vrot.lane.b32.xlu0 %v8201, 64
        %v8405 = vpop.permute.xlu0 %8404
        %8406 = vrot.lane.b32.xlu0 %v8215, 64
        %v8407 = vpop.permute.xlu0 %8406
        %8408 = vrot.lane.b32.xlu0 %v8225, 64
        %v8409 = vpop.permute.xlu0 %8408
        %8410 = vrot.lane.b32.xlu0 %v8239, 64
        %v8411 = vpop.permute.xlu0 %8410
        %8412 = vrot.lane.b32.xlu0 %v8249, 64
        %v8413 = vpop.permute.xlu0 %8412
        %8414 = vrot.lane.b32.xlu0 %v8263, 64
        %v8415 = vpop.permute.xlu0 %8414
        %8416 = vrot.lane.b32.xlu0 %v8273, 64
        %v8417 = vpop.permute.xlu0 %8416
        %8418 = vrot.lane.b32.xlu0 %v8287, 64
        %v8419 = vpop.permute.xlu0 %8418
        %8420 = vrot.lane.b32.xlu0 %v8297, 64
        %v8421 = vpop.permute.xlu0 %8420
        %8422 = vrot.lane.b32.xlu0 %v8311, 64
        %v8423 = vpop.permute.xlu0 %8422
        %8424 = vrot.lane.b32.xlu0 %v8321, 64
        %v8425 = vpop.permute.xlu0 %8424
        %8426 = vrot.lane.b32.xlu0 %v8335, 64
        %v8427 = vpop.permute.xlu0 %8426
        %8428 = vrot.lane.b32.xlu0 %v8345, 64
        %v8429 = vpop.permute.xlu0 %8428
        %8430 = vrot.lane.b32.xlu0 %v8359, 64
        %v8431 = vpop.permute.xlu0 %8430
        %8432 = vrot.lane.b32.xlu0 %v8369, 64
        %v8433 = vpop.permute.xlu0 %8432
        %8466 = vst.msk [vmem:[#allocation3 + $0xc] sm:$0xf] %vm1842, %v8371
        %8467 = vst.msk [vmem:[#allocation3 + $0x20] sm:$0xf] %vm1842, %v8373
        %8468 = vst.msk [vmem:[#allocation3 + $0x34] sm:$0xf] %vm1842, %v8375
        %8469 = vst.msk [vmem:[#allocation3 + $0x48] sm:$0xf] %vm1842, %v8377
        %8470 = vst.msk [vmem:[#allocation3 + $0x5c] sm:$0xf] %vm1842, %v8379
        %8471 = vst.msk [vmem:[#allocation3 + $0x70] sm:$0xf] %vm1842, %v8381
        %8472 = vst.msk [vmem:[#allocation3 + $0x84] sm:$0xf] %vm1842, %v8383
        %8473 = vst.msk [vmem:[#allocation3 + $0x98] sm:$0xf] %vm1842, %v8385
        %8474 = vst.msk [vmem:[#allocation3 + $0xac] sm:$0xf] %vm1842, %v8387
        %8475 = vst.msk [vmem:[#allocation3 + $0xc0] sm:$0xf] %vm1842, %v8389
        %8476 = vst.msk [vmem:[#allocation3 + $0xd4] sm:$0xf] %vm1842, %v8391
        %8477 = vst.msk [vmem:[#allocation3 + $0xe8] sm:$0xf] %vm1842, %v8393
        %8478 = vst.msk [vmem:[#allocation3 + $0xfc] sm:$0xf] %vm1842, %v8395
        %8479 = vst.msk [vmem:[#allocation3 + $0x110] sm:$0xf] %vm1842, %v8397
        %8480 = vst.msk [vmem:[#allocation3 + $0x124] sm:$0xf] %vm1842, %v8399
        %8481 = vst.msk [vmem:[#allocation3 + $0x138] sm:$0xf] %vm1842, %v8401
        %8482 = vst.msk [vmem:[#allocation3 + $0x14c] sm:$0xf] %vm1842, %v8403
        %8483 = vst.msk [vmem:[#allocation3 + $0x160] sm:$0xf] %vm1842, %v8405
        %8484 = vst.msk [vmem:[#allocation3 + $0x174] sm:$0xf] %vm1842, %v8407
        %8485 = vst.msk [vmem:[#allocation3 + $0x188] sm:$0xf] %vm1842, %v8409
        %8486 = vst.msk [vmem:[#allocation3 + $0x19c] sm:$0xf] %vm1842, %v8411
        %8487 = vst.msk [vmem:[#allocation3 + $0x1b0] sm:$0xf] %vm1842, %v8413
        %8488 = vst.msk [vmem:[#allocation3 + $0x1c4] sm:$0xf] %vm1842, %v8415
        %8489 = vst.msk [vmem:[#allocation3 + $0x1d8] sm:$0xf] %vm1842, %v8417
        %8490 = vst.msk [vmem:[#allocation3 + $0x1ec] sm:$0xf] %vm1842, %v8419
        %8491 = vst.msk [vmem:[#allocation3 + $0x200] sm:$0xf] %vm1842, %v8421
        %8492 = vst.msk [vmem:[#allocation3 + $0x214] sm:$0xf] %vm1842, %v8423
        %8493 = vst.msk [vmem:[#allocation3 + $0x228] sm:$0xf] %vm1842, %v8425
        %8494 = vst.msk [vmem:[#allocation3 + $0x23c] sm:$0xf] %vm1842, %v8427
        %8495 = vst.msk [vmem:[#allocation3 + $0x250] sm:$0xf] %vm1842, %v8429
        %8496 = vst.msk [vmem:[#allocation3 + $0x264] sm:$0xf] %vm1842, %v8431
        %8497 = vst.msk [vmem:[#allocation3 + $0x278] sm:$0xf] %vm1842, %v8433
        %v8498 = vld [vmem:[%s3174] sm:$0xe]
        %v8499 = vld [vmem:[%s3174 + $0x4] sm:$0xf]
        %v8500 = vld [vmem:[%s3174 + $0x8] sm:$0x1]
        %v8501 = vld [vmem:[%s3174 + $0xc] sm:$0xe]
        %v8502 = vld [vmem:[%s3174 + $0x10] sm:$0xf]
        %v8503 = vld [vmem:[%s3174 + $0x14] sm:$0x1]
        %v8504 = vld [vmem:[%s3174 + $0x18] sm:$0xe]
        %v8505 = vld [vmem:[%s3174 + $0x1c] sm:$0xf]
        %v8506 = vld [vmem:[%s3174 + $0x20] sm:$0x1]
        %v8507 = vld [vmem:[%s3174 + $0x24] sm:$0xe]
        %v8508 = vld [vmem:[%s3174 + $0x28] sm:$0xf]
        %v8509 = vld [vmem:[%s3174 + $0x2c] sm:$0x1]
        %v8510 = vld [vmem:[%s3174 + $0x30] sm:$0xe]
        %v8511 = vld [vmem:[%s3174 + $0x34] sm:$0xf]
        %v8512 = vld [vmem:[%s3174 + $0x38] sm:$0x1]
        %v8513 = vld [vmem:[%s3174 + $0x3c] sm:$0xe]
        %v8514 = vld [vmem:[%s3174 + $0x40] sm:$0xf]
        %v8515 = vld [vmem:[%s3174 + $0x44] sm:$0x1]
        %v8516 = vld [vmem:[%s3174 + $0x48] sm:$0xe]
        %v8517 = vld [vmem:[%s3174 + $0x4c] sm:$0xf]
        %v8518 = vld [vmem:[%s3174 + $0x50] sm:$0x1]
        %v8519 = vld [vmem:[%s3174 + $0x54] sm:$0xe]
        %v8520 = vld [vmem:[%s3174 + $0x58] sm:$0xf]
        %v8521 = vld [vmem:[%s3174 + $0x5c] sm:$0x1]
        %v8522 = vld [vmem:[%s3174 + $0x60] sm:$0xe]
        %v8523 = vld [vmem:[%s3174 + $0x64] sm:$0xf]
        %v8524 = vld [vmem:[%s3174 + $0x68] sm:$0x1]
        %v8525 = vld [vmem:[%s3174 + $0x6c] sm:$0xe]
        %v8526 = vld [vmem:[%s3174 + $0x70] sm:$0xf]
        %v8527 = vld [vmem:[%s3174 + $0x74] sm:$0x1]
        %v8528 = vld [vmem:[%s3174 + $0x78] sm:$0xe]
        %v8529 = vld [vmem:[%s3174 + $0x7c] sm:$0xf]
        %v8530 = vld [vmem:[%s3174 + $0x80] sm:$0x1]
        %v8531 = vld [vmem:[%s3174 + $0x84] sm:$0xe]
        %v8532 = vld [vmem:[%s3174 + $0x88] sm:$0xf]
        %v8533 = vld [vmem:[%s3174 + $0x8c] sm:$0x1]
        %v8534 = vld [vmem:[%s3174 + $0x90] sm:$0xe]
        %v8535 = vld [vmem:[%s3174 + $0x94] sm:$0xf]
        %v8536 = vld [vmem:[%s3174 + $0x98] sm:$0x1]
        %v8537 = vld [vmem:[%s3174 + $0x9c] sm:$0xe]
        %v8538 = vld [vmem:[%s3174 + $0xa0] sm:$0xf]
        %v8539 = vld [vmem:[%s3174 + $0xa4] sm:$0x1]
        %v8540 = vld [vmem:[%s3174 + $0xa8] sm:$0xe]
        %v8541 = vld [vmem:[%s3174 + $0xac] sm:$0xf]
        %v8542 = vld [vmem:[%s3174 + $0xb0] sm:$0x1]
        %v8543 = vld [vmem:[%s3174 + $0xb4] sm:$0xe]
        %v8544 = vld [vmem:[%s3174 + $0xb8] sm:$0xf]
        %v8545 = vld [vmem:[%s3174 + $0xbc] sm:$0x1]
        %v8594 = vrot.slane %v8498, 5
        %v8595 = vrot.slane %v8594, 4
        %v8596 = vrot.slane %v8499, 5
        %v8597 = vsel %vm1973, %v8595, %v8596
        %v8598 = vrot.slane %v8596, 4
        %v8599 = vrot.slane %v8500, 5
        %v8600 = vsel %vm1973, %v8598, %v8599
        %v8601 = vrot.slane %v8501, 5
        %v8602 = vrot.slane %v8601, 4
        %v8603 = vrot.slane %v8502, 5
        %v8604 = vsel %vm1973, %v8602, %v8603
        %v8605 = vrot.slane %v8603, 4
        %v8606 = vrot.slane %v8503, 5
        %v8607 = vsel %vm1973, %v8605, %v8606
        %v8608 = vrot.slane %v8504, 5
        %v8609 = vrot.slane %v8608, 4
        %v8610 = vrot.slane %v8505, 5
        %v8611 = vsel %vm1973, %v8609, %v8610
        %v8612 = vrot.slane %v8610, 4
        %v8613 = vrot.slane %v8506, 5
        %v8614 = vsel %vm1973, %v8612, %v8613
        %v8615 = vrot.slane %v8507, 5
        %v8616 = vrot.slane %v8615, 4
        %v8617 = vrot.slane %v8508, 5
        %v8618 = vsel %vm1973, %v8616, %v8617
        %v8619 = vrot.slane %v8617, 4
        %v8620 = vrot.slane %v8509, 5
        %v8621 = vsel %vm1973, %v8619, %v8620
        %v8622 = vrot.slane %v8510, 5
        %v8623 = vrot.slane %v8622, 4
        %v8624 = vrot.slane %v8511, 5
        %v8625 = vsel %vm1973, %v8623, %v8624
        %v8626 = vrot.slane %v8624, 4
        %v8627 = vrot.slane %v8512, 5
        %v8628 = vsel %vm1973, %v8626, %v8627
        %v8629 = vrot.slane %v8513, 5
        %v8630 = vrot.slane %v8629, 4
        %v8631 = vrot.slane %v8514, 5
        %v8632 = vsel %vm1973, %v8630, %v8631
        %v8633 = vrot.slane %v8631, 4
        %v8634 = vrot.slane %v8515, 5
        %v8635 = vsel %vm1973, %v8633, %v8634
        %v8636 = vrot.slane %v8516, 5
        %v8637 = vrot.slane %v8636, 4
        %v8638 = vrot.slane %v8517, 5
        %v8639 = vsel %vm1973, %v8637, %v8638
        %v8640 = vrot.slane %v8638, 4
        %v8641 = vrot.slane %v8518, 5
        %v8642 = vsel %vm1973, %v8640, %v8641
        %v8643 = vrot.slane %v8519, 5
        %v8644 = vrot.slane %v8643, 4
        %v8645 = vrot.slane %v8520, 5
        %v8646 = vsel %vm1973, %v8644, %v8645
        %v8647 = vrot.slane %v8645, 4
        %v8648 = vrot.slane %v8521, 5
        %v8649 = vsel %vm1973, %v8647, %v8648
        %v8650 = vrot.slane %v8522, 5
        %v8651 = vrot.slane %v8650, 4
        %v8652 = vrot.slane %v8523, 5
        %v8653 = vsel %vm1973, %v8651, %v8652
        %v8654 = vrot.slane %v8652, 4
        %v8655 = vrot.slane %v8524, 5
        %v8656 = vsel %vm1973, %v8654, %v8655
        %v8657 = vrot.slane %v8525, 5
        %v8658 = vrot.slane %v8657, 4
        %v8659 = vrot.slane %v8526, 5
        %v8660 = vsel %vm1973, %v8658, %v8659
        %v8661 = vrot.slane %v8659, 4
        %v8662 = vrot.slane %v8527, 5
        %v8663 = vsel %vm1973, %v8661, %v8662
        %v8664 = vrot.slane %v8528, 5
        %v8665 = vrot.slane %v8664, 4
        %v8666 = vrot.slane %v8529, 5
        %v8667 = vsel %vm1973, %v8665, %v8666
        %v8668 = vrot.slane %v8666, 4
        %v8669 = vrot.slane %v8530, 5
        %v8670 = vsel %vm1973, %v8668, %v8669
        %v8671 = vrot.slane %v8531, 5
        %v8672 = vrot.slane %v8671, 4
        %v8673 = vrot.slane %v8532, 5
        %v8674 = vsel %vm1973, %v8672, %v8673
        %v8675 = vrot.slane %v8673, 4
        %v8676 = vrot.slane %v8533, 5
        %v8677 = vsel %vm1973, %v8675, %v8676
        %v8678 = vrot.slane %v8534, 5
        %v8679 = vrot.slane %v8678, 4
        %v8680 = vrot.slane %v8535, 5
        %v8681 = vsel %vm1973, %v8679, %v8680
        %v8682 = vrot.slane %v8680, 4
        %v8683 = vrot.slane %v8536, 5
        %v8684 = vsel %vm1973, %v8682, %v8683
        %v8685 = vrot.slane %v8537, 5
        %v8686 = vrot.slane %v8685, 4
        %v8687 = vrot.slane %v8538, 5
        %v8688 = vsel %vm1973, %v8686, %v8687
        %v8689 = vrot.slane %v8687, 4
        %v8690 = vrot.slane %v8539, 5
        %v8691 = vsel %vm1973, %v8689, %v8690
        %v8692 = vrot.slane %v8540, 5
        %v8693 = vrot.slane %v8692, 4
        %v8694 = vrot.slane %v8541, 5
        %v8695 = vsel %vm1973, %v8693, %v8694
        %v8696 = vrot.slane %v8694, 4
        %v8697 = vrot.slane %v8542, 5
        %v8698 = vsel %vm1973, %v8696, %v8697
        %v8699 = vrot.slane %v8543, 5
        %v8700 = vrot.slane %v8699, 4
        %v8701 = vrot.slane %v8544, 5
        %v8702 = vsel %vm1973, %v8700, %v8701
        %v8703 = vrot.slane %v8701, 4
        %v8704 = vrot.slane %v8545, 5
        %v8705 = vsel %vm1973, %v8703, %v8704
        %8738 = vst.msk [vmem:[#allocation3 + $0x10] sm:$0xf] %vm654, %v8597
        %8739 = vst.msk [vmem:[#allocation3 + $0x24] sm:$0xf] %vm654, %v8600
        %8740 = vst.msk [vmem:[#allocation3 + $0x38] sm:$0xf] %vm654, %v8604
        %8741 = vst.msk [vmem:[#allocation3 + $0x4c] sm:$0xf] %vm654, %v8607
        %8742 = vst.msk [vmem:[#allocation3 + $0x60] sm:$0xf] %vm654, %v8611
        %8743 = vst.msk [vmem:[#allocation3 + $0x74] sm:$0xf] %vm654, %v8614
        %8744 = vst.msk [vmem:[#allocation3 + $0x88] sm:$0xf] %vm654, %v8618
        %8745 = vst.msk [vmem:[#allocation3 + $0x9c] sm:$0xf] %vm654, %v8621
        %8746 = vst.msk [vmem:[#allocation3 + $0xb0] sm:$0xf] %vm654, %v8625
        %8747 = vst.msk [vmem:[#allocation3 + $0xc4] sm:$0xf] %vm654, %v8628
        %8748 = vst.msk [vmem:[#allocation3 + $0xd8] sm:$0xf] %vm654, %v8632
        %8749 = vst.msk [vmem:[#allocation3 + $0xec] sm:$0xf] %vm654, %v8635
        %8750 = vst.msk [vmem:[#allocation3 + $0x100] sm:$0xf] %vm654, %v8639
        %8751 = vst.msk [vmem:[#allocation3 + $0x114] sm:$0xf] %vm654, %v8642
        %8752 = vst.msk [vmem:[#allocation3 + $0x128] sm:$0xf] %vm654, %v8646
        %8753 = vst.msk [vmem:[#allocation3 + $0x13c] sm:$0xf] %vm654, %v8649
        %8754 = vst.msk [vmem:[#allocation3 + $0x150] sm:$0xf] %vm654, %v8653
        %8755 = vst.msk [vmem:[#allocation3 + $0x164] sm:$0xf] %vm654, %v8656
        %8756 = vst.msk [vmem:[#allocation3 + $0x178] sm:$0xf] %vm654, %v8660
        %8757 = vst.msk [vmem:[#allocation3 + $0x18c] sm:$0xf] %vm654, %v8663
        %8758 = vst.msk [vmem:[#allocation3 + $0x1a0] sm:$0xf] %vm654, %v8667
        %8759 = vst.msk [vmem:[#allocation3 + $0x1b4] sm:$0xf] %vm654, %v8670
        %8760 = vst.msk [vmem:[#allocation3 + $0x1c8] sm:$0xf] %vm654, %v8674
        %8761 = vst.msk [vmem:[#allocation3 + $0x1dc] sm:$0xf] %vm654, %v8677
        %8762 = vst.msk [vmem:[#allocation3 + $0x1f0] sm:$0xf] %vm654, %v8681
        %8763 = vst.msk [vmem:[#allocation3 + $0x204] sm:$0xf] %vm654, %v8684
        %8764 = vst.msk [vmem:[#allocation3 + $0x218] sm:$0xf] %vm654, %v8688
        %8765 = vst.msk [vmem:[#allocation3 + $0x22c] sm:$0xf] %vm654, %v8691
        %8766 = vst.msk [vmem:[#allocation3 + $0x240] sm:$0xf] %vm654, %v8695
        %8767 = vst.msk [vmem:[#allocation3 + $0x254] sm:$0xf] %vm654, %v8698
        %8768 = vst.msk [vmem:[#allocation3 + $0x268] sm:$0xf] %vm654, %v8702
        %8769 = vst.msk [vmem:[#allocation3 + $0x27c] sm:$0xf] %vm654, %v8705
        %v8770 = vld [vmem:[#allocation3] sm:$0xff]
        %v8771 = vld [vmem:[#allocation3 + $0x8] sm:$0xff]
        %v8772 = vld [vmem:[#allocation3 + $0x10] sm:$0xf]
        %v8773 = vld [vmem:[#allocation3 + $0x14] sm:$0xff]
        %v8774 = vld [vmem:[#allocation3 + $0x1c] sm:$0xff]
        %v8775 = vld [vmem:[#allocation3 + $0x24] sm:$0xf]
        %v8776 = vld [vmem:[#allocation3 + $0x28] sm:$0xff]
        %v8777 = vld [vmem:[#allocation3 + $0x30] sm:$0xff]
        %v8778 = vld [vmem:[#allocation3 + $0x38] sm:$0xf]
        %v8779 = vld [vmem:[#allocation3 + $0x3c] sm:$0xff]
        %v8780 = vld [vmem:[#allocation3 + $0x44] sm:$0xff]
        %v8781 = vld [vmem:[#allocation3 + $0x4c] sm:$0xf]
        %v8782 = vld [vmem:[#allocation3 + $0x50] sm:$0xff]
        %v8783 = vld [vmem:[#allocation3 + $0x58] sm:$0xff]
        %v8784 = vld [vmem:[#allocation3 + $0x60] sm:$0xf]
        %v8785 = vld [vmem:[#allocation3 + $0x64] sm:$0xff]
        %v8786 = vld [vmem:[#allocation3 + $0x6c] sm:$0xff]
        %v8787 = vld [vmem:[#allocation3 + $0x74] sm:$0xf]
        %v8788 = vld [vmem:[#allocation3 + $0x78] sm:$0xff]
        %v8789 = vld [vmem:[#allocation3 + $0x80] sm:$0xff]
        %v8790 = vld [vmem:[#allocation3 + $0x88] sm:$0xf]
        %v8791 = vld [vmem:[#allocation3 + $0x8c] sm:$0xff]
        %v8792 = vld [vmem:[#allocation3 + $0x94] sm:$0xff]
        %v8793 = vld [vmem:[#allocation3 + $0x9c] sm:$0xf]
        %v8794 = vld [vmem:[#allocation3 + $0xa0] sm:$0xff]
        %v8795 = vld [vmem:[#allocation3 + $0xa8] sm:$0xff]
        %v8796 = vld [vmem:[#allocation3 + $0xb0] sm:$0xf]
        %v8797 = vld [vmem:[#allocation3 + $0xb4] sm:$0xff]
        %v8798 = vld [vmem:[#allocation3 + $0xbc] sm:$0xff]
        %v8799 = vld [vmem:[#allocation3 + $0xc4] sm:$0xf]
        %v8800 = vld [vmem:[#allocation3 + $0xc8] sm:$0xff]
        %v8801 = vld [vmem:[#allocation3 + $0xd0] sm:$0xff]
        %v8802 = vld [vmem:[#allocation3 + $0xd8] sm:$0xf]
        %v8803 = vld [vmem:[#allocation3 + $0xdc] sm:$0xff]
        %v8804 = vld [vmem:[#allocation3 + $0xe4] sm:$0xff]
        %v8805 = vld [vmem:[#allocation3 + $0xec] sm:$0xf]
        %v8806 = vld [vmem:[#allocation3 + $0xf0] sm:$0xff]
        %v8807 = vld [vmem:[#allocation3 + $0xf8] sm:$0xff]
        %v8808 = vld [vmem:[#allocation3 + $0x100] sm:$0xf]
        %v8809 = vld [vmem:[#allocation3 + $0x104] sm:$0xff]
        %v8810 = vld [vmem:[#allocation3 + $0x10c] sm:$0xff]
        %v8811 = vld [vmem:[#allocation3 + $0x114] sm:$0xf]
        %v8812 = vld [vmem:[#allocation3 + $0x118] sm:$0xff]
        %v8813 = vld [vmem:[#allocation3 + $0x120] sm:$0xff]
        %v8814 = vld [vmem:[#allocation3 + $0x128] sm:$0xf]
        %v8815 = vld [vmem:[#allocation3 + $0x12c] sm:$0xff]
        %v8816 = vld [vmem:[#allocation3 + $0x134] sm:$0xff]
        %v8817 = vld [vmem:[#allocation3 + $0x13c] sm:$0xf]
        %v8818 = vld [vmem:[#allocation3 + $0x140] sm:$0xff]
        %v8819 = vld [vmem:[#allocation3 + $0x148] sm:$0xff]
        %v8820 = vld [vmem:[#allocation3 + $0x150] sm:$0xf]
        %v8821 = vld [vmem:[#allocation3 + $0x154] sm:$0xff]
        %v8822 = vld [vmem:[#allocation3 + $0x15c] sm:$0xff]
        %v8823 = vld [vmem:[#allocation3 + $0x164] sm:$0xf]
        %v8824 = vld [vmem:[#allocation3 + $0x168] sm:$0xff]
        %v8825 = vld [vmem:[#allocation3 + $0x170] sm:$0xff]
        %v8826 = vld [vmem:[#allocation3 + $0x178] sm:$0xf]
        %v8827 = vld [vmem:[#allocation3 + $0x17c] sm:$0xff]
        %v8828 = vld [vmem:[#allocation3 + $0x184] sm:$0xff]
        %v8829 = vld [vmem:[#allocation3 + $0x18c] sm:$0xf]
        %v8830 = vld [vmem:[#allocation3 + $0x190] sm:$0xff]
        %v8831 = vld [vmem:[#allocation3 + $0x198] sm:$0xff]
        %v8832 = vld [vmem:[#allocation3 + $0x1a0] sm:$0xf]
        %v8833 = vld [vmem:[#allocation3 + $0x1a4] sm:$0xff]
        %v8834 = vld [vmem:[#allocation3 + $0x1ac] sm:$0xff]
        %v8835 = vld [vmem:[#allocation3 + $0x1b4] sm:$0xf]
        %v8836 = vld [vmem:[#allocation3 + $0x1b8] sm:$0xff]
        %v8837 = vld [vmem:[#allocation3 + $0x1c0] sm:$0xff]
        %v8838 = vld [vmem:[#allocation3 + $0x1c8] sm:$0xf]
        %v8839 = vld [vmem:[#allocation3 + $0x1cc] sm:$0xff]
        %v8840 = vld [vmem:[#allocation3 + $0x1d4] sm:$0xff]
        %v8841 = vld [vmem:[#allocation3 + $0x1dc] sm:$0xf]
        %v8842 = vld [vmem:[#allocation3 + $0x1e0] sm:$0xff]
        %v8843 = vld [vmem:[#allocation3 + $0x1e8] sm:$0xff]
        %v8844 = vld [vmem:[#allocation3 + $0x1f0] sm:$0xf]
        %v8845 = vld [vmem:[#allocation3 + $0x1f4] sm:$0xff]
        %v8846 = vld [vmem:[#allocation3 + $0x1fc] sm:$0xff]
        %v8847 = vld [vmem:[#allocation3 + $0x204] sm:$0xf]
        %v8848 = vld [vmem:[#allocation3 + $0x208] sm:$0xff]
        %v8849 = vld [vmem:[#allocation3 + $0x210] sm:$0xff]
        %v8850 = vld [vmem:[#allocation3 + $0x218] sm:$0xf]
        %v8851 = vld [vmem:[#allocation3 + $0x21c] sm:$0xff]
        %v8852 = vld [vmem:[#allocation3 + $0x224] sm:$0xff]
        %v8853 = vld [vmem:[#allocation3 + $0x22c] sm:$0xf]
        %v8854 = vld [vmem:[#allocation3 + $0x230] sm:$0xff]
        %v8855 = vld [vmem:[#allocation3 + $0x238] sm:$0xff]
        %v8856 = vld [vmem:[#allocation3 + $0x240] sm:$0xf]
        %v8857 = vld [vmem:[#allocation3 + $0x244] sm:$0xff]
        %v8858 = vld [vmem:[#allocation3 + $0x24c] sm:$0xff]
        %v8859 = vld [vmem:[#allocation3 + $0x254] sm:$0xf]
        %v8860 = vld [vmem:[#allocation3 + $0x258] sm:$0xff]
        %v8861 = vld [vmem:[#allocation3 + $0x260] sm:$0xff]
        %v8862 = vld [vmem:[#allocation3 + $0x268] sm:$0xf]
        %v8863 = vld [vmem:[#allocation3 + $0x26c] sm:$0xff]
        %v8864 = vld [vmem:[#allocation3 + $0x274] sm:$0xff]
        %v8865 = vld [vmem:[#allocation3 + $0x27c] sm:$0xf]
        %v8866 = vld [vmem:[%s5] sm:$0xf]
        %v8867 = vld [vmem:[%s5 + $0x4] sm:$0xf]
        %v8868 = vld [vmem:[%s5 + $0x8] sm:$0xf]
        %v8869 = vld [vmem:[%s5 + $0xc] sm:$0xf]
        %v8870 = vld [vmem:[%s5 + $0x10] sm:$0xf]
        %v8871 = vld [vmem:[%s5 + $0x14] sm:$0xf]
        %v8872 = vld [vmem:[%s5 + $0x18] sm:$0xf]
        %v8873 = vld [vmem:[%s5 + $0x1c] sm:$0xf]
        %v8874 = vld [vmem:[%s5 + $0x20] sm:$0xf]
        %v8875 = vld [vmem:[%s5 + $0x24] sm:$0xf]
        %v8876 = vld [vmem:[%s5 + $0x28] sm:$0xf]
        %v8877 = vld [vmem:[%s5 + $0x2c] sm:$0xf]
        %v8878 = vld [vmem:[%s5 + $0x30] sm:$0xf]
        %v8879 = vld [vmem:[%s5 + $0x34] sm:$0xf]
        %v8880 = vld [vmem:[%s5 + $0x38] sm:$0xf]
        %v8881 = vld [vmem:[%s5 + $0x3c] sm:$0xf]
        %v8882 = vld [vmem:[%s5 + $0x40] sm:$0xf]
        %v8883 = vld [vmem:[%s5 + $0x44] sm:$0xf]
        %v8884 = vld [vmem:[%s5 + $0x48] sm:$0xf]
        %v8885 = vld [vmem:[%s5 + $0x4c] sm:$0xf]
        %v8886 = vld [vmem:[%s5 + $0x50] sm:$0xf]
        %v8887 = vld [vmem:[%s5 + $0x54] sm:$0xf]
        %v8888 = vld [vmem:[%s5 + $0x58] sm:$0xf]
        %v8889 = vld [vmem:[%s5 + $0x5c] sm:$0xf]
        %v8890 = vld [vmem:[%s5 + $0x60] sm:$0xf]
        %v8891 = vld [vmem:[%s5 + $0x64] sm:$0xf]
        %v8892 = vld [vmem:[%s5 + $0x68] sm:$0xf]
        %v8893 = vld [vmem:[%s5 + $0x6c] sm:$0xf]
        %v8894 = vld [vmem:[%s5 + $0x70] sm:$0xf]
        %v8895 = vld [vmem:[%s5 + $0x74] sm:$0xf]
        %v8896 = vld [vmem:[%s5 + $0x78] sm:$0xf]
        %v8897 = vld [vmem:[%s5 + $0x7c] sm:$0xf]
        %v8898 = vld [vmem:[%s5 + $0x80] sm:$0xf]
        %v8899 = vld [vmem:[%s5 + $0x84] sm:$0xf]
        %v8900 = vld [vmem:[%s5 + $0x88] sm:$0xf]
        %v8901 = vld [vmem:[%s5 + $0x8c] sm:$0xf]
        %v8902 = vld [vmem:[%s5 + $0x90] sm:$0xf]
        %v8903 = vld [vmem:[%s5 + $0x94] sm:$0xf]
        %v8904 = vld [vmem:[%s5 + $0x98] sm:$0xf]
        %v8905 = vld [vmem:[%s5 + $0x9c] sm:$0xf]
        %v8906 = vld [vmem:[%s5 + $0xa0] sm:$0xf]
        %v8907 = vld [vmem:[%s5 + $0xa4] sm:$0xf]
        %v8908 = vld [vmem:[%s5 + $0xa8] sm:$0xf]
        %v8909 = vld [vmem:[%s5 + $0xac] sm:$0xf]
        %v8910 = vld [vmem:[%s5 + $0xb0] sm:$0xf]
        %v8911 = vld [vmem:[%s5 + $0xb4] sm:$0xf]
        %v8912 = vld [vmem:[%s5 + $0xb8] sm:$0xf]
        %v8913 = vld [vmem:[%s5 + $0xbc] sm:$0xf]
        %v8914 = vld [vmem:[%s5 + $0xc0] sm:$0xf]
        %v8915 = vld [vmem:[%s5 + $0xc4] sm:$0xf]
        %v8916 = vld [vmem:[%s5 + $0xc8] sm:$0xf]
        %v8917 = vld [vmem:[%s5 + $0xcc] sm:$0xf]
        %v8918 = vld [vmem:[%s5 + $0xd0] sm:$0xf]
        %v8919 = vld [vmem:[%s5 + $0xd4] sm:$0xf]
        %v8920 = vld [vmem:[%s5 + $0xd8] sm:$0xf]
        %v8921 = vld [vmem:[%s5 + $0xdc] sm:$0xf]
        %v8922 = vld [vmem:[%s5 + $0xe0] sm:$0xf]
        %v8923 = vld [vmem:[%s5 + $0xe4] sm:$0xf]
        %v8924 = vld [vmem:[%s5 + $0xe8] sm:$0xf]
        %v8925 = vld [vmem:[%s5 + $0xec] sm:$0xf]
        %v8926 = vld [vmem:[%s5 + $0xf0] sm:$0xf]
        %v8927 = vld [vmem:[%s5 + $0xf4] sm:$0xf]
        %v8928 = vld [vmem:[%s5 + $0xf8] sm:$0xf]
        %v8929 = vld [vmem:[%s5 + $0xfc] sm:$0xf]
        %v8930 = vld [vmem:[%s5 + $0x100] sm:$0xf]
        %v8931 = vld [vmem:[%s5 + $0x104] sm:$0xf]
        %v8932 = vld [vmem:[%s5 + $0x108] sm:$0xf]
        %v8933 = vld [vmem:[%s5 + $0x10c] sm:$0xf]
        %v8934 = vld [vmem:[%s5 + $0x110] sm:$0xf]
        %v8935 = vld [vmem:[%s5 + $0x114] sm:$0xf]
        %v8936 = vld [vmem:[%s5 + $0x118] sm:$0xf]
        %v8937 = vld [vmem:[%s5 + $0x11c] sm:$0xf]
        %v8938 = vld [vmem:[%s6] sm:$0x1]
        %v8940 = vlaneseq
        %v8941 = vshrl.u32 %v8940, 7
        %v8942 = vsub.s32 0, %v8941
        %v8943 = vrot.slane %v8938, %v8942
        %v9041 = vunpack.c.l.b16 %v8770
        %v9042 = vunpack.c.h.b16 %v8770
        %v9043 = vunpack.c.l.b16 %v8771
        %v9044 = vunpack.c.h.b16 %v8771
        %v9045 = vunpack.c.l.b16 %v8772
        %v9046 = vunpack.c.l.b16 %v8773
        %v9047 = vunpack.c.h.b16 %v8773
        %v9048 = vunpack.c.l.b16 %v8774
        %v9049 = vunpack.c.h.b16 %v8774
        %v9050 = vunpack.c.l.b16 %v8775
        %v9051 = vunpack.c.l.b16 %v8776
        %v9052 = vunpack.c.h.b16 %v8776
        %v9053 = vunpack.c.l.b16 %v8777
        %v9054 = vunpack.c.h.b16 %v8777
        %v9055 = vunpack.c.l.b16 %v8778
        %v9056 = vunpack.c.l.b16 %v8779
        %v9057 = vunpack.c.h.b16 %v8779
        %v9058 = vunpack.c.l.b16 %v8780
        %v9059 = vunpack.c.h.b16 %v8780
        %v9060 = vunpack.c.l.b16 %v8781
        %v9061 = vunpack.c.l.b16 %v8782
        %v9062 = vunpack.c.h.b16 %v8782
        %v9063 = vunpack.c.l.b16 %v8783
        %v9064 = vunpack.c.h.b16 %v8783
        %v9065 = vunpack.c.l.b16 %v8784
        %v9066 = vunpack.c.l.b16 %v8785
        %v9067 = vunpack.c.h.b16 %v8785
        %v9068 = vunpack.c.l.b16 %v8786
        %v9069 = vunpack.c.h.b16 %v8786
        %v9070 = vunpack.c.l.b16 %v8787
        %v9071 = vunpack.c.l.b16 %v8788
        %v9072 = vunpack.c.h.b16 %v8788
        %v9073 = vunpack.c.l.b16 %v8789
        %v9074 = vunpack.c.h.b16 %v8789
        %v9075 = vunpack.c.l.b16 %v8790
        %v9076 = vunpack.c.l.b16 %v8791
        %v9077 = vunpack.c.h.b16 %v8791
        %v9078 = vunpack.c.l.b16 %v8792
        %v9079 = vunpack.c.h.b16 %v8792
        %v9080 = vunpack.c.l.b16 %v8793
        %v9081 = vunpack.c.l.b16 %v8794
        %v9082 = vunpack.c.h.b16 %v8794
        %v9083 = vunpack.c.l.b16 %v8795
        %v9084 = vunpack.c.h.b16 %v8795
        %v9085 = vunpack.c.l.b16 %v8796
        %v9086 = vunpack.c.l.b16 %v8797
        %v9087 = vunpack.c.h.b16 %v8797
        %v9088 = vunpack.c.l.b16 %v8798
        %v9089 = vunpack.c.h.b16 %v8798
        %v9090 = vunpack.c.l.b16 %v8799
        %v9091 = vunpack.c.l.b16 %v8800
        %v9092 = vunpack.c.h.b16 %v8800
        %v9093 = vunpack.c.l.b16 %v8801
        %v9094 = vunpack.c.h.b16 %v8801
        %v9095 = vunpack.c.l.b16 %v8802
        %v9096 = vunpack.c.l.b16 %v8803
        %v9097 = vunpack.c.h.b16 %v8803
        %v9098 = vunpack.c.l.b16 %v8804
        %v9099 = vunpack.c.h.b16 %v8804
        %v9100 = vunpack.c.l.b16 %v8805
        %v9101 = vunpack.c.l.b16 %v8806
        %v9102 = vunpack.c.h.b16 %v8806
        %v9103 = vunpack.c.l.b16 %v8807
        %v9104 = vunpack.c.h.b16 %v8807
        %v9105 = vunpack.c.l.b16 %v8808
        %v9106 = vunpack.c.l.b16 %v8809
        %v9107 = vunpack.c.h.b16 %v8809
        %v9108 = vunpack.c.l.b16 %v8810
        %v9109 = vunpack.c.h.b16 %v8810
        %v9110 = vunpack.c.l.b16 %v8811
        %v9111 = vunpack.c.l.b16 %v8812
        %v9112 = vunpack.c.h.b16 %v8812
        %v9113 = vunpack.c.l.b16 %v8813
        %v9114 = vunpack.c.h.b16 %v8813
        %v9115 = vunpack.c.l.b16 %v8814
        %v9116 = vunpack.c.l.b16 %v8815
        %v9117 = vunpack.c.h.b16 %v8815
        %v9118 = vunpack.c.l.b16 %v8816
        %v9119 = vunpack.c.h.b16 %v8816
        %v9120 = vunpack.c.l.b16 %v8817
        %v9121 = vunpack.c.l.b16 %v8818
        %v9122 = vunpack.c.h.b16 %v8818
        %v9123 = vunpack.c.l.b16 %v8819
        %v9124 = vunpack.c.h.b16 %v8819
        %v9125 = vunpack.c.l.b16 %v8820
        %v9126 = vunpack.c.l.b16 %v8821
        %v9127 = vunpack.c.h.b16 %v8821
        %v9128 = vunpack.c.l.b16 %v8822
        %v9129 = vunpack.c.h.b16 %v8822
        %v9130 = vunpack.c.l.b16 %v8823
        %v9131 = vunpack.c.l.b16 %v8824
        %v9132 = vunpack.c.h.b16 %v8824
        %v9133 = vunpack.c.l.b16 %v8825
        %v9134 = vunpack.c.h.b16 %v8825
        %v9135 = vunpack.c.l.b16 %v8826
        %v9136 = vunpack.c.l.b16 %v8827
        %v9137 = vunpack.c.h.b16 %v8827
        %v9138 = vunpack.c.l.b16 %v8828
        %v9139 = vunpack.c.h.b16 %v8828
        %v9140 = vunpack.c.l.b16 %v8829
        %v9141 = vunpack.c.l.b16 %v8830
        %v9142 = vunpack.c.h.b16 %v8830
        %v9143 = vunpack.c.l.b16 %v8831
        %v9144 = vunpack.c.h.b16 %v8831
        %v9145 = vunpack.c.l.b16 %v8832
        %v9146 = vunpack.c.l.b16 %v8833
        %v9147 = vunpack.c.h.b16 %v8833
        %v9148 = vunpack.c.l.b16 %v8834
        %v9149 = vunpack.c.h.b16 %v8834
        %v9150 = vunpack.c.l.b16 %v8835
        %v9151 = vunpack.c.l.b16 %v8836
        %v9152 = vunpack.c.h.b16 %v8836
        %v9153 = vunpack.c.l.b16 %v8837
        %v9154 = vunpack.c.h.b16 %v8837
        %v9155 = vunpack.c.l.b16 %v8838
        %v9156 = vunpack.c.l.b16 %v8839
        %v9157 = vunpack.c.h.b16 %v8839
        %v9158 = vunpack.c.l.b16 %v8840
        %v9159 = vunpack.c.h.b16 %v8840
        %v9160 = vunpack.c.l.b16 %v8841
        %v9161 = vunpack.c.l.b16 %v8842
        %v9162 = vunpack.c.h.b16 %v8842
        %v9163 = vunpack.c.l.b16 %v8843
        %v9164 = vunpack.c.h.b16 %v8843
        %v9165 = vunpack.c.l.b16 %v8844
        %v9166 = vunpack.c.l.b16 %v8845
        %v9167 = vunpack.c.h.b16 %v8845
        %v9168 = vunpack.c.l.b16 %v8846
        %v9169 = vunpack.c.h.b16 %v8846
        %v9170 = vunpack.c.l.b16 %v8847
        %v9171 = vunpack.c.l.b16 %v8848
        %v9172 = vunpack.c.h.b16 %v8848
        %v9173 = vunpack.c.l.b16 %v8849
        %v9174 = vunpack.c.h.b16 %v8849
        %v9175 = vunpack.c.l.b16 %v8850
        %v9176 = vunpack.c.l.b16 %v8851
        %v9177 = vunpack.c.h.b16 %v8851
        %v9178 = vunpack.c.l.b16 %v8852
        %v9179 = vunpack.c.h.b16 %v8852
        %v9180 = vunpack.c.l.b16 %v8853
        %v9181 = vunpack.c.l.b16 %v8854
        %v9182 = vunpack.c.h.b16 %v8854
        %v9183 = vunpack.c.l.b16 %v8855
        %v9184 = vunpack.c.h.b16 %v8855
        %v9185 = vunpack.c.l.b16 %v8856
        %v9186 = vunpack.c.l.b16 %v8857
        %v9187 = vunpack.c.h.b16 %v8857
        %v9188 = vunpack.c.l.b16 %v8858
        %v9189 = vunpack.c.h.b16 %v8858
        %v9190 = vunpack.c.l.b16 %v8859
        %v9191 = vunpack.c.l.b16 %v8860
        %v9192 = vunpack.c.h.b16 %v8860
        %v9193 = vunpack.c.l.b16 %v8861
        %v9194 = vunpack.c.h.b16 %v8861
        %v9195 = vunpack.c.l.b16 %v8862
        %v9196 = vunpack.c.l.b16 %v8863
        %v9197 = vunpack.c.h.b16 %v8863
        %v9198 = vunpack.c.l.b16 %v8864
        %v9199 = vunpack.c.h.b16 %v8864
        %v9200 = vunpack.c.l.b16 %v8865
        %v9201 = vpack.c.b16 %v9046, %v9041
        %v9202 = vpack.c.b16 %v9047, %v9042
        %v9203 = vpack.c.b16 %v9048, %v9043
        %v9204 = vpack.c.b16 %v9049, %v9044
        %v9205 = vpack.c.b16 %v9050, %v9045
        %v9206 = vpack.c.b16 %v9056, %v9051
        %v9207 = vpack.c.b16 %v9057, %v9052
        %v9208 = vpack.c.b16 %v9058, %v9053
        %v9209 = vpack.c.b16 %v9059, %v9054
        %v9210 = vpack.c.b16 %v9060, %v9055
        %v9211 = vpack.c.b16 %v9066, %v9061
        %v9212 = vpack.c.b16 %v9067, %v9062
        %v9213 = vpack.c.b16 %v9068, %v9063
        %v9214 = vpack.c.b16 %v9069, %v9064
        %v9215 = vpack.c.b16 %v9070, %v9065
        %v9216 = vpack.c.b16 %v9076, %v9071
        %v9217 = vpack.c.b16 %v9077, %v9072
        %v9218 = vpack.c.b16 %v9078, %v9073
        %v9219 = vpack.c.b16 %v9079, %v9074
        %v9220 = vpack.c.b16 %v9080, %v9075
        %v9221 = vpack.c.b16 %v9086, %v9081
        %v9222 = vpack.c.b16 %v9087, %v9082
        %v9223 = vpack.c.b16 %v9088, %v9083
        %v9224 = vpack.c.b16 %v9089, %v9084
        %v9225 = vpack.c.b16 %v9090, %v9085
        %v9226 = vpack.c.b16 %v9096, %v9091
        %v9227 = vpack.c.b16 %v9097, %v9092
        %v9228 = vpack.c.b16 %v9098, %v9093
        %v9229 = vpack.c.b16 %v9099, %v9094
        %v9230 = vpack.c.b16 %v9100, %v9095
        %v9231 = vpack.c.b16 %v9106, %v9101
        %v9232 = vpack.c.b16 %v9107, %v9102
        %v9233 = vpack.c.b16 %v9108, %v9103
        %v9234 = vpack.c.b16 %v9109, %v9104
        %v9235 = vpack.c.b16 %v9110, %v9105
        %v9236 = vpack.c.b16 %v9116, %v9111
        %v9237 = vpack.c.b16 %v9117, %v9112
        %v9238 = vpack.c.b16 %v9118, %v9113
        %v9239 = vpack.c.b16 %v9119, %v9114
        %v9240 = vpack.c.b16 %v9120, %v9115
        %v9241 = vpack.c.b16 %v9126, %v9121
        %v9242 = vpack.c.b16 %v9127, %v9122
        %v9243 = vpack.c.b16 %v9128, %v9123
        %v9244 = vpack.c.b16 %v9129, %v9124
        %v9245 = vpack.c.b16 %v9130, %v9125
        %v9246 = vpack.c.b16 %v9136, %v9131
        %v9247 = vpack.c.b16 %v9137, %v9132
        %v9248 = vpack.c.b16 %v9138, %v9133
        %v9249 = vpack.c.b16 %v9139, %v9134
        %v9250 = vpack.c.b16 %v9140, %v9135
        %v9251 = vpack.c.b16 %v9146, %v9141
        %v9252 = vpack.c.b16 %v9147, %v9142
        %v9253 = vpack.c.b16 %v9148, %v9143
        %v9254 = vpack.c.b16 %v9149, %v9144
        %v9255 = vpack.c.b16 %v9150, %v9145
        %v9256 = vpack.c.b16 %v9156, %v9151
        %v9257 = vpack.c.b16 %v9157, %v9152
        %v9258 = vpack.c.b16 %v9158, %v9153
        %v9259 = vpack.c.b16 %v9159, %v9154
        %v9260 = vpack.c.b16 %v9160, %v9155
        %v9261 = vpack.c.b16 %v9166, %v9161
        %v9262 = vpack.c.b16 %v9167, %v9162
        %v9263 = vpack.c.b16 %v9168, %v9163
        %v9264 = vpack.c.b16 %v9169, %v9164
        %v9265 = vpack.c.b16 %v9170, %v9165
        %v9266 = vpack.c.b16 %v9176, %v9171
        %v9267 = vpack.c.b16 %v9177, %v9172
        %v9268 = vpack.c.b16 %v9178, %v9173
        %v9269 = vpack.c.b16 %v9179, %v9174
        %v9270 = vpack.c.b16 %v9180, %v9175
        %v9271 = vpack.c.b16 %v9186, %v9181
        %v9272 = vpack.c.b16 %v9187, %v9182
        %v9273 = vpack.c.b16 %v9188, %v9183
        %v9274 = vpack.c.b16 %v9189, %v9184
        %v9275 = vpack.c.b16 %v9190, %v9185
        %v9276 = vpack.c.b16 %v9196, %v9191
        %v9277 = vpack.c.b16 %v9197, %v9192
        %v9278 = vpack.c.b16 %v9198, %v9193
        %v9279 = vpack.c.b16 %v9199, %v9194
        %v9280 = vpack.c.b16 %v9200, %v9195
        %v9417 = vunpack.c.l.b16 %v8866
        %v9418 = vunpack.c.l.b16 %v8867
        %v9419 = vunpack.c.l.b16 %v8868
        %v9420 = vunpack.c.l.b16 %v8869
        %v9421 = vunpack.c.l.b16 %v8870
        %v9422 = vunpack.c.l.b16 %v8871
        %v9423 = vunpack.c.l.b16 %v8872
        %v9424 = vunpack.c.l.b16 %v8873
        %v9425 = vunpack.c.l.b16 %v8874
        %v9426 = vunpack.c.l.b16 %v8875
        %v9427 = vunpack.c.l.b16 %v8876
        %v9428 = vunpack.c.l.b16 %v8877
        %v9429 = vunpack.c.l.b16 %v8878
        %v9430 = vunpack.c.l.b16 %v8879
        %v9431 = vunpack.c.l.b16 %v8880
        %v9432 = vunpack.c.l.b16 %v8881
        %v9433 = vunpack.c.l.b16 %v8882
        %v9434 = vunpack.c.l.b16 %v8883
        %v9435 = vunpack.c.l.b16 %v8884
        %v9436 = vunpack.c.l.b16 %v8885
        %v9437 = vunpack.c.l.b16 %v8886
        %v9438 = vunpack.c.l.b16 %v8887
        %v9439 = vunpack.c.l.b16 %v8888
        %v9440 = vunpack.c.l.b16 %v8889
        %v9441 = vunpack.c.l.b16 %v8890
        %v9442 = vunpack.c.l.b16 %v8891
        %v9443 = vunpack.c.l.b16 %v8892
        %v9444 = vunpack.c.l.b16 %v8893
        %v9445 = vunpack.c.l.b16 %v8894
        %v9446 = vunpack.c.l.b16 %v8895
        %v9447 = vunpack.c.l.b16 %v8896
        %v9448 = vunpack.c.l.b16 %v8897
        %v9449 = vunpack.c.l.b16 %v8898
        %v9450 = vunpack.c.l.b16 %v8899
        %v9451 = vunpack.c.l.b16 %v8900
        %v9452 = vunpack.c.l.b16 %v8901
        %v9453 = vunpack.c.l.b16 %v8902
        %v9454 = vunpack.c.l.b16 %v8903
        %v9455 = vunpack.c.l.b16 %v8904
        %v9456 = vunpack.c.l.b16 %v8905
        %v9457 = vunpack.c.l.b16 %v8906
        %v9458 = vunpack.c.l.b16 %v8907
        %v9459 = vunpack.c.l.b16 %v8908
        %v9460 = vunpack.c.l.b16 %v8909
        %v9461 = vunpack.c.l.b16 %v8910
        %v9462 = vunpack.c.l.b16 %v8911
        %v9463 = vunpack.c.l.b16 %v8912
        %v9464 = vunpack.c.l.b16 %v8913
        %v9465 = vunpack.c.l.b16 %v8914
        %v9466 = vunpack.c.l.b16 %v8915
        %v9467 = vunpack.c.l.b16 %v8916
        %v9468 = vunpack.c.l.b16 %v8917
        %v9469 = vunpack.c.l.b16 %v8918
        %v9470 = vunpack.c.l.b16 %v8919
        %v9471 = vunpack.c.l.b16 %v8920
        %v9472 = vunpack.c.l.b16 %v8921
        %v9473 = vunpack.c.l.b16 %v8922
        %v9474 = vunpack.c.l.b16 %v8923
        %v9475 = vunpack.c.l.b16 %v8924
        %v9476 = vunpack.c.l.b16 %v8925
        %v9477 = vunpack.c.l.b16 %v8926
        %v9478 = vunpack.c.l.b16 %v8927
        %v9479 = vunpack.c.l.b16 %v8928
        %v9480 = vunpack.c.l.b16 %v8929
        %v9481 = vunpack.c.l.b16 %v8930
        %v9482 = vunpack.c.l.b16 %v8931
        %v9483 = vunpack.c.l.b16 %v8932
        %v9484 = vunpack.c.l.b16 %v8933
        %v9485 = vunpack.c.l.b16 %v8934
        %v9486 = vunpack.c.l.b16 %v8935
        %v9487 = vunpack.c.l.b16 %v8936
        %v9488 = vunpack.c.l.b16 %v8937
        %v9489 = vpack.c.b16 %v9418, %v9417
        %v9490 = vpack.c.b16 %v9420, %v9419
        %v9491 = vpack.c.b16 %v9422, %v9421
        %v9492 = vpack.c.b16 %v9424, %v9423
        %v9493 = vpack.c.b16 %v9426, %v9425
        %v9494 = vpack.c.b16 %v9428, %v9427
        %v9495 = vpack.c.b16 %v9430, %v9429
        %v9496 = vpack.c.b16 %v9432, %v9431
        %v9497 = vpack.c.b16 %v9434, %v9433
        %v9498 = vpack.c.b16 %v9436, %v9435
        %v9499 = vpack.c.b16 %v9438, %v9437
        %v9500 = vpack.c.b16 %v9440, %v9439
        %v9501 = vpack.c.b16 %v9442, %v9441
        %v9502 = vpack.c.b16 %v9444, %v9443
        %v9503 = vpack.c.b16 %v9446, %v9445
        %v9504 = vpack.c.b16 %v9448, %v9447
        %v9505 = vpack.c.b16 %v9450, %v9449
        %v9506 = vpack.c.b16 %v9452, %v9451
        %v9507 = vpack.c.b16 %v9454, %v9453
        %v9508 = vpack.c.b16 %v9456, %v9455
        %v9509 = vpack.c.b16 %v9458, %v9457
        %v9510 = vpack.c.b16 %v9460, %v9459
        %v9511 = vpack.c.b16 %v9462, %v9461
        %v9512 = vpack.c.b16 %v9464, %v9463
        %v9513 = vpack.c.b16 %v9466, %v9465
        %v9514 = vpack.c.b16 %v9468, %v9467
        %v9515 = vpack.c.b16 %v9470, %v9469
        %v9516 = vpack.c.b16 %v9472, %v9471
        %v9517 = vpack.c.b16 %v9474, %v9473
        %v9518 = vpack.c.b16 %v9476, %v9475
        %v9519 = vpack.c.b16 %v9478, %v9477
        %v9520 = vpack.c.b16 %v9480, %v9479
        %v9521 = vpack.c.b16 %v9482, %v9481
        %v9522 = vpack.c.b16 %v9484, %v9483
        %v9523 = vpack.c.b16 %v9486, %v9485
        %v9524 = vpack.c.b16 %v9488, %v9487
        %v9562 = vsel %vm4862, %v9205, 0
        %v9565 = vsel %vm4862, %v9210, 0
        %v9568 = vsel %vm4862, %v9215, 0
        %v9571 = vsel %vm4862, %v9220, 0
        %v9574 = vsel %vm4862, %v9225, 0
        %v9577 = vsel %vm4862, %v9230, 0
        %v9580 = vsel %vm4862, %v9235, 0
        %v9583 = vsel %vm4862, %v9240, 0
        %v9586 = vsel %vm4862, %v9245, 0
        %v9589 = vsel %vm4862, %v9250, 0
        %v9592 = vsel %vm4862, %v9255, 0
        %v9595 = vsel %vm4862, %v9260, 0
        %v9598 = vsel %vm4862, %v9265, 0
        %v9601 = vsel %vm4862, %v9270, 0
        %v9604 = vsel %vm4862, %v9275, 0
        %v9607 = vsel %vm4862, %v9280, 0
        %9609 = vmatprep.subr.bf16.mxu0 0
        %9610 = vmatpush1.bf16.msra.mxu0 %v9496
        %9611 = vmatprep.subr.bf16.mxu0 0
        %9612 = vmatpush1.bf16.msra.mxu0 %v9495
        %9613 = vmatprep.subr.bf16.mxu0 0
        %9614 = vmatpush1.bf16.msra.mxu0 %v9494
        %9615 = vmatprep.subr.bf16.mxu0 0
        %9616 = vmatpush1.bf16.msra.mxu0 %v9493
        %9617 = vmatprep.subr.bf16.mxu0 0
        %9618 = vmatpush1.bf16.msra.mxu0 %v9492
        %9619 = vmatprep.subr.bf16.mxu0 0
        %9620 = vmatpush1.bf16.msra.mxu0 %v9491
        %9621 = vmatprep.subr.bf16.mxu0 0
        %9622 = vmatpush1.bf16.msra.mxu0 %v9490
        %9623 = vmatprep.subr.bf16.mxu0 0
        %9624 = vmatpush1.bf16.msra.mxu0 %v9489
        %9625 = vmatprep.subr.bf16.mxu0 0
        %9626 = vmatpush2.bf16.msra.mxu0 %v9504
        %9627 = vmatprep.subr.bf16.mxu0 0
        %9628 = vmatpush2.bf16.msra.mxu0 %v9503
        %9629 = vmatprep.subr.bf16.mxu0 0
        %9630 = vmatpush2.bf16.msra.mxu0 %v9502
        %9631 = vmatprep.subr.bf16.mxu0 0
        %9632 = vmatpush2.bf16.msra.mxu0 %v9501
        %9633 = vmatprep.subr.bf16.mxu0 0
        %9634 = vmatpush2.bf16.msra.mxu0 %v9500
        %9635 = vmatprep.subr.bf16.mxu0 0
        %9636 = vmatpush2.bf16.msra.mxu0 %v9499
        %9637 = vmatprep.subr.bf16.mxu0 0
        %9638 = vmatpush2.bf16.msra.mxu0 %v9498
        %9639 = vmatprep.subr.bf16.mxu0 0
        %9640 = vmatpush2.bf16.msra.mxu0 %v9497
        %9641 = vmatprep.mubr.bf16.mxu0 %v9202
        %9642 = vmatmul.mubr.bf16.gmra.mxu0 %v9201
        %v9643 = vpop.f32.mrf.mxu0
        %v9644 = vadd.f32 %v8943, %v9643
        %v9645 = vpop.f32.mrf.mxu0
        %v9646 = vpop.f32.mrf.mxu0
        %v9647 = vadd.f32 %v8943, %v9646
        %v9648 = vpop.f32.mrf.mxu0
        %9649 = vmatprep.mubr.bf16.mxu0 %v9207
        %9650 = vmatmul.mubr.bf16.gmra.mxu0 %v9206
        %v9651 = vpop.f32.mrf.mxu0
        %v9652 = vadd.f32 %v8943, %v9651
        %v9653 = vpop.f32.mrf.mxu0
        %v9654 = vpop.f32.mrf.mxu0
        %v9655 = vadd.f32 %v8943, %v9654
        %v9656 = vpop.f32.mrf.mxu0
        %9657 = vmatprep.mubr.bf16.mxu0 %v9212
        %9658 = vmatmul.mubr.bf16.gmra.mxu0 %v9211
        %v9659 = vpop.f32.mrf.mxu0
        %v9660 = vadd.f32 %v8943, %v9659
        %v9661 = vpop.f32.mrf.mxu0
        %v9662 = vpop.f32.mrf.mxu0
        %v9663 = vadd.f32 %v8943, %v9662
        %v9664 = vpop.f32.mrf.mxu0
        %9665 = vmatprep.mubr.bf16.mxu0 %v9217
        %9666 = vmatmul.mubr.bf16.gmra.mxu0 %v9216
        %v9667 = vpop.f32.mrf.mxu0
        %v9668 = vadd.f32 %v8943, %v9667
        %v9669 = vpop.f32.mrf.mxu0
        %v9670 = vpop.f32.mrf.mxu0
        %v9671 = vadd.f32 %v8943, %v9670
        %v9672 = vpop.f32.mrf.mxu0
        %9673 = vmatprep.mubr.bf16.mxu0 %v9222
        %9674 = vmatmul.mubr.bf16.gmra.mxu0 %v9221
        %v9675 = vpop.f32.mrf.mxu0
        %v9676 = vadd.f32 %v8943, %v9675
        %v9677 = vpop.f32.mrf.mxu0
        %v9678 = vpop.f32.mrf.mxu0
        %v9679 = vadd.f32 %v8943, %v9678
        %v9680 = vpop.f32.mrf.mxu0
        %9681 = vmatprep.mubr.bf16.mxu0 %v9227
        %9682 = vmatmul.mubr.bf16.gmra.mxu0 %v9226
        %v9683 = vpop.f32.mrf.mxu0
        %v9684 = vadd.f32 %v8943, %v9683
        %v9685 = vpop.f32.mrf.mxu0
        %v9686 = vpop.f32.mrf.mxu0
        %v9687 = vadd.f32 %v8943, %v9686
        %v9688 = vpop.f32.mrf.mxu0
        %9689 = vmatprep.mubr.bf16.mxu0 %v9232
        %9690 = vmatmul.mubr.bf16.gmra.mxu0 %v9231
        %v9691 = vpop.f32.mrf.mxu0
        %v9692 = vadd.f32 %v8943, %v9691
        %v9693 = vpop.f32.mrf.mxu0
        %v9694 = vpop.f32.mrf.mxu0
        %v9695 = vadd.f32 %v8943, %v9694
        %v9696 = vpop.f32.mrf.mxu0
        %9697 = vmatprep.mubr.bf16.mxu0 %v9237
        %9698 = vmatmul.mubr.bf16.gmra.mxu0 %v9236
        %v9699 = vpop.f32.mrf.mxu0
        %v9700 = vadd.f32 %v8943, %v9699
        %v9701 = vpop.f32.mrf.mxu0
        %v9702 = vpop.f32.mrf.mxu0
        %v9703 = vadd.f32 %v8943, %v9702
        %v9704 = vpop.f32.mrf.mxu0
        %9705 = vmatprep.mubr.bf16.mxu0 %v9242
        %9706 = vmatmul.mubr.bf16.gmra.mxu0 %v9241
        %v9707 = vpop.f32.mrf.mxu0
        %v9708 = vadd.f32 %v8943, %v9707
        %v9709 = vpop.f32.mrf.mxu0
        %v9710 = vpop.f32.mrf.mxu0
        %v9711 = vadd.f32 %v8943, %v9710
        %v9712 = vpop.f32.mrf.mxu0
        %9713 = vmatprep.mubr.bf16.mxu0 %v9247
        %9714 = vmatmul.mubr.bf16.gmra.mxu0 %v9246
        %v9715 = vpop.f32.mrf.mxu0
        %v9716 = vadd.f32 %v8943, %v9715
        %v9717 = vpop.f32.mrf.mxu0
        %v9718 = vpop.f32.mrf.mxu0
        %v9719 = vadd.f32 %v8943, %v9718
        %v9720 = vpop.f32.mrf.mxu0
        %9721 = vmatprep.mubr.bf16.mxu0 %v9252
        %9722 = vmatmul.mubr.bf16.gmra.mxu0 %v9251
        %v9723 = vpop.f32.mrf.mxu0
        %v9724 = vadd.f32 %v8943, %v9723
        %v9725 = vpop.f32.mrf.mxu0
        %v9726 = vpop.f32.mrf.mxu0
        %v9727 = vadd.f32 %v8943, %v9726
        %v9728 = vpop.f32.mrf.mxu0
        %9729 = vmatprep.mubr.bf16.mxu0 %v9257
        %9730 = vmatmul.mubr.bf16.gmra.mxu0 %v9256
        %v9731 = vpop.f32.mrf.mxu0
        %v9732 = vadd.f32 %v8943, %v9731
        %v9733 = vpop.f32.mrf.mxu0
        %v9734 = vpop.f32.mrf.mxu0
        %v9735 = vadd.f32 %v8943, %v9734
        %v9736 = vpop.f32.mrf.mxu0
        %9737 = vmatprep.mubr.bf16.mxu0 %v9262
        %9738 = vmatmul.mubr.bf16.gmra.mxu0 %v9261
        %v9739 = vpop.f32.mrf.mxu0
        %v9740 = vadd.f32 %v8943, %v9739
        %v9741 = vpop.f32.mrf.mxu0
        %v9742 = vpop.f32.mrf.mxu0
        %v9743 = vadd.f32 %v8943, %v9742
        %v9744 = vpop.f32.mrf.mxu0
        %9745 = vmatprep.mubr.bf16.mxu0 %v9267
        %9746 = vmatmul.mubr.bf16.gmra.mxu0 %v9266
        %v9747 = vpop.f32.mrf.mxu0
        %v9748 = vadd.f32 %v8943, %v9747
        %v9749 = vpop.f32.mrf.mxu0
        %v9750 = vpop.f32.mrf.mxu0
        %v9751 = vadd.f32 %v8943, %v9750
        %v9752 = vpop.f32.mrf.mxu0
        %9753 = vmatprep.mubr.bf16.mxu0 %v9272
        %9754 = vmatmul.mubr.bf16.gmra.mxu0 %v9271
        %v9755 = vpop.f32.mrf.mxu0
        %v9756 = vadd.f32 %v8943, %v9755
        %v9757 = vpop.f32.mrf.mxu0
        %v9758 = vpop.f32.mrf.mxu0
        %v9759 = vadd.f32 %v8943, %v9758
        %v9760 = vpop.f32.mrf.mxu0
        %9761 = vmatprep.mubr.bf16.mxu0 %v9277
        %9762 = vmatmul.mubr.bf16.gmra.mxu0 %v9276
        %v9763 = vpop.f32.mrf.mxu0
        %v9764 = vadd.f32 %v8943, %v9763
        %v9765 = vpop.f32.mrf.mxu0
        %v9766 = vpop.f32.mrf.mxu0
        %v9767 = vadd.f32 %v8943, %v9766
        %v9768 = vpop.f32.mrf.mxu0
        %9769 = vdwg.mxu0
        %9770 = vmatprep.subr.bf16.mxu0 0
        %9771 = vmatpush1.bf16.msra.mxu0 %v9512
        %9772 = vmatprep.subr.bf16.mxu0 0
        %9773 = vmatpush1.bf16.msra.mxu0 %v9511
        %9774 = vmatprep.subr.bf16.mxu0 0
        %9775 = vmatpush1.bf16.msra.mxu0 %v9510
        %9776 = vmatprep.subr.bf16.mxu0 0
        %9777 = vmatpush1.bf16.msra.mxu0 %v9509
        %9778 = vmatprep.subr.bf16.mxu0 0
        %9779 = vmatpush1.bf16.msra.mxu0 %v9508
        %9780 = vmatprep.subr.bf16.mxu0 0
        %9781 = vmatpush1.bf16.msra.mxu0 %v9507
        %9782 = vmatprep.subr.bf16.mxu0 0
        %9783 = vmatpush1.bf16.msra.mxu0 %v9506
        %9784 = vmatprep.subr.bf16.mxu0 0
        %9785 = vmatpush1.bf16.msra.mxu0 %v9505
        %9786 = vmatprep.subr.bf16.mxu0 0
        %9787 = vmatpush2.bf16.msra.mxu0 %v9520
        %9788 = vmatprep.subr.bf16.mxu0 0
        %9789 = vmatpush2.bf16.msra.mxu0 %v9519
        %9790 = vmatprep.subr.bf16.mxu0 0
        %9791 = vmatpush2.bf16.msra.mxu0 %v9518
        %9792 = vmatprep.subr.bf16.mxu0 0
        %9793 = vmatpush2.bf16.msra.mxu0 %v9517
        %9794 = vmatprep.subr.bf16.mxu0 0
        %9795 = vmatpush2.bf16.msra.mxu0 %v9516
        %9796 = vmatprep.subr.bf16.mxu0 0
        %9797 = vmatpush2.bf16.msra.mxu0 %v9515
        %9798 = vmatprep.subr.bf16.mxu0 0
        %9799 = vmatpush2.bf16.msra.mxu0 %v9514
        %9800 = vmatprep.subr.bf16.mxu0 0
        %9801 = vmatpush2.bf16.msra.mxu0 %v9513
        %9802 = vmatprep.mubr.bf16.mxu0 %v9204
        %9803 = vmatmul.mubr.bf16.gmra.mxu0 %v9203
        %v9804 = vpop.f32.mrf.mxu0
        %v9805 = vadd.f32 %v9644, %v9804
        %v9806 = vpop.f32.mrf.mxu0
        %v9807 = vpop.f32.mrf.mxu0
        %v9808 = vadd.f32 %v9647, %v9807
        %v9809 = vpop.f32.mrf.mxu0
        %9810 = vmatprep.mubr.bf16.mxu0 %v9209
        %9811 = vmatmul.mubr.bf16.gmra.mxu0 %v9208
        %v9812 = vpop.f32.mrf.mxu0
        %v9813 = vadd.f32 %v9652, %v9812
        %v9814 = vpop.f32.mrf.mxu0
        %v9815 = vpop.f32.mrf.mxu0
        %v9816 = vadd.f32 %v9655, %v9815
        %v9817 = vpop.f32.mrf.mxu0
        %9818 = vmatprep.mubr.bf16.mxu0 %v9214
        %9819 = vmatmul.mubr.bf16.gmra.mxu0 %v9213
        %v9820 = vpop.f32.mrf.mxu0
        %v9821 = vadd.f32 %v9660, %v9820
        %v9822 = vpop.f32.mrf.mxu0
        %v9823 = vpop.f32.mrf.mxu0
        %v9824 = vadd.f32 %v9663, %v9823
        %v9825 = vpop.f32.mrf.mxu0
        %9826 = vmatprep.mubr.bf16.mxu0 %v9219
        %9827 = vmatmul.mubr.bf16.gmra.mxu0 %v9218
        %v9828 = vpop.f32.mrf.mxu0
        %v9829 = vadd.f32 %v9668, %v9828
        %v9830 = vpop.f32.mrf.mxu0
        %v9831 = vpop.f32.mrf.mxu0
        %v9832 = vadd.f32 %v9671, %v9831
        %v9833 = vpop.f32.mrf.mxu0
        %9834 = vmatprep.mubr.bf16.mxu0 %v9224
        %9835 = vmatmul.mubr.bf16.gmra.mxu0 %v9223
        %v9836 = vpop.f32.mrf.mxu0
        %v9837 = vadd.f32 %v9676, %v9836
        %v9838 = vpop.f32.mrf.mxu0
        %v9839 = vpop.f32.mrf.mxu0
        %v9840 = vadd.f32 %v9679, %v9839
        %v9841 = vpop.f32.mrf.mxu0
        %9842 = vmatprep.mubr.bf16.mxu0 %v9229
        %9843 = vmatmul.mubr.bf16.gmra.mxu0 %v9228
        %v9844 = vpop.f32.mrf.mxu0
        %v9845 = vadd.f32 %v9684, %v9844
        %v9846 = vpop.f32.mrf.mxu0
        %v9847 = vpop.f32.mrf.mxu0
        %v9848 = vadd.f32 %v9687, %v9847
        %v9849 = vpop.f32.mrf.mxu0
        %9850 = vmatprep.mubr.bf16.mxu0 %v9234
        %9851 = vmatmul.mubr.bf16.gmra.mxu0 %v9233
        %v9852 = vpop.f32.mrf.mxu0
        %v9853 = vadd.f32 %v9692, %v9852
        %v9854 = vpop.f32.mrf.mxu0
        %v9855 = vpop.f32.mrf.mxu0
        %v9856 = vadd.f32 %v9695, %v9855
        %v9857 = vpop.f32.mrf.mxu0
        %9858 = vmatprep.mubr.bf16.mxu0 %v9239
        %9859 = vmatmul.mubr.bf16.gmra.mxu0 %v9238
        %v9860 = vpop.f32.mrf.mxu0
        %v9861 = vadd.f32 %v9700, %v9860
        %v9862 = vpop.f32.mrf.mxu0
        %v9863 = vpop.f32.mrf.mxu0
        %v9864 = vadd.f32 %v9703, %v9863
        %v9865 = vpop.f32.mrf.mxu0
        %9866 = vmatprep.mubr.bf16.mxu0 %v9244
        %9867 = vmatmul.mubr.bf16.gmra.mxu0 %v9243
        %v9868 = vpop.f32.mrf.mxu0
        %v9869 = vadd.f32 %v9708, %v9868
        %v9870 = vpop.f32.mrf.mxu0
        %v9871 = vpop.f32.mrf.mxu0
        %v9872 = vadd.f32 %v9711, %v9871
        %v9873 = vpop.f32.mrf.mxu0
        %9874 = vmatprep.mubr.bf16.mxu0 %v9249
        %9875 = vmatmul.mubr.bf16.gmra.mxu0 %v9248
        %v9876 = vpop.f32.mrf.mxu0
        %v9877 = vadd.f32 %v9716, %v9876
        %v9878 = vpop.f32.mrf.mxu0
        %v9879 = vpop.f32.mrf.mxu0
        %v9880 = vadd.f32 %v9719, %v9879
        %v9881 = vpop.f32.mrf.mxu0
        %9882 = vmatprep.mubr.bf16.mxu0 %v9254
        %9883 = vmatmul.mubr.bf16.gmra.mxu0 %v9253
        %v9884 = vpop.f32.mrf.mxu0
        %v9885 = vadd.f32 %v9724, %v9884
        %v9886 = vpop.f32.mrf.mxu0
        %v9887 = vpop.f32.mrf.mxu0
        %v9888 = vadd.f32 %v9727, %v9887
        %v9889 = vpop.f32.mrf.mxu0
        %9890 = vmatprep.mubr.bf16.mxu0 %v9259
        %9891 = vmatmul.mubr.bf16.gmra.mxu0 %v9258
        %v9892 = vpop.f32.mrf.mxu0
        %v9893 = vadd.f32 %v9732, %v9892
        %v9894 = vpop.f32.mrf.mxu0
        %v9895 = vpop.f32.mrf.mxu0
        %v9896 = vadd.f32 %v9735, %v9895
        %v9897 = vpop.f32.mrf.mxu0
        %9898 = vmatprep.mubr.bf16.mxu0 %v9264
        %9899 = vmatmul.mubr.bf16.gmra.mxu0 %v9263
        %v9900 = vpop.f32.mrf.mxu0
        %v9901 = vadd.f32 %v9740, %v9900
        %v9902 = vpop.f32.mrf.mxu0
        %v9903 = vpop.f32.mrf.mxu0
        %v9904 = vadd.f32 %v9743, %v9903
        %v9905 = vpop.f32.mrf.mxu0
        %9906 = vmatprep.mubr.bf16.mxu0 %v9269
        %9907 = vmatmul.mubr.bf16.gmra.mxu0 %v9268
        %v9908 = vpop.f32.mrf.mxu0
        %v9909 = vadd.f32 %v9748, %v9908
        %v9910 = vpop.f32.mrf.mxu0
        %v9911 = vpop.f32.mrf.mxu0
        %v9912 = vadd.f32 %v9751, %v9911
        %v9913 = vpop.f32.mrf.mxu0
        %9914 = vmatprep.mubr.bf16.mxu0 %v9274
        %9915 = vmatmul.mubr.bf16.gmra.mxu0 %v9273
        %v9916 = vpop.f32.mrf.mxu0
        %v9917 = vadd.f32 %v9756, %v9916
        %v9918 = vpop.f32.mrf.mxu0
        %v9919 = vpop.f32.mrf.mxu0
        %v9920 = vadd.f32 %v9759, %v9919
        %v9921 = vpop.f32.mrf.mxu0
        %9922 = vmatprep.mubr.bf16.mxu0 %v9279
        %9923 = vmatmul.mubr.bf16.gmra.mxu0 %v9278
        %v9924 = vpop.f32.mrf.mxu0
        %v9925 = vadd.f32 %v9764, %v9924
        %v9926 = vpop.f32.mrf.mxu0
        %v9927 = vpop.f32.mrf.mxu0
        %v9928 = vadd.f32 %v9767, %v9927
        %v9929 = vpop.f32.mrf.mxu0
        %9930 = vdwg.mxu0
        %9931 = vmatprep.subr.bf16.mxu0 0
        %9932 = vmatpush1.bf16.msra.mxu0 0
        %9933 = vmatprep.subr.bf16.mxu0 0
        %9934 = vmatpush1.bf16.msra.mxu0 0
        %9935 = vmatprep.subr.bf16.mxu0 0
        %9936 = vmatpush1.bf16.msra.mxu0 0
        %9937 = vmatprep.subr.bf16.mxu0 0
        %9938 = vmatpush1.bf16.msra.mxu0 0
        %9939 = vmatprep.subr.bf16.mxu0 0
        %9940 = vmatpush1.bf16.msra.mxu0 %v9524
        %9941 = vmatprep.subr.bf16.mxu0 0
        %9942 = vmatpush1.bf16.msra.mxu0 %v9523
        %9943 = vmatprep.subr.bf16.mxu0 0
        %9944 = vmatpush1.bf16.msra.mxu0 %v9522
        %9945 = vmatprep.subr.bf16.mxu0 0
        %9946 = vmatpush1.bf16.msra.mxu0 %v9521
        %9947 = vmatprep.subr.bf16.mxu0 0
        %9948 = vmatpush2.bf16.msra.mxu0 0
        %9949 = vmatprep.subr.bf16.mxu0 0
        %9950 = vmatpush2.bf16.msra.mxu0 0
        %9951 = vmatprep.subr.bf16.mxu0 0
        %9952 = vmatpush2.bf16.msra.mxu0 0
        %9953 = vmatprep.subr.bf16.mxu0 0
        %9954 = vmatpush2.bf16.msra.mxu0 0
        %9955 = vmatprep.subr.bf16.mxu0 0
        %9956 = vmatpush2.bf16.msra.mxu0 0
        %9957 = vmatprep.subr.bf16.mxu0 0
        %9958 = vmatpush2.bf16.msra.mxu0 0
        %9959 = vmatprep.subr.bf16.mxu0 0
        %9960 = vmatpush2.bf16.msra.mxu0 0
        %9961 = vmatprep.subr.bf16.mxu0 0
        %9962 = vmatpush2.bf16.msra.mxu0 0
        %9963 = vmatprep.mubr.bf16.mxu0 0
        %9964 = vmatmul.mubr.bf16.gmra.mxu0 %v9562
        %v9965 = vpop.f32.mrf.mxu0
        %v9966 = vadd.f32 %v9805, %v9965
        %v9967 = vpop.f32.mrf.mxu0
        %v9968 = vpop.f32.mrf.mxu0
        %v9969 = vadd.f32 %v9808, %v9968
        %v9970 = vpop.f32.mrf.mxu0
        %9971 = vmatprep.mubr.bf16.mxu0 0
        %9972 = vmatmul.mubr.bf16.gmra.mxu0 %v9565
        %v9973 = vpop.f32.mrf.mxu0
        %v9974 = vadd.f32 %v9813, %v9973
        %v9975 = vpop.f32.mrf.mxu0
        %v9976 = vpop.f32.mrf.mxu0
        %v9977 = vadd.f32 %v9816, %v9976
        %v9978 = vpop.f32.mrf.mxu0
        %9979 = vmatprep.mubr.bf16.mxu0 0
        %9980 = vmatmul.mubr.bf16.gmra.mxu0 %v9568
        %v9981 = vpop.f32.mrf.mxu0
        %v9982 = vadd.f32 %v9821, %v9981
        %v9983 = vpop.f32.mrf.mxu0
        %v9984 = vpop.f32.mrf.mxu0
        %v9985 = vadd.f32 %v9824, %v9984
        %v9986 = vpop.f32.mrf.mxu0
        %9987 = vmatprep.mubr.bf16.mxu0 0
        %9988 = vmatmul.mubr.bf16.gmra.mxu0 %v9571
        %v9989 = vpop.f32.mrf.mxu0
        %v9990 = vadd.f32 %v9829, %v9989
        %v9991 = vpop.f32.mrf.mxu0
        %v9992 = vpop.f32.mrf.mxu0
        %v9993 = vadd.f32 %v9832, %v9992
        %v9994 = vpop.f32.mrf.mxu0
        %9995 = vmatprep.mubr.bf16.mxu0 0
        %9996 = vmatmul.mubr.bf16.gmra.mxu0 %v9574
        %v9997 = vpop.f32.mrf.mxu0
        %v9998 = vadd.f32 %v9837, %v9997
        %v9999 = vpop.f32.mrf.mxu0
        %v10000 = vpop.f32.mrf.mxu0
        %v10001 = vadd.f32 %v9840, %v10000
        %v10002 = vpop.f32.mrf.mxu0
        %10003 = vmatprep.mubr.bf16.mxu0 0
        %10004 = vmatmul.mubr.bf16.gmra.mxu0 %v9577
        %v10005 = vpop.f32.mrf.mxu0
        %v10006 = vadd.f32 %v9845, %v10005
        %v10007 = vpop.f32.mrf.mxu0
        %v10008 = vpop.f32.mrf.mxu0
        %v10009 = vadd.f32 %v9848, %v10008
        %v10010 = vpop.f32.mrf.mxu0
        %10011 = vmatprep.mubr.bf16.mxu0 0
        %10012 = vmatmul.mubr.bf16.gmra.mxu0 %v9580
        %v10013 = vpop.f32.mrf.mxu0
        %v10014 = vadd.f32 %v9853, %v10013
        %v10015 = vpop.f32.mrf.mxu0
        %v10016 = vpop.f32.mrf.mxu0
        %v10017 = vadd.f32 %v9856, %v10016
        %v10018 = vpop.f32.mrf.mxu0
        %10019 = vmatprep.mubr.bf16.mxu0 0
        %10020 = vmatmul.mubr.bf16.gmra.mxu0 %v9583
        %v10021 = vpop.f32.mrf.mxu0
        %v10022 = vadd.f32 %v9861, %v10021
        %v10023 = vpop.f32.mrf.mxu0
        %v10024 = vpop.f32.mrf.mxu0
        %v10025 = vadd.f32 %v9864, %v10024
        %v10026 = vpop.f32.mrf.mxu0
        %10027 = vmatprep.mubr.bf16.mxu0 0
        %10028 = vmatmul.mubr.bf16.gmra.mxu0 %v9586
        %v10029 = vpop.f32.mrf.mxu0
        %v10030 = vadd.f32 %v9869, %v10029
        %v10031 = vpop.f32.mrf.mxu0
        %v10032 = vpop.f32.mrf.mxu0
        %v10033 = vadd.f32 %v9872, %v10032
        %v10034 = vpop.f32.mrf.mxu0
        %10035 = vmatprep.mubr.bf16.mxu0 0
        %10036 = vmatmul.mubr.bf16.gmra.mxu0 %v9589
        %v10037 = vpop.f32.mrf.mxu0
        %v10038 = vadd.f32 %v9877, %v10037
        %v10039 = vpop.f32.mrf.mxu0
        %v10040 = vpop.f32.mrf.mxu0
        %v10041 = vadd.f32 %v9880, %v10040
        %v10042 = vpop.f32.mrf.mxu0
        %10043 = vmatprep.mubr.bf16.mxu0 0
        %10044 = vmatmul.mubr.bf16.gmra.mxu0 %v9592
        %v10045 = vpop.f32.mrf.mxu0
        %v10046 = vadd.f32 %v9885, %v10045
        %v10047 = vpop.f32.mrf.mxu0
        %v10048 = vpop.f32.mrf.mxu0
        %v10049 = vadd.f32 %v9888, %v10048
        %v10050 = vpop.f32.mrf.mxu0
        %10051 = vmatprep.mubr.bf16.mxu0 0
        %10052 = vmatmul.mubr.bf16.gmra.mxu0 %v9595
        %v10053 = vpop.f32.mrf.mxu0
        %v10054 = vadd.f32 %v9893, %v10053
        %v10055 = vpop.f32.mrf.mxu0
        %v10056 = vpop.f32.mrf.mxu0
        %v10057 = vadd.f32 %v9896, %v10056
        %v10058 = vpop.f32.mrf.mxu0
        %10059 = vmatprep.mubr.bf16.mxu0 0
        %10060 = vmatmul.mubr.bf16.gmra.mxu0 %v9598
        %v10061 = vpop.f32.mrf.mxu0
        %v10062 = vadd.f32 %v9901, %v10061
        %v10063 = vpop.f32.mrf.mxu0
        %v10064 = vpop.f32.mrf.mxu0
        %v10065 = vadd.f32 %v9904, %v10064
        %v10066 = vpop.f32.mrf.mxu0
        %10067 = vmatprep.mubr.bf16.mxu0 0
        %10068 = vmatmul.mubr.bf16.gmra.mxu0 %v9601
        %v10069 = vpop.f32.mrf.mxu0
        %v10070 = vadd.f32 %v9909, %v10069
        %v10071 = vpop.f32.mrf.mxu0
        %v10072 = vpop.f32.mrf.mxu0
        %v10073 = vadd.f32 %v9912, %v10072
        %v10074 = vpop.f32.mrf.mxu0
        %10075 = vmatprep.mubr.bf16.mxu0 0
        %10076 = vmatmul.mubr.bf16.gmra.mxu0 %v9604
        %v10077 = vpop.f32.mrf.mxu0
        %v10078 = vadd.f32 %v9917, %v10077
        %v10079 = vpop.f32.mrf.mxu0
        %v10080 = vpop.f32.mrf.mxu0
        %v10081 = vadd.f32 %v9920, %v10080
        %v10082 = vpop.f32.mrf.mxu0
        %10083 = vmatprep.mubr.bf16.mxu0 0
        %10084 = vmatmul.mubr.bf16.gmra.mxu0 %v9607
        %v10085 = vpop.f32.mrf.mxu0
        %v10086 = vadd.f32 %v9925, %v10085
        %v10087 = vpop.f32.mrf.mxu0
        %v10088 = vpop.f32.mrf.mxu0
        %v10089 = vadd.f32 %v9928, %v10088
        %v10090 = vpop.f32.mrf.mxu0
        %10091 = vdwg.mxu0
        %v10092 = vadd.f32 %v9966, %v622
        %v10093 = vadd.f32 %v9969, %v623
        %v10094 = vadd.f32 %v9974, %v624
        %v10095 = vadd.f32 %v9977, %v625
        %v10096 = vadd.f32 %v9982, %v626
        %v10097 = vadd.f32 %v9985, %v627
        %v10098 = vadd.f32 %v9990, %v628
        %v10099 = vadd.f32 %v9993, %v629
        %v10100 = vadd.f32 %v9998, %v630
        %v10101 = vadd.f32 %v10001, %v631
        %v10102 = vadd.f32 %v10006, %v632
        %v10103 = vadd.f32 %v10009, %v633
        %v10104 = vadd.f32 %v10014, %v634
        %v10105 = vadd.f32 %v10017, %v635
        %v10106 = vadd.f32 %v10022, %v636
        %v10107 = vadd.f32 %v10025, %v637
        %v10108 = vadd.f32 %v10030, %v638
        %v10109 = vadd.f32 %v10033, %v639
        %v10110 = vadd.f32 %v10038, %v640
        %v10111 = vadd.f32 %v10041, %v641
        %v10112 = vadd.f32 %v10046, %v642
        %v10113 = vadd.f32 %v10049, %v643
        %v10114 = vadd.f32 %v10054, %v644
        %v10115 = vadd.f32 %v10057, %v645
        %v10116 = vadd.f32 %v10062, %v646
        %v10117 = vadd.f32 %v10065, %v647
        %v10118 = vadd.f32 %v10070, %v648
        %v10119 = vadd.f32 %v10073, %v649
        %v10120 = vadd.f32 %v10078, %v650
        %v10121 = vadd.f32 %v10081, %v651
        %v10122 = vadd.f32 %v10086, %v652
        %v10123 = vadd.f32 %v10089, %v653
        %v10124 = vmax.f32 %v10092, 0.0
        %v10125 = vmax.f32 %v10093, 0.0
        %v10126 = vmax.f32 %v10094, 0.0
        %v10127 = vmax.f32 %v10095, 0.0
        %v10128 = vmax.f32 %v10096, 0.0
        %v10129 = vmax.f32 %v10097, 0.0
        %v10130 = vmax.f32 %v10098, 0.0
        %v10131 = vmax.f32 %v10099, 0.0
        %v10132 = vmax.f32 %v10100, 0.0
        %v10133 = vmax.f32 %v10101, 0.0
        %v10134 = vmax.f32 %v10102, 0.0
        %v10135 = vmax.f32 %v10103, 0.0
        %v10136 = vmax.f32 %v10104, 0.0
        %v10137 = vmax.f32 %v10105, 0.0
        %v10138 = vmax.f32 %v10106, 0.0
        %v10139 = vmax.f32 %v10107, 0.0
        %v10140 = vmax.f32 %v10108, 0.0
        %v10141 = vmax.f32 %v10109, 0.0
        %v10142 = vmax.f32 %v10110, 0.0
        %v10143 = vmax.f32 %v10111, 0.0
        %v10144 = vmax.f32 %v10112, 0.0
        %v10145 = vmax.f32 %v10113, 0.0
        %v10146 = vmax.f32 %v10114, 0.0
        %v10147 = vmax.f32 %v10115, 0.0
        %v10148 = vmax.f32 %v10116, 0.0
        %v10149 = vmax.f32 %v10117, 0.0
        %v10150 = vmax.f32 %v10118, 0.0
        %v10151 = vmax.f32 %v10119, 0.0
        %v10152 = vmax.f32 %v10120, 0.0
        %v10153 = vmax.f32 %v10121, 0.0
        %v10154 = vmax.f32 %v10122, 0.0
        %v10155 = vmax.f32 %v10123, 0.0
        %v10156 = vsel %vm4862, %v10124, 0.0
        %v10157 = vsel %vm4862, %v10125, 0.0
        %v10158 = vadd.f32 %v10156, %v10157
        %v10159 = vsel %vm4862, %v10126, 0.0
        %v10160 = vadd.f32 %v10158, %v10159
        %v10161 = vsel %vm4862, %v10127, 0.0
        %v10162 = vadd.f32 %v10160, %v10161
        %v10163 = vsel %vm4862, %v10128, 0.0
        %v10164 = vadd.f32 %v10162, %v10163
        %v10165 = vsel %vm4862, %v10129, 0.0
        %v10166 = vadd.f32 %v10164, %v10165
        %v10167 = vsel %vm4862, %v10130, 0.0
        %v10168 = vadd.f32 %v10166, %v10167
        %v10169 = vsel %vm4862, %v10131, 0.0
        %v10170 = vadd.f32 %v10168, %v10169
        %v10171 = vsel %vm4862, %v10132, 0.0
        %v10172 = vadd.f32 %v10170, %v10171
        %v10173 = vsel %vm4862, %v10133, 0.0
        %v10174 = vadd.f32 %v10172, %v10173
        %v10175 = vsel %vm4862, %v10134, 0.0
        %v10176 = vadd.f32 %v10174, %v10175
        %v10177 = vsel %vm4862, %v10135, 0.0
        %v10178 = vadd.f32 %v10176, %v10177
        %v10179 = vsel %vm4862, %v10136, 0.0
        %v10180 = vadd.f32 %v10178, %v10179
        %v10181 = vsel %vm4862, %v10137, 0.0
        %v10182 = vadd.f32 %v10180, %v10181
        %v10183 = vsel %vm4862, %v10138, 0.0
        %v10184 = vadd.f32 %v10182, %v10183
        %v10185 = vsel %vm4862, %v10139, 0.0
        %v10186 = vadd.f32 %v10184, %v10185
        %v10187 = vsel %vm4862, %v10140, 0.0
        %v10188 = vadd.f32 %v10186, %v10187
        %v10189 = vsel %vm4862, %v10141, 0.0
        %v10190 = vadd.f32 %v10188, %v10189
        %v10191 = vsel %vm4862, %v10142, 0.0
        %v10192 = vadd.f32 %v10190, %v10191
        %v10193 = vsel %vm4862, %v10143, 0.0
        %v10194 = vadd.f32 %v10192, %v10193
        %v10195 = vsel %vm4862, %v10144, 0.0
        %v10196 = vadd.f32 %v10194, %v10195
        %v10197 = vsel %vm4862, %v10145, 0.0
        %v10198 = vadd.f32 %v10196, %v10197
        %v10199 = vsel %vm4862, %v10146, 0.0
        %v10200 = vadd.f32 %v10198, %v10199
        %v10201 = vsel %vm4862, %v10147, 0.0
        %v10202 = vadd.f32 %v10200, %v10201
        %v10203 = vsel %vm4862, %v10148, 0.0
        %v10204 = vadd.f32 %v10202, %v10203
        %v10205 = vsel %vm4862, %v10149, 0.0
        %v10206 = vadd.f32 %v10204, %v10205
        %v10207 = vsel %vm4862, %v10150, 0.0
        %v10208 = vadd.f32 %v10206, %v10207
        %v10209 = vsel %vm4862, %v10151, 0.0
        %v10210 = vadd.f32 %v10208, %v10209
        %v10211 = vsel %vm4862, %v10152, 0.0
        %v10212 = vadd.f32 %v10210, %v10211
        %v10213 = vsel %vm4862, %v10153, 0.0
        %v10214 = vadd.f32 %v10212, %v10213
        %v10215 = vsel %vm4862, %v10154, 0.0
        %v10216 = vadd.f32 %v10214, %v10215
        %v10217 = vsel %vm4862, %v10155, 0.0
        %v10218 = vadd.f32 %v10216, %v10217
        %v10219 = vrot.slane %v10218, 4
        %v10220 = vadd.f32 %v10218, %v10219
        %v10221 = vrot.slane %v10220, 2
        %v10222 = vadd.f32 %v10220, %v10221
        %v10223 = vrot.slane %v10222, 1
        %v10224 = vadd.f32 %v10222, %v10223
        %v10225 = vrcp.pop 256.0
        %v10226 = vmul.f32 %v10224, %v10225
        %10227 = vst.msk [vmem:[%s270] sm:$0x1] %vm657, %v10226
        %s10228 = sand.u32 %s181, 1
        %s10229 = scalar_lea.sflag [#allocation5], %s10228
        %s10230 = sand.u32 %s181, 1
        %s10231 = scalar_lea.vmem [#allocation4], %s10230
        // Predicated region
        $region49: #{encoder_forward.1} parent=47 // pred_check
          %p10232 = pneg %p191
        $region50: #{encoder_forward.1} parent=47 // pred_check_branch
          %10234 = sbr.rel (%p10232) target = $region52
        $region51: #{encoder_forward.1} parent=47 // pred_region
          %s10236 = ssub.s32 16, 16
          %10237 = vsyncadd %s10229, %s10236
          %s10238 = smul.addr %s21, 16
          %s10239 = scalar_lea.hbm %s7, %s10238
          %s10241 = sshll.u32 %s10231, 4
          %s10242 = int_to_ptr.vmem [resolvable:$true] %s10241
          %10244 = dma.vmem_to_hbm [thread:$0]  %s10242, 16, %s10239, %s10229
        $region52: #{encoder_forward.1} parent=47 // pred_fallthru
          _
      $region48: #{encoder_forward.1} parent=5 // pred_fallthru
        _
      %p10245 = scmp.le.s32.totalorder 2, %s16
      // Predicated region
      $region53: #{encoder_forward.1} parent=5 // pred_check
        %p10246 = pneg %p10245
      $region54: #{encoder_forward.1} parent=5 // pred_check_branch
        %10248 = sbr.rel (%p10246) target = $region56
      $region55: #{encoder_forward.1} parent=5 // pred_region
        %s10249 = ssub.s32 %s16, 2
        // Predicated region
        $region57: #{encoder_forward.1} parent=55 // pred_check
          %p10250 = pneg %p197
        $region58: #{encoder_forward.1} parent=55 // pred_check_branch
          %10252 = sbr.rel (%p10250) target = $region60
        $region59: #{encoder_forward.1} parent=55 // pred_region
          %s10253 = sand.u32 %s182, 1
          %s10254 = scalar_lea.sflag [#allocation5], %s10253
          %s10255 = sand.u32 %s182, 1
          %s10256 = scalar_lea.vmem [#allocation4], %s10255
          %10257 = dma.done %s10254, 16
        $region60: #{encoder_forward.1} parent=55 // pred_fallthru
          _
      $region56: #{encoder_forward.1} parent=5 // pred_fallthru
        _
    $region6: #{encoder_forward.1} parent=1 // loop_footer
      %s20 = sadd.s32 1, %s16
    $region7: #{encoder_forward.1} parent=1 // loop_footer_branch
      %15 = sbr.rel target = $region3
    $region8: #{encoder_forward.1} parent=1 // loop_exit
      _
    %10258 = vsyncpa [#allocation5], 1
    %s10259 = scalar_lea.sflag [#allocation5], 1
    %10260 = vsyncpa %s10259, 1

</llo_original>
